<compile_context>
chip_gen: v6e
topology: v6e:2x2x1
jax: 0.10.0
libtpu: 0.0.40
codegen_flags: <defaults>
</compile_context>

<pallas_src>
import functools
import numpy as np
import jax
import jax.numpy as jnp
from jax.experimental import pallas as pl
from jax.experimental.pallas import tpu as pltpu

# ---------------- hparams (small, deterministic) ----------------
VOCAB = 50
VOCAB_PAD = 64         # vocab padded to a lane-friendly size for the one-hot matmul
EMB_DIM = 32           # hparams.embedding_dim
TITLE_SIZE = 8         # hparams.title_size (sequence length)
HEAD_NUM = 4           # hparams.head_num
HEAD_DIM = 8           # hparams.head_dim
HD = HEAD_NUM * HEAD_DIM            # 32
LINEAR_HIDDEN = 32     # hparams.linear_hidden_dim
ATT_HIDDEN = 16        # hparams.attention_hidden_dim
BATCH = 2
LN_EPS = 1e-5
SQRT_HALF = 0.7071067811865476

MAX_BBLK = 512         # titles per grid step (tunable; ~few MiB VMEM at 512.
                       # If pushed into the thousands, budget against v7x's
                       # 64 MiB and set CompilerParams(vmem_limit_bytes=...)).
CORE_SPLIT = 2         # aim for >= this many grid blocks (v7x dual TensorCore)
LANE = 128             # lane-tile width used to align the packed weight slabs

# ---------------- packed-slab layout ----------------
# wslab: (32, 4*128).  Every remaining weight matrix has in_features=32, so
# they share the sublane axis; each matrix gets its own 128-lane-aligned
# column chunk (aligned windows -> no lane rotates on load).
W_D1, W_D2, W_D3, W_ATT = (c * LANE for c in range(4))
# ew: (64, 128).  Folded embedding-gather + QKV projection table, see pack_params.
# vslab: (12, 128).  One row vector per row, payload starting at lane 0.
V_BQKV = 0
V_B1, V_G1, V_BB1 = 1, 2, 3
V_B2, V_G2, V_BB2 = 4, 5, 6
V_B3, V_G3, V_BB3 = 7, 8, 9
V_BA, V_QA = 10, 11


# ---------------- in-kernel math helpers ----------------
def _erf(x):
    # Abramowitz & Stegun 7.1.26 polynomial, |err| <= 1.5e-7.  Keeps the
    # exact-erf GELU semantics of nn.GELU() (tanh-approx GELU would be
    # cheaper on the VALU but breaks the 1e-4 tolerance contract).
    a1, a2, a3, a4, a5 = 0.254829592, -0.284496736, 1.421413741, -1.453152027, 1.061405429
    p = 0.3275911
    z = jnp.abs(x)
    t = 1.0 / (1.0 + p * z)
    poly = ((((a5 * t + a4) * t + a3) * t + a2) * t + a1) * t
    y = 1.0 - poly * jnp.exp(-z * z)
    return jnp.where(x >= 0.0, y, -y)


def _gelu(x):
    # exact GELU (PyTorch nn.GELU default, approximate='none')
    return 0.5 * x * (1.0 + _erf(x * SQRT_HALF))


def _layernorm(x, g, b):
    mu = jnp.mean(x, axis=-1, keepdims=True)
    var = jnp.mean(jnp.square(x - mu), axis=-1, keepdims=True)
    return (x - mu) * jax.lax.rsqrt(var + LN_EPS) * g + b


# ---------------- the Pallas kernel (one block of titles per grid step) ----------------
def news_encoder_kernel(tok_ref, ew_ref, w_ref, v_ref, out_ref, attn_ref, *, bblk, t):
    n = bblk * t

    def vec(row, width):                                      # (1, width) row vector
        return v_ref[row:row + 1, 0:width]

    def mat(col, width):                                      # (32, width) weight
        return w_ref[:, col:col + width]

    # ---- fused embedding gather + QKV projection ----
    # one-hot over the padded vocab; ew = emb_pad @ [wq*scale | wk | wv], so the
    # matmul is an exact row selection of the precomputed per-token QKV rows.
    tok = tok_ref[...]                                        # (bblk, T) int32
    iota = jax.lax.broadcasted_iota(jnp.int32, (bblk, t, VOCAB_PAD), 2)
    onehot = (tok[:, :, None] == iota).astype(jnp.float32)    # (bblk, T, VP)
    qkv = jnp.dot(onehot.reshape(n, VOCAB_PAD), ew_ref[:, 0:3 * HD],
                  preferred_element_type=jnp.float32) + vec(V_BQKV, 3 * HD)
    q3 = qkv[:, 0:HD].reshape(bblk, t, HD)
    k3 = qkv[:, HD:2 * HD].reshape(bblk, t, HD)
    v3 = qkv[:, 2 * HD:3 * HD].reshape(bblk, t, HD)

    # ---- multi-head self-attention (1/sqrt(Dh) already folded into ew / bq) ----
    # Per-head batched dot_general over the bblk titles; each head writes its
    # (n, 8) output directly into its lane slice of the VMEM scratch (no
    # jnp.concatenate relayouts).
    for h in range(HEAD_NUM):                                 # static unroll (4)
        lo = h * HEAD_DIM
        qh = q3[:, :, lo:lo + HEAD_DIM]
        kh = k3[:, :, lo:lo + HEAD_DIM]
        vh = v3[:, :, lo:lo + HEAD_DIM]
        s = jax.lax.dot_general(qh, kh, (((2,), (2,)), ((0,), (0,))),
                                preferred_element_type=jnp.float32)   # (B,T,T)
        s = s - jnp.max(s, axis=-1, keepdims=True)
        p = jnp.exp(s)
        p = p / jnp.sum(p, axis=-1, keepdims=True)
        oh = jax.lax.dot_general(p, vh, (((2,), (1,)), ((0,), (0,))),
                                 preferred_element_type=jnp.float32)  # (B,T,Dh)
        attn_ref[:, lo:lo + HEAD_DIM] = oh.reshape(n, HEAD_DIM)
    attn = attn_ref[...]                                      # (n, HD)

    # ---- dense stack: (Linear -> LayerNorm -> GELU) x 3, dropout = identity ----
    def dense_block(hin, col, width, vrow):
        y = jnp.dot(hin, mat(col, width),
                    preferred_element_type=jnp.float32) + vec(vrow, width)
        return _gelu(_layernorm(y, vec(vrow + 1, width), vec(vrow + 2, width)))

    h1 = dense_block(attn, W_D1, LINEAR_HIDDEN, V_B1)
    h2 = dense_block(h1, W_D2, LINEAR_HIDDEN, V_B2)
    h3 = dense_block(h2, W_D3, HD, V_B3)                      # (n, HD)

    # ---- additive attention pooling over the T tokens of each title ----
    # VPU mul + lane reduce for the logits; VPU mul + sublane reduce (T = 8 =
    # one sublane group) for the weighted sum.  No M=1 batched dot_generals.
    proj = jnp.tanh(jnp.dot(h3, mat(W_ATT, ATT_HIDDEN),
                            preferred_element_type=jnp.float32)
                    + vec(V_BA, ATT_HIDDEN))                  # (n, A)
    logits = jnp.sum(proj * vec(V_QA, ATT_HIDDEN), axis=-1, keepdims=True)   # (n, 1)
    l3 = logits.reshape(bblk, t, 1)
    l3 = l3 - jnp.max(l3, axis=1, keepdims=True)
    e3 = jnp.exp(l3)
    alpha3 = e3 / jnp.sum(e3, axis=1, keepdims=True)          # (bblk, T, 1) softmax over T
    pooled = jnp.sum(alpha3 * h3.reshape(bblk, t, HD), axis=1)  # (bblk, HD)
    out_ref[...] = pooled


# ---------------- one-time parameter packing ----------------
def pack_params(p):
    """Pack the 21 small parameter tensors into three lane-aligned f32 slabs."""
    scale = jnp.float32(1.0 / np.sqrt(HEAD_DIM))
    # fold the attention scale into wq / bq (one-time preprocessing)
    wqkv = jnp.concatenate([p["wq"] * scale, p["wk"], p["wv"]], axis=1)   # (E, 96)
    bqkv = jnp.concatenate([p["bq"] * scale, p["bk"], p["bv"]], axis=1)   # (1, 96)

    # Fold embedding lookup + QKV projection: the embedded sequence is only
    # consumed by Q/K/V, so (onehot @ emb) @ wqkv == onehot @ (emb @ wqkv).
    emb_pad = jnp.pad(p["emb"].astype(jnp.float32),
                      ((0, VOCAB_PAD - VOCAB), (0, 0)))                   # (64, E)
    ew = jnp.dot(emb_pad, wqkv, precision=jax.lax.Precision.HIGHEST)      # (64, 96)

    def pad_cols(a):
        return jnp.pad(a, ((0, 0), (0, LANE - a.shape[1])))

    wslab = jnp.concatenate(
        [pad_cols(m) for m in (p["w1"], p["w2"], p["w3"], p["wa"])],
        axis=1)                                                            # (32, 512)

    vrows = [bqkv,
             p["b1"], p["g1"], p["bb1"],
             p["b2"], p["g2"], p["bb2"],
             p["b3"], p["g3"], p["bb3"],
             p["ba"], p["qa"]]
    vslab = jnp.concatenate([pad_cols(r) for r in vrows], axis=0)          # (12, 128)

    return {"ew": pad_cols(ew).astype(jnp.float32),
            "wslab": wslab.astype(jnp.float32),
            "vslab": vslab.astype(jnp.float32)}


# ---------------- wrapper ----------------
def news_encoder_forward(tokens, packed, *, max_bblk=MAX_BBLK, core_split=CORE_SPLIT):
    B, T = tokens.shape
    # Titles per grid step: multiple of 8 (sublane-full tiles), capped at
    # max_bblk, and targeted at ~B/core_split so v7x's two TensorCores each
    # get at least one "parallel" block once B is large.  (On single-TC
    # v5e/v6e the extra split only costs one ~0.5us grid step.)
    bblk = -(-B // core_split)
    bblk = ((bblk + 7) // 8) * 8
    bblk = max(8, min(max_bblk, bblk))
    nblk = pl.cdiv(B, bblk)
    bpad = nblk * bblk

    toks = tokens.astype(jnp.int32)
    if bpad != B:
        # Only the int32 token ids get padded (tiny); padded titles compute
        # finite garbage and are sliced off below.
        toks = jnp.pad(toks, ((0, bpad - B), (0, 0)))

    # TODO(synk): PositionEncoder / time-embedding branches are config-gated
    # off in this configuration and are not implemented.

    kernel = functools.partial(news_encoder_kernel, bblk=bblk, t=T)
    out = pl.pallas_call(
        kernel,
        out_shape=jax.ShapeDtypeStruct((bpad, HD), jnp.float32),
        grid=(nblk,),
        in_specs=[
            pl.BlockSpec((bblk, T), lambda b: (b, 0)),              # token ids (int32)
            pl.BlockSpec(packed["ew"].shape, lambda b: (0, 0)),     # (64, 128)
            pl.BlockSpec(packed["wslab"].shape, lambda b: (0, 0)),  # (32, 512)
            pl.BlockSpec(packed["vslab"].shape, lambda b: (0, 0)),  # (12, 128)
        ],
        out_specs=pl.BlockSpec((bblk, HD), lambda b: (b, 0)),
        scratch_shapes=[pltpu.VMEM((bblk * T, HD), jnp.float32)],   # head-output slab
        compiler_params=pltpu.CompilerParams(dimension_semantics=("parallel",)),
    )(toks, packed["ew"], packed["wslab"], packed["vslab"])
    return out[:B] if bpad != B else out


# ---------------- deterministic parameter init ----------------
def init_params(key):
    ks = jax.random.split(key, 16)
    it = iter(range(16))

    def norm(shape, scale):
        return (scale * jax.random.normal(ks[next(it)], shape)).astype(jnp.float32)

    p = {}
    p["emb"] = norm((VOCAB, EMB_DIM), 0.5)
    # self-attention projections
    p["wq"] = norm((EMB_DIM, HD), 1.0 / np.sqrt(EMB_DIM)); p["bq"] = norm((1, HD), 0.02)
    p["wk"] = norm((EMB_DIM, HD), 1.0 / np.sqrt(EMB_DIM)); p["bk"] = norm((1, HD), 0.02)
    p["wv"] = norm((EMB_DIM, HD), 1.0 / np.sqrt(EMB_DIM)); p["bv"] = norm((1, HD), 0.02)
    # dense block 1: HD -> L
    p["w1"] = norm((HD, LINEAR_HIDDEN), 1.0 / np.sqrt(HD)); p["b1"] = norm((1, LINEAR_HIDDEN), 0.02)
    p["g1"] = jnp.ones((1, LINEAR_HIDDEN), jnp.float32); p["bb1"] = jnp.zeros((1, LINEAR_HIDDEN), jnp.float32)
    # dense block 2: L -> L
    p["w2"] = norm((LINEAR_HIDDEN, LINEAR_HIDDEN), 1.0 / np.sqrt(LINEAR_HIDDEN)); p["b2"] = norm((1, LINEAR_HIDDEN), 0.02)
    p["g2"] = jnp.ones((1, LINEAR_HIDDEN), jnp.float32); p["bb2"] = jnp.zeros((1, LINEAR_HIDDEN), jnp.float32)
    # dense block 3: L -> HD
    p["w3"] = norm((LINEAR_HIDDEN, HD), 1.0 / np.sqrt(LINEAR_HIDDEN)); p["b3"] = norm((1, HD), 0.02)
    p["g3"] = jnp.ones((1, HD), jnp.float32); p["bb3"] = jnp.zeros((1, HD), jnp.float32)
    # additive attention
    p["wa"] = norm((HD, ATT_HIDDEN), 1.0 / np.sqrt(HD)); p["ba"] = norm((1, ATT_HIDDEN), 0.02)
    p["qa"] = norm((1, ATT_HIDDEN), 1.0 / np.sqrt(ATT_HIDDEN))
    return p


# ---------------- pure-JAX reference (numerical sanity check) ----------------
def reference_forward(tokens, p):
    hi = jax.lax.Precision.HIGHEST
    x = jnp.take(p["emb"], tokens, axis=0).astype(jnp.float32)   # (B, T, E)

    def lin(h, w, b):
        return jnp.einsum("bti,io->bto", h, w, precision=hi) + b

    q = lin(x, p["wq"], p["bq"]); k = lin(x, p["wk"], p["bk"]); v = lin(x, p["wv"], p["bv"])
    B, T, _ = q.shape
    qh = q.reshape(B, T, HEAD_NUM, HEAD_DIM)
    kh = k.reshape(B, T, HEAD_NUM, HEAD_DIM)
    vh = v.reshape(B, T, HEAD_NUM, HEAD_DIM)
    s = jnp.einsum("bqhd,bkhd->bhqk", qh, kh, precision=hi) / np.sqrt(HEAD_DIM)
    a = jax.nn.softmax(s, axis=-1)
    o = jnp.einsum("bhqk,bkhd->bqhd", a, vh, precision=hi).reshape(B, T, HD)

    def ln(h, g, b):
        mu = jnp.mean(h, axis=-1, keepdims=True)
        var = jnp.mean(jnp.square(h - mu), axis=-1, keepdims=True)
        return (h - mu) * jax.lax.rsqrt(var + LN_EPS) * g + b

    def gelu(h):
        return 0.5 * h * (1.0 + jax.lax.erf(h * SQRT_HALF))

    h1 = gelu(ln(lin(o, p["w1"], p["b1"]), p["g1"], p["bb1"]))
    h2 = gelu(ln(lin(h1, p["w2"], p["b2"]), p["g2"], p["bb2"]))
    h3 = gelu(ln(lin(h2, p["w3"], p["b3"]), p["g3"], p["bb3"]))

    proj = jnp.tanh(lin(h3, p["wa"], p["ba"]))
    logits = jnp.sum(proj * p["qa"], axis=-1, keepdims=True)
    alpha = jax.nn.softmax(logits, axis=1)
    return jnp.sum(alpha * h3, axis=1)                           # (B, HD)


if __name__ == "__main__":
    key = jax.random.PRNGKey(0)
    pkey, tkey = jax.random.split(key)
    params = init_params(pkey)
    tokens = jax.random.randint(tkey, (BATCH, TITLE_SIZE), 0, VOCAB, dtype=jnp.int32)

    packed = pack_params(params)          # one-time weight preprocessing
    out = news_encoder_forward(tokens, packed)
    out = jax.block_until_ready(out)

    ref = reference_forward(tokens, params)
    assert out.shape == (BATCH, HD)
    np.testing.assert_allclose(np.asarray(out), np.asarray(ref), atol=1e-4, rtol=1e-4)

    print("KERNEL_OK")
</pallas_src>

<mosaic_0001>
module attributes {stable_mosaic.version = 11 : i64} {
  func.func @news_encoder_kernel(%arg0: i32, %arg1: memref<8x8xi32, #tpu.memory_space<vmem>>, %arg2: memref<64x128xf32, #tpu.memory_space<vmem>>, %arg3: memref<32x512xf32, #tpu.memory_space<vmem>>, %arg4: memref<12x128xf32, #tpu.memory_space<vmem>>, %arg5: memref<8x32xf32, #tpu.memory_space<vmem>>, %arg6: memref<64x32xf32, #tpu.memory_space<vmem>>) attributes {dimension_semantics = [#tpu.dimension_semantics<parallel>], iteration_bounds = array<i64: 1>, scalar_prefetch = 0 : i64, scratch_operands = 1 : i64, tpu.core_type = #tpu.core_type<tc>, window_params = [{transform_indices = @transform_0, window_bounds = array<i64: 8, 8>}, {pipeline_mode = #tpu.pipeline_mode<synchronous>, transform_indices = @transform_1, window_bounds = array<i64: 64, 128>}, {pipeline_mode = #tpu.pipeline_mode<synchronous>, transform_indices = @transform_2, window_bounds = array<i64: 32, 512>}, {pipeline_mode = #tpu.pipeline_mode<synchronous>, transform_indices = @transform_3, window_bounds = array<i64: 12, 128>}, {transform_indices = @transform_4, window_bounds = array<i64: 8, 32>}]} {
    %c0 = arith.constant 0 : index
    %c0_0 = arith.constant 0 : index
    %0 = vector.load %arg1[%c0, %c0_0] : memref<8x8xi32, #tpu.memory_space<vmem>>, vector<8x8xi32>
    %1 = tpu.iota {dimensions = array<i32: 2>} : vector<8x8x64xi32>
    %2 = vector.shape_cast %0 : vector<8x8xi32> to vector<8x8x1xi32>
    %3 = vector.broadcast %2 : vector<8x8x1xi32> to vector<8x8x64xi32>
    %4 = arith.cmpi eq, %3, %1 : vector<8x8x64xi32>
    %5 = arith.extui %4 : vector<8x8x64xi1> to vector<8x8x64xi32>
    %6 = arith.sitofp %5 : vector<8x8x64xi32> to vector<8x8x64xf32>
    %7 = vector.shape_cast %6 : vector<8x8x64xf32> to vector<64x64xf32>
    %c0_1 = arith.constant 0 : index
    %c0_2 = arith.constant 0 : index
    %8 = vector.load %arg2[%c0_1, %c0_2] : memref<64x128xf32, #tpu.memory_space<vmem>>, vector<64x96xf32>
    %cst = arith.constant dense<0.000000e+00> : vector<64x96xf32>
    %9 = tpu.matmul %7, %8, %cst {dimension_numbers = #tpu.dot_dimension_numbers<[1], [0], [0], [1], [0, 0, 1, 1], [], []>} : vector<64x64xf32>, vector<64x96xf32>, vector<64x96xf32> -> vector<64x96xf32>
    %c0_3 = arith.constant 0 : index
    %c0_4 = arith.constant 0 : index
    %10 = vector.load %arg4[%c0_3, %c0_4] : memref<12x128xf32, #tpu.memory_space<vmem>>, vector<1x96xf32>
    %11 = vector.broadcast %10 : vector<1x96xf32> to vector<64x96xf32>
    %12 = arith.addf %9, %11 : vector<64x96xf32>
    %13 = vector.extract_strided_slice %12 {offsets = [0, 0], sizes = [64, 32], strides = [1, 1]} : vector<64x96xf32> to vector<64x32xf32>
    %14 = vector.shape_cast %13 : vector<64x32xf32> to vector<8x8x32xf32>
    %15 = vector.extract_strided_slice %12 {offsets = [0, 32], sizes = [64, 32], strides = [1, 1]} : vector<64x96xf32> to vector<64x32xf32>
    %16 = vector.shape_cast %15 : vector<64x32xf32> to vector<8x8x32xf32>
    %17 = vector.extract_strided_slice %12 {offsets = [0, 64], sizes = [64, 32], strides = [1, 1]} : vector<64x96xf32> to vector<64x32xf32>
    %18 = vector.shape_cast %17 : vector<64x32xf32> to vector<8x8x32xf32>
    %19 = vector.extract_strided_slice %14 {offsets = [0, 0, 0], sizes = [8, 8, 8], strides = [1, 1, 1]} : vector<8x8x32xf32> to vector<8x8x8xf32>
    %20 = vector.extract_strided_slice %16 {offsets = [0, 0, 0], sizes = [8, 8, 8], strides = [1, 1, 1]} : vector<8x8x32xf32> to vector<8x8x8xf32>
    %21 = vector.extract_strided_slice %18 {offsets = [0, 0, 0], sizes = [8, 8, 8], strides = [1, 1, 1]} : vector<8x8x32xf32> to vector<8x8x8xf32>
    %cst_5 = arith.constant dense<0.000000e+00> : vector<8x8x8xf32>
    %22 = tpu.matmul %19, %20, %cst_5 {dimension_numbers = #tpu.dot_dimension_numbers<[2], [2], [1], [1], [0, 0, 0, 1, 1, 1], [0], [0]>} : vector<8x8x8xf32>, vector<8x8x8xf32>, vector<8x8x8xf32> -> vector<8x8x8xf32>
    %cst_6 = arith.constant dense<0xFF800000> : vector<8x8xf32>
    %23 = vector.multi_reduction <maximumf>, %22, %cst_6 [2] : vector<8x8x8xf32> to vector<8x8xf32>
    %24 = vector.shape_cast %23 : vector<8x8xf32> to vector<8x8x1xf32>
    %25 = vector.broadcast %24 : vector<8x8x1xf32> to vector<8x8x8xf32>
    %26 = arith.subf %22, %25 : vector<8x8x8xf32>
    %27 = math.exp %26 : vector<8x8x8xf32>
    %cst_7 = arith.constant dense<0.000000e+00> : vector<8x8xf32>
    %28 = vector.multi_reduction <add>, %27, %cst_7 [2] : vector<8x8x8xf32> to vector<8x8xf32>
    %29 = vector.shape_cast %28 : vector<8x8xf32> to vector<8x8x1xf32>
    %30 = vector.broadcast %29 : vector<8x8x1xf32> to vector<8x8x8xf32>
    %31 = arith.divf %27, %30 : vector<8x8x8xf32>
    %cst_8 = arith.constant dense<0.000000e+00> : vector<8x8x8xf32>
    %32 = tpu.matmul %31, %21, %cst_8 {dimension_numbers = #tpu.dot_dimension_numbers<[2], [1], [1], [2], [0, 0, 0, 1, 1, 2], [0], [0]>} : vector<8x8x8xf32>, vector<8x8x8xf32>, vector<8x8x8xf32> -> vector<8x8x8xf32>
    %33 = vector.shape_cast %32 : vector<8x8x8xf32> to vector<64x8xf32>
    %c0_9 = arith.constant 0 : index
    %c0_10 = arith.constant 0 : index
    %34 = vector.load %arg6[%c0_9, %c0_10] : memref<64x32xf32, #tpu.memory_space<vmem>>, vector<64x8xf32>
    tpu.vector_store %arg6[%c0_9, %c0_10], %33 {strides = array<i32>} : memref<64x32xf32, #tpu.memory_space<vmem>>, vector<64x8xf32>,
    %35 = vector.extract_strided_slice %14 {offsets = [0, 0, 8], sizes = [8, 8, 8], strides = [1, 1, 1]} : vector<8x8x32xf32> to vector<8x8x8xf32>
    %36 = vector.extract_strided_slice %16 {offsets = [0, 0, 8], sizes = [8, 8, 8], strides = [1, 1, 1]} : vector<8x8x32xf32> to vector<8x8x8xf32>
    %37 = vector.extract_strided_slice %18 {offsets = [0, 0, 8], sizes = [8, 8, 8], strides = [1, 1, 1]} : vector<8x8x32xf32> to vector<8x8x8xf32>
    %cst_11 = arith.constant dense<0.000000e+00> : vector<8x8x8xf32>
    %38 = tpu.matmul %35, %36, %cst_11 {dimension_numbers = #tpu.dot_dimension_numbers<[2], [2], [1], [1], [0, 0, 0, 1, 1, 1], [0], [0]>} : vector<8x8x8xf32>, vector<8x8x8xf32>, vector<8x8x8xf32> -> vector<8x8x8xf32>
    %cst_12 = arith.constant dense<0xFF800000> : vector<8x8xf32>
    %39 = vector.multi_reduction <maximumf>, %38, %cst_12 [2] : vector<8x8x8xf32> to vector<8x8xf32>
    %40 = vector.shape_cast %39 : vector<8x8xf32> to vector<8x8x1xf32>
    %41 = vector.broadcast %40 : vector<8x8x1xf32> to vector<8x8x8xf32>
    %42 = arith.subf %38, %41 : vector<8x8x8xf32>
    %43 = math.exp %42 : vector<8x8x8xf32>
    %cst_13 = arith.constant dense<0.000000e+00> : vector<8x8xf32>
    %44 = vector.multi_reduction <add>, %43, %cst_13 [2] : vector<8x8x8xf32> to vector<8x8xf32>
    %45 = vector.shape_cast %44 : vector<8x8xf32> to vector<8x8x1xf32>
    %46 = vector.broadcast %45 : vector<8x8x1xf32> to vector<8x8x8xf32>
    %47 = arith.divf %43, %46 : vector<8x8x8xf32>
    %cst_14 = arith.constant dense<0.000000e+00> : vector<8x8x8xf32>
    %48 = tpu.matmul %47, %37, %cst_14 {dimension_numbers = #tpu.dot_dimension_numbers<[2], [1], [1], [2], [0, 0, 0, 1, 1, 2], [0], [0]>} : vector<8x8x8xf32>, vector<8x8x8xf32>, vector<8x8x8xf32> -> vector<8x8x8xf32>
    %49 = vector.shape_cast %48 : vector<8x8x8xf32> to vector<64x8xf32>
    %c0_15 = arith.constant 0 : index
    %c8 = arith.constant 8 : index
    %50 = vector.load %arg6[%c0_15, %c8] : memref<64x32xf32, #tpu.memory_space<vmem>>, vector<64x8xf32>
    tpu.vector_store %arg6[%c0_15, %c8], %49 {strides = array<i32>} : memref<64x32xf32, #tpu.memory_space<vmem>>, vector<64x8xf32>,
    %51 = vector.extract_strided_slice %14 {offsets = [0, 0, 16], sizes = [8, 8, 8], strides = [1, 1, 1]} : vector<8x8x32xf32> to vector<8x8x8xf32>
    %52 = vector.extract_strided_slice %16 {offsets = [0, 0, 16], sizes = [8, 8, 8], strides = [1, 1, 1]} : vector<8x8x32xf32> to vector<8x8x8xf32>
    %53 = vector.extract_strided_slice %18 {offsets = [0, 0, 16], sizes = [8, 8, 8], strides = [1, 1, 1]} : vector<8x8x32xf32> to vector<8x8x8xf32>
    %cst_16 = arith.constant dense<0.000000e+00> : vector<8x8x8xf32>
    %54 = tpu.matmul %51, %52, %cst_16 {dimension_numbers = #tpu.dot_dimension_numbers<[2], [2], [1], [1], [0, 0, 0, 1, 1, 1], [0], [0]>} : vector<8x8x8xf32>, vector<8x8x8xf32>, vector<8x8x8xf32> -> vector<8x8x8xf32>
    %cst_17 = arith.constant dense<0xFF800000> : vector<8x8xf32>
    %55 = vector.multi_reduction <maximumf>, %54, %cst_17 [2] : vector<8x8x8xf32> to vector<8x8xf32>
    %56 = vector.shape_cast %55 : vector<8x8xf32> to vector<8x8x1xf32>
    %57 = vector.broadcast %56 : vector<8x8x1xf32> to vector<8x8x8xf32>
    %58 = arith.subf %54, %57 : vector<8x8x8xf32>
    %59 = math.exp %58 : vector<8x8x8xf32>
    %cst_18 = arith.constant dense<0.000000e+00> : vector<8x8xf32>
    %60 = vector.multi_reduction <add>, %59, %cst_18 [2] : vector<8x8x8xf32> to vector<8x8xf32>
    %61 = vector.shape_cast %60 : vector<8x8xf32> to vector<8x8x1xf32>
    %62 = vector.broadcast %61 : vector<8x8x1xf32> to vector<8x8x8xf32>
    %63 = arith.divf %59, %62 : vector<8x8x8xf32>
    %cst_19 = arith.constant dense<0.000000e+00> : vector<8x8x8xf32>
    %64 = tpu.matmul %63, %53, %cst_19 {dimension_numbers = #tpu.dot_dimension_numbers<[2], [1], [1], [2], [0, 0, 0, 1, 1, 2], [0], [0]>} : vector<8x8x8xf32>, vector<8x8x8xf32>, vector<8x8x8xf32> -> vector<8x8x8xf32>
    %65 = vector.shape_cast %64 : vector<8x8x8xf32> to vector<64x8xf32>
    %c0_20 = arith.constant 0 : index
    %c16 = arith.constant 16 : index
    %66 = vector.load %arg6[%c0_20, %c16] : memref<64x32xf32, #tpu.memory_space<vmem>>, vector<64x8xf32>
    tpu.vector_store %arg6[%c0_20, %c16], %65 {strides = array<i32>} : memref<64x32xf32, #tpu.memory_space<vmem>>, vector<64x8xf32>,
    %67 = vector.extract_strided_slice %14 {offsets = [0, 0, 24], sizes = [8, 8, 8], strides = [1, 1, 1]} : vector<8x8x32xf32> to vector<8x8x8xf32>
    %68 = vector.extract_strided_slice %16 {offsets = [0, 0, 24], sizes = [8, 8, 8], strides = [1, 1, 1]} : vector<8x8x32xf32> to vector<8x8x8xf32>
    %69 = vector.extract_strided_slice %18 {offsets = [0, 0, 24], sizes = [8, 8, 8], strides = [1, 1, 1]} : vector<8x8x32xf32> to vector<8x8x8xf32>
    %cst_21 = arith.constant dense<0.000000e+00> : vector<8x8x8xf32>
    %70 = tpu.matmul %67, %68, %cst_21 {dimension_numbers = #tpu.dot_dimension_numbers<[2], [2], [1], [1], [0, 0, 0, 1, 1, 1], [0], [0]>} : vector<8x8x8xf32>, vector<8x8x8xf32>, vector<8x8x8xf32> -> vector<8x8x8xf32>
    %cst_22 = arith.constant dense<0xFF800000> : vector<8x8xf32>
    %71 = vector.multi_reduction <maximumf>, %70, %cst_22 [2] : vector<8x8x8xf32> to vector<8x8xf32>
    %72 = vector.shape_cast %71 : vector<8x8xf32> to vector<8x8x1xf32>
    %73 = vector.broadcast %72 : vector<8x8x1xf32> to vector<8x8x8xf32>
    %74 = arith.subf %70, %73 : vector<8x8x8xf32>
    %75 = math.exp %74 : vector<8x8x8xf32>
    %cst_23 = arith.constant dense<0.000000e+00> : vector<8x8xf32>
    %76 = vector.multi_reduction <add>, %75, %cst_23 [2] : vector<8x8x8xf32> to vector<8x8xf32>
    %77 = vector.shape_cast %76 : vector<8x8xf32> to vector<8x8x1xf32>
    %78 = vector.broadcast %77 : vector<8x8x1xf32> to vector<8x8x8xf32>
    %79 = arith.divf %75, %78 : vector<8x8x8xf32>
    %cst_24 = arith.constant dense<0.000000e+00> : vector<8x8x8xf32>
    %80 = tpu.matmul %79, %69, %cst_24 {dimension_numbers = #tpu.dot_dimension_numbers<[2], [1], [1], [2], [0, 0, 0, 1, 1, 2], [0], [0]>} : vector<8x8x8xf32>, vector<8x8x8xf32>, vector<8x8x8xf32> -> vector<8x8x8xf32>
    %81 = vector.shape_cast %80 : vector<8x8x8xf32> to vector<64x8xf32>
    %c0_25 = arith.constant 0 : index
    %c24 = arith.constant 24 : index
    %82 = vector.load %arg6[%c0_25, %c24] : memref<64x32xf32, #tpu.memory_space<vmem>>, vector<64x8xf32>
    tpu.vector_store %arg6[%c0_25, %c24], %81 {strides = array<i32>} : memref<64x32xf32, #tpu.memory_space<vmem>>, vector<64x8xf32>,
    %c0_26 = arith.constant 0 : index
    %c0_27 = arith.constant 0 : index
    %83 = vector.load %arg6[%c0_26, %c0_27] : memref<64x32xf32, #tpu.memory_space<vmem>>, vector<64x32xf32>
    %c0_28 = arith.constant 0 : index
    %c0_29 = arith.constant 0 : index
    %84 = vector.load %arg3[%c0_28, %c0_29] : memref<32x512xf32, #tpu.memory_space<vmem>>, vector<32x32xf32>
    %cst_30 = arith.constant dense<0.000000e+00> : vector<64x32xf32>
    %85 = tpu.matmul %83, %84, %cst_30 {dimension_numbers = #tpu.dot_dimension_numbers<[1], [0], [0], [1], [0, 0, 1, 1], [], []>} : vector<64x32xf32>, vector<32x32xf32>, vector<64x32xf32> -> vector<64x32xf32>
    %c1 = arith.constant 1 : index
    %c0_31 = arith.constant 0 : index
    %86 = vector.load %arg4[%c1, %c0_31] : memref<12x128xf32, #tpu.memory_space<vmem>>, vector<1x32xf32>
    %87 = vector.broadcast %86 : vector<1x32xf32> to vector<64x32xf32>
    %88 = arith.addf %85, %87 : vector<64x32xf32>
    %c2 = arith.constant 2 : index
    %c0_32 = arith.constant 0 : index
    %89 = vector.load %arg4[%c2, %c0_32] : memref<12x128xf32, #tpu.memory_space<vmem>>, vector<1x32xf32>
    %c3 = arith.constant 3 : index
    %c0_33 = arith.constant 0 : index
    %90 = vector.load %arg4[%c3, %c0_33] : memref<12x128xf32, #tpu.memory_space<vmem>>, vector<1x32xf32>
    %cst_34 = arith.constant dense<0.000000e+00> : vector<64xf32>
    %91 = vector.multi_reduction <add>, %88, %cst_34 [1] : vector<64x32xf32> to vector<64xf32>
    %92 = vector.shape_cast %91 : vector<64xf32> to vector<64x1xf32>
    %cst_35 = arith.constant 3.200000e+01 : f32
    %93 = vector.broadcast %cst_35 : f32 to vector<64x1xf32>
    %94 = arith.divf %92, %93 : vector<64x1xf32>
    %95 = vector.broadcast %94 : vector<64x1xf32> to vector<64x32xf32>
    %96 = arith.subf %88, %95 : vector<64x32xf32>
    %97 = arith.mulf %96, %96 : vector<64x32xf32>
    %cst_36 = arith.constant dense<0.000000e+00> : vector<64xf32>
    %98 = vector.multi_reduction <add>, %97, %cst_36 [1] : vector<64x32xf32> to vector<64xf32>
    %99 = vector.shape_cast %98 : vector<64xf32> to vector<64x1xf32>
    %cst_37 = arith.constant 3.200000e+01 : f32
    %100 = vector.broadcast %cst_37 : f32 to vector<64x1xf32>
    %101 = arith.divf %99, %100 : vector<64x1xf32>
    %102 = vector.broadcast %94 : vector<64x1xf32> to vector<64x32xf32>
    %103 = arith.subf %88, %102 : vector<64x32xf32>
    %cst_38 = arith.constant 9.99999974E-6 : f32
    %104 = vector.broadcast %cst_38 : f32 to vector<64x1xf32>
    %105 = arith.addf %101, %104 : vector<64x1xf32>
    %106 = math.rsqrt %105 : vector<64x1xf32>
    %107 = vector.broadcast %106 : vector<64x1xf32> to vector<64x32xf32>
    %108 = arith.mulf %103, %107 : vector<64x32xf32>
    %109 = vector.broadcast %89 : vector<1x32xf32> to vector<64x32xf32>
    %110 = arith.mulf %108, %109 : vector<64x32xf32>
    %111 = vector.broadcast %90 : vector<1x32xf32> to vector<64x32xf32>
    %112 = arith.addf %110, %111 : vector<64x32xf32>
    %cst_39 = arith.constant 5.000000e-01 : f32
    %113 = vector.broadcast %cst_39 : f32 to vector<64x32xf32>
    %114 = arith.mulf %113, %112 : vector<64x32xf32>
    %cst_40 = arith.constant 0.707106769 : f32
    %115 = vector.broadcast %cst_40 : f32 to vector<64x32xf32>
    %116 = arith.mulf %112, %115 : vector<64x32xf32>
    %117 = math.absf %116 : vector<64x32xf32>
    %cst_41 = arith.constant 0.327591091 : f32
    %118 = vector.broadcast %cst_41 : f32 to vector<64x32xf32>
    %119 = arith.mulf %118, %117 : vector<64x32xf32>
    %cst_42 = arith.constant 1.000000e+00 : f32
    %120 = vector.broadcast %cst_42 : f32 to vector<64x32xf32>
    %121 = arith.addf %120, %119 : vector<64x32xf32>
    %cst_43 = arith.constant 1.000000e+00 : f32
    %122 = vector.broadcast %cst_43 : f32 to vector<64x32xf32>
    %123 = arith.divf %122, %121 : vector<64x32xf32>
    %cst_44 = arith.constant 1.06140542 : f32
    %124 = vector.broadcast %cst_44 : f32 to vector<64x32xf32>
    %125 = arith.mulf %124, %123 : vector<64x32xf32>
    %cst_45 = arith.constant -1.45315206 : f32
    %126 = vector.broadcast %cst_45 : f32 to vector<64x32xf32>
    %127 = arith.addf %125, %126 : vector<64x32xf32>
    %128 = arith.mulf %127, %123 : vector<64x32xf32>
    %cst_46 = arith.constant 1.42141378 : f32
    %129 = vector.broadcast %cst_46 : f32 to vector<64x32xf32>
    %130 = arith.addf %128, %129 : vector<64x32xf32>
    %131 = arith.mulf %130, %123 : vector<64x32xf32>
    %cst_47 = arith.constant -0.284496725 : f32
    %132 = vector.broadcast %cst_47 : f32 to vector<64x32xf32>
    %133 = arith.addf %131, %132 : vector<64x32xf32>
    %134 = arith.mulf %133, %123 : vector<64x32xf32>
    %cst_48 = arith.constant 0.254829586 : f32
    %135 = vector.broadcast %cst_48 : f32 to vector<64x32xf32>
    %136 = arith.addf %134, %135 : vector<64x32xf32>
    %137 = arith.mulf %136, %123 : vector<64x32xf32>
    %cst_49 = arith.constant 0.000000e+00 : f32
    %138 = vector.broadcast %cst_49 : f32 to vector<64x32xf32>
    %139 = arith.subf %138, %117 : vector<64x32xf32>
    %140 = arith.mulf %139, %117 : vector<64x32xf32>
    %141 = math.exp %140 : vector<64x32xf32>
    %142 = arith.mulf %137, %141 : vector<64x32xf32>
    %cst_50 = arith.constant 1.000000e+00 : f32
    %143 = vector.broadcast %cst_50 : f32 to vector<64x32xf32>
    %144 = arith.subf %143, %142 : vector<64x32xf32>
    %cst_51 = arith.constant 0.000000e+00 : f32
    %145 = vector.broadcast %cst_51 : f32 to vector<64x32xf32>
    %146 = arith.cmpf oge, %116, %145 : vector<64x32xf32>
    %cst_52 = arith.constant 0.000000e+00 : f32
    %147 = vector.broadcast %cst_52 : f32 to vector<64x32xf32>
    %148 = arith.subf %147, %144 : vector<64x32xf32>
    %149 = arith.select %146, %144, %148 : vector<64x32xi1>, vector<64x32xf32>
    %cst_53 = arith.constant 1.000000e+00 : f32
    %150 = vector.broadcast %cst_53 : f32 to vector<64x32xf32>
    %151 = arith.addf %150, %149 : vector<64x32xf32>
    %152 = arith.mulf %114, %151 : vector<64x32xf32>
    %c0_54 = arith.constant 0 : index
    %c128 = arith.constant 128 : index
    %153 = vector.load %arg3[%c0_54, %c128] : memref<32x512xf32, #tpu.memory_space<vmem>>, vector<32x32xf32>
    %cst_55 = arith.constant dense<0.000000e+00> : vector<64x32xf32>
    %154 = tpu.matmul %152, %153, %cst_55 {dimension_numbers = #tpu.dot_dimension_numbers<[1], [0], [0], [1], [0, 0, 1, 1], [], []>} : vector<64x32xf32>, vector<32x32xf32>, vector<64x32xf32> -> vector<64x32xf32>
    %c4 = arith.constant 4 : index
    %c0_56 = arith.constant 0 : index
    %155 = vector.load %arg4[%c4, %c0_56] : memref<12x128xf32, #tpu.memory_space<vmem>>, vector<1x32xf32>
    %156 = vector.broadcast %155 : vector<1x32xf32> to vector<64x32xf32>
    %157 = arith.addf %154, %156 : vector<64x32xf32>
    %c5 = arith.constant 5 : index
    %c0_57 = arith.constant 0 : index
    %158 = vector.load %arg4[%c5, %c0_57] : memref<12x128xf32, #tpu.memory_space<vmem>>, vector<1x32xf32>
    %c6 = arith.constant 6 : index
    %c0_58 = arith.constant 0 : index
    %159 = vector.load %arg4[%c6, %c0_58] : memref<12x128xf32, #tpu.memory_space<vmem>>, vector<1x32xf32>
    %cst_59 = arith.constant dense<0.000000e+00> : vector<64xf32>
    %160 = vector.multi_reduction <add>, %157, %cst_59 [1] : vector<64x32xf32> to vector<64xf32>
    %161 = vector.shape_cast %160 : vector<64xf32> to vector<64x1xf32>
    %cst_60 = arith.constant 3.200000e+01 : f32
    %162 = vector.broadcast %cst_60 : f32 to vector<64x1xf32>
    %163 = arith.divf %161, %162 : vector<64x1xf32>
    %164 = vector.broadcast %163 : vector<64x1xf32> to vector<64x32xf32>
    %165 = arith.subf %157, %164 : vector<64x32xf32>
    %166 = arith.mulf %165, %165 : vector<64x32xf32>
    %cst_61 = arith.constant dense<0.000000e+00> : vector<64xf32>
    %167 = vector.multi_reduction <add>, %166, %cst_61 [1] : vector<64x32xf32> to vector<64xf32>
    %168 = vector.shape_cast %167 : vector<64xf32> to vector<64x1xf32>
    %cst_62 = arith.constant 3.200000e+01 : f32
    %169 = vector.broadcast %cst_62 : f32 to vector<64x1xf32>
    %170 = arith.divf %168, %169 : vector<64x1xf32>
    %171 = vector.broadcast %163 : vector<64x1xf32> to vector<64x32xf32>
    %172 = arith.subf %157, %171 : vector<64x32xf32>
    %cst_63 = arith.constant 9.99999974E-6 : f32
    %173 = vector.broadcast %cst_63 : f32 to vector<64x1xf32>
    %174 = arith.addf %170, %173 : vector<64x1xf32>
    %175 = math.rsqrt %174 : vector<64x1xf32>
    %176 = vector.broadcast %175 : vector<64x1xf32> to vector<64x32xf32>
    %177 = arith.mulf %172, %176 : vector<64x32xf32>
    %178 = vector.broadcast %158 : vector<1x32xf32> to vector<64x32xf32>
    %179 = arith.mulf %177, %178 : vector<64x32xf32>
    %180 = vector.broadcast %159 : vector<1x32xf32> to vector<64x32xf32>
    %181 = arith.addf %179, %180 : vector<64x32xf32>
    %cst_64 = arith.constant 5.000000e-01 : f32
    %182 = vector.broadcast %cst_64 : f32 to vector<64x32xf32>
    %183 = arith.mulf %182, %181 : vector<64x32xf32>
    %cst_65 = arith.constant 0.707106769 : f32
    %184 = vector.broadcast %cst_65 : f32 to vector<64x32xf32>
    %185 = arith.mulf %181, %184 : vector<64x32xf32>
    %186 = math.absf %185 : vector<64x32xf32>
    %cst_66 = arith.constant 0.327591091 : f32
    %187 = vector.broadcast %cst_66 : f32 to vector<64x32xf32>
    %188 = arith.mulf %187, %186 : vector<64x32xf32>
    %cst_67 = arith.constant 1.000000e+00 : f32
    %189 = vector.broadcast %cst_67 : f32 to vector<64x32xf32>
    %190 = arith.addf %189, %188 : vector<64x32xf32>
    %cst_68 = arith.constant 1.000000e+00 : f32
    %191 = vector.broadcast %cst_68 : f32 to vector<64x32xf32>
    %192 = arith.divf %191, %190 : vector<64x32xf32>
    %cst_69 = arith.constant 1.06140542 : f32
    %193 = vector.broadcast %cst_69 : f32 to vector<64x32xf32>
    %194 = arith.mulf %193, %192 : vector<64x32xf32>
    %cst_70 = arith.constant -1.45315206 : f32
    %195 = vector.broadcast %cst_70 : f32 to vector<64x32xf32>
    %196 = arith.addf %194, %195 : vector<64x32xf32>
    %197 = arith.mulf %196, %192 : vector<64x32xf32>
    %cst_71 = arith.constant 1.42141378 : f32
    %198 = vector.broadcast %cst_71 : f32 to vector<64x32xf32>
    %199 = arith.addf %197, %198 : vector<64x32xf32>
    %200 = arith.mulf %199, %192 : vector<64x32xf32>
    %cst_72 = arith.constant -0.284496725 : f32
    %201 = vector.broadcast %cst_72 : f32 to vector<64x32xf32>
    %202 = arith.addf %200, %201 : vector<64x32xf32>
    %203 = arith.mulf %202, %192 : vector<64x32xf32>
    %cst_73 = arith.constant 0.254829586 : f32
    %204 = vector.broadcast %cst_73 : f32 to vector<64x32xf32>
    %205 = arith.addf %203, %204 : vector<64x32xf32>
    %206 = arith.mulf %205, %192 : vector<64x32xf32>
    %cst_74 = arith.constant 0.000000e+00 : f32
    %207 = vector.broadcast %cst_74 : f32 to vector<64x32xf32>
    %208 = arith.subf %207, %186 : vector<64x32xf32>
    %209 = arith.mulf %208, %186 : vector<64x32xf32>
    %210 = math.exp %209 : vector<64x32xf32>
    %211 = arith.mulf %206, %210 : vector<64x32xf32>
    %cst_75 = arith.constant 1.000000e+00 : f32
    %212 = vector.broadcast %cst_75 : f32 to vector<64x32xf32>
    %213 = arith.subf %212, %211 : vector<64x32xf32>
    %cst_76 = arith.constant 0.000000e+00 : f32
    %214 = vector.broadcast %cst_76 : f32 to vector<64x32xf32>
    %215 = arith.cmpf oge, %185, %214 : vector<64x32xf32>
    %cst_77 = arith.constant 0.000000e+00 : f32
    %216 = vector.broadcast %cst_77 : f32 to vector<64x32xf32>
    %217 = arith.subf %216, %213 : vector<64x32xf32>
    %218 = arith.select %215, %213, %217 : vector<64x32xi1>, vector<64x32xf32>
    %cst_78 = arith.constant 1.000000e+00 : f32
    %219 = vector.broadcast %cst_78 : f32 to vector<64x32xf32>
    %220 = arith.addf %219, %218 : vector<64x32xf32>
    %221 = arith.mulf %183, %220 : vector<64x32xf32>
    %c0_79 = arith.constant 0 : index
    %c256 = arith.constant 256 : index
    %222 = vector.load %arg3[%c0_79, %c256] : memref<32x512xf32, #tpu.memory_space<vmem>>, vector<32x32xf32>
    %cst_80 = arith.constant dense<0.000000e+00> : vector<64x32xf32>
    %223 = tpu.matmul %221, %222, %cst_80 {dimension_numbers = #tpu.dot_dimension_numbers<[1], [0], [0], [1], [0, 0, 1, 1], [], []>} : vector<64x32xf32>, vector<32x32xf32>, vector<64x32xf32> -> vector<64x32xf32>
    %c7 = arith.constant 7 : index
    %c0_81 = arith.constant 0 : index
    %224 = vector.load %arg4[%c7, %c0_81] : memref<12x128xf32, #tpu.memory_space<vmem>>, vector<1x32xf32>
    %225 = vector.broadcast %224 : vector<1x32xf32> to vector<64x32xf32>
    %226 = arith.addf %223, %225 : vector<64x32xf32>
    %c8_82 = arith.constant 8 : index
    %c0_83 = arith.constant 0 : index
    %227 = vector.load %arg4[%c8_82, %c0_83] : memref<12x128xf32, #tpu.memory_space<vmem>>, vector<1x32xf32>
    %c9 = arith.constant 9 : index
    %c0_84 = arith.constant 0 : index
    %228 = vector.load %arg4[%c9, %c0_84] : memref<12x128xf32, #tpu.memory_space<vmem>>, vector<1x32xf32>
    %cst_85 = arith.constant dense<0.000000e+00> : vector<64xf32>
    %229 = vector.multi_reduction <add>, %226, %cst_85 [1] : vector<64x32xf32> to vector<64xf32>
    %230 = vector.shape_cast %229 : vector<64xf32> to vector<64x1xf32>
    %cst_86 = arith.constant 3.200000e+01 : f32
    %231 = vector.broadcast %cst_86 : f32 to vector<64x1xf32>
    %232 = arith.divf %230, %231 : vector<64x1xf32>
    %233 = vector.broadcast %232 : vector<64x1xf32> to vector<64x32xf32>
    %234 = arith.subf %226, %233 : vector<64x32xf32>
    %235 = arith.mulf %234, %234 : vector<64x32xf32>
    %cst_87 = arith.constant dense<0.000000e+00> : vector<64xf32>
    %236 = vector.multi_reduction <add>, %235, %cst_87 [1] : vector<64x32xf32> to vector<64xf32>
    %237 = vector.shape_cast %236 : vector<64xf32> to vector<64x1xf32>
    %cst_88 = arith.constant 3.200000e+01 : f32
    %238 = vector.broadcast %cst_88 : f32 to vector<64x1xf32>
    %239 = arith.divf %237, %238 : vector<64x1xf32>
    %240 = vector.broadcast %232 : vector<64x1xf32> to vector<64x32xf32>
    %241 = arith.subf %226, %240 : vector<64x32xf32>
    %cst_89 = arith.constant 9.99999974E-6 : f32
    %242 = vector.broadcast %cst_89 : f32 to vector<64x1xf32>
    %243 = arith.addf %239, %242 : vector<64x1xf32>
    %244 = math.rsqrt %243 : vector<64x1xf32>
    %245 = vector.broadcast %244 : vector<64x1xf32> to vector<64x32xf32>
    %246 = arith.mulf %241, %245 : vector<64x32xf32>
    %247 = vector.broadcast %227 : vector<1x32xf32> to vector<64x32xf32>
    %248 = arith.mulf %246, %247 : vector<64x32xf32>
    %249 = vector.broadcast %228 : vector<1x32xf32> to vector<64x32xf32>
    %250 = arith.addf %248, %249 : vector<64x32xf32>
    %cst_90 = arith.constant 5.000000e-01 : f32
    %251 = vector.broadcast %cst_90 : f32 to vector<64x32xf32>
    %252 = arith.mulf %251, %250 : vector<64x32xf32>
    %cst_91 = arith.constant 0.707106769 : f32
    %253 = vector.broadcast %cst_91 : f32 to vector<64x32xf32>
    %254 = arith.mulf %250, %253 : vector<64x32xf32>
    %255 = math.absf %254 : vector<64x32xf32>
    %cst_92 = arith.constant 0.327591091 : f32
    %256 = vector.broadcast %cst_92 : f32 to vector<64x32xf32>
    %257 = arith.mulf %256, %255 : vector<64x32xf32>
    %cst_93 = arith.constant 1.000000e+00 : f32
    %258 = vector.broadcast %cst_93 : f32 to vector<64x32xf32>
    %259 = arith.addf %258, %257 : vector<64x32xf32>
    %cst_94 = arith.constant 1.000000e+00 : f32
    %260 = vector.broadcast %cst_94 : f32 to vector<64x32xf32>
    %261 = arith.divf %260, %259 : vector<64x32xf32>
    %cst_95 = arith.constant 1.06140542 : f32
    %262 = vector.broadcast %cst_95 : f32 to vector<64x32xf32>
    %263 = arith.mulf %262, %261 : vector<64x32xf32>
    %cst_96 = arith.constant -1.45315206 : f32
    %264 = vector.broadcast %cst_96 : f32 to vector<64x32xf32>
    %265 = arith.addf %263, %264 : vector<64x32xf32>
    %266 = arith.mulf %265, %261 : vector<64x32xf32>
    %cst_97 = arith.constant 1.42141378 : f32
    %267 = vector.broadcast %cst_97 : f32 to vector<64x32xf32>
    %268 = arith.addf %266, %267 : vector<64x32xf32>
    %269 = arith.mulf %268, %261 : vector<64x32xf32>
    %cst_98 = arith.constant -0.284496725 : f32
    %270 = vector.broadcast %cst_98 : f32 to vector<64x32xf32>
    %271 = arith.addf %269, %270 : vector<64x32xf32>
    %272 = arith.mulf %271, %261 : vector<64x32xf32>
    %cst_99 = arith.constant 0.254829586 : f32
    %273 = vector.broadcast %cst_99 : f32 to vector<64x32xf32>
    %274 = arith.addf %272, %273 : vector<64x32xf32>
    %275 = arith.mulf %274, %261 : vector<64x32xf32>
    %cst_100 = arith.constant 0.000000e+00 : f32
    %276 = vector.broadcast %cst_100 : f32 to vector<64x32xf32>
    %277 = arith.subf %276, %255 : vector<64x32xf32>
    %278 = arith.mulf %277, %255 : vector<64x32xf32>
    %279 = math.exp %278 : vector<64x32xf32>
    %280 = arith.mulf %275, %279 : vector<64x32xf32>
    %cst_101 = arith.constant 1.000000e+00 : f32
    %281 = vector.broadcast %cst_101 : f32 to vector<64x32xf32>
    %282 = arith.subf %281, %280 : vector<64x32xf32>
    %cst_102 = arith.constant 0.000000e+00 : f32
    %283 = vector.broadcast %cst_102 : f32 to vector<64x32xf32>
    %284 = arith.cmpf oge, %254, %283 : vector<64x32xf32>
    %cst_103 = arith.constant 0.000000e+00 : f32
    %285 = vector.broadcast %cst_103 : f32 to vector<64x32xf32>
    %286 = arith.subf %285, %282 : vector<64x32xf32>
    %287 = arith.select %284, %282, %286 : vector<64x32xi1>, vector<64x32xf32>
    %cst_104 = arith.constant 1.000000e+00 : f32
    %288 = vector.broadcast %cst_104 : f32 to vector<64x32xf32>
    %289 = arith.addf %288, %287 : vector<64x32xf32>
    %290 = arith.mulf %252, %289 : vector<64x32xf32>
    %c0_105 = arith.constant 0 : index
    %c384 = arith.constant 384 : index
    %291 = vector.load %arg3[%c0_105, %c384] : memref<32x512xf32, #tpu.memory_space<vmem>>, vector<32x16xf32>
    %cst_106 = arith.constant dense<0.000000e+00> : vector<64x16xf32>
    %292 = tpu.matmul %290, %291, %cst_106 {dimension_numbers = #tpu.dot_dimension_numbers<[1], [0], [0], [1], [0, 0, 1, 1], [], []>} : vector<64x32xf32>, vector<32x16xf32>, vector<64x16xf32> -> vector<64x16xf32>
    %c10 = arith.constant 10 : index
    %c0_107 = arith.constant 0 : index
    %293 = vector.load %arg4[%c10, %c0_107] : memref<12x128xf32, #tpu.memory_space<vmem>>, vector<1x16xf32>
    %294 = vector.broadcast %293 : vector<1x16xf32> to vector<64x16xf32>
    %295 = arith.addf %292, %294 : vector<64x16xf32>
    %296 = math.tanh %295 : vector<64x16xf32>
    %c11 = arith.constant 11 : index
    %c0_108 = arith.constant 0 : index
    %297 = vector.load %arg4[%c11, %c0_108] : memref<12x128xf32, #tpu.memory_space<vmem>>, vector<1x16xf32>
    %298 = vector.broadcast %297 : vector<1x16xf32> to vector<64x16xf32>
    %299 = arith.mulf %296, %298 : vector<64x16xf32>
    %cst_109 = arith.constant dense<0.000000e+00> : vector<64xf32>
    %300 = vector.multi_reduction <add>, %299, %cst_109 [1] : vector<64x16xf32> to vector<64xf32>
    %301 = vector.shape_cast %300 : vector<64xf32> to vector<64x1xf32>
    %302 = vector.shape_cast %301 : vector<64x1xf32> to vector<8x8x1xf32>
    %cst_110 = arith.constant dense<0xFF800000> : vector<8x1xf32>
    %303 = vector.multi_reduction <maximumf>, %302, %cst_110 [1] : vector<8x8x1xf32> to vector<8x1xf32>
    %304 = vector.shape_cast %303 : vector<8x1xf32> to vector<8x1x1xf32>
    %305 = vector.broadcast %304 : vector<8x1x1xf32> to vector<8x8x1xf32>
    %306 = arith.subf %302, %305 : vector<8x8x1xf32>
    %307 = math.exp %306 : vector<8x8x1xf32>
    %cst_111 = arith.constant dense<0.000000e+00> : vector<8x1xf32>
    %308 = vector.multi_reduction <add>, %307, %cst_111 [1] : vector<8x8x1xf32> to vector<8x1xf32>
    %309 = vector.shape_cast %308 : vector<8x1xf32> to vector<8x1x1xf32>
    %310 = vector.broadcast %309 : vector<8x1x1xf32> to vector<8x8x1xf32>
    %311 = arith.divf %307, %310 : vector<8x8x1xf32>
    %312 = vector.shape_cast %290 : vector<64x32xf32> to vector<8x8x32xf32>
    %313 = vector.broadcast %311 : vector<8x8x1xf32> to vector<8x8x32xf32>
    %314 = arith.mulf %313, %312 : vector<8x8x32xf32>
    %cst_112 = arith.constant dense<0.000000e+00> : vector<8x32xf32>
    %315 = vector.multi_reduction <add>, %314, %cst_112 [1] : vector<8x8x32xf32> to vector<8x32xf32>
    %c0_113 = arith.constant 0 : index
    %c0_114 = arith.constant 0 : index
    %316 = vector.load %arg5[%c0_113, %c0_114] : memref<8x32xf32, #tpu.memory_space<vmem>>, vector<8x32xf32>
    tpu.vector_store %arg5[%c0_113, %c0_114], %315 {strides = array<i32>} : memref<8x32xf32, #tpu.memory_space<vmem>>, vector<8x32xf32>,
    return
  }
  func.func @transform_0(%arg0: i32) -> (i32, i32) {
    %c0_i32 = arith.constant 0 : i32
    %c0_i32_0 = arith.constant 0 : i32
    return %arg0, %c0_i32 : i32, i32
  }
  func.func @transform_1(%arg0: i32) -> (i32, i32) {
    %c0_i32 = arith.constant 0 : i32
    %c0_i32_0 = arith.constant 0 : i32
    %c0_i32_1 = arith.constant 0 : i32
    return %c0_i32, %c0_i32_0 : i32, i32
  }
  func.func @transform_2(%arg0: i32) -> (i32, i32) {
    %c0_i32 = arith.constant 0 : i32
    %c0_i32_0 = arith.constant 0 : i32
    %c0_i32_1 = arith.constant 0 : i32
    return %c0_i32, %c0_i32_0 : i32, i32
  }
  func.func @transform_3(%arg0: i32) -> (i32, i32) {
    %c0_i32 = arith.constant 0 : i32
    %c0_i32_0 = arith.constant 0 : i32
    %c0_i32_1 = arith.constant 0 : i32
    return %c0_i32, %c0_i32_0 : i32, i32
  }
  func.func @transform_4(%arg0: i32) -> (i32, i32) {
    %c0_i32 = arith.constant 0 : i32
    %c0_i32_0 = arith.constant 0 : i32
    return %arg0, %c0_i32 : i32, i32
  }
}

</mosaic_0001>

<llo_original>
// kernel: tpu_custom_call.1
$region0: #{tpu_custom_call.1}
  #allocation0 [shape = 'u32[]', space=smem, size = 0x4, offset = 0x4, fixed_abs, tag = 'smem constant byte address 0x4 - core index']
  #allocation1 [shape = 'u32[144,128]{1,0:T(1,128)}', space=vmem, size = 0x12000, scoped, tag = 'internal scratch']
  #allocation2 [shape = 'f32[64,32]{1,0:T(8,128)}', space=vmem, size = 0x8000, scoped, tag = 'scratch operand']
  %s0 = inlined_call_operand.hbm [shape: s32[8,8], index: 0, kind: input, shape index: {}]
  %s1 = inlined_call_operand.hbm [shape: f32[64,128], index: 1, kind: input, shape index: {}]
  %s2 = inlined_call_operand.hbm [shape: f32[32,512], index: 2, kind: input, shape index: {}]
  %s3 = inlined_call_operand.hbm [shape: f32[12,128], index: 3, kind: input, shape index: {}]
  %s4 = inlined_call_operand.hbm [shape: f32[8,32], index: 4, kind: output, shape index: {}]
  %s5 = sld [smem:[#allocation0]]
  $region42: #{tpu_custom_call.1} parent=0
    _
  %s7 = ssub.s32 1, %s5
  %s8 = scalar_select 0, %s7, %s5
  $region1: #{tpu_custom_call.1} parent=0
    #allocation3 [shape = 'u8[4096]{0}', space=vmem, size = 0x1000, scoped, tag = 'input window, operand 0, single buffered']
    #allocation4 [shape = 's32[1]{0}', space=sflag, size = 0x4, scoped, tag = 'scoped memory for tpu_custom_call.1']
    #allocation5 [shape = 's32[1]{0}', space=sflag, size = 0x4, scoped, tag = 'scoped memory for tpu_custom_call.1']
    #allocation6 [shape = 'u8[32768]{0}', space=vmem, size = 0x8000, scoped, tag = 'input window, operand 1, single buffered']
    #allocation7 [shape = 's32[1]{0}', space=sflag, size = 0x4, scoped, tag = 'scoped memory for tpu_custom_call.1']
    #allocation8 [shape = 'u8[65536]{0}', space=vmem, size = 0x10000, scoped, tag = 'input window, operand 2, single buffered']
    #allocation9 [shape = 'u8[8192]{0}', space=vmem, size = 0x2000, scoped, tag = 'input window, operand 3, single buffered']
    #allocation10 [shape = 's32[1]{0}', space=sflag, size = 0x4, scoped, tag = 'scoped memory for tpu_custom_call.1']
    #allocation11 [shape = 'u8[4096]{0}', space=vmem, size = 0x1000, scoped, tag = 'output window, operand 0, single buffered']
    %9 = vsyncpa [#allocation4], 0
    %10 = vsyncpa [#allocation7], 0
    %11 = vsyncpa [#allocation10], 0
    %12 = vsyncpa [#allocation5], 0
    // Predicated region
    $region2: #{tpu_custom_call.1} parent=1 // pred_check
      _
    $region3: #{tpu_custom_call.1} parent=1 // pred_check_branch
      %14 = sbr.rel (0) target = $region5
    $region4: #{tpu_custom_call.1} parent=1 // pred_region
      %s16 = ssub.s32 128, 128
      %17 = vsyncadd [#allocation4], %s16
      %s19 = sshll.u32 [#allocation3], 4
      %s20 = int_to_ptr.vmem [resolvable:$true] %s19
      %22 = dma.hbm_to_vmem [thread:$0]  %s0, 128, %s20, [#allocation4]
    $region5: #{tpu_custom_call.1} parent=1 // pred_fallthru
      _
    // Predicated region
    $region6: #{tpu_custom_call.1} parent=1 // pred_check
      _
    $region7: #{tpu_custom_call.1} parent=1 // pred_check_branch
      %24 = sbr.rel (0) target = $region9
    $region8: #{tpu_custom_call.1} parent=1 // pred_region
      %s26 = ssub.s32 1024, 1024
      %27 = vsyncadd [#allocation7], %s26
      %s28 = sshll.u32 [#allocation6], 4
      %s29 = int_to_ptr.vmem [resolvable:$true] %s28
      %34 = dma.hbm_to_vmem [thread:$0]  %s1, 1024, %s29, [#allocation7], 128, 128, 8
    $region9: #{tpu_custom_call.1} parent=1 // pred_fallthru
      _
    // Predicated region
    $region10: #{tpu_custom_call.1} parent=1 // pred_check
      _
    $region11: #{tpu_custom_call.1} parent=1 // pred_check_branch
      %36 = sbr.rel (0) target = $region13
    $region12: #{tpu_custom_call.1} parent=1 // pred_region
      %s38 = ssub.s32 2048, 2048
      %39 = vsyncadd [#allocation7], %s38
      %s40 = sshll.u32 [#allocation8], 4
      %s41 = int_to_ptr.vmem [resolvable:$true] %s40
      %46 = dma.hbm_to_vmem [thread:$0]  %s2, 2048, %s41, [#allocation7], 512, 512, 32
    $region13: #{tpu_custom_call.1} parent=1 // pred_fallthru
      _
    // Predicated region
    $region14: #{tpu_custom_call.1} parent=1 // pred_check
      _
    $region15: #{tpu_custom_call.1} parent=1 // pred_check_branch
      %48 = sbr.rel (0) target = $region17
    $region16: #{tpu_custom_call.1} parent=1 // pred_region
      %s50 = ssub.s32 256, 256
      %51 = vsyncadd [#allocation10], %s50
      %s52 = sshll.u32 [#allocation9], 4
      %s53 = int_to_ptr.vmem [resolvable:$true] %s52
      %58 = dma.hbm_to_vmem [thread:$0]  %s3, 256, %s53, [#allocation10], 128, 128, 8
    $region17: #{tpu_custom_call.1} parent=1 // pred_fallthru
      _
    // Predicated region
    $region18: #{tpu_custom_call.1} parent=1 // pred_check
      _
    $region19: #{tpu_custom_call.1} parent=1 // pred_check_branch
      %60 = sbr.rel (0) target = $region21
    $region20: #{tpu_custom_call.1} parent=1 // pred_region
      %61 = dma.done [#allocation4], 128
    $region21: #{tpu_custom_call.1} parent=1 // pred_fallthru
      _
    // Predicated region
    $region22: #{tpu_custom_call.1} parent=1 // pred_check
      _
    $region23: #{tpu_custom_call.1} parent=1 // pred_check_branch
      %63 = sbr.rel (0) target = $region25
    $region24: #{tpu_custom_call.1} parent=1 // pred_region
      %64 = dma.done [#allocation7], 1024
    $region25: #{tpu_custom_call.1} parent=1 // pred_fallthru
      _
    // Predicated region
    $region26: #{tpu_custom_call.1} parent=1 // pred_check
      _
    $region27: #{tpu_custom_call.1} parent=1 // pred_check_branch
      %66 = sbr.rel (0) target = $region29
    $region28: #{tpu_custom_call.1} parent=1 // pred_region
      %67 = dma.done [#allocation7], 2048
    $region29: #{tpu_custom_call.1} parent=1 // pred_fallthru
      _
    // Predicated region
    $region30: #{tpu_custom_call.1} parent=1 // pred_check
      _
    $region31: #{tpu_custom_call.1} parent=1 // pred_check_branch
      %69 = sbr.rel (0) target = $region33
    $region32: #{tpu_custom_call.1} parent=1 // pred_region
      %70 = dma.done [#allocation10], 256
    $region33: #{tpu_custom_call.1} parent=1 // pred_fallthru
      _
    %v71 = vld [vmem:[#allocation3] sm:$0xff]
    %v72 = vlaneseq
    %v73 = vand.u32 %v72, 127
    %v74 = vlaneseq
    %v75 = vshrl.u32 %v74, 7
    %v76 = vsub.s32 0, %v75
    %v77 = vrot.slane %v71, %v76
    %79 = vbcast.lane.b32.xlu0 %v77, 256
    %v80 = vpop.permute.xlu0 %79
    %v81 = vlaneseq
    %v82 = vshrl.u32 %v81, 7
    %v83 = vsub.s32 1, %v82
    %v84 = vrot.slane %v71, %v83
    %86 = vbcast.lane.b32.xlu0 %v84, 256
    %v87 = vpop.permute.xlu0 %86
    %v88 = vlaneseq
    %v89 = vshrl.u32 %v88, 7
    %v90 = vsub.s32 2, %v89
    %v91 = vrot.slane %v71, %v90
    %93 = vbcast.lane.b32.xlu0 %v91, 256
    %v94 = vpop.permute.xlu0 %93
    %v95 = vlaneseq
    %v96 = vshrl.u32 %v95, 7
    %v97 = vsub.s32 3, %v96
    %v98 = vrot.slane %v71, %v97
    %100 = vbcast.lane.b32.xlu0 %v98, 256
    %v101 = vpop.permute.xlu0 %100
    %v102 = vlaneseq
    %v103 = vshrl.u32 %v102, 7
    %v104 = vsub.s32 4, %v103
    %v105 = vrot.slane %v71, %v104
    %107 = vbcast.lane.b32.xlu0 %v105, 256
    %v108 = vpop.permute.xlu0 %107
    %v109 = vlaneseq
    %v110 = vshrl.u32 %v109, 7
    %v111 = vsub.s32 5, %v110
    %v112 = vrot.slane %v71, %v111
    %114 = vbcast.lane.b32.xlu0 %v112, 256
    %v115 = vpop.permute.xlu0 %114
    %v116 = vlaneseq
    %v117 = vshrl.u32 %v116, 7
    %v118 = vsub.s32 6, %v117
    %v119 = vrot.slane %v71, %v118
    %121 = vbcast.lane.b32.xlu0 %v119, 256
    %v122 = vpop.permute.xlu0 %121
    %v123 = vlaneseq
    %v124 = vshrl.u32 %v123, 7
    %v125 = vsub.s32 7, %v124
    %v126 = vrot.slane %v71, %v125
    %128 = vbcast.lane.b32.xlu0 %v126, 256
    %v129 = vpop.permute.xlu0 %128
    %vm130 = vcmp.eq.s32.totalorder %v80, %v73
    %vm131 = vcmp.eq.s32.totalorder %v87, %v73
    %vm132 = vcmp.eq.s32.totalorder %v94, %v73
    %vm133 = vcmp.eq.s32.totalorder %v101, %v73
    %vm134 = vcmp.eq.s32.totalorder %v108, %v73
    %vm135 = vcmp.eq.s32.totalorder %v115, %v73
    %vm136 = vcmp.eq.s32.totalorder %v122, %v73
    %vm137 = vcmp.eq.s32.totalorder %v129, %v73
    %v138 = vsel %vm130, 1, 0
    %v139 = vsel %vm131, 1, 0
    %v140 = vsel %vm132, 1, 0
    %v141 = vsel %vm133, 1, 0
    %v142 = vsel %vm134, 1, 0
    %v143 = vsel %vm135, 1, 0
    %v144 = vsel %vm136, 1, 0
    %v145 = vsel %vm137, 1, 0
    %v146 = vcvt.s32.f32 %v138
    %v147 = vcvt.s32.f32 %v139
    %v148 = vcvt.s32.f32 %v140
    %v149 = vcvt.s32.f32 %v141
    %v150 = vcvt.s32.f32 %v142
    %v151 = vcvt.s32.f32 %v143
    %v152 = vcvt.s32.f32 %v144
    %v153 = vcvt.s32.f32 %v145
    %v154 = vld [vmem:[#allocation6] sm:$0xff]
    %v155 = vld [vmem:[#allocation6 + $0x8] sm:$0xff]
    %v156 = vld [vmem:[#allocation6 + $0x10] sm:$0xff]
    %v157 = vld [vmem:[#allocation6 + $0x18] sm:$0xff]
    %v158 = vld [vmem:[#allocation6 + $0x20] sm:$0xff]
    %v159 = vld [vmem:[#allocation6 + $0x28] sm:$0xff]
    %v160 = vld [vmem:[#allocation6 + $0x30] sm:$0xff]
    %v161 = vld [vmem:[#allocation6 + $0x38] sm:$0xff]
    %v162 = vld [vmem:[#allocation9] sm:$0x1]
    %v163 = vlaneseq
    %v164 = vshrl.u32 %v163, 7
    %v165 = vsub.s32 0, %v164
    %v166 = vrot.slane %v162, %v165
    %vm167 = vcmask 523264
    %v169 = vsel %vm167, %v146, 0
    %v172 = vsel %vm167, %v147, 0
    %v175 = vsel %vm167, %v148, 0
    %v178 = vsel %vm167, %v149, 0
    %v181 = vsel %vm167, %v150, 0
    %v184 = vsel %vm167, %v151, 0
    %v187 = vsel %vm167, %v152, 0
    %v190 = vsel %vm167, %v153, 0
    %192 = vmatprep.subr.mxu0 0.0
    %193 = vmatpush1.msra.mxu0 0.0
    %194 = vmatprep.subr.mxu0 0.0
    %195 = vmatpush1.msra.mxu0 0.0
    %196 = vmatprep.subr.mxu0 0.0
    %197 = vmatpush1.msra.mxu0 0.0
    %198 = vmatprep.subr.mxu0 0.0
    %199 = vmatpush1.msra.mxu0 0.0
    %200 = vmatprep.subr.mxu0 0.0
    %201 = vmatpush1.msra.mxu0 0.0
    %202 = vmatprep.subr.mxu0 0.0
    %203 = vmatpush1.msra.mxu0 0.0
    %204 = vmatprep.subr.mxu0 0.0
    %205 = vmatpush1.msra.mxu0 0.0
    %206 = vmatprep.subr.mxu0 0.0
    %207 = vmatpush1.msra.mxu0 0.0
    %208 = vmatprep.subr.mxu0 0.0
    %209 = vmatpush1.msra.mxu0 %v161
    %210 = vmatprep.subr.mxu0 0.0
    %211 = vmatpush1.msra.mxu0 %v160
    %212 = vmatprep.subr.mxu0 0.0
    %213 = vmatpush1.msra.mxu0 %v159
    %214 = vmatprep.subr.mxu0 0.0
    %215 = vmatpush1.msra.mxu0 %v158
    %216 = vmatprep.subr.mxu0 0.0
    %217 = vmatpush1.msra.mxu0 %v157
    %218 = vmatprep.subr.mxu0 0.0
    %219 = vmatpush1.msra.mxu0 %v156
    %220 = vmatprep.subr.mxu0 0.0
    %221 = vmatpush1.msra.mxu0 %v155
    %222 = vmatprep.subr.mxu0 0.0
    %223 = vmatpush1.msra.mxu0 %v154
    %224 = vmatprep.subr.mxu0 0.0
    %225 = vmatpush2.msra.mxu0 0.0
    %226 = vmatprep.subr.mxu0 0.0
    %227 = vmatpush2.msra.mxu0 0.0
    %228 = vmatprep.subr.mxu0 0.0
    %229 = vmatpush2.msra.mxu0 0.0
    %230 = vmatprep.subr.mxu0 0.0
    %231 = vmatpush2.msra.mxu0 0.0
    %232 = vmatprep.subr.mxu0 0.0
    %233 = vmatpush2.msra.mxu0 0.0
    %234 = vmatprep.subr.mxu0 0.0
    %235 = vmatpush2.msra.mxu0 0.0
    %236 = vmatprep.subr.mxu0 0.0
    %237 = vmatpush2.msra.mxu0 0.0
    %238 = vmatprep.subr.mxu0 0.0
    %239 = vmatpush2.msra.mxu0 0.0
    %240 = vmatprep.subr.mxu0 0.0
    %241 = vmatpush2.msra.mxu0 0.0
    %242 = vmatprep.subr.mxu0 0.0
    %243 = vmatpush2.msra.mxu0 0.0
    %244 = vmatprep.subr.mxu0 0.0
    %245 = vmatpush2.msra.mxu0 0.0
    %246 = vmatprep.subr.mxu0 0.0
    %247 = vmatpush2.msra.mxu0 0.0
    %248 = vmatprep.subr.mxu0 0.0
    %249 = vmatpush2.msra.mxu0 0.0
    %250 = vmatprep.subr.mxu0 0.0
    %251 = vmatpush2.msra.mxu0 0.0
    %252 = vmatprep.subr.mxu0 0.0
    %253 = vmatpush2.msra.mxu0 0.0
    %254 = vmatprep.subr.mxu0 0.0
    %255 = vmatpush2.msra.mxu0 0.0
    %256 = vmatprep.mubr.f32.mxu0 0.0
    %257 = vmatmul.mubr.f32.gmra.mxu0 %v169
    %v258 = vpop.f32.mrf.mxu0
    %v259 = vadd.f32 %v166, %v258
    %v260 = vpop.f32.mrf.mxu0
    %261 = vmatprep.mubr.f32.mxu0 0.0
    %262 = vmatmul.mubr.f32.gmra.mxu0 %v172
    %v263 = vpop.f32.mrf.mxu0
    %v264 = vadd.f32 %v166, %v263
    %v265 = vpop.f32.mrf.mxu0
    %266 = vmatprep.mubr.f32.mxu0 0.0
    %267 = vmatmul.mubr.f32.gmra.mxu0 %v175
    %v268 = vpop.f32.mrf.mxu0
    %v269 = vadd.f32 %v166, %v268
    %v270 = vpop.f32.mrf.mxu0
    %271 = vmatprep.mubr.f32.mxu0 0.0
    %272 = vmatmul.mubr.f32.gmra.mxu0 %v178
    %v273 = vpop.f32.mrf.mxu0
    %v274 = vadd.f32 %v166, %v273
    %v275 = vpop.f32.mrf.mxu0
    %276 = vmatprep.mubr.f32.mxu0 0.0
    %277 = vmatmul.mubr.f32.gmra.mxu0 %v181
    %v278 = vpop.f32.mrf.mxu0
    %v279 = vadd.f32 %v166, %v278
    %v280 = vpop.f32.mrf.mxu0
    %281 = vmatprep.mubr.f32.mxu0 0.0
    %282 = vmatmul.mubr.f32.gmra.mxu0 %v184
    %v283 = vpop.f32.mrf.mxu0
    %v284 = vadd.f32 %v166, %v283
    %v285 = vpop.f32.mrf.mxu0
    %286 = vmatprep.mubr.f32.mxu0 0.0
    %287 = vmatmul.mubr.f32.gmra.mxu0 %v187
    %v288 = vpop.f32.mrf.mxu0
    %v289 = vadd.f32 %v166, %v288
    %v290 = vpop.f32.mrf.mxu0
    %291 = vmatprep.mubr.f32.mxu0 0.0
    %292 = vmatmul.mubr.f32.gmra.mxu0 %v190
    %v293 = vpop.f32.mrf.mxu0
    %v294 = vadd.f32 %v166, %v293
    %v295 = vpop.f32.mrf.mxu0
    %296 = vdwg.mxu0
    %298 = vrot.lane.b32.xlu0 %v259, 96
    %v299 = vpop.permute.xlu0 %298
    %vm300 = vcmask 64512
    %v301 = vsel %vm300, %v259, 0
    %v303 = vsel %vm300, %v299, 0
    %305 = vmatprep.subr.mxu0 0.0
    %306 = vmatpush1.xpose.msra.mxu0 0.0
    %307 = vmatprep.subr.mxu0 0.0
    %308 = vmatpush1.xpose.msra.mxu0 0.0
    %309 = vmatprep.subr.mxu0 0.0
    %310 = vmatpush1.xpose.msra.mxu0 0.0
    %311 = vmatprep.subr.mxu0 0.0
    %312 = vmatpush1.xpose.msra.mxu0 0.0
    %313 = vmatprep.subr.mxu0 0.0
    %314 = vmatpush1.xpose.msra.mxu0 0.0
    %315 = vmatprep.subr.mxu0 0.0
    %316 = vmatpush1.xpose.msra.mxu0 0.0
    %317 = vmatprep.subr.mxu0 0.0
    %318 = vmatpush1.xpose.msra.mxu0 0.0
    %319 = vmatprep.subr.mxu0 0.0
    %320 = vmatpush1.xpose.msra.mxu0 0.0
    %321 = vmatprep.subr.mxu0 0.0
    %322 = vmatpush1.xpose.msra.mxu0 0.0
    %323 = vmatprep.subr.mxu0 0.0
    %324 = vmatpush1.xpose.msra.mxu0 0.0
    %325 = vmatprep.subr.mxu0 0.0
    %326 = vmatpush1.xpose.msra.mxu0 0.0
    %327 = vmatprep.subr.mxu0 0.0
    %328 = vmatpush1.xpose.msra.mxu0 0.0
    %329 = vmatprep.subr.mxu0 0.0
    %330 = vmatpush1.xpose.msra.mxu0 0.0
    %331 = vmatprep.subr.mxu0 0.0
    %332 = vmatpush1.xpose.msra.mxu0 0.0
    %333 = vmatprep.subr.mxu0 0.0
    %334 = vmatpush1.xpose.msra.mxu0 0.0
    %335 = vmatprep.subr.mxu0 0.0
    %336 = vmatpush1.xpose.msra.mxu0 %v303
    %337 = vmatprep.subr.mxu0 0.0
    %338 = vmatpush2.xpose.msra.mxu0 0.0
    %339 = vmatprep.subr.mxu0 0.0
    %340 = vmatpush2.xpose.msra.mxu0 0.0
    %341 = vmatprep.subr.mxu0 0.0
    %342 = vmatpush2.xpose.msra.mxu0 0.0
    %343 = vmatprep.subr.mxu0 0.0
    %344 = vmatpush2.xpose.msra.mxu0 0.0
    %345 = vmatprep.subr.mxu0 0.0
    %346 = vmatpush2.xpose.msra.mxu0 0.0
    %347 = vmatprep.subr.mxu0 0.0
    %348 = vmatpush2.xpose.msra.mxu0 0.0
    %349 = vmatprep.subr.mxu0 0.0
    %350 = vmatpush2.xpose.msra.mxu0 0.0
    %351 = vmatprep.subr.mxu0 0.0
    %352 = vmatpush2.xpose.msra.mxu0 0.0
    %353 = vmatprep.subr.mxu0 0.0
    %354 = vmatpush2.xpose.msra.mxu0 0.0
    %355 = vmatprep.subr.mxu0 0.0
    %356 = vmatpush2.xpose.msra.mxu0 0.0
    %357 = vmatprep.subr.mxu0 0.0
    %358 = vmatpush2.xpose.msra.mxu0 0.0
    %359 = vmatprep.subr.mxu0 0.0
    %360 = vmatpush2.xpose.msra.mxu0 0.0
    %361 = vmatprep.subr.mxu0 0.0
    %362 = vmatpush2.xpose.msra.mxu0 0.0
    %363 = vmatprep.subr.mxu0 0.0
    %364 = vmatpush2.xpose.msra.mxu0 0.0
    %365 = vmatprep.subr.mxu0 0.0
    %366 = vmatpush2.xpose.msra.mxu0 0.0
    %367 = vmatprep.subr.mxu0 0.0
    %368 = vmatpush2.xpose.msra.mxu0 0.0
    %369 = vmatprep.mubr.f32.mxu0 0.0
    %370 = vmatmul.mubr.f32.gmra.mxu0 %v301
    %v371 = vpop.f32.mrf.mxu0
    %v372 = vadd.f32 0.0, %v371
    %v373 = vpop.f32.mrf.mxu0
    %374 = vdwg.mxu0
    %376 = vrot.lane.b32.xlu0 %v264, 96
    %v377 = vpop.permute.xlu0 %376
    %v378 = vsel %vm300, %v264, 0
    %v380 = vsel %vm300, %v377, 0
    %382 = vmatprep.subr.mxu0 0.0
    %383 = vmatpush1.xpose.msra.mxu0 0.0
    %384 = vmatprep.subr.mxu0 0.0
    %385 = vmatpush1.xpose.msra.mxu0 0.0
    %386 = vmatprep.subr.mxu0 0.0
    %387 = vmatpush1.xpose.msra.mxu0 0.0
    %388 = vmatprep.subr.mxu0 0.0
    %389 = vmatpush1.xpose.msra.mxu0 0.0
    %390 = vmatprep.subr.mxu0 0.0
    %391 = vmatpush1.xpose.msra.mxu0 0.0
    %392 = vmatprep.subr.mxu0 0.0
    %393 = vmatpush1.xpose.msra.mxu0 0.0
    %394 = vmatprep.subr.mxu0 0.0
    %395 = vmatpush1.xpose.msra.mxu0 0.0
    %396 = vmatprep.subr.mxu0 0.0
    %397 = vmatpush1.xpose.msra.mxu0 0.0
    %398 = vmatprep.subr.mxu0 0.0
    %399 = vmatpush1.xpose.msra.mxu0 0.0
    %400 = vmatprep.subr.mxu0 0.0
    %401 = vmatpush1.xpose.msra.mxu0 0.0
    %402 = vmatprep.subr.mxu0 0.0
    %403 = vmatpush1.xpose.msra.mxu0 0.0
    %404 = vmatprep.subr.mxu0 0.0
    %405 = vmatpush1.xpose.msra.mxu0 0.0
    %406 = vmatprep.subr.mxu0 0.0
    %407 = vmatpush1.xpose.msra.mxu0 0.0
    %408 = vmatprep.subr.mxu0 0.0
    %409 = vmatpush1.xpose.msra.mxu0 0.0
    %410 = vmatprep.subr.mxu0 0.0
    %411 = vmatpush1.xpose.msra.mxu0 0.0
    %412 = vmatprep.subr.mxu0 0.0
    %413 = vmatpush1.xpose.msra.mxu0 %v380
    %414 = vmatprep.subr.mxu0 0.0
    %415 = vmatpush2.xpose.msra.mxu0 0.0
    %416 = vmatprep.subr.mxu0 0.0
    %417 = vmatpush2.xpose.msra.mxu0 0.0
    %418 = vmatprep.subr.mxu0 0.0
    %419 = vmatpush2.xpose.msra.mxu0 0.0
    %420 = vmatprep.subr.mxu0 0.0
    %421 = vmatpush2.xpose.msra.mxu0 0.0
    %422 = vmatprep.subr.mxu0 0.0
    %423 = vmatpush2.xpose.msra.mxu0 0.0
    %424 = vmatprep.subr.mxu0 0.0
    %425 = vmatpush2.xpose.msra.mxu0 0.0
    %426 = vmatprep.subr.mxu0 0.0
    %427 = vmatpush2.xpose.msra.mxu0 0.0
    %428 = vmatprep.subr.mxu0 0.0
    %429 = vmatpush2.xpose.msra.mxu0 0.0
    %430 = vmatprep.subr.mxu0 0.0
    %431 = vmatpush2.xpose.msra.mxu0 0.0
    %432 = vmatprep.subr.mxu0 0.0
    %433 = vmatpush2.xpose.msra.mxu0 0.0
    %434 = vmatprep.subr.mxu0 0.0
    %435 = vmatpush2.xpose.msra.mxu0 0.0
    %436 = vmatprep.subr.mxu0 0.0
    %437 = vmatpush2.xpose.msra.mxu0 0.0
    %438 = vmatprep.subr.mxu0 0.0
    %439 = vmatpush2.xpose.msra.mxu0 0.0
    %440 = vmatprep.subr.mxu0 0.0
    %441 = vmatpush2.xpose.msra.mxu0 0.0
    %442 = vmatprep.subr.mxu0 0.0
    %443 = vmatpush2.xpose.msra.mxu0 0.0
    %444 = vmatprep.subr.mxu0 0.0
    %445 = vmatpush2.xpose.msra.mxu0 0.0
    %446 = vmatprep.mubr.f32.mxu0 0.0
    %447 = vmatmul.mubr.f32.gmra.mxu0 %v378
    %v448 = vpop.f32.mrf.mxu0
    %v449 = vadd.f32 0.0, %v448
    %v450 = vpop.f32.mrf.mxu0
    %451 = vdwg.mxu0
    %453 = vrot.lane.b32.xlu0 %v269, 96
    %v454 = vpop.permute.xlu0 %453
    %v455 = vsel %vm300, %v269, 0
    %v457 = vsel %vm300, %v454, 0
    %459 = vmatprep.subr.mxu0 0.0
    %460 = vmatpush1.xpose.msra.mxu0 0.0
    %461 = vmatprep.subr.mxu0 0.0
    %462 = vmatpush1.xpose.msra.mxu0 0.0
    %463 = vmatprep.subr.mxu0 0.0
    %464 = vmatpush1.xpose.msra.mxu0 0.0
    %465 = vmatprep.subr.mxu0 0.0
    %466 = vmatpush1.xpose.msra.mxu0 0.0
    %467 = vmatprep.subr.mxu0 0.0
    %468 = vmatpush1.xpose.msra.mxu0 0.0
    %469 = vmatprep.subr.mxu0 0.0
    %470 = vmatpush1.xpose.msra.mxu0 0.0
    %471 = vmatprep.subr.mxu0 0.0
    %472 = vmatpush1.xpose.msra.mxu0 0.0
    %473 = vmatprep.subr.mxu0 0.0
    %474 = vmatpush1.xpose.msra.mxu0 0.0
    %475 = vmatprep.subr.mxu0 0.0
    %476 = vmatpush1.xpose.msra.mxu0 0.0
    %477 = vmatprep.subr.mxu0 0.0
    %478 = vmatpush1.xpose.msra.mxu0 0.0
    %479 = vmatprep.subr.mxu0 0.0
    %480 = vmatpush1.xpose.msra.mxu0 0.0
    %481 = vmatprep.subr.mxu0 0.0
    %482 = vmatpush1.xpose.msra.mxu0 0.0
    %483 = vmatprep.subr.mxu0 0.0
    %484 = vmatpush1.xpose.msra.mxu0 0.0
    %485 = vmatprep.subr.mxu0 0.0
    %486 = vmatpush1.xpose.msra.mxu0 0.0
    %487 = vmatprep.subr.mxu0 0.0
    %488 = vmatpush1.xpose.msra.mxu0 0.0
    %489 = vmatprep.subr.mxu0 0.0
    %490 = vmatpush1.xpose.msra.mxu0 %v457
    %491 = vmatprep.subr.mxu0 0.0
    %492 = vmatpush2.xpose.msra.mxu0 0.0
    %493 = vmatprep.subr.mxu0 0.0
    %494 = vmatpush2.xpose.msra.mxu0 0.0
    %495 = vmatprep.subr.mxu0 0.0
    %496 = vmatpush2.xpose.msra.mxu0 0.0
    %497 = vmatprep.subr.mxu0 0.0
    %498 = vmatpush2.xpose.msra.mxu0 0.0
    %499 = vmatprep.subr.mxu0 0.0
    %500 = vmatpush2.xpose.msra.mxu0 0.0
    %501 = vmatprep.subr.mxu0 0.0
    %502 = vmatpush2.xpose.msra.mxu0 0.0
    %503 = vmatprep.subr.mxu0 0.0
    %504 = vmatpush2.xpose.msra.mxu0 0.0
    %505 = vmatprep.subr.mxu0 0.0
    %506 = vmatpush2.xpose.msra.mxu0 0.0
    %507 = vmatprep.subr.mxu0 0.0
    %508 = vmatpush2.xpose.msra.mxu0 0.0
    %509 = vmatprep.subr.mxu0 0.0
    %510 = vmatpush2.xpose.msra.mxu0 0.0
    %511 = vmatprep.subr.mxu0 0.0
    %512 = vmatpush2.xpose.msra.mxu0 0.0
    %513 = vmatprep.subr.mxu0 0.0
    %514 = vmatpush2.xpose.msra.mxu0 0.0
    %515 = vmatprep.subr.mxu0 0.0
    %516 = vmatpush2.xpose.msra.mxu0 0.0
    %517 = vmatprep.subr.mxu0 0.0
    %518 = vmatpush2.xpose.msra.mxu0 0.0
    %519 = vmatprep.subr.mxu0 0.0
    %520 = vmatpush2.xpose.msra.mxu0 0.0
    %521 = vmatprep.subr.mxu0 0.0
    %522 = vmatpush2.xpose.msra.mxu0 0.0
    %523 = vmatprep.mubr.f32.mxu0 0.0
    %524 = vmatmul.mubr.f32.gmra.mxu0 %v455
    %v525 = vpop.f32.mrf.mxu0
    %v526 = vadd.f32 0.0, %v525
    %v527 = vpop.f32.mrf.mxu0
    %528 = vdwg.mxu0
    %530 = vrot.lane.b32.xlu0 %v274, 96
    %v531 = vpop.permute.xlu0 %530
    %v532 = vsel %vm300, %v274, 0
    %v534 = vsel %vm300, %v531, 0
    %536 = vmatprep.subr.mxu0 0.0
    %537 = vmatpush1.xpose.msra.mxu0 0.0
    %538 = vmatprep.subr.mxu0 0.0
    %539 = vmatpush1.xpose.msra.mxu0 0.0
    %540 = vmatprep.subr.mxu0 0.0
    %541 = vmatpush1.xpose.msra.mxu0 0.0
    %542 = vmatprep.subr.mxu0 0.0
    %543 = vmatpush1.xpose.msra.mxu0 0.0
    %544 = vmatprep.subr.mxu0 0.0
    %545 = vmatpush1.xpose.msra.mxu0 0.0
    %546 = vmatprep.subr.mxu0 0.0
    %547 = vmatpush1.xpose.msra.mxu0 0.0
    %548 = vmatprep.subr.mxu0 0.0
    %549 = vmatpush1.xpose.msra.mxu0 0.0
    %550 = vmatprep.subr.mxu0 0.0
    %551 = vmatpush1.xpose.msra.mxu0 0.0
    %552 = vmatprep.subr.mxu0 0.0
    %553 = vmatpush1.xpose.msra.mxu0 0.0
    %554 = vmatprep.subr.mxu0 0.0
    %555 = vmatpush1.xpose.msra.mxu0 0.0
    %556 = vmatprep.subr.mxu0 0.0
    %557 = vmatpush1.xpose.msra.mxu0 0.0
    %558 = vmatprep.subr.mxu0 0.0
    %559 = vmatpush1.xpose.msra.mxu0 0.0
    %560 = vmatprep.subr.mxu0 0.0
    %561 = vmatpush1.xpose.msra.mxu0 0.0
    %562 = vmatprep.subr.mxu0 0.0
    %563 = vmatpush1.xpose.msra.mxu0 0.0
    %564 = vmatprep.subr.mxu0 0.0
    %565 = vmatpush1.xpose.msra.mxu0 0.0
    %566 = vmatprep.subr.mxu0 0.0
    %567 = vmatpush1.xpose.msra.mxu0 %v534
    %568 = vmatprep.subr.mxu0 0.0
    %569 = vmatpush2.xpose.msra.mxu0 0.0
    %570 = vmatprep.subr.mxu0 0.0
    %571 = vmatpush2.xpose.msra.mxu0 0.0
    %572 = vmatprep.subr.mxu0 0.0
    %573 = vmatpush2.xpose.msra.mxu0 0.0
    %574 = vmatprep.subr.mxu0 0.0
    %575 = vmatpush2.xpose.msra.mxu0 0.0
    %576 = vmatprep.subr.mxu0 0.0
    %577 = vmatpush2.xpose.msra.mxu0 0.0
    %578 = vmatprep.subr.mxu0 0.0
    %579 = vmatpush2.xpose.msra.mxu0 0.0
    %580 = vmatprep.subr.mxu0 0.0
    %581 = vmatpush2.xpose.msra.mxu0 0.0
    %582 = vmatprep.subr.mxu0 0.0
    %583 = vmatpush2.xpose.msra.mxu0 0.0
    %584 = vmatprep.subr.mxu0 0.0
    %585 = vmatpush2.xpose.msra.mxu0 0.0
    %586 = vmatprep.subr.mxu0 0.0
    %587 = vmatpush2.xpose.msra.mxu0 0.0
    %588 = vmatprep.subr.mxu0 0.0
    %589 = vmatpush2.xpose.msra.mxu0 0.0
    %590 = vmatprep.subr.mxu0 0.0
    %591 = vmatpush2.xpose.msra.mxu0 0.0
    %592 = vmatprep.subr.mxu0 0.0
    %593 = vmatpush2.xpose.msra.mxu0 0.0
    %594 = vmatprep.subr.mxu0 0.0
    %595 = vmatpush2.xpose.msra.mxu0 0.0
    %596 = vmatprep.subr.mxu0 0.0
    %597 = vmatpush2.xpose.msra.mxu0 0.0
    %598 = vmatprep.subr.mxu0 0.0
    %599 = vmatpush2.xpose.msra.mxu0 0.0
    %600 = vmatprep.mubr.f32.mxu0 0.0
    %601 = vmatmul.mubr.f32.gmra.mxu0 %v532
    %v602 = vpop.f32.mrf.mxu0
    %v603 = vadd.f32 0.0, %v602
    %v604 = vpop.f32.mrf.mxu0
    %605 = vdwg.mxu0
    %607 = vrot.lane.b32.xlu0 %v279, 96
    %v608 = vpop.permute.xlu0 %607
    %v609 = vsel %vm300, %v279, 0
    %v611 = vsel %vm300, %v608, 0
    %613 = vmatprep.subr.mxu0 0.0
    %614 = vmatpush1.xpose.msra.mxu0 0.0
    %615 = vmatprep.subr.mxu0 0.0
    %616 = vmatpush1.xpose.msra.mxu0 0.0
    %617 = vmatprep.subr.mxu0 0.0
    %618 = vmatpush1.xpose.msra.mxu0 0.0
    %619 = vmatprep.subr.mxu0 0.0
    %620 = vmatpush1.xpose.msra.mxu0 0.0
    %621 = vmatprep.subr.mxu0 0.0
    %622 = vmatpush1.xpose.msra.mxu0 0.0
    %623 = vmatprep.subr.mxu0 0.0
    %624 = vmatpush1.xpose.msra.mxu0 0.0
    %625 = vmatprep.subr.mxu0 0.0
    %626 = vmatpush1.xpose.msra.mxu0 0.0
    %627 = vmatprep.subr.mxu0 0.0
    %628 = vmatpush1.xpose.msra.mxu0 0.0
    %629 = vmatprep.subr.mxu0 0.0
    %630 = vmatpush1.xpose.msra.mxu0 0.0
    %631 = vmatprep.subr.mxu0 0.0
    %632 = vmatpush1.xpose.msra.mxu0 0.0
    %633 = vmatprep.subr.mxu0 0.0
    %634 = vmatpush1.xpose.msra.mxu0 0.0
    %635 = vmatprep.subr.mxu0 0.0
    %636 = vmatpush1.xpose.msra.mxu0 0.0
    %637 = vmatprep.subr.mxu0 0.0
    %638 = vmatpush1.xpose.msra.mxu0 0.0
    %639 = vmatprep.subr.mxu0 0.0
    %640 = vmatpush1.xpose.msra.mxu0 0.0
    %641 = vmatprep.subr.mxu0 0.0
    %642 = vmatpush1.xpose.msra.mxu0 0.0
    %643 = vmatprep.subr.mxu0 0.0
    %644 = vmatpush1.xpose.msra.mxu0 %v611
    %645 = vmatprep.subr.mxu0 0.0
    %646 = vmatpush2.xpose.msra.mxu0 0.0
    %647 = vmatprep.subr.mxu0 0.0
    %648 = vmatpush2.xpose.msra.mxu0 0.0
    %649 = vmatprep.subr.mxu0 0.0
    %650 = vmatpush2.xpose.msra.mxu0 0.0
    %651 = vmatprep.subr.mxu0 0.0
    %652 = vmatpush2.xpose.msra.mxu0 0.0
    %653 = vmatprep.subr.mxu0 0.0
    %654 = vmatpush2.xpose.msra.mxu0 0.0
    %655 = vmatprep.subr.mxu0 0.0
    %656 = vmatpush2.xpose.msra.mxu0 0.0
    %657 = vmatprep.subr.mxu0 0.0
    %658 = vmatpush2.xpose.msra.mxu0 0.0
    %659 = vmatprep.subr.mxu0 0.0
    %660 = vmatpush2.xpose.msra.mxu0 0.0
    %661 = vmatprep.subr.mxu0 0.0
    %662 = vmatpush2.xpose.msra.mxu0 0.0
    %663 = vmatprep.subr.mxu0 0.0
    %664 = vmatpush2.xpose.msra.mxu0 0.0
    %665 = vmatprep.subr.mxu0 0.0
    %666 = vmatpush2.xpose.msra.mxu0 0.0
    %667 = vmatprep.subr.mxu0 0.0
    %668 = vmatpush2.xpose.msra.mxu0 0.0
    %669 = vmatprep.subr.mxu0 0.0
    %670 = vmatpush2.xpose.msra.mxu0 0.0
    %671 = vmatprep.subr.mxu0 0.0
    %672 = vmatpush2.xpose.msra.mxu0 0.0
    %673 = vmatprep.subr.mxu0 0.0
    %674 = vmatpush2.xpose.msra.mxu0 0.0
    %675 = vmatprep.subr.mxu0 0.0
    %676 = vmatpush2.xpose.msra.mxu0 0.0
    %677 = vmatprep.mubr.f32.mxu0 0.0
    %678 = vmatmul.mubr.f32.gmra.mxu0 %v609
    %v679 = vpop.f32.mrf.mxu0
    %v680 = vadd.f32 0.0, %v679
    %v681 = vpop.f32.mrf.mxu0
    %682 = vdwg.mxu0
    %684 = vrot.lane.b32.xlu0 %v284, 96
    %v685 = vpop.permute.xlu0 %684
    %v686 = vsel %vm300, %v284, 0
    %v688 = vsel %vm300, %v685, 0
    %690 = vmatprep.subr.mxu0 0.0
    %691 = vmatpush1.xpose.msra.mxu0 0.0
    %692 = vmatprep.subr.mxu0 0.0
    %693 = vmatpush1.xpose.msra.mxu0 0.0
    %694 = vmatprep.subr.mxu0 0.0
    %695 = vmatpush1.xpose.msra.mxu0 0.0
    %696 = vmatprep.subr.mxu0 0.0
    %697 = vmatpush1.xpose.msra.mxu0 0.0
    %698 = vmatprep.subr.mxu0 0.0
    %699 = vmatpush1.xpose.msra.mxu0 0.0
    %700 = vmatprep.subr.mxu0 0.0
    %701 = vmatpush1.xpose.msra.mxu0 0.0
    %702 = vmatprep.subr.mxu0 0.0
    %703 = vmatpush1.xpose.msra.mxu0 0.0
    %704 = vmatprep.subr.mxu0 0.0
    %705 = vmatpush1.xpose.msra.mxu0 0.0
    %706 = vmatprep.subr.mxu0 0.0
    %707 = vmatpush1.xpose.msra.mxu0 0.0
    %708 = vmatprep.subr.mxu0 0.0
    %709 = vmatpush1.xpose.msra.mxu0 0.0
    %710 = vmatprep.subr.mxu0 0.0
    %711 = vmatpush1.xpose.msra.mxu0 0.0
    %712 = vmatprep.subr.mxu0 0.0
    %713 = vmatpush1.xpose.msra.mxu0 0.0
    %714 = vmatprep.subr.mxu0 0.0
    %715 = vmatpush1.xpose.msra.mxu0 0.0
    %716 = vmatprep.subr.mxu0 0.0
    %717 = vmatpush1.xpose.msra.mxu0 0.0
    %718 = vmatprep.subr.mxu0 0.0
    %719 = vmatpush1.xpose.msra.mxu0 0.0
    %720 = vmatprep.subr.mxu0 0.0
    %721 = vmatpush1.xpose.msra.mxu0 %v688
    %722 = vmatprep.subr.mxu0 0.0
    %723 = vmatpush2.xpose.msra.mxu0 0.0
    %724 = vmatprep.subr.mxu0 0.0
    %725 = vmatpush2.xpose.msra.mxu0 0.0
    %726 = vmatprep.subr.mxu0 0.0
    %727 = vmatpush2.xpose.msra.mxu0 0.0
    %728 = vmatprep.subr.mxu0 0.0
    %729 = vmatpush2.xpose.msra.mxu0 0.0
    %730 = vmatprep.subr.mxu0 0.0
    %731 = vmatpush2.xpose.msra.mxu0 0.0
    %732 = vmatprep.subr.mxu0 0.0
    %733 = vmatpush2.xpose.msra.mxu0 0.0
    %734 = vmatprep.subr.mxu0 0.0
    %735 = vmatpush2.xpose.msra.mxu0 0.0
    %736 = vmatprep.subr.mxu0 0.0
    %737 = vmatpush2.xpose.msra.mxu0 0.0
    %738 = vmatprep.subr.mxu0 0.0
    %739 = vmatpush2.xpose.msra.mxu0 0.0
    %740 = vmatprep.subr.mxu0 0.0
    %741 = vmatpush2.xpose.msra.mxu0 0.0
    %742 = vmatprep.subr.mxu0 0.0
    %743 = vmatpush2.xpose.msra.mxu0 0.0
    %744 = vmatprep.subr.mxu0 0.0
    %745 = vmatpush2.xpose.msra.mxu0 0.0
    %746 = vmatprep.subr.mxu0 0.0
    %747 = vmatpush2.xpose.msra.mxu0 0.0
    %748 = vmatprep.subr.mxu0 0.0
    %749 = vmatpush2.xpose.msra.mxu0 0.0
    %750 = vmatprep.subr.mxu0 0.0
    %751 = vmatpush2.xpose.msra.mxu0 0.0
    %752 = vmatprep.subr.mxu0 0.0
    %753 = vmatpush2.xpose.msra.mxu0 0.0
    %754 = vmatprep.mubr.f32.mxu0 0.0
    %755 = vmatmul.mubr.f32.gmra.mxu0 %v686
    %v756 = vpop.f32.mrf.mxu0
    %v757 = vadd.f32 0.0, %v756
    %v758 = vpop.f32.mrf.mxu0
    %759 = vdwg.mxu0
    %761 = vrot.lane.b32.xlu0 %v289, 96
    %v762 = vpop.permute.xlu0 %761
    %v763 = vsel %vm300, %v289, 0
    %v765 = vsel %vm300, %v762, 0
    %767 = vmatprep.subr.mxu0 0.0
    %768 = vmatpush1.xpose.msra.mxu0 0.0
    %769 = vmatprep.subr.mxu0 0.0
    %770 = vmatpush1.xpose.msra.mxu0 0.0
    %771 = vmatprep.subr.mxu0 0.0
    %772 = vmatpush1.xpose.msra.mxu0 0.0
    %773 = vmatprep.subr.mxu0 0.0
    %774 = vmatpush1.xpose.msra.mxu0 0.0
    %775 = vmatprep.subr.mxu0 0.0
    %776 = vmatpush1.xpose.msra.mxu0 0.0
    %777 = vmatprep.subr.mxu0 0.0
    %778 = vmatpush1.xpose.msra.mxu0 0.0
    %779 = vmatprep.subr.mxu0 0.0
    %780 = vmatpush1.xpose.msra.mxu0 0.0
    %781 = vmatprep.subr.mxu0 0.0
    %782 = vmatpush1.xpose.msra.mxu0 0.0
    %783 = vmatprep.subr.mxu0 0.0
    %784 = vmatpush1.xpose.msra.mxu0 0.0
    %785 = vmatprep.subr.mxu0 0.0
    %786 = vmatpush1.xpose.msra.mxu0 0.0
    %787 = vmatprep.subr.mxu0 0.0
    %788 = vmatpush1.xpose.msra.mxu0 0.0
    %789 = vmatprep.subr.mxu0 0.0
    %790 = vmatpush1.xpose.msra.mxu0 0.0
    %791 = vmatprep.subr.mxu0 0.0
    %792 = vmatpush1.xpose.msra.mxu0 0.0
    %793 = vmatprep.subr.mxu0 0.0
    %794 = vmatpush1.xpose.msra.mxu0 0.0
    %795 = vmatprep.subr.mxu0 0.0
    %796 = vmatpush1.xpose.msra.mxu0 0.0
    %797 = vmatprep.subr.mxu0 0.0
    %798 = vmatpush1.xpose.msra.mxu0 %v765
    %799 = vmatprep.subr.mxu0 0.0
    %800 = vmatpush2.xpose.msra.mxu0 0.0
    %801 = vmatprep.subr.mxu0 0.0
    %802 = vmatpush2.xpose.msra.mxu0 0.0
    %803 = vmatprep.subr.mxu0 0.0
    %804 = vmatpush2.xpose.msra.mxu0 0.0
    %805 = vmatprep.subr.mxu0 0.0
    %806 = vmatpush2.xpose.msra.mxu0 0.0
    %807 = vmatprep.subr.mxu0 0.0
    %808 = vmatpush2.xpose.msra.mxu0 0.0
    %809 = vmatprep.subr.mxu0 0.0
    %810 = vmatpush2.xpose.msra.mxu0 0.0
    %811 = vmatprep.subr.mxu0 0.0
    %812 = vmatpush2.xpose.msra.mxu0 0.0
    %813 = vmatprep.subr.mxu0 0.0
    %814 = vmatpush2.xpose.msra.mxu0 0.0
    %815 = vmatprep.subr.mxu0 0.0
    %816 = vmatpush2.xpose.msra.mxu0 0.0
    %817 = vmatprep.subr.mxu0 0.0
    %818 = vmatpush2.xpose.msra.mxu0 0.0
    %819 = vmatprep.subr.mxu0 0.0
    %820 = vmatpush2.xpose.msra.mxu0 0.0
    %821 = vmatprep.subr.mxu0 0.0
    %822 = vmatpush2.xpose.msra.mxu0 0.0
    %823 = vmatprep.subr.mxu0 0.0
    %824 = vmatpush2.xpose.msra.mxu0 0.0
    %825 = vmatprep.subr.mxu0 0.0
    %826 = vmatpush2.xpose.msra.mxu0 0.0
    %827 = vmatprep.subr.mxu0 0.0
    %828 = vmatpush2.xpose.msra.mxu0 0.0
    %829 = vmatprep.subr.mxu0 0.0
    %830 = vmatpush2.xpose.msra.mxu0 0.0
    %831 = vmatprep.mubr.f32.mxu0 0.0
    %832 = vmatmul.mubr.f32.gmra.mxu0 %v763
    %v833 = vpop.f32.mrf.mxu0
    %v834 = vadd.f32 0.0, %v833
    %v835 = vpop.f32.mrf.mxu0
    %836 = vdwg.mxu0
    %838 = vrot.lane.b32.xlu0 %v294, 96
    %v839 = vpop.permute.xlu0 %838
    %v840 = vsel %vm300, %v294, 0
    %v842 = vsel %vm300, %v839, 0
    %844 = vmatprep.subr.mxu0 0.0
    %845 = vmatpush1.xpose.msra.mxu0 0.0
    %846 = vmatprep.subr.mxu0 0.0
    %847 = vmatpush1.xpose.msra.mxu0 0.0
    %848 = vmatprep.subr.mxu0 0.0
    %849 = vmatpush1.xpose.msra.mxu0 0.0
    %850 = vmatprep.subr.mxu0 0.0
    %851 = vmatpush1.xpose.msra.mxu0 0.0
    %852 = vmatprep.subr.mxu0 0.0
    %853 = vmatpush1.xpose.msra.mxu0 0.0
    %854 = vmatprep.subr.mxu0 0.0
    %855 = vmatpush1.xpose.msra.mxu0 0.0
    %856 = vmatprep.subr.mxu0 0.0
    %857 = vmatpush1.xpose.msra.mxu0 0.0
    %858 = vmatprep.subr.mxu0 0.0
    %859 = vmatpush1.xpose.msra.mxu0 0.0
    %860 = vmatprep.subr.mxu0 0.0
    %861 = vmatpush1.xpose.msra.mxu0 0.0
    %862 = vmatprep.subr.mxu0 0.0
    %863 = vmatpush1.xpose.msra.mxu0 0.0
    %864 = vmatprep.subr.mxu0 0.0
    %865 = vmatpush1.xpose.msra.mxu0 0.0
    %866 = vmatprep.subr.mxu0 0.0
    %867 = vmatpush1.xpose.msra.mxu0 0.0
    %868 = vmatprep.subr.mxu0 0.0
    %869 = vmatpush1.xpose.msra.mxu0 0.0
    %870 = vmatprep.subr.mxu0 0.0
    %871 = vmatpush1.xpose.msra.mxu0 0.0
    %872 = vmatprep.subr.mxu0 0.0
    %873 = vmatpush1.xpose.msra.mxu0 0.0
    %874 = vmatprep.subr.mxu0 0.0
    %875 = vmatpush1.xpose.msra.mxu0 %v842
    %876 = vmatprep.subr.mxu0 0.0
    %877 = vmatpush2.xpose.msra.mxu0 0.0
    %878 = vmatprep.subr.mxu0 0.0
    %879 = vmatpush2.xpose.msra.mxu0 0.0
    %880 = vmatprep.subr.mxu0 0.0
    %881 = vmatpush2.xpose.msra.mxu0 0.0
    %882 = vmatprep.subr.mxu0 0.0
    %883 = vmatpush2.xpose.msra.mxu0 0.0
    %884 = vmatprep.subr.mxu0 0.0
    %885 = vmatpush2.xpose.msra.mxu0 0.0
    %886 = vmatprep.subr.mxu0 0.0
    %887 = vmatpush2.xpose.msra.mxu0 0.0
    %888 = vmatprep.subr.mxu0 0.0
    %889 = vmatpush2.xpose.msra.mxu0 0.0
    %890 = vmatprep.subr.mxu0 0.0
    %891 = vmatpush2.xpose.msra.mxu0 0.0
    %892 = vmatprep.subr.mxu0 0.0
    %893 = vmatpush2.xpose.msra.mxu0 0.0
    %894 = vmatprep.subr.mxu0 0.0
    %895 = vmatpush2.xpose.msra.mxu0 0.0
    %896 = vmatprep.subr.mxu0 0.0
    %897 = vmatpush2.xpose.msra.mxu0 0.0
    %898 = vmatprep.subr.mxu0 0.0
    %899 = vmatpush2.xpose.msra.mxu0 0.0
    %900 = vmatprep.subr.mxu0 0.0
    %901 = vmatpush2.xpose.msra.mxu0 0.0
    %902 = vmatprep.subr.mxu0 0.0
    %903 = vmatpush2.xpose.msra.mxu0 0.0
    %904 = vmatprep.subr.mxu0 0.0
    %905 = vmatpush2.xpose.msra.mxu0 0.0
    %906 = vmatprep.subr.mxu0 0.0
    %907 = vmatpush2.xpose.msra.mxu0 0.0
    %908 = vmatprep.mubr.f32.mxu0 0.0
    %909 = vmatmul.mubr.f32.gmra.mxu0 %v840
    %v910 = vpop.f32.mrf.mxu0
    %v911 = vadd.f32 0.0, %v910
    %v912 = vpop.f32.mrf.mxu0
    %913 = vdwg.mxu0
    %v914 = vsel %vm300, %v372, -inf
    %915 = vmax.xlane.f32.xlu0 %v914
    %v916 = vpop.xlane.xlu0 %915
    %v917 = vsel %vm300, %v449, -inf
    %918 = vmax.xlane.f32.xlu0 %v917
    %v919 = vpop.xlane.xlu0 %918
    %v920 = vsel %vm300, %v526, -inf
    %921 = vmax.xlane.f32.xlu0 %v920
    %v922 = vpop.xlane.xlu0 %921
    %v923 = vsel %vm300, %v603, -inf
    %924 = vmax.xlane.f32.xlu0 %v923
    %v925 = vpop.xlane.xlu0 %924
    %v926 = vsel %vm300, %v680, -inf
    %927 = vmax.xlane.f32.xlu0 %v926
    %v928 = vpop.xlane.xlu0 %927
    %v929 = vsel %vm300, %v757, -inf
    %930 = vmax.xlane.f32.xlu0 %v929
    %v931 = vpop.xlane.xlu0 %930
    %v932 = vsel %vm300, %v834, -inf
    %933 = vmax.xlane.f32.xlu0 %v932
    %v934 = vpop.xlane.xlu0 %933
    %v935 = vsel %vm300, %v911, -inf
    %936 = vmax.xlane.f32.xlu0 %v935
    %v937 = vpop.xlane.xlu0 %936
    %v938 = vsub.f32 %v372, %v916
    %v939 = vsub.f32 %v449, %v919
    %v940 = vsub.f32 %v526, %v922
    %v941 = vsub.f32 %v603, %v925
    %v942 = vsub.f32 %v680, %v928
    %v943 = vsub.f32 %v757, %v931
    %v944 = vsub.f32 %v834, %v934
    %v945 = vsub.f32 %v911, %v937
    %v946 = vmul.f32 %v938, 1.442695
    %v947 = vpow.pop %v946
    %v948 = vmul.f32 %v939, 1.442695
    %v949 = vpow.pop %v948
    %v950 = vmul.f32 %v940, 1.442695
    %v951 = vpow.pop %v950
    %v952 = vmul.f32 %v941, 1.442695
    %v953 = vpow.pop %v952
    %v954 = vmul.f32 %v942, 1.442695
    %v955 = vpow.pop %v954
    %v956 = vmul.f32 %v943, 1.442695
    %v957 = vpow.pop %v956
    %v958 = vmul.f32 %v944, 1.442695
    %v959 = vpow.pop %v958
    %v960 = vmul.f32 %v945, 1.442695
    %v961 = vpow.pop %v960
    %v962 = vsel %vm300, %v947, 0.0
    %963 = vadd.xlane.f32.xlu0 %v962
    %v964 = vpop.xlane.xlu0 %963
    %v965 = vsel %vm300, %v949, 0.0
    %966 = vadd.xlane.f32.xlu0 %v965
    %v967 = vpop.xlane.xlu0 %966
    %v968 = vsel %vm300, %v951, 0.0
    %969 = vadd.xlane.f32.xlu0 %v968
    %v970 = vpop.xlane.xlu0 %969
    %v971 = vsel %vm300, %v953, 0.0
    %972 = vadd.xlane.f32.xlu0 %v971
    %v973 = vpop.xlane.xlu0 %972
    %v974 = vsel %vm300, %v955, 0.0
    %975 = vadd.xlane.f32.xlu0 %v974
    %v976 = vpop.xlane.xlu0 %975
    %v977 = vsel %vm300, %v957, 0.0
    %978 = vadd.xlane.f32.xlu0 %v977
    %v979 = vpop.xlane.xlu0 %978
    %v980 = vsel %vm300, %v959, 0.0
    %981 = vadd.xlane.f32.xlu0 %v980
    %v982 = vpop.xlane.xlu0 %981
    %v983 = vsel %vm300, %v961, 0.0
    %984 = vadd.xlane.f32.xlu0 %v983
    %v985 = vpop.xlane.xlu0 %984
    %v986 = vrcp.pop %v964
    %v987 = vmul.f32 %v947, %v986
    %v988 = vrcp.pop %v967
    %v989 = vmul.f32 %v949, %v988
    %v990 = vrcp.pop %v970
    %v991 = vmul.f32 %v951, %v990
    %v992 = vrcp.pop %v973
    %v993 = vmul.f32 %v953, %v992
    %v994 = vrcp.pop %v976
    %v995 = vmul.f32 %v955, %v994
    %v996 = vrcp.pop %v979
    %v997 = vmul.f32 %v957, %v996
    %v998 = vrcp.pop %v982
    %v999 = vmul.f32 %v959, %v998
    %v1000 = vrcp.pop %v985
    %v1001 = vmul.f32 %v961, %v1000
    %1002 = vrot.lane.b32.xlu0 %v259, 64
    %v1003 = vpop.permute.xlu0 %1002
    %v1006 = vsel %vm300, %v987, 0
    %1008 = vmatprep.subr.mxu0 0.0
    %1009 = vmatpush1.msra.mxu0 0.0
    %1010 = vmatprep.subr.mxu0 0.0
    %1011 = vmatpush1.msra.mxu0 0.0
    %1012 = vmatprep.subr.mxu0 0.0
    %1013 = vmatpush1.msra.mxu0 0.0
    %1014 = vmatprep.subr.mxu0 0.0
    %1015 = vmatpush1.msra.mxu0 0.0
    %1016 = vmatprep.subr.mxu0 0.0
    %1017 = vmatpush1.msra.mxu0 0.0
    %1018 = vmatprep.subr.mxu0 0.0
    %1019 = vmatpush1.msra.mxu0 0.0
    %1020 = vmatprep.subr.mxu0 0.0
    %1021 = vmatpush1.msra.mxu0 0.0
    %1022 = vmatprep.subr.mxu0 0.0
    %1023 = vmatpush1.msra.mxu0 0.0
    %1024 = vmatprep.subr.mxu0 0.0
    %1025 = vmatpush1.msra.mxu0 0.0
    %1026 = vmatprep.subr.mxu0 0.0
    %1027 = vmatpush1.msra.mxu0 0.0
    %1028 = vmatprep.subr.mxu0 0.0
    %1029 = vmatpush1.msra.mxu0 0.0
    %1030 = vmatprep.subr.mxu0 0.0
    %1031 = vmatpush1.msra.mxu0 0.0
    %1032 = vmatprep.subr.mxu0 0.0
    %1033 = vmatpush1.msra.mxu0 0.0
    %1034 = vmatprep.subr.mxu0 0.0
    %1035 = vmatpush1.msra.mxu0 0.0
    %1036 = vmatprep.subr.mxu0 0.0
    %1037 = vmatpush1.msra.mxu0 0.0
    %1038 = vmatprep.subr.mxu0 0.0
    %1039 = vmatpush1.msra.mxu0 %v1003
    %1040 = vmatprep.subr.mxu0 0.0
    %1041 = vmatpush2.msra.mxu0 0.0
    %1042 = vmatprep.subr.mxu0 0.0
    %1043 = vmatpush2.msra.mxu0 0.0
    %1044 = vmatprep.subr.mxu0 0.0
    %1045 = vmatpush2.msra.mxu0 0.0
    %1046 = vmatprep.subr.mxu0 0.0
    %1047 = vmatpush2.msra.mxu0 0.0
    %1048 = vmatprep.subr.mxu0 0.0
    %1049 = vmatpush2.msra.mxu0 0.0
    %1050 = vmatprep.subr.mxu0 0.0
    %1051 = vmatpush2.msra.mxu0 0.0
    %1052 = vmatprep.subr.mxu0 0.0
    %1053 = vmatpush2.msra.mxu0 0.0
    %1054 = vmatprep.subr.mxu0 0.0
    %1055 = vmatpush2.msra.mxu0 0.0
    %1056 = vmatprep.subr.mxu0 0.0
    %1057 = vmatpush2.msra.mxu0 0.0
    %1058 = vmatprep.subr.mxu0 0.0
    %1059 = vmatpush2.msra.mxu0 0.0
    %1060 = vmatprep.subr.mxu0 0.0
    %1061 = vmatpush2.msra.mxu0 0.0
    %1062 = vmatprep.subr.mxu0 0.0
    %1063 = vmatpush2.msra.mxu0 0.0
    %1064 = vmatprep.subr.mxu0 0.0
    %1065 = vmatpush2.msra.mxu0 0.0
    %1066 = vmatprep.subr.mxu0 0.0
    %1067 = vmatpush2.msra.mxu0 0.0
    %1068 = vmatprep.subr.mxu0 0.0
    %1069 = vmatpush2.msra.mxu0 0.0
    %1070 = vmatprep.subr.mxu0 0.0
    %1071 = vmatpush2.msra.mxu0 0.0
    %1072 = vmatprep.mubr.f32.mxu0 0.0
    %1073 = vmatmul.mubr.f32.gmra.mxu0 %v1006
    %v1074 = vpop.f32.mrf.mxu0
    %v1075 = vadd.f32 0.0, %v1074
    %v1076 = vpop.f32.mrf.mxu0
    %1077 = vdwg.mxu0
    %1078 = vrot.lane.b32.xlu0 %v264, 64
    %v1079 = vpop.permute.xlu0 %1078
    %v1082 = vsel %vm300, %v989, 0
    %1084 = vmatprep.subr.mxu0 0.0
    %1085 = vmatpush1.msra.mxu0 0.0
    %1086 = vmatprep.subr.mxu0 0.0
    %1087 = vmatpush1.msra.mxu0 0.0
    %1088 = vmatprep.subr.mxu0 0.0
    %1089 = vmatpush1.msra.mxu0 0.0
    %1090 = vmatprep.subr.mxu0 0.0
    %1091 = vmatpush1.msra.mxu0 0.0
    %1092 = vmatprep.subr.mxu0 0.0
    %1093 = vmatpush1.msra.mxu0 0.0
    %1094 = vmatprep.subr.mxu0 0.0
    %1095 = vmatpush1.msra.mxu0 0.0
    %1096 = vmatprep.subr.mxu0 0.0
    %1097 = vmatpush1.msra.mxu0 0.0
    %1098 = vmatprep.subr.mxu0 0.0
    %1099 = vmatpush1.msra.mxu0 0.0
    %1100 = vmatprep.subr.mxu0 0.0
    %1101 = vmatpush1.msra.mxu0 0.0
    %1102 = vmatprep.subr.mxu0 0.0
    %1103 = vmatpush1.msra.mxu0 0.0
    %1104 = vmatprep.subr.mxu0 0.0
    %1105 = vmatpush1.msra.mxu0 0.0
    %1106 = vmatprep.subr.mxu0 0.0
    %1107 = vmatpush1.msra.mxu0 0.0
    %1108 = vmatprep.subr.mxu0 0.0
    %1109 = vmatpush1.msra.mxu0 0.0
    %1110 = vmatprep.subr.mxu0 0.0
    %1111 = vmatpush1.msra.mxu0 0.0
    %1112 = vmatprep.subr.mxu0 0.0
    %1113 = vmatpush1.msra.mxu0 0.0
    %1114 = vmatprep.subr.mxu0 0.0
    %1115 = vmatpush1.msra.mxu0 %v1079
    %1116 = vmatprep.subr.mxu0 0.0
    %1117 = vmatpush2.msra.mxu0 0.0
    %1118 = vmatprep.subr.mxu0 0.0
    %1119 = vmatpush2.msra.mxu0 0.0
    %1120 = vmatprep.subr.mxu0 0.0
    %1121 = vmatpush2.msra.mxu0 0.0
    %1122 = vmatprep.subr.mxu0 0.0
    %1123 = vmatpush2.msra.mxu0 0.0
    %1124 = vmatprep.subr.mxu0 0.0
    %1125 = vmatpush2.msra.mxu0 0.0
    %1126 = vmatprep.subr.mxu0 0.0
    %1127 = vmatpush2.msra.mxu0 0.0
    %1128 = vmatprep.subr.mxu0 0.0
    %1129 = vmatpush2.msra.mxu0 0.0
    %1130 = vmatprep.subr.mxu0 0.0
    %1131 = vmatpush2.msra.mxu0 0.0
    %1132 = vmatprep.subr.mxu0 0.0
    %1133 = vmatpush2.msra.mxu0 0.0
    %1134 = vmatprep.subr.mxu0 0.0
    %1135 = vmatpush2.msra.mxu0 0.0
    %1136 = vmatprep.subr.mxu0 0.0
    %1137 = vmatpush2.msra.mxu0 0.0
    %1138 = vmatprep.subr.mxu0 0.0
    %1139 = vmatpush2.msra.mxu0 0.0
    %1140 = vmatprep.subr.mxu0 0.0
    %1141 = vmatpush2.msra.mxu0 0.0
    %1142 = vmatprep.subr.mxu0 0.0
    %1143 = vmatpush2.msra.mxu0 0.0
    %1144 = vmatprep.subr.mxu0 0.0
    %1145 = vmatpush2.msra.mxu0 0.0
    %1146 = vmatprep.subr.mxu0 0.0
    %1147 = vmatpush2.msra.mxu0 0.0
    %1148 = vmatprep.mubr.f32.mxu0 0.0
    %1149 = vmatmul.mubr.f32.gmra.mxu0 %v1082
    %v1150 = vpop.f32.mrf.mxu0
    %v1151 = vadd.f32 0.0, %v1150
    %v1152 = vpop.f32.mrf.mxu0
    %1153 = vdwg.mxu0
    %1154 = vrot.lane.b32.xlu0 %v269, 64
    %v1155 = vpop.permute.xlu0 %1154
    %v1158 = vsel %vm300, %v991, 0
    %1160 = vmatprep.subr.mxu0 0.0
    %1161 = vmatpush1.msra.mxu0 0.0
    %1162 = vmatprep.subr.mxu0 0.0
    %1163 = vmatpush1.msra.mxu0 0.0
    %1164 = vmatprep.subr.mxu0 0.0
    %1165 = vmatpush1.msra.mxu0 0.0
    %1166 = vmatprep.subr.mxu0 0.0
    %1167 = vmatpush1.msra.mxu0 0.0
    %1168 = vmatprep.subr.mxu0 0.0
    %1169 = vmatpush1.msra.mxu0 0.0
    %1170 = vmatprep.subr.mxu0 0.0
    %1171 = vmatpush1.msra.mxu0 0.0
    %1172 = vmatprep.subr.mxu0 0.0
    %1173 = vmatpush1.msra.mxu0 0.0
    %1174 = vmatprep.subr.mxu0 0.0
    %1175 = vmatpush1.msra.mxu0 0.0
    %1176 = vmatprep.subr.mxu0 0.0
    %1177 = vmatpush1.msra.mxu0 0.0
    %1178 = vmatprep.subr.mxu0 0.0
    %1179 = vmatpush1.msra.mxu0 0.0
    %1180 = vmatprep.subr.mxu0 0.0
    %1181 = vmatpush1.msra.mxu0 0.0
    %1182 = vmatprep.subr.mxu0 0.0
    %1183 = vmatpush1.msra.mxu0 0.0
    %1184 = vmatprep.subr.mxu0 0.0
    %1185 = vmatpush1.msra.mxu0 0.0
    %1186 = vmatprep.subr.mxu0 0.0
    %1187 = vmatpush1.msra.mxu0 0.0
    %1188 = vmatprep.subr.mxu0 0.0
    %1189 = vmatpush1.msra.mxu0 0.0
    %1190 = vmatprep.subr.mxu0 0.0
    %1191 = vmatpush1.msra.mxu0 %v1155
    %1192 = vmatprep.subr.mxu0 0.0
    %1193 = vmatpush2.msra.mxu0 0.0
    %1194 = vmatprep.subr.mxu0 0.0
    %1195 = vmatpush2.msra.mxu0 0.0
    %1196 = vmatprep.subr.mxu0 0.0
    %1197 = vmatpush2.msra.mxu0 0.0
    %1198 = vmatprep.subr.mxu0 0.0
    %1199 = vmatpush2.msra.mxu0 0.0
    %1200 = vmatprep.subr.mxu0 0.0
    %1201 = vmatpush2.msra.mxu0 0.0
    %1202 = vmatprep.subr.mxu0 0.0
    %1203 = vmatpush2.msra.mxu0 0.0
    %1204 = vmatprep.subr.mxu0 0.0
    %1205 = vmatpush2.msra.mxu0 0.0
    %1206 = vmatprep.subr.mxu0 0.0
    %1207 = vmatpush2.msra.mxu0 0.0
    %1208 = vmatprep.subr.mxu0 0.0
    %1209 = vmatpush2.msra.mxu0 0.0
    %1210 = vmatprep.subr.mxu0 0.0
    %1211 = vmatpush2.msra.mxu0 0.0
    %1212 = vmatprep.subr.mxu0 0.0
    %1213 = vmatpush2.msra.mxu0 0.0
    %1214 = vmatprep.subr.mxu0 0.0
    %1215 = vmatpush2.msra.mxu0 0.0
    %1216 = vmatprep.subr.mxu0 0.0
    %1217 = vmatpush2.msra.mxu0 0.0
    %1218 = vmatprep.subr.mxu0 0.0
    %1219 = vmatpush2.msra.mxu0 0.0
    %1220 = vmatprep.subr.mxu0 0.0
    %1221 = vmatpush2.msra.mxu0 0.0
    %1222 = vmatprep.subr.mxu0 0.0
    %1223 = vmatpush2.msra.mxu0 0.0
    %1224 = vmatprep.mubr.f32.mxu0 0.0
    %1225 = vmatmul.mubr.f32.gmra.mxu0 %v1158
    %v1226 = vpop.f32.mrf.mxu0
    %v1227 = vadd.f32 0.0, %v1226
    %v1228 = vpop.f32.mrf.mxu0
    %1229 = vdwg.mxu0
    %1230 = vrot.lane.b32.xlu0 %v274, 64
    %v1231 = vpop.permute.xlu0 %1230
    %v1234 = vsel %vm300, %v993, 0
    %1236 = vmatprep.subr.mxu0 0.0
    %1237 = vmatpush1.msra.mxu0 0.0
    %1238 = vmatprep.subr.mxu0 0.0
    %1239 = vmatpush1.msra.mxu0 0.0
    %1240 = vmatprep.subr.mxu0 0.0
    %1241 = vmatpush1.msra.mxu0 0.0
    %1242 = vmatprep.subr.mxu0 0.0
    %1243 = vmatpush1.msra.mxu0 0.0
    %1244 = vmatprep.subr.mxu0 0.0
    %1245 = vmatpush1.msra.mxu0 0.0
    %1246 = vmatprep.subr.mxu0 0.0
    %1247 = vmatpush1.msra.mxu0 0.0
    %1248 = vmatprep.subr.mxu0 0.0
    %1249 = vmatpush1.msra.mxu0 0.0
    %1250 = vmatprep.subr.mxu0 0.0
    %1251 = vmatpush1.msra.mxu0 0.0
    %1252 = vmatprep.subr.mxu0 0.0
    %1253 = vmatpush1.msra.mxu0 0.0
    %1254 = vmatprep.subr.mxu0 0.0
    %1255 = vmatpush1.msra.mxu0 0.0
    %1256 = vmatprep.subr.mxu0 0.0
    %1257 = vmatpush1.msra.mxu0 0.0
    %1258 = vmatprep.subr.mxu0 0.0
    %1259 = vmatpush1.msra.mxu0 0.0
    %1260 = vmatprep.subr.mxu0 0.0
    %1261 = vmatpush1.msra.mxu0 0.0
    %1262 = vmatprep.subr.mxu0 0.0
    %1263 = vmatpush1.msra.mxu0 0.0
    %1264 = vmatprep.subr.mxu0 0.0
    %1265 = vmatpush1.msra.mxu0 0.0
    %1266 = vmatprep.subr.mxu0 0.0
    %1267 = vmatpush1.msra.mxu0 %v1231
    %1268 = vmatprep.subr.mxu0 0.0
    %1269 = vmatpush2.msra.mxu0 0.0
    %1270 = vmatprep.subr.mxu0 0.0
    %1271 = vmatpush2.msra.mxu0 0.0
    %1272 = vmatprep.subr.mxu0 0.0
    %1273 = vmatpush2.msra.mxu0 0.0
    %1274 = vmatprep.subr.mxu0 0.0
    %1275 = vmatpush2.msra.mxu0 0.0
    %1276 = vmatprep.subr.mxu0 0.0
    %1277 = vmatpush2.msra.mxu0 0.0
    %1278 = vmatprep.subr.mxu0 0.0
    %1279 = vmatpush2.msra.mxu0 0.0
    %1280 = vmatprep.subr.mxu0 0.0
    %1281 = vmatpush2.msra.mxu0 0.0
    %1282 = vmatprep.subr.mxu0 0.0
    %1283 = vmatpush2.msra.mxu0 0.0
    %1284 = vmatprep.subr.mxu0 0.0
    %1285 = vmatpush2.msra.mxu0 0.0
    %1286 = vmatprep.subr.mxu0 0.0
    %1287 = vmatpush2.msra.mxu0 0.0
    %1288 = vmatprep.subr.mxu0 0.0
    %1289 = vmatpush2.msra.mxu0 0.0
    %1290 = vmatprep.subr.mxu0 0.0
    %1291 = vmatpush2.msra.mxu0 0.0
    %1292 = vmatprep.subr.mxu0 0.0
    %1293 = vmatpush2.msra.mxu0 0.0
    %1294 = vmatprep.subr.mxu0 0.0
    %1295 = vmatpush2.msra.mxu0 0.0
    %1296 = vmatprep.subr.mxu0 0.0
    %1297 = vmatpush2.msra.mxu0 0.0
    %1298 = vmatprep.subr.mxu0 0.0
    %1299 = vmatpush2.msra.mxu0 0.0
    %1300 = vmatprep.mubr.f32.mxu0 0.0
    %1301 = vmatmul.mubr.f32.gmra.mxu0 %v1234
    %v1302 = vpop.f32.mrf.mxu0
    %v1303 = vadd.f32 0.0, %v1302
    %v1304 = vpop.f32.mrf.mxu0
    %1305 = vdwg.mxu0
    %1306 = vrot.lane.b32.xlu0 %v279, 64
    %v1307 = vpop.permute.xlu0 %1306
    %v1310 = vsel %vm300, %v995, 0
    %1312 = vmatprep.subr.mxu0 0.0
    %1313 = vmatpush1.msra.mxu0 0.0
    %1314 = vmatprep.subr.mxu0 0.0
    %1315 = vmatpush1.msra.mxu0 0.0
    %1316 = vmatprep.subr.mxu0 0.0
    %1317 = vmatpush1.msra.mxu0 0.0
    %1318 = vmatprep.subr.mxu0 0.0
    %1319 = vmatpush1.msra.mxu0 0.0
    %1320 = vmatprep.subr.mxu0 0.0
    %1321 = vmatpush1.msra.mxu0 0.0
    %1322 = vmatprep.subr.mxu0 0.0
    %1323 = vmatpush1.msra.mxu0 0.0
    %1324 = vmatprep.subr.mxu0 0.0
    %1325 = vmatpush1.msra.mxu0 0.0
    %1326 = vmatprep.subr.mxu0 0.0
    %1327 = vmatpush1.msra.mxu0 0.0
    %1328 = vmatprep.subr.mxu0 0.0
    %1329 = vmatpush1.msra.mxu0 0.0
    %1330 = vmatprep.subr.mxu0 0.0
    %1331 = vmatpush1.msra.mxu0 0.0
    %1332 = vmatprep.subr.mxu0 0.0
    %1333 = vmatpush1.msra.mxu0 0.0
    %1334 = vmatprep.subr.mxu0 0.0
    %1335 = vmatpush1.msra.mxu0 0.0
    %1336 = vmatprep.subr.mxu0 0.0
    %1337 = vmatpush1.msra.mxu0 0.0
    %1338 = vmatprep.subr.mxu0 0.0
    %1339 = vmatpush1.msra.mxu0 0.0
    %1340 = vmatprep.subr.mxu0 0.0
    %1341 = vmatpush1.msra.mxu0 0.0
    %1342 = vmatprep.subr.mxu0 0.0
    %1343 = vmatpush1.msra.mxu0 %v1307
    %1344 = vmatprep.subr.mxu0 0.0
    %1345 = vmatpush2.msra.mxu0 0.0
    %1346 = vmatprep.subr.mxu0 0.0
    %1347 = vmatpush2.msra.mxu0 0.0
    %1348 = vmatprep.subr.mxu0 0.0
    %1349 = vmatpush2.msra.mxu0 0.0
    %1350 = vmatprep.subr.mxu0 0.0
    %1351 = vmatpush2.msra.mxu0 0.0
    %1352 = vmatprep.subr.mxu0 0.0
    %1353 = vmatpush2.msra.mxu0 0.0
    %1354 = vmatprep.subr.mxu0 0.0
    %1355 = vmatpush2.msra.mxu0 0.0
    %1356 = vmatprep.subr.mxu0 0.0
    %1357 = vmatpush2.msra.mxu0 0.0
    %1358 = vmatprep.subr.mxu0 0.0
    %1359 = vmatpush2.msra.mxu0 0.0
    %1360 = vmatprep.subr.mxu0 0.0
    %1361 = vmatpush2.msra.mxu0 0.0
    %1362 = vmatprep.subr.mxu0 0.0
    %1363 = vmatpush2.msra.mxu0 0.0
    %1364 = vmatprep.subr.mxu0 0.0
    %1365 = vmatpush2.msra.mxu0 0.0
    %1366 = vmatprep.subr.mxu0 0.0
    %1367 = vmatpush2.msra.mxu0 0.0
    %1368 = vmatprep.subr.mxu0 0.0
    %1369 = vmatpush2.msra.mxu0 0.0
    %1370 = vmatprep.subr.mxu0 0.0
    %1371 = vmatpush2.msra.mxu0 0.0
    %1372 = vmatprep.subr.mxu0 0.0
    %1373 = vmatpush2.msra.mxu0 0.0
    %1374 = vmatprep.subr.mxu0 0.0
    %1375 = vmatpush2.msra.mxu0 0.0
    %1376 = vmatprep.mubr.f32.mxu0 0.0
    %1377 = vmatmul.mubr.f32.gmra.mxu0 %v1310
    %v1378 = vpop.f32.mrf.mxu0
    %v1379 = vadd.f32 0.0, %v1378
    %v1380 = vpop.f32.mrf.mxu0
    %1381 = vdwg.mxu0
    %1382 = vrot.lane.b32.xlu0 %v284, 64
    %v1383 = vpop.permute.xlu0 %1382
    %v1386 = vsel %vm300, %v997, 0
    %1388 = vmatprep.subr.mxu0 0.0
    %1389 = vmatpush1.msra.mxu0 0.0
    %1390 = vmatprep.subr.mxu0 0.0
    %1391 = vmatpush1.msra.mxu0 0.0
    %1392 = vmatprep.subr.mxu0 0.0
    %1393 = vmatpush1.msra.mxu0 0.0
    %1394 = vmatprep.subr.mxu0 0.0
    %1395 = vmatpush1.msra.mxu0 0.0
    %1396 = vmatprep.subr.mxu0 0.0
    %1397 = vmatpush1.msra.mxu0 0.0
    %1398 = vmatprep.subr.mxu0 0.0
    %1399 = vmatpush1.msra.mxu0 0.0
    %1400 = vmatprep.subr.mxu0 0.0
    %1401 = vmatpush1.msra.mxu0 0.0
    %1402 = vmatprep.subr.mxu0 0.0
    %1403 = vmatpush1.msra.mxu0 0.0
    %1404 = vmatprep.subr.mxu0 0.0
    %1405 = vmatpush1.msra.mxu0 0.0
    %1406 = vmatprep.subr.mxu0 0.0
    %1407 = vmatpush1.msra.mxu0 0.0
    %1408 = vmatprep.subr.mxu0 0.0
    %1409 = vmatpush1.msra.mxu0 0.0
    %1410 = vmatprep.subr.mxu0 0.0
    %1411 = vmatpush1.msra.mxu0 0.0
    %1412 = vmatprep.subr.mxu0 0.0
    %1413 = vmatpush1.msra.mxu0 0.0
    %1414 = vmatprep.subr.mxu0 0.0
    %1415 = vmatpush1.msra.mxu0 0.0
    %1416 = vmatprep.subr.mxu0 0.0
    %1417 = vmatpush1.msra.mxu0 0.0
    %1418 = vmatprep.subr.mxu0 0.0
    %1419 = vmatpush1.msra.mxu0 %v1383
    %1420 = vmatprep.subr.mxu0 0.0
    %1421 = vmatpush2.msra.mxu0 0.0
    %1422 = vmatprep.subr.mxu0 0.0
    %1423 = vmatpush2.msra.mxu0 0.0
    %1424 = vmatprep.subr.mxu0 0.0
    %1425 = vmatpush2.msra.mxu0 0.0
    %1426 = vmatprep.subr.mxu0 0.0
    %1427 = vmatpush2.msra.mxu0 0.0
    %1428 = vmatprep.subr.mxu0 0.0
    %1429 = vmatpush2.msra.mxu0 0.0
    %1430 = vmatprep.subr.mxu0 0.0
    %1431 = vmatpush2.msra.mxu0 0.0
    %1432 = vmatprep.subr.mxu0 0.0
    %1433 = vmatpush2.msra.mxu0 0.0
    %1434 = vmatprep.subr.mxu0 0.0
    %1435 = vmatpush2.msra.mxu0 0.0
    %1436 = vmatprep.subr.mxu0 0.0
    %1437 = vmatpush2.msra.mxu0 0.0
    %1438 = vmatprep.subr.mxu0 0.0
    %1439 = vmatpush2.msra.mxu0 0.0
    %1440 = vmatprep.subr.mxu0 0.0
    %1441 = vmatpush2.msra.mxu0 0.0
    %1442 = vmatprep.subr.mxu0 0.0
    %1443 = vmatpush2.msra.mxu0 0.0
    %1444 = vmatprep.subr.mxu0 0.0
    %1445 = vmatpush2.msra.mxu0 0.0
    %1446 = vmatprep.subr.mxu0 0.0
    %1447 = vmatpush2.msra.mxu0 0.0
    %1448 = vmatprep.subr.mxu0 0.0
    %1449 = vmatpush2.msra.mxu0 0.0
    %1450 = vmatprep.subr.mxu0 0.0
    %1451 = vmatpush2.msra.mxu0 0.0
    %1452 = vmatprep.mubr.f32.mxu0 0.0
    %1453 = vmatmul.mubr.f32.gmra.mxu0 %v1386
    %v1454 = vpop.f32.mrf.mxu0
    %v1455 = vadd.f32 0.0, %v1454
    %v1456 = vpop.f32.mrf.mxu0
    %1457 = vdwg.mxu0
    %1458 = vrot.lane.b32.xlu0 %v289, 64
    %v1459 = vpop.permute.xlu0 %1458
    %v1462 = vsel %vm300, %v999, 0
    %1464 = vmatprep.subr.mxu0 0.0
    %1465 = vmatpush1.msra.mxu0 0.0
    %1466 = vmatprep.subr.mxu0 0.0
    %1467 = vmatpush1.msra.mxu0 0.0
    %1468 = vmatprep.subr.mxu0 0.0
    %1469 = vmatpush1.msra.mxu0 0.0
    %1470 = vmatprep.subr.mxu0 0.0
    %1471 = vmatpush1.msra.mxu0 0.0
    %1472 = vmatprep.subr.mxu0 0.0
    %1473 = vmatpush1.msra.mxu0 0.0
    %1474 = vmatprep.subr.mxu0 0.0
    %1475 = vmatpush1.msra.mxu0 0.0
    %1476 = vmatprep.subr.mxu0 0.0
    %1477 = vmatpush1.msra.mxu0 0.0
    %1478 = vmatprep.subr.mxu0 0.0
    %1479 = vmatpush1.msra.mxu0 0.0
    %1480 = vmatprep.subr.mxu0 0.0
    %1481 = vmatpush1.msra.mxu0 0.0
    %1482 = vmatprep.subr.mxu0 0.0
    %1483 = vmatpush1.msra.mxu0 0.0
    %1484 = vmatprep.subr.mxu0 0.0
    %1485 = vmatpush1.msra.mxu0 0.0
    %1486 = vmatprep.subr.mxu0 0.0
    %1487 = vmatpush1.msra.mxu0 0.0
    %1488 = vmatprep.subr.mxu0 0.0
    %1489 = vmatpush1.msra.mxu0 0.0
    %1490 = vmatprep.subr.mxu0 0.0
    %1491 = vmatpush1.msra.mxu0 0.0
    %1492 = vmatprep.subr.mxu0 0.0
    %1493 = vmatpush1.msra.mxu0 0.0
    %1494 = vmatprep.subr.mxu0 0.0
    %1495 = vmatpush1.msra.mxu0 %v1459
    %1496 = vmatprep.subr.mxu0 0.0
    %1497 = vmatpush2.msra.mxu0 0.0
    %1498 = vmatprep.subr.mxu0 0.0
    %1499 = vmatpush2.msra.mxu0 0.0
    %1500 = vmatprep.subr.mxu0 0.0
    %1501 = vmatpush2.msra.mxu0 0.0
    %1502 = vmatprep.subr.mxu0 0.0
    %1503 = vmatpush2.msra.mxu0 0.0
    %1504 = vmatprep.subr.mxu0 0.0
    %1505 = vmatpush2.msra.mxu0 0.0
    %1506 = vmatprep.subr.mxu0 0.0
    %1507 = vmatpush2.msra.mxu0 0.0
    %1508 = vmatprep.subr.mxu0 0.0
    %1509 = vmatpush2.msra.mxu0 0.0
    %1510 = vmatprep.subr.mxu0 0.0
    %1511 = vmatpush2.msra.mxu0 0.0
    %1512 = vmatprep.subr.mxu0 0.0
    %1513 = vmatpush2.msra.mxu0 0.0
    %1514 = vmatprep.subr.mxu0 0.0
    %1515 = vmatpush2.msra.mxu0 0.0
    %1516 = vmatprep.subr.mxu0 0.0
    %1517 = vmatpush2.msra.mxu0 0.0
    %1518 = vmatprep.subr.mxu0 0.0
    %1519 = vmatpush2.msra.mxu0 0.0
    %1520 = vmatprep.subr.mxu0 0.0
    %1521 = vmatpush2.msra.mxu0 0.0
    %1522 = vmatprep.subr.mxu0 0.0
    %1523 = vmatpush2.msra.mxu0 0.0
    %1524 = vmatprep.subr.mxu0 0.0
    %1525 = vmatpush2.msra.mxu0 0.0
    %1526 = vmatprep.subr.mxu0 0.0
    %1527 = vmatpush2.msra.mxu0 0.0
    %1528 = vmatprep.mubr.f32.mxu0 0.0
    %1529 = vmatmul.mubr.f32.gmra.mxu0 %v1462
    %v1530 = vpop.f32.mrf.mxu0
    %v1531 = vadd.f32 0.0, %v1530
    %v1532 = vpop.f32.mrf.mxu0
    %1533 = vdwg.mxu0
    %1534 = vrot.lane.b32.xlu0 %v294, 64
    %v1535 = vpop.permute.xlu0 %1534
    %v1538 = vsel %vm300, %v1001, 0
    %1540 = vmatprep.subr.mxu0 0.0
    %1541 = vmatpush1.msra.mxu0 0.0
    %1542 = vmatprep.subr.mxu0 0.0
    %1543 = vmatpush1.msra.mxu0 0.0
    %1544 = vmatprep.subr.mxu0 0.0
    %1545 = vmatpush1.msra.mxu0 0.0
    %1546 = vmatprep.subr.mxu0 0.0
    %1547 = vmatpush1.msra.mxu0 0.0
    %1548 = vmatprep.subr.mxu0 0.0
    %1549 = vmatpush1.msra.mxu0 0.0
    %1550 = vmatprep.subr.mxu0 0.0
    %1551 = vmatpush1.msra.mxu0 0.0
    %1552 = vmatprep.subr.mxu0 0.0
    %1553 = vmatpush1.msra.mxu0 0.0
    %1554 = vmatprep.subr.mxu0 0.0
    %1555 = vmatpush1.msra.mxu0 0.0
    %1556 = vmatprep.subr.mxu0 0.0
    %1557 = vmatpush1.msra.mxu0 0.0
    %1558 = vmatprep.subr.mxu0 0.0
    %1559 = vmatpush1.msra.mxu0 0.0
    %1560 = vmatprep.subr.mxu0 0.0
    %1561 = vmatpush1.msra.mxu0 0.0
    %1562 = vmatprep.subr.mxu0 0.0
    %1563 = vmatpush1.msra.mxu0 0.0
    %1564 = vmatprep.subr.mxu0 0.0
    %1565 = vmatpush1.msra.mxu0 0.0
    %1566 = vmatprep.subr.mxu0 0.0
    %1567 = vmatpush1.msra.mxu0 0.0
    %1568 = vmatprep.subr.mxu0 0.0
    %1569 = vmatpush1.msra.mxu0 0.0
    %1570 = vmatprep.subr.mxu0 0.0
    %1571 = vmatpush1.msra.mxu0 %v1535
    %1572 = vmatprep.subr.mxu0 0.0
    %1573 = vmatpush2.msra.mxu0 0.0
    %1574 = vmatprep.subr.mxu0 0.0
    %1575 = vmatpush2.msra.mxu0 0.0
    %1576 = vmatprep.subr.mxu0 0.0
    %1577 = vmatpush2.msra.mxu0 0.0
    %1578 = vmatprep.subr.mxu0 0.0
    %1579 = vmatpush2.msra.mxu0 0.0
    %1580 = vmatprep.subr.mxu0 0.0
    %1581 = vmatpush2.msra.mxu0 0.0
    %1582 = vmatprep.subr.mxu0 0.0
    %1583 = vmatpush2.msra.mxu0 0.0
    %1584 = vmatprep.subr.mxu0 0.0
    %1585 = vmatpush2.msra.mxu0 0.0
    %1586 = vmatprep.subr.mxu0 0.0
    %1587 = vmatpush2.msra.mxu0 0.0
    %1588 = vmatprep.subr.mxu0 0.0
    %1589 = vmatpush2.msra.mxu0 0.0
    %1590 = vmatprep.subr.mxu0 0.0
    %1591 = vmatpush2.msra.mxu0 0.0
    %1592 = vmatprep.subr.mxu0 0.0
    %1593 = vmatpush2.msra.mxu0 0.0
    %1594 = vmatprep.subr.mxu0 0.0
    %1595 = vmatpush2.msra.mxu0 0.0
    %1596 = vmatprep.subr.mxu0 0.0
    %1597 = vmatpush2.msra.mxu0 0.0
    %1598 = vmatprep.subr.mxu0 0.0
    %1599 = vmatpush2.msra.mxu0 0.0
    %1600 = vmatprep.subr.mxu0 0.0
    %1601 = vmatpush2.msra.mxu0 0.0
    %1602 = vmatprep.subr.mxu0 0.0
    %1603 = vmatpush2.msra.mxu0 0.0
    %1604 = vmatprep.mubr.f32.mxu0 0.0
    %1605 = vmatmul.mubr.f32.gmra.mxu0 %v1538
    %v1606 = vpop.f32.mrf.mxu0
    %v1607 = vadd.f32 0.0, %v1606
    %v1608 = vpop.f32.mrf.mxu0
    %1609 = vdwg.mxu0
    %1610 = vst.msk [vmem:[#allocation2] sm:$0xff] %vm300, %v1075
    %1611 = vst.msk [vmem:[#allocation2 + $0x8] sm:$0xff] %vm300, %v1151
    %1612 = vst.msk [vmem:[#allocation2 + $0x10] sm:$0xff] %vm300, %v1227
    %1613 = vst.msk [vmem:[#allocation2 + $0x18] sm:$0xff] %vm300, %v1303
    %1614 = vst.msk [vmem:[#allocation2 + $0x20] sm:$0xff] %vm300, %v1379
    %1615 = vst.msk [vmem:[#allocation2 + $0x28] sm:$0xff] %vm300, %v1455
    %1616 = vst.msk [vmem:[#allocation2 + $0x30] sm:$0xff] %vm300, %v1531
    %1617 = vst.msk [vmem:[#allocation2 + $0x38] sm:$0xff] %vm300, %v1607
    %1618 = vrot.lane.b32.xlu0 %v259, 120
    %v1619 = vpop.permute.xlu0 %1618
    %1620 = vrot.lane.b32.xlu0 %v259, 88
    %v1621 = vpop.permute.xlu0 %1620
    %v1622 = vsel %vm300, %v1619, 0
    %v1624 = vsel %vm300, %v1621, 0
    %1626 = vmatprep.subr.mxu0 0.0
    %1627 = vmatpush1.xpose.msra.mxu0 0.0
    %1628 = vmatprep.subr.mxu0 0.0
    %1629 = vmatpush1.xpose.msra.mxu0 0.0
    %1630 = vmatprep.subr.mxu0 0.0
    %1631 = vmatpush1.xpose.msra.mxu0 0.0
    %1632 = vmatprep.subr.mxu0 0.0
    %1633 = vmatpush1.xpose.msra.mxu0 0.0
    %1634 = vmatprep.subr.mxu0 0.0
    %1635 = vmatpush1.xpose.msra.mxu0 0.0
    %1636 = vmatprep.subr.mxu0 0.0
    %1637 = vmatpush1.xpose.msra.mxu0 0.0
    %1638 = vmatprep.subr.mxu0 0.0
    %1639 = vmatpush1.xpose.msra.mxu0 0.0
    %1640 = vmatprep.subr.mxu0 0.0
    %1641 = vmatpush1.xpose.msra.mxu0 0.0
    %1642 = vmatprep.subr.mxu0 0.0
    %1643 = vmatpush1.xpose.msra.mxu0 0.0
    %1644 = vmatprep.subr.mxu0 0.0
    %1645 = vmatpush1.xpose.msra.mxu0 0.0
    %1646 = vmatprep.subr.mxu0 0.0
    %1647 = vmatpush1.xpose.msra.mxu0 0.0
    %1648 = vmatprep.subr.mxu0 0.0
    %1649 = vmatpush1.xpose.msra.mxu0 0.0
    %1650 = vmatprep.subr.mxu0 0.0
    %1651 = vmatpush1.xpose.msra.mxu0 0.0
    %1652 = vmatprep.subr.mxu0 0.0
    %1653 = vmatpush1.xpose.msra.mxu0 0.0
    %1654 = vmatprep.subr.mxu0 0.0
    %1655 = vmatpush1.xpose.msra.mxu0 0.0
    %1656 = vmatprep.subr.mxu0 0.0
    %1657 = vmatpush1.xpose.msra.mxu0 %v1624
    %1658 = vmatprep.subr.mxu0 0.0
    %1659 = vmatpush2.xpose.msra.mxu0 0.0
    %1660 = vmatprep.subr.mxu0 0.0
    %1661 = vmatpush2.xpose.msra.mxu0 0.0
    %1662 = vmatprep.subr.mxu0 0.0
    %1663 = vmatpush2.xpose.msra.mxu0 0.0
    %1664 = vmatprep.subr.mxu0 0.0
    %1665 = vmatpush2.xpose.msra.mxu0 0.0
    %1666 = vmatprep.subr.mxu0 0.0
    %1667 = vmatpush2.xpose.msra.mxu0 0.0
    %1668 = vmatprep.subr.mxu0 0.0
    %1669 = vmatpush2.xpose.msra.mxu0 0.0
    %1670 = vmatprep.subr.mxu0 0.0
    %1671 = vmatpush2.xpose.msra.mxu0 0.0
    %1672 = vmatprep.subr.mxu0 0.0
    %1673 = vmatpush2.xpose.msra.mxu0 0.0
    %1674 = vmatprep.subr.mxu0 0.0
    %1675 = vmatpush2.xpose.msra.mxu0 0.0
    %1676 = vmatprep.subr.mxu0 0.0
    %1677 = vmatpush2.xpose.msra.mxu0 0.0
    %1678 = vmatprep.subr.mxu0 0.0
    %1679 = vmatpush2.xpose.msra.mxu0 0.0
    %1680 = vmatprep.subr.mxu0 0.0
    %1681 = vmatpush2.xpose.msra.mxu0 0.0
    %1682 = vmatprep.subr.mxu0 0.0
    %1683 = vmatpush2.xpose.msra.mxu0 0.0
    %1684 = vmatprep.subr.mxu0 0.0
    %1685 = vmatpush2.xpose.msra.mxu0 0.0
    %1686 = vmatprep.subr.mxu0 0.0
    %1687 = vmatpush2.xpose.msra.mxu0 0.0
    %1688 = vmatprep.subr.mxu0 0.0
    %1689 = vmatpush2.xpose.msra.mxu0 0.0
    %1690 = vmatprep.mubr.f32.mxu0 0.0
    %1691 = vmatmul.mubr.f32.gmra.mxu0 %v1622
    %v1692 = vpop.f32.mrf.mxu0
    %v1693 = vadd.f32 0.0, %v1692
    %v1694 = vpop.f32.mrf.mxu0
    %1695 = vdwg.mxu0
    %1696 = vrot.lane.b32.xlu0 %v264, 120
    %v1697 = vpop.permute.xlu0 %1696
    %1698 = vrot.lane.b32.xlu0 %v264, 88
    %v1699 = vpop.permute.xlu0 %1698
    %v1700 = vsel %vm300, %v1697, 0
    %v1702 = vsel %vm300, %v1699, 0
    %1704 = vmatprep.subr.mxu0 0.0
    %1705 = vmatpush1.xpose.msra.mxu0 0.0
    %1706 = vmatprep.subr.mxu0 0.0
    %1707 = vmatpush1.xpose.msra.mxu0 0.0
    %1708 = vmatprep.subr.mxu0 0.0
    %1709 = vmatpush1.xpose.msra.mxu0 0.0
    %1710 = vmatprep.subr.mxu0 0.0
    %1711 = vmatpush1.xpose.msra.mxu0 0.0
    %1712 = vmatprep.subr.mxu0 0.0
    %1713 = vmatpush1.xpose.msra.mxu0 0.0
    %1714 = vmatprep.subr.mxu0 0.0
    %1715 = vmatpush1.xpose.msra.mxu0 0.0
    %1716 = vmatprep.subr.mxu0 0.0
    %1717 = vmatpush1.xpose.msra.mxu0 0.0
    %1718 = vmatprep.subr.mxu0 0.0
    %1719 = vmatpush1.xpose.msra.mxu0 0.0
    %1720 = vmatprep.subr.mxu0 0.0
    %1721 = vmatpush1.xpose.msra.mxu0 0.0
    %1722 = vmatprep.subr.mxu0 0.0
    %1723 = vmatpush1.xpose.msra.mxu0 0.0
    %1724 = vmatprep.subr.mxu0 0.0
    %1725 = vmatpush1.xpose.msra.mxu0 0.0
    %1726 = vmatprep.subr.mxu0 0.0
    %1727 = vmatpush1.xpose.msra.mxu0 0.0
    %1728 = vmatprep.subr.mxu0 0.0
    %1729 = vmatpush1.xpose.msra.mxu0 0.0
    %1730 = vmatprep.subr.mxu0 0.0
    %1731 = vmatpush1.xpose.msra.mxu0 0.0
    %1732 = vmatprep.subr.mxu0 0.0
    %1733 = vmatpush1.xpose.msra.mxu0 0.0
    %1734 = vmatprep.subr.mxu0 0.0
    %1735 = vmatpush1.xpose.msra.mxu0 %v1702
    %1736 = vmatprep.subr.mxu0 0.0
    %1737 = vmatpush2.xpose.msra.mxu0 0.0
    %1738 = vmatprep.subr.mxu0 0.0
    %1739 = vmatpush2.xpose.msra.mxu0 0.0
    %1740 = vmatprep.subr.mxu0 0.0
    %1741 = vmatpush2.xpose.msra.mxu0 0.0
    %1742 = vmatprep.subr.mxu0 0.0
    %1743 = vmatpush2.xpose.msra.mxu0 0.0
    %1744 = vmatprep.subr.mxu0 0.0
    %1745 = vmatpush2.xpose.msra.mxu0 0.0
    %1746 = vmatprep.subr.mxu0 0.0
    %1747 = vmatpush2.xpose.msra.mxu0 0.0
    %1748 = vmatprep.subr.mxu0 0.0
    %1749 = vmatpush2.xpose.msra.mxu0 0.0
    %1750 = vmatprep.subr.mxu0 0.0
    %1751 = vmatpush2.xpose.msra.mxu0 0.0
    %1752 = vmatprep.subr.mxu0 0.0
    %1753 = vmatpush2.xpose.msra.mxu0 0.0
    %1754 = vmatprep.subr.mxu0 0.0
    %1755 = vmatpush2.xpose.msra.mxu0 0.0
    %1756 = vmatprep.subr.mxu0 0.0
    %1757 = vmatpush2.xpose.msra.mxu0 0.0
    %1758 = vmatprep.subr.mxu0 0.0
    %1759 = vmatpush2.xpose.msra.mxu0 0.0
    %1760 = vmatprep.subr.mxu0 0.0
    %1761 = vmatpush2.xpose.msra.mxu0 0.0
    %1762 = vmatprep.subr.mxu0 0.0
    %1763 = vmatpush2.xpose.msra.mxu0 0.0
    %1764 = vmatprep.subr.mxu0 0.0
    %1765 = vmatpush2.xpose.msra.mxu0 0.0
    %1766 = vmatprep.subr.mxu0 0.0
    %1767 = vmatpush2.xpose.msra.mxu0 0.0
    %1768 = vmatprep.mubr.f32.mxu0 0.0
    %1769 = vmatmul.mubr.f32.gmra.mxu0 %v1700
    %v1770 = vpop.f32.mrf.mxu0
    %v1771 = vadd.f32 0.0, %v1770
    %v1772 = vpop.f32.mrf.mxu0
    %1773 = vdwg.mxu0
    %1774 = vrot.lane.b32.xlu0 %v269, 120
    %v1775 = vpop.permute.xlu0 %1774
    %1776 = vrot.lane.b32.xlu0 %v269, 88
    %v1777 = vpop.permute.xlu0 %1776
    %v1778 = vsel %vm300, %v1775, 0
    %v1780 = vsel %vm300, %v1777, 0
    %1782 = vmatprep.subr.mxu0 0.0
    %1783 = vmatpush1.xpose.msra.mxu0 0.0
    %1784 = vmatprep.subr.mxu0 0.0
    %1785 = vmatpush1.xpose.msra.mxu0 0.0
    %1786 = vmatprep.subr.mxu0 0.0
    %1787 = vmatpush1.xpose.msra.mxu0 0.0
    %1788 = vmatprep.subr.mxu0 0.0
    %1789 = vmatpush1.xpose.msra.mxu0 0.0
    %1790 = vmatprep.subr.mxu0 0.0
    %1791 = vmatpush1.xpose.msra.mxu0 0.0
    %1792 = vmatprep.subr.mxu0 0.0
    %1793 = vmatpush1.xpose.msra.mxu0 0.0
    %1794 = vmatprep.subr.mxu0 0.0
    %1795 = vmatpush1.xpose.msra.mxu0 0.0
    %1796 = vmatprep.subr.mxu0 0.0
    %1797 = vmatpush1.xpose.msra.mxu0 0.0
    %1798 = vmatprep.subr.mxu0 0.0
    %1799 = vmatpush1.xpose.msra.mxu0 0.0
    %1800 = vmatprep.subr.mxu0 0.0
    %1801 = vmatpush1.xpose.msra.mxu0 0.0
    %1802 = vmatprep.subr.mxu0 0.0
    %1803 = vmatpush1.xpose.msra.mxu0 0.0
    %1804 = vmatprep.subr.mxu0 0.0
    %1805 = vmatpush1.xpose.msra.mxu0 0.0
    %1806 = vmatprep.subr.mxu0 0.0
    %1807 = vmatpush1.xpose.msra.mxu0 0.0
    %1808 = vmatprep.subr.mxu0 0.0
    %1809 = vmatpush1.xpose.msra.mxu0 0.0
    %1810 = vmatprep.subr.mxu0 0.0
    %1811 = vmatpush1.xpose.msra.mxu0 0.0
    %1812 = vmatprep.subr.mxu0 0.0
    %1813 = vmatpush1.xpose.msra.mxu0 %v1780
    %1814 = vmatprep.subr.mxu0 0.0
    %1815 = vmatpush2.xpose.msra.mxu0 0.0
    %1816 = vmatprep.subr.mxu0 0.0
    %1817 = vmatpush2.xpose.msra.mxu0 0.0
    %1818 = vmatprep.subr.mxu0 0.0
    %1819 = vmatpush2.xpose.msra.mxu0 0.0
    %1820 = vmatprep.subr.mxu0 0.0
    %1821 = vmatpush2.xpose.msra.mxu0 0.0
    %1822 = vmatprep.subr.mxu0 0.0
    %1823 = vmatpush2.xpose.msra.mxu0 0.0
    %1824 = vmatprep.subr.mxu0 0.0
    %1825 = vmatpush2.xpose.msra.mxu0 0.0
    %1826 = vmatprep.subr.mxu0 0.0
    %1827 = vmatpush2.xpose.msra.mxu0 0.0
    %1828 = vmatprep.subr.mxu0 0.0
    %1829 = vmatpush2.xpose.msra.mxu0 0.0
    %1830 = vmatprep.subr.mxu0 0.0
    %1831 = vmatpush2.xpose.msra.mxu0 0.0
    %1832 = vmatprep.subr.mxu0 0.0
    %1833 = vmatpush2.xpose.msra.mxu0 0.0
    %1834 = vmatprep.subr.mxu0 0.0
    %1835 = vmatpush2.xpose.msra.mxu0 0.0
    %1836 = vmatprep.subr.mxu0 0.0
    %1837 = vmatpush2.xpose.msra.mxu0 0.0
    %1838 = vmatprep.subr.mxu0 0.0
    %1839 = vmatpush2.xpose.msra.mxu0 0.0
    %1840 = vmatprep.subr.mxu0 0.0
    %1841 = vmatpush2.xpose.msra.mxu0 0.0
    %1842 = vmatprep.subr.mxu0 0.0
    %1843 = vmatpush2.xpose.msra.mxu0 0.0
    %1844 = vmatprep.subr.mxu0 0.0
    %1845 = vmatpush2.xpose.msra.mxu0 0.0
    %1846 = vmatprep.mubr.f32.mxu0 0.0
    %1847 = vmatmul.mubr.f32.gmra.mxu0 %v1778
    %v1848 = vpop.f32.mrf.mxu0
    %v1849 = vadd.f32 0.0, %v1848
    %v1850 = vpop.f32.mrf.mxu0
    %1851 = vdwg.mxu0
    %1852 = vrot.lane.b32.xlu0 %v274, 120
    %v1853 = vpop.permute.xlu0 %1852
    %1854 = vrot.lane.b32.xlu0 %v274, 88
    %v1855 = vpop.permute.xlu0 %1854
    %v1856 = vsel %vm300, %v1853, 0
    %v1858 = vsel %vm300, %v1855, 0
    %1860 = vmatprep.subr.mxu0 0.0
    %1861 = vmatpush1.xpose.msra.mxu0 0.0
    %1862 = vmatprep.subr.mxu0 0.0
    %1863 = vmatpush1.xpose.msra.mxu0 0.0
    %1864 = vmatprep.subr.mxu0 0.0
    %1865 = vmatpush1.xpose.msra.mxu0 0.0
    %1866 = vmatprep.subr.mxu0 0.0
    %1867 = vmatpush1.xpose.msra.mxu0 0.0
    %1868 = vmatprep.subr.mxu0 0.0
    %1869 = vmatpush1.xpose.msra.mxu0 0.0
    %1870 = vmatprep.subr.mxu0 0.0
    %1871 = vmatpush1.xpose.msra.mxu0 0.0
    %1872 = vmatprep.subr.mxu0 0.0
    %1873 = vmatpush1.xpose.msra.mxu0 0.0
    %1874 = vmatprep.subr.mxu0 0.0
    %1875 = vmatpush1.xpose.msra.mxu0 0.0
    %1876 = vmatprep.subr.mxu0 0.0
    %1877 = vmatpush1.xpose.msra.mxu0 0.0
    %1878 = vmatprep.subr.mxu0 0.0
    %1879 = vmatpush1.xpose.msra.mxu0 0.0
    %1880 = vmatprep.subr.mxu0 0.0
    %1881 = vmatpush1.xpose.msra.mxu0 0.0
    %1882 = vmatprep.subr.mxu0 0.0
    %1883 = vmatpush1.xpose.msra.mxu0 0.0
    %1884 = vmatprep.subr.mxu0 0.0
    %1885 = vmatpush1.xpose.msra.mxu0 0.0
    %1886 = vmatprep.subr.mxu0 0.0
    %1887 = vmatpush1.xpose.msra.mxu0 0.0
    %1888 = vmatprep.subr.mxu0 0.0
    %1889 = vmatpush1.xpose.msra.mxu0 0.0
    %1890 = vmatprep.subr.mxu0 0.0
    %1891 = vmatpush1.xpose.msra.mxu0 %v1858
    %1892 = vmatprep.subr.mxu0 0.0
    %1893 = vmatpush2.xpose.msra.mxu0 0.0
    %1894 = vmatprep.subr.mxu0 0.0
    %1895 = vmatpush2.xpose.msra.mxu0 0.0
    %1896 = vmatprep.subr.mxu0 0.0
    %1897 = vmatpush2.xpose.msra.mxu0 0.0
    %1898 = vmatprep.subr.mxu0 0.0
    %1899 = vmatpush2.xpose.msra.mxu0 0.0
    %1900 = vmatprep.subr.mxu0 0.0
    %1901 = vmatpush2.xpose.msra.mxu0 0.0
    %1902 = vmatprep.subr.mxu0 0.0
    %1903 = vmatpush2.xpose.msra.mxu0 0.0
    %1904 = vmatprep.subr.mxu0 0.0
    %1905 = vmatpush2.xpose.msra.mxu0 0.0
    %1906 = vmatprep.subr.mxu0 0.0
    %1907 = vmatpush2.xpose.msra.mxu0 0.0
    %1908 = vmatprep.subr.mxu0 0.0
    %1909 = vmatpush2.xpose.msra.mxu0 0.0
    %1910 = vmatprep.subr.mxu0 0.0
    %1911 = vmatpush2.xpose.msra.mxu0 0.0
    %1912 = vmatprep.subr.mxu0 0.0
    %1913 = vmatpush2.xpose.msra.mxu0 0.0
    %1914 = vmatprep.subr.mxu0 0.0
    %1915 = vmatpush2.xpose.msra.mxu0 0.0
    %1916 = vmatprep.subr.mxu0 0.0
    %1917 = vmatpush2.xpose.msra.mxu0 0.0
    %1918 = vmatprep.subr.mxu0 0.0
    %1919 = vmatpush2.xpose.msra.mxu0 0.0
    %1920 = vmatprep.subr.mxu0 0.0
    %1921 = vmatpush2.xpose.msra.mxu0 0.0
    %1922 = vmatprep.subr.mxu0 0.0
    %1923 = vmatpush2.xpose.msra.mxu0 0.0
    %1924 = vmatprep.mubr.f32.mxu0 0.0
    %1925 = vmatmul.mubr.f32.gmra.mxu0 %v1856
    %v1926 = vpop.f32.mrf.mxu0
    %v1927 = vadd.f32 0.0, %v1926
    %v1928 = vpop.f32.mrf.mxu0
    %1929 = vdwg.mxu0
    %1930 = vrot.lane.b32.xlu0 %v279, 120
    %v1931 = vpop.permute.xlu0 %1930
    %1932 = vrot.lane.b32.xlu0 %v279, 88
    %v1933 = vpop.permute.xlu0 %1932
    %v1934 = vsel %vm300, %v1931, 0
    %v1936 = vsel %vm300, %v1933, 0
    %1938 = vmatprep.subr.mxu0 0.0
    %1939 = vmatpush1.xpose.msra.mxu0 0.0
    %1940 = vmatprep.subr.mxu0 0.0
    %1941 = vmatpush1.xpose.msra.mxu0 0.0
    %1942 = vmatprep.subr.mxu0 0.0
    %1943 = vmatpush1.xpose.msra.mxu0 0.0
    %1944 = vmatprep.subr.mxu0 0.0
    %1945 = vmatpush1.xpose.msra.mxu0 0.0
    %1946 = vmatprep.subr.mxu0 0.0
    %1947 = vmatpush1.xpose.msra.mxu0 0.0
    %1948 = vmatprep.subr.mxu0 0.0
    %1949 = vmatpush1.xpose.msra.mxu0 0.0
    %1950 = vmatprep.subr.mxu0 0.0
    %1951 = vmatpush1.xpose.msra.mxu0 0.0
    %1952 = vmatprep.subr.mxu0 0.0
    %1953 = vmatpush1.xpose.msra.mxu0 0.0
    %1954 = vmatprep.subr.mxu0 0.0
    %1955 = vmatpush1.xpose.msra.mxu0 0.0
    %1956 = vmatprep.subr.mxu0 0.0
    %1957 = vmatpush1.xpose.msra.mxu0 0.0
    %1958 = vmatprep.subr.mxu0 0.0
    %1959 = vmatpush1.xpose.msra.mxu0 0.0
    %1960 = vmatprep.subr.mxu0 0.0
    %1961 = vmatpush1.xpose.msra.mxu0 0.0
    %1962 = vmatprep.subr.mxu0 0.0
    %1963 = vmatpush1.xpose.msra.mxu0 0.0
    %1964 = vmatprep.subr.mxu0 0.0
    %1965 = vmatpush1.xpose.msra.mxu0 0.0
    %1966 = vmatprep.subr.mxu0 0.0
    %1967 = vmatpush1.xpose.msra.mxu0 0.0
    %1968 = vmatprep.subr.mxu0 0.0
    %1969 = vmatpush1.xpose.msra.mxu0 %v1936
    %1970 = vmatprep.subr.mxu0 0.0
    %1971 = vmatpush2.xpose.msra.mxu0 0.0
    %1972 = vmatprep.subr.mxu0 0.0
    %1973 = vmatpush2.xpose.msra.mxu0 0.0
    %1974 = vmatprep.subr.mxu0 0.0
    %1975 = vmatpush2.xpose.msra.mxu0 0.0
    %1976 = vmatprep.subr.mxu0 0.0
    %1977 = vmatpush2.xpose.msra.mxu0 0.0
    %1978 = vmatprep.subr.mxu0 0.0
    %1979 = vmatpush2.xpose.msra.mxu0 0.0
    %1980 = vmatprep.subr.mxu0 0.0
    %1981 = vmatpush2.xpose.msra.mxu0 0.0
    %1982 = vmatprep.subr.mxu0 0.0
    %1983 = vmatpush2.xpose.msra.mxu0 0.0
    %1984 = vmatprep.subr.mxu0 0.0
    %1985 = vmatpush2.xpose.msra.mxu0 0.0
    %1986 = vmatprep.subr.mxu0 0.0
    %1987 = vmatpush2.xpose.msra.mxu0 0.0
    %1988 = vmatprep.subr.mxu0 0.0
    %1989 = vmatpush2.xpose.msra.mxu0 0.0
    %1990 = vmatprep.subr.mxu0 0.0
    %1991 = vmatpush2.xpose.msra.mxu0 0.0
    %1992 = vmatprep.subr.mxu0 0.0
    %1993 = vmatpush2.xpose.msra.mxu0 0.0
    %1994 = vmatprep.subr.mxu0 0.0
    %1995 = vmatpush2.xpose.msra.mxu0 0.0
    %1996 = vmatprep.subr.mxu0 0.0
    %1997 = vmatpush2.xpose.msra.mxu0 0.0
    %1998 = vmatprep.subr.mxu0 0.0
    %1999 = vmatpush2.xpose.msra.mxu0 0.0
    %2000 = vmatprep.subr.mxu0 0.0
    %2001 = vmatpush2.xpose.msra.mxu0 0.0
    %2002 = vmatprep.mubr.f32.mxu0 0.0
    %2003 = vmatmul.mubr.f32.gmra.mxu0 %v1934
    %v2004 = vpop.f32.mrf.mxu0
    %v2005 = vadd.f32 0.0, %v2004
    %v2006 = vpop.f32.mrf.mxu0
    %2007 = vdwg.mxu0
    %2008 = vrot.lane.b32.xlu0 %v284, 120
    %v2009 = vpop.permute.xlu0 %2008
    %2010 = vrot.lane.b32.xlu0 %v284, 88
    %v2011 = vpop.permute.xlu0 %2010
    %v2012 = vsel %vm300, %v2009, 0
    %v2014 = vsel %vm300, %v2011, 0
    %2016 = vmatprep.subr.mxu0 0.0
    %2017 = vmatpush1.xpose.msra.mxu0 0.0
    %2018 = vmatprep.subr.mxu0 0.0
    %2019 = vmatpush1.xpose.msra.mxu0 0.0
    %2020 = vmatprep.subr.mxu0 0.0
    %2021 = vmatpush1.xpose.msra.mxu0 0.0
    %2022 = vmatprep.subr.mxu0 0.0
    %2023 = vmatpush1.xpose.msra.mxu0 0.0
    %2024 = vmatprep.subr.mxu0 0.0
    %2025 = vmatpush1.xpose.msra.mxu0 0.0
    %2026 = vmatprep.subr.mxu0 0.0
    %2027 = vmatpush1.xpose.msra.mxu0 0.0
    %2028 = vmatprep.subr.mxu0 0.0
    %2029 = vmatpush1.xpose.msra.mxu0 0.0
    %2030 = vmatprep.subr.mxu0 0.0
    %2031 = vmatpush1.xpose.msra.mxu0 0.0
    %2032 = vmatprep.subr.mxu0 0.0
    %2033 = vmatpush1.xpose.msra.mxu0 0.0
    %2034 = vmatprep.subr.mxu0 0.0
    %2035 = vmatpush1.xpose.msra.mxu0 0.0
    %2036 = vmatprep.subr.mxu0 0.0
    %2037 = vmatpush1.xpose.msra.mxu0 0.0
    %2038 = vmatprep.subr.mxu0 0.0
    %2039 = vmatpush1.xpose.msra.mxu0 0.0
    %2040 = vmatprep.subr.mxu0 0.0
    %2041 = vmatpush1.xpose.msra.mxu0 0.0
    %2042 = vmatprep.subr.mxu0 0.0
    %2043 = vmatpush1.xpose.msra.mxu0 0.0
    %2044 = vmatprep.subr.mxu0 0.0
    %2045 = vmatpush1.xpose.msra.mxu0 0.0
    %2046 = vmatprep.subr.mxu0 0.0
    %2047 = vmatpush1.xpose.msra.mxu0 %v2014
    %2048 = vmatprep.subr.mxu0 0.0
    %2049 = vmatpush2.xpose.msra.mxu0 0.0
    %2050 = vmatprep.subr.mxu0 0.0
    %2051 = vmatpush2.xpose.msra.mxu0 0.0
    %2052 = vmatprep.subr.mxu0 0.0
    %2053 = vmatpush2.xpose.msra.mxu0 0.0
    %2054 = vmatprep.subr.mxu0 0.0
    %2055 = vmatpush2.xpose.msra.mxu0 0.0
    %2056 = vmatprep.subr.mxu0 0.0
    %2057 = vmatpush2.xpose.msra.mxu0 0.0
    %2058 = vmatprep.subr.mxu0 0.0
    %2059 = vmatpush2.xpose.msra.mxu0 0.0
    %2060 = vmatprep.subr.mxu0 0.0
    %2061 = vmatpush2.xpose.msra.mxu0 0.0
    %2062 = vmatprep.subr.mxu0 0.0
    %2063 = vmatpush2.xpose.msra.mxu0 0.0
    %2064 = vmatprep.subr.mxu0 0.0
    %2065 = vmatpush2.xpose.msra.mxu0 0.0
    %2066 = vmatprep.subr.mxu0 0.0
    %2067 = vmatpush2.xpose.msra.mxu0 0.0
    %2068 = vmatprep.subr.mxu0 0.0
    %2069 = vmatpush2.xpose.msra.mxu0 0.0
    %2070 = vmatprep.subr.mxu0 0.0
    %2071 = vmatpush2.xpose.msra.mxu0 0.0
    %2072 = vmatprep.subr.mxu0 0.0
    %2073 = vmatpush2.xpose.msra.mxu0 0.0
    %2074 = vmatprep.subr.mxu0 0.0
    %2075 = vmatpush2.xpose.msra.mxu0 0.0
    %2076 = vmatprep.subr.mxu0 0.0
    %2077 = vmatpush2.xpose.msra.mxu0 0.0
    %2078 = vmatprep.subr.mxu0 0.0
    %2079 = vmatpush2.xpose.msra.mxu0 0.0
    %2080 = vmatprep.mubr.f32.mxu0 0.0
    %2081 = vmatmul.mubr.f32.gmra.mxu0 %v2012
    %v2082 = vpop.f32.mrf.mxu0
    %v2083 = vadd.f32 0.0, %v2082
    %v2084 = vpop.f32.mrf.mxu0
    %2085 = vdwg.mxu0
    %2086 = vrot.lane.b32.xlu0 %v289, 120
    %v2087 = vpop.permute.xlu0 %2086
    %2088 = vrot.lane.b32.xlu0 %v289, 88
    %v2089 = vpop.permute.xlu0 %2088
    %v2090 = vsel %vm300, %v2087, 0
    %v2092 = vsel %vm300, %v2089, 0
    %2094 = vmatprep.subr.mxu0 0.0
    %2095 = vmatpush1.xpose.msra.mxu0 0.0
    %2096 = vmatprep.subr.mxu0 0.0
    %2097 = vmatpush1.xpose.msra.mxu0 0.0
    %2098 = vmatprep.subr.mxu0 0.0
    %2099 = vmatpush1.xpose.msra.mxu0 0.0
    %2100 = vmatprep.subr.mxu0 0.0
    %2101 = vmatpush1.xpose.msra.mxu0 0.0
    %2102 = vmatprep.subr.mxu0 0.0
    %2103 = vmatpush1.xpose.msra.mxu0 0.0
    %2104 = vmatprep.subr.mxu0 0.0
    %2105 = vmatpush1.xpose.msra.mxu0 0.0
    %2106 = vmatprep.subr.mxu0 0.0
    %2107 = vmatpush1.xpose.msra.mxu0 0.0
    %2108 = vmatprep.subr.mxu0 0.0
    %2109 = vmatpush1.xpose.msra.mxu0 0.0
    %2110 = vmatprep.subr.mxu0 0.0
    %2111 = vmatpush1.xpose.msra.mxu0 0.0
    %2112 = vmatprep.subr.mxu0 0.0
    %2113 = vmatpush1.xpose.msra.mxu0 0.0
    %2114 = vmatprep.subr.mxu0 0.0
    %2115 = vmatpush1.xpose.msra.mxu0 0.0
    %2116 = vmatprep.subr.mxu0 0.0
    %2117 = vmatpush1.xpose.msra.mxu0 0.0
    %2118 = vmatprep.subr.mxu0 0.0
    %2119 = vmatpush1.xpose.msra.mxu0 0.0
    %2120 = vmatprep.subr.mxu0 0.0
    %2121 = vmatpush1.xpose.msra.mxu0 0.0
    %2122 = vmatprep.subr.mxu0 0.0
    %2123 = vmatpush1.xpose.msra.mxu0 0.0
    %2124 = vmatprep.subr.mxu0 0.0
    %2125 = vmatpush1.xpose.msra.mxu0 %v2092
    %2126 = vmatprep.subr.mxu0 0.0
    %2127 = vmatpush2.xpose.msra.mxu0 0.0
    %2128 = vmatprep.subr.mxu0 0.0
    %2129 = vmatpush2.xpose.msra.mxu0 0.0
    %2130 = vmatprep.subr.mxu0 0.0
    %2131 = vmatpush2.xpose.msra.mxu0 0.0
    %2132 = vmatprep.subr.mxu0 0.0
    %2133 = vmatpush2.xpose.msra.mxu0 0.0
    %2134 = vmatprep.subr.mxu0 0.0
    %2135 = vmatpush2.xpose.msra.mxu0 0.0
    %2136 = vmatprep.subr.mxu0 0.0
    %2137 = vmatpush2.xpose.msra.mxu0 0.0
    %2138 = vmatprep.subr.mxu0 0.0
    %2139 = vmatpush2.xpose.msra.mxu0 0.0
    %2140 = vmatprep.subr.mxu0 0.0
    %2141 = vmatpush2.xpose.msra.mxu0 0.0
    %2142 = vmatprep.subr.mxu0 0.0
    %2143 = vmatpush2.xpose.msra.mxu0 0.0
    %2144 = vmatprep.subr.mxu0 0.0
    %2145 = vmatpush2.xpose.msra.mxu0 0.0
    %2146 = vmatprep.subr.mxu0 0.0
    %2147 = vmatpush2.xpose.msra.mxu0 0.0
    %2148 = vmatprep.subr.mxu0 0.0
    %2149 = vmatpush2.xpose.msra.mxu0 0.0
    %2150 = vmatprep.subr.mxu0 0.0
    %2151 = vmatpush2.xpose.msra.mxu0 0.0
    %2152 = vmatprep.subr.mxu0 0.0
    %2153 = vmatpush2.xpose.msra.mxu0 0.0
    %2154 = vmatprep.subr.mxu0 0.0
    %2155 = vmatpush2.xpose.msra.mxu0 0.0
    %2156 = vmatprep.subr.mxu0 0.0
    %2157 = vmatpush2.xpose.msra.mxu0 0.0
    %2158 = vmatprep.mubr.f32.mxu0 0.0
    %2159 = vmatmul.mubr.f32.gmra.mxu0 %v2090
    %v2160 = vpop.f32.mrf.mxu0
    %v2161 = vadd.f32 0.0, %v2160
    %v2162 = vpop.f32.mrf.mxu0
    %2163 = vdwg.mxu0
    %2164 = vrot.lane.b32.xlu0 %v294, 120
    %v2165 = vpop.permute.xlu0 %2164
    %2166 = vrot.lane.b32.xlu0 %v294, 88
    %v2167 = vpop.permute.xlu0 %2166
    %v2168 = vsel %vm300, %v2165, 0
    %v2170 = vsel %vm300, %v2167, 0
    %2172 = vmatprep.subr.mxu0 0.0
    %2173 = vmatpush1.xpose.msra.mxu0 0.0
    %2174 = vmatprep.subr.mxu0 0.0
    %2175 = vmatpush1.xpose.msra.mxu0 0.0
    %2176 = vmatprep.subr.mxu0 0.0
    %2177 = vmatpush1.xpose.msra.mxu0 0.0
    %2178 = vmatprep.subr.mxu0 0.0
    %2179 = vmatpush1.xpose.msra.mxu0 0.0
    %2180 = vmatprep.subr.mxu0 0.0
    %2181 = vmatpush1.xpose.msra.mxu0 0.0
    %2182 = vmatprep.subr.mxu0 0.0
    %2183 = vmatpush1.xpose.msra.mxu0 0.0
    %2184 = vmatprep.subr.mxu0 0.0
    %2185 = vmatpush1.xpose.msra.mxu0 0.0
    %2186 = vmatprep.subr.mxu0 0.0
    %2187 = vmatpush1.xpose.msra.mxu0 0.0
    %2188 = vmatprep.subr.mxu0 0.0
    %2189 = vmatpush1.xpose.msra.mxu0 0.0
    %2190 = vmatprep.subr.mxu0 0.0
    %2191 = vmatpush1.xpose.msra.mxu0 0.0
    %2192 = vmatprep.subr.mxu0 0.0
    %2193 = vmatpush1.xpose.msra.mxu0 0.0
    %2194 = vmatprep.subr.mxu0 0.0
    %2195 = vmatpush1.xpose.msra.mxu0 0.0
    %2196 = vmatprep.subr.mxu0 0.0
    %2197 = vmatpush1.xpose.msra.mxu0 0.0
    %2198 = vmatprep.subr.mxu0 0.0
    %2199 = vmatpush1.xpose.msra.mxu0 0.0
    %2200 = vmatprep.subr.mxu0 0.0
    %2201 = vmatpush1.xpose.msra.mxu0 0.0
    %2202 = vmatprep.subr.mxu0 0.0
    %2203 = vmatpush1.xpose.msra.mxu0 %v2170
    %2204 = vmatprep.subr.mxu0 0.0
    %2205 = vmatpush2.xpose.msra.mxu0 0.0
    %2206 = vmatprep.subr.mxu0 0.0
    %2207 = vmatpush2.xpose.msra.mxu0 0.0
    %2208 = vmatprep.subr.mxu0 0.0
    %2209 = vmatpush2.xpose.msra.mxu0 0.0
    %2210 = vmatprep.subr.mxu0 0.0
    %2211 = vmatpush2.xpose.msra.mxu0 0.0
    %2212 = vmatprep.subr.mxu0 0.0
    %2213 = vmatpush2.xpose.msra.mxu0 0.0
    %2214 = vmatprep.subr.mxu0 0.0
    %2215 = vmatpush2.xpose.msra.mxu0 0.0
    %2216 = vmatprep.subr.mxu0 0.0
    %2217 = vmatpush2.xpose.msra.mxu0 0.0
    %2218 = vmatprep.subr.mxu0 0.0
    %2219 = vmatpush2.xpose.msra.mxu0 0.0
    %2220 = vmatprep.subr.mxu0 0.0
    %2221 = vmatpush2.xpose.msra.mxu0 0.0
    %2222 = vmatprep.subr.mxu0 0.0
    %2223 = vmatpush2.xpose.msra.mxu0 0.0
    %2224 = vmatprep.subr.mxu0 0.0
    %2225 = vmatpush2.xpose.msra.mxu0 0.0
    %2226 = vmatprep.subr.mxu0 0.0
    %2227 = vmatpush2.xpose.msra.mxu0 0.0
    %2228 = vmatprep.subr.mxu0 0.0
    %2229 = vmatpush2.xpose.msra.mxu0 0.0
    %2230 = vmatprep.subr.mxu0 0.0
    %2231 = vmatpush2.xpose.msra.mxu0 0.0
    %2232 = vmatprep.subr.mxu0 0.0
    %2233 = vmatpush2.xpose.msra.mxu0 0.0
    %2234 = vmatprep.subr.mxu0 0.0
    %2235 = vmatpush2.xpose.msra.mxu0 0.0
    %2236 = vmatprep.mubr.f32.mxu0 0.0
    %2237 = vmatmul.mubr.f32.gmra.mxu0 %v2168
    %v2238 = vpop.f32.mrf.mxu0
    %v2239 = vadd.f32 0.0, %v2238
    %v2240 = vpop.f32.mrf.mxu0
    %2241 = vdwg.mxu0
    %v2242 = vsel %vm300, %v1693, -inf
    %2243 = vmax.xlane.f32.xlu0 %v2242
    %v2244 = vpop.xlane.xlu0 %2243
    %v2245 = vsel %vm300, %v1771, -inf
    %2246 = vmax.xlane.f32.xlu0 %v2245
    %v2247 = vpop.xlane.xlu0 %2246
    %v2248 = vsel %vm300, %v1849, -inf
    %2249 = vmax.xlane.f32.xlu0 %v2248
    %v2250 = vpop.xlane.xlu0 %2249
    %v2251 = vsel %vm300, %v1927, -inf
    %2252 = vmax.xlane.f32.xlu0 %v2251
    %v2253 = vpop.xlane.xlu0 %2252
    %v2254 = vsel %vm300, %v2005, -inf
    %2255 = vmax.xlane.f32.xlu0 %v2254
    %v2256 = vpop.xlane.xlu0 %2255
    %v2257 = vsel %vm300, %v2083, -inf
    %2258 = vmax.xlane.f32.xlu0 %v2257
    %v2259 = vpop.xlane.xlu0 %2258
    %v2260 = vsel %vm300, %v2161, -inf
    %2261 = vmax.xlane.f32.xlu0 %v2260
    %v2262 = vpop.xlane.xlu0 %2261
    %v2263 = vsel %vm300, %v2239, -inf
    %2264 = vmax.xlane.f32.xlu0 %v2263
    %v2265 = vpop.xlane.xlu0 %2264
    %v2266 = vsub.f32 %v1693, %v2244
    %v2267 = vsub.f32 %v1771, %v2247
    %v2268 = vsub.f32 %v1849, %v2250
    %v2269 = vsub.f32 %v1927, %v2253
    %v2270 = vsub.f32 %v2005, %v2256
    %v2271 = vsub.f32 %v2083, %v2259
    %v2272 = vsub.f32 %v2161, %v2262
    %v2273 = vsub.f32 %v2239, %v2265
    %v2274 = vmul.f32 %v2266, 1.442695
    %v2275 = vpow.pop %v2274
    %v2276 = vmul.f32 %v2267, 1.442695
    %v2277 = vpow.pop %v2276
    %v2278 = vmul.f32 %v2268, 1.442695
    %v2279 = vpow.pop %v2278
    %v2280 = vmul.f32 %v2269, 1.442695
    %v2281 = vpow.pop %v2280
    %v2282 = vmul.f32 %v2270, 1.442695
    %v2283 = vpow.pop %v2282
    %v2284 = vmul.f32 %v2271, 1.442695
    %v2285 = vpow.pop %v2284
    %v2286 = vmul.f32 %v2272, 1.442695
    %v2287 = vpow.pop %v2286
    %v2288 = vmul.f32 %v2273, 1.442695
    %v2289 = vpow.pop %v2288
    %v2290 = vsel %vm300, %v2275, 0.0
    %2291 = vadd.xlane.f32.xlu0 %v2290
    %v2292 = vpop.xlane.xlu0 %2291
    %v2293 = vsel %vm300, %v2277, 0.0
    %2294 = vadd.xlane.f32.xlu0 %v2293
    %v2295 = vpop.xlane.xlu0 %2294
    %v2296 = vsel %vm300, %v2279, 0.0
    %2297 = vadd.xlane.f32.xlu0 %v2296
    %v2298 = vpop.xlane.xlu0 %2297
    %v2299 = vsel %vm300, %v2281, 0.0
    %2300 = vadd.xlane.f32.xlu0 %v2299
    %v2301 = vpop.xlane.xlu0 %2300
    %v2302 = vsel %vm300, %v2283, 0.0
    %2303 = vadd.xlane.f32.xlu0 %v2302
    %v2304 = vpop.xlane.xlu0 %2303
    %v2305 = vsel %vm300, %v2285, 0.0
    %2306 = vadd.xlane.f32.xlu0 %v2305
    %v2307 = vpop.xlane.xlu0 %2306
    %v2308 = vsel %vm300, %v2287, 0.0
    %2309 = vadd.xlane.f32.xlu0 %v2308
    %v2310 = vpop.xlane.xlu0 %2309
    %v2311 = vsel %vm300, %v2289, 0.0
    %2312 = vadd.xlane.f32.xlu0 %v2311
    %v2313 = vpop.xlane.xlu0 %2312
    %v2314 = vrcp.pop %v2292
    %v2315 = vmul.f32 %v2275, %v2314
    %v2316 = vrcp.pop %v2295
    %v2317 = vmul.f32 %v2277, %v2316
    %v2318 = vrcp.pop %v2298
    %v2319 = vmul.f32 %v2279, %v2318
    %v2320 = vrcp.pop %v2301
    %v2321 = vmul.f32 %v2281, %v2320
    %v2322 = vrcp.pop %v2304
    %v2323 = vmul.f32 %v2283, %v2322
    %v2324 = vrcp.pop %v2307
    %v2325 = vmul.f32 %v2285, %v2324
    %v2326 = vrcp.pop %v2310
    %v2327 = vmul.f32 %v2287, %v2326
    %v2328 = vrcp.pop %v2313
    %v2329 = vmul.f32 %v2289, %v2328
    %2330 = vrot.lane.b32.xlu0 %v259, 56
    %v2331 = vpop.permute.xlu0 %2330
    %v2334 = vsel %vm300, %v2315, 0
    %2336 = vmatprep.subr.mxu0 0.0
    %2337 = vmatpush1.msra.mxu0 0.0
    %2338 = vmatprep.subr.mxu0 0.0
    %2339 = vmatpush1.msra.mxu0 0.0
    %2340 = vmatprep.subr.mxu0 0.0
    %2341 = vmatpush1.msra.mxu0 0.0
    %2342 = vmatprep.subr.mxu0 0.0
    %2343 = vmatpush1.msra.mxu0 0.0
    %2344 = vmatprep.subr.mxu0 0.0
    %2345 = vmatpush1.msra.mxu0 0.0
    %2346 = vmatprep.subr.mxu0 0.0
    %2347 = vmatpush1.msra.mxu0 0.0
    %2348 = vmatprep.subr.mxu0 0.0
    %2349 = vmatpush1.msra.mxu0 0.0
    %2350 = vmatprep.subr.mxu0 0.0
    %2351 = vmatpush1.msra.mxu0 0.0
    %2352 = vmatprep.subr.mxu0 0.0
    %2353 = vmatpush1.msra.mxu0 0.0
    %2354 = vmatprep.subr.mxu0 0.0
    %2355 = vmatpush1.msra.mxu0 0.0
    %2356 = vmatprep.subr.mxu0 0.0
    %2357 = vmatpush1.msra.mxu0 0.0
    %2358 = vmatprep.subr.mxu0 0.0
    %2359 = vmatpush1.msra.mxu0 0.0
    %2360 = vmatprep.subr.mxu0 0.0
    %2361 = vmatpush1.msra.mxu0 0.0
    %2362 = vmatprep.subr.mxu0 0.0
    %2363 = vmatpush1.msra.mxu0 0.0
    %2364 = vmatprep.subr.mxu0 0.0
    %2365 = vmatpush1.msra.mxu0 0.0
    %2366 = vmatprep.subr.mxu0 0.0
    %2367 = vmatpush1.msra.mxu0 %v2331
    %2368 = vmatprep.subr.mxu0 0.0
    %2369 = vmatpush2.msra.mxu0 0.0
    %2370 = vmatprep.subr.mxu0 0.0
    %2371 = vmatpush2.msra.mxu0 0.0
    %2372 = vmatprep.subr.mxu0 0.0
    %2373 = vmatpush2.msra.mxu0 0.0
    %2374 = vmatprep.subr.mxu0 0.0
    %2375 = vmatpush2.msra.mxu0 0.0
    %2376 = vmatprep.subr.mxu0 0.0
    %2377 = vmatpush2.msra.mxu0 0.0
    %2378 = vmatprep.subr.mxu0 0.0
    %2379 = vmatpush2.msra.mxu0 0.0
    %2380 = vmatprep.subr.mxu0 0.0
    %2381 = vmatpush2.msra.mxu0 0.0
    %2382 = vmatprep.subr.mxu0 0.0
    %2383 = vmatpush2.msra.mxu0 0.0
    %2384 = vmatprep.subr.mxu0 0.0
    %2385 = vmatpush2.msra.mxu0 0.0
    %2386 = vmatprep.subr.mxu0 0.0
    %2387 = vmatpush2.msra.mxu0 0.0
    %2388 = vmatprep.subr.mxu0 0.0
    %2389 = vmatpush2.msra.mxu0 0.0
    %2390 = vmatprep.subr.mxu0 0.0
    %2391 = vmatpush2.msra.mxu0 0.0
    %2392 = vmatprep.subr.mxu0 0.0
    %2393 = vmatpush2.msra.mxu0 0.0
    %2394 = vmatprep.subr.mxu0 0.0
    %2395 = vmatpush2.msra.mxu0 0.0
    %2396 = vmatprep.subr.mxu0 0.0
    %2397 = vmatpush2.msra.mxu0 0.0
    %2398 = vmatprep.subr.mxu0 0.0
    %2399 = vmatpush2.msra.mxu0 0.0
    %2400 = vmatprep.mubr.f32.mxu0 0.0
    %2401 = vmatmul.mubr.f32.gmra.mxu0 %v2334
    %v2402 = vpop.f32.mrf.mxu0
    %v2403 = vadd.f32 0.0, %v2402
    %v2404 = vpop.f32.mrf.mxu0
    %2405 = vdwg.mxu0
    %2406 = vrot.lane.b32.xlu0 %v264, 56
    %v2407 = vpop.permute.xlu0 %2406
    %v2410 = vsel %vm300, %v2317, 0
    %2412 = vmatprep.subr.mxu0 0.0
    %2413 = vmatpush1.msra.mxu0 0.0
    %2414 = vmatprep.subr.mxu0 0.0
    %2415 = vmatpush1.msra.mxu0 0.0
    %2416 = vmatprep.subr.mxu0 0.0
    %2417 = vmatpush1.msra.mxu0 0.0
    %2418 = vmatprep.subr.mxu0 0.0
    %2419 = vmatpush1.msra.mxu0 0.0
    %2420 = vmatprep.subr.mxu0 0.0
    %2421 = vmatpush1.msra.mxu0 0.0
    %2422 = vmatprep.subr.mxu0 0.0
    %2423 = vmatpush1.msra.mxu0 0.0
    %2424 = vmatprep.subr.mxu0 0.0
    %2425 = vmatpush1.msra.mxu0 0.0
    %2426 = vmatprep.subr.mxu0 0.0
    %2427 = vmatpush1.msra.mxu0 0.0
    %2428 = vmatprep.subr.mxu0 0.0
    %2429 = vmatpush1.msra.mxu0 0.0
    %2430 = vmatprep.subr.mxu0 0.0
    %2431 = vmatpush1.msra.mxu0 0.0
    %2432 = vmatprep.subr.mxu0 0.0
    %2433 = vmatpush1.msra.mxu0 0.0
    %2434 = vmatprep.subr.mxu0 0.0
    %2435 = vmatpush1.msra.mxu0 0.0
    %2436 = vmatprep.subr.mxu0 0.0
    %2437 = vmatpush1.msra.mxu0 0.0
    %2438 = vmatprep.subr.mxu0 0.0
    %2439 = vmatpush1.msra.mxu0 0.0
    %2440 = vmatprep.subr.mxu0 0.0
    %2441 = vmatpush1.msra.mxu0 0.0
    %2442 = vmatprep.subr.mxu0 0.0
    %2443 = vmatpush1.msra.mxu0 %v2407
    %2444 = vmatprep.subr.mxu0 0.0
    %2445 = vmatpush2.msra.mxu0 0.0
    %2446 = vmatprep.subr.mxu0 0.0
    %2447 = vmatpush2.msra.mxu0 0.0
    %2448 = vmatprep.subr.mxu0 0.0
    %2449 = vmatpush2.msra.mxu0 0.0
    %2450 = vmatprep.subr.mxu0 0.0
    %2451 = vmatpush2.msra.mxu0 0.0
    %2452 = vmatprep.subr.mxu0 0.0
    %2453 = vmatpush2.msra.mxu0 0.0
    %2454 = vmatprep.subr.mxu0 0.0
    %2455 = vmatpush2.msra.mxu0 0.0
    %2456 = vmatprep.subr.mxu0 0.0
    %2457 = vmatpush2.msra.mxu0 0.0
    %2458 = vmatprep.subr.mxu0 0.0
    %2459 = vmatpush2.msra.mxu0 0.0
    %2460 = vmatprep.subr.mxu0 0.0
    %2461 = vmatpush2.msra.mxu0 0.0
    %2462 = vmatprep.subr.mxu0 0.0
    %2463 = vmatpush2.msra.mxu0 0.0
    %2464 = vmatprep.subr.mxu0 0.0
    %2465 = vmatpush2.msra.mxu0 0.0
    %2466 = vmatprep.subr.mxu0 0.0
    %2467 = vmatpush2.msra.mxu0 0.0
    %2468 = vmatprep.subr.mxu0 0.0
    %2469 = vmatpush2.msra.mxu0 0.0
    %2470 = vmatprep.subr.mxu0 0.0
    %2471 = vmatpush2.msra.mxu0 0.0
    %2472 = vmatprep.subr.mxu0 0.0
    %2473 = vmatpush2.msra.mxu0 0.0
    %2474 = vmatprep.subr.mxu0 0.0
    %2475 = vmatpush2.msra.mxu0 0.0
    %2476 = vmatprep.mubr.f32.mxu0 0.0
    %2477 = vmatmul.mubr.f32.gmra.mxu0 %v2410
    %v2478 = vpop.f32.mrf.mxu0
    %v2479 = vadd.f32 0.0, %v2478
    %v2480 = vpop.f32.mrf.mxu0
    %2481 = vdwg.mxu0
    %2482 = vrot.lane.b32.xlu0 %v269, 56
    %v2483 = vpop.permute.xlu0 %2482
    %v2486 = vsel %vm300, %v2319, 0
    %2488 = vmatprep.subr.mxu0 0.0
    %2489 = vmatpush1.msra.mxu0 0.0
    %2490 = vmatprep.subr.mxu0 0.0
    %2491 = vmatpush1.msra.mxu0 0.0
    %2492 = vmatprep.subr.mxu0 0.0
    %2493 = vmatpush1.msra.mxu0 0.0
    %2494 = vmatprep.subr.mxu0 0.0
    %2495 = vmatpush1.msra.mxu0 0.0
    %2496 = vmatprep.subr.mxu0 0.0
    %2497 = vmatpush1.msra.mxu0 0.0
    %2498 = vmatprep.subr.mxu0 0.0
    %2499 = vmatpush1.msra.mxu0 0.0
    %2500 = vmatprep.subr.mxu0 0.0
    %2501 = vmatpush1.msra.mxu0 0.0
    %2502 = vmatprep.subr.mxu0 0.0
    %2503 = vmatpush1.msra.mxu0 0.0
    %2504 = vmatprep.subr.mxu0 0.0
    %2505 = vmatpush1.msra.mxu0 0.0
    %2506 = vmatprep.subr.mxu0 0.0
    %2507 = vmatpush1.msra.mxu0 0.0
    %2508 = vmatprep.subr.mxu0 0.0
    %2509 = vmatpush1.msra.mxu0 0.0
    %2510 = vmatprep.subr.mxu0 0.0
    %2511 = vmatpush1.msra.mxu0 0.0
    %2512 = vmatprep.subr.mxu0 0.0
    %2513 = vmatpush1.msra.mxu0 0.0
    %2514 = vmatprep.subr.mxu0 0.0
    %2515 = vmatpush1.msra.mxu0 0.0
    %2516 = vmatprep.subr.mxu0 0.0
    %2517 = vmatpush1.msra.mxu0 0.0
    %2518 = vmatprep.subr.mxu0 0.0
    %2519 = vmatpush1.msra.mxu0 %v2483
    %2520 = vmatprep.subr.mxu0 0.0
    %2521 = vmatpush2.msra.mxu0 0.0
    %2522 = vmatprep.subr.mxu0 0.0
    %2523 = vmatpush2.msra.mxu0 0.0
    %2524 = vmatprep.subr.mxu0 0.0
    %2525 = vmatpush2.msra.mxu0 0.0
    %2526 = vmatprep.subr.mxu0 0.0
    %2527 = vmatpush2.msra.mxu0 0.0
    %2528 = vmatprep.subr.mxu0 0.0
    %2529 = vmatpush2.msra.mxu0 0.0
    %2530 = vmatprep.subr.mxu0 0.0
    %2531 = vmatpush2.msra.mxu0 0.0
    %2532 = vmatprep.subr.mxu0 0.0
    %2533 = vmatpush2.msra.mxu0 0.0
    %2534 = vmatprep.subr.mxu0 0.0
    %2535 = vmatpush2.msra.mxu0 0.0
    %2536 = vmatprep.subr.mxu0 0.0
    %2537 = vmatpush2.msra.mxu0 0.0
    %2538 = vmatprep.subr.mxu0 0.0
    %2539 = vmatpush2.msra.mxu0 0.0
    %2540 = vmatprep.subr.mxu0 0.0
    %2541 = vmatpush2.msra.mxu0 0.0
    %2542 = vmatprep.subr.mxu0 0.0
    %2543 = vmatpush2.msra.mxu0 0.0
    %2544 = vmatprep.subr.mxu0 0.0
    %2545 = vmatpush2.msra.mxu0 0.0
    %2546 = vmatprep.subr.mxu0 0.0
    %2547 = vmatpush2.msra.mxu0 0.0
    %2548 = vmatprep.subr.mxu0 0.0
    %2549 = vmatpush2.msra.mxu0 0.0
    %2550 = vmatprep.subr.mxu0 0.0
    %2551 = vmatpush2.msra.mxu0 0.0
    %2552 = vmatprep.mubr.f32.mxu0 0.0
    %2553 = vmatmul.mubr.f32.gmra.mxu0 %v2486
    %v2554 = vpop.f32.mrf.mxu0
    %v2555 = vadd.f32 0.0, %v2554
    %v2556 = vpop.f32.mrf.mxu0
    %2557 = vdwg.mxu0
    %2558 = vrot.lane.b32.xlu0 %v274, 56
    %v2559 = vpop.permute.xlu0 %2558
    %v2562 = vsel %vm300, %v2321, 0
    %2564 = vmatprep.subr.mxu0 0.0
    %2565 = vmatpush1.msra.mxu0 0.0
    %2566 = vmatprep.subr.mxu0 0.0
    %2567 = vmatpush1.msra.mxu0 0.0
    %2568 = vmatprep.subr.mxu0 0.0
    %2569 = vmatpush1.msra.mxu0 0.0
    %2570 = vmatprep.subr.mxu0 0.0
    %2571 = vmatpush1.msra.mxu0 0.0
    %2572 = vmatprep.subr.mxu0 0.0
    %2573 = vmatpush1.msra.mxu0 0.0
    %2574 = vmatprep.subr.mxu0 0.0
    %2575 = vmatpush1.msra.mxu0 0.0
    %2576 = vmatprep.subr.mxu0 0.0
    %2577 = vmatpush1.msra.mxu0 0.0
    %2578 = vmatprep.subr.mxu0 0.0
    %2579 = vmatpush1.msra.mxu0 0.0
    %2580 = vmatprep.subr.mxu0 0.0
    %2581 = vmatpush1.msra.mxu0 0.0
    %2582 = vmatprep.subr.mxu0 0.0
    %2583 = vmatpush1.msra.mxu0 0.0
    %2584 = vmatprep.subr.mxu0 0.0
    %2585 = vmatpush1.msra.mxu0 0.0
    %2586 = vmatprep.subr.mxu0 0.0
    %2587 = vmatpush1.msra.mxu0 0.0
    %2588 = vmatprep.subr.mxu0 0.0
    %2589 = vmatpush1.msra.mxu0 0.0
    %2590 = vmatprep.subr.mxu0 0.0
    %2591 = vmatpush1.msra.mxu0 0.0
    %2592 = vmatprep.subr.mxu0 0.0
    %2593 = vmatpush1.msra.mxu0 0.0
    %2594 = vmatprep.subr.mxu0 0.0
    %2595 = vmatpush1.msra.mxu0 %v2559
    %2596 = vmatprep.subr.mxu0 0.0
    %2597 = vmatpush2.msra.mxu0 0.0
    %2598 = vmatprep.subr.mxu0 0.0
    %2599 = vmatpush2.msra.mxu0 0.0
    %2600 = vmatprep.subr.mxu0 0.0
    %2601 = vmatpush2.msra.mxu0 0.0
    %2602 = vmatprep.subr.mxu0 0.0
    %2603 = vmatpush2.msra.mxu0 0.0
    %2604 = vmatprep.subr.mxu0 0.0
    %2605 = vmatpush2.msra.mxu0 0.0
    %2606 = vmatprep.subr.mxu0 0.0
    %2607 = vmatpush2.msra.mxu0 0.0
    %2608 = vmatprep.subr.mxu0 0.0
    %2609 = vmatpush2.msra.mxu0 0.0
    %2610 = vmatprep.subr.mxu0 0.0
    %2611 = vmatpush2.msra.mxu0 0.0
    %2612 = vmatprep.subr.mxu0 0.0
    %2613 = vmatpush2.msra.mxu0 0.0
    %2614 = vmatprep.subr.mxu0 0.0
    %2615 = vmatpush2.msra.mxu0 0.0
    %2616 = vmatprep.subr.mxu0 0.0
    %2617 = vmatpush2.msra.mxu0 0.0
    %2618 = vmatprep.subr.mxu0 0.0
    %2619 = vmatpush2.msra.mxu0 0.0
    %2620 = vmatprep.subr.mxu0 0.0
    %2621 = vmatpush2.msra.mxu0 0.0
    %2622 = vmatprep.subr.mxu0 0.0
    %2623 = vmatpush2.msra.mxu0 0.0
    %2624 = vmatprep.subr.mxu0 0.0
    %2625 = vmatpush2.msra.mxu0 0.0
    %2626 = vmatprep.subr.mxu0 0.0
    %2627 = vmatpush2.msra.mxu0 0.0
    %2628 = vmatprep.mubr.f32.mxu0 0.0
    %2629 = vmatmul.mubr.f32.gmra.mxu0 %v2562
    %v2630 = vpop.f32.mrf.mxu0
    %v2631 = vadd.f32 0.0, %v2630
    %v2632 = vpop.f32.mrf.mxu0
    %2633 = vdwg.mxu0
    %2634 = vrot.lane.b32.xlu0 %v279, 56
    %v2635 = vpop.permute.xlu0 %2634
    %v2638 = vsel %vm300, %v2323, 0
    %2640 = vmatprep.subr.mxu0 0.0
    %2641 = vmatpush1.msra.mxu0 0.0
    %2642 = vmatprep.subr.mxu0 0.0
    %2643 = vmatpush1.msra.mxu0 0.0
    %2644 = vmatprep.subr.mxu0 0.0
    %2645 = vmatpush1.msra.mxu0 0.0
    %2646 = vmatprep.subr.mxu0 0.0
    %2647 = vmatpush1.msra.mxu0 0.0
    %2648 = vmatprep.subr.mxu0 0.0
    %2649 = vmatpush1.msra.mxu0 0.0
    %2650 = vmatprep.subr.mxu0 0.0
    %2651 = vmatpush1.msra.mxu0 0.0
    %2652 = vmatprep.subr.mxu0 0.0
    %2653 = vmatpush1.msra.mxu0 0.0
    %2654 = vmatprep.subr.mxu0 0.0
    %2655 = vmatpush1.msra.mxu0 0.0
    %2656 = vmatprep.subr.mxu0 0.0
    %2657 = vmatpush1.msra.mxu0 0.0
    %2658 = vmatprep.subr.mxu0 0.0
    %2659 = vmatpush1.msra.mxu0 0.0
    %2660 = vmatprep.subr.mxu0 0.0
    %2661 = vmatpush1.msra.mxu0 0.0
    %2662 = vmatprep.subr.mxu0 0.0
    %2663 = vmatpush1.msra.mxu0 0.0
    %2664 = vmatprep.subr.mxu0 0.0
    %2665 = vmatpush1.msra.mxu0 0.0
    %2666 = vmatprep.subr.mxu0 0.0
    %2667 = vmatpush1.msra.mxu0 0.0
    %2668 = vmatprep.subr.mxu0 0.0
    %2669 = vmatpush1.msra.mxu0 0.0
    %2670 = vmatprep.subr.mxu0 0.0
    %2671 = vmatpush1.msra.mxu0 %v2635
    %2672 = vmatprep.subr.mxu0 0.0
    %2673 = vmatpush2.msra.mxu0 0.0
    %2674 = vmatprep.subr.mxu0 0.0
    %2675 = vmatpush2.msra.mxu0 0.0
    %2676 = vmatprep.subr.mxu0 0.0
    %2677 = vmatpush2.msra.mxu0 0.0
    %2678 = vmatprep.subr.mxu0 0.0
    %2679 = vmatpush2.msra.mxu0 0.0
    %2680 = vmatprep.subr.mxu0 0.0
    %2681 = vmatpush2.msra.mxu0 0.0
    %2682 = vmatprep.subr.mxu0 0.0
    %2683 = vmatpush2.msra.mxu0 0.0
    %2684 = vmatprep.subr.mxu0 0.0
    %2685 = vmatpush2.msra.mxu0 0.0
    %2686 = vmatprep.subr.mxu0 0.0
    %2687 = vmatpush2.msra.mxu0 0.0
    %2688 = vmatprep.subr.mxu0 0.0
    %2689 = vmatpush2.msra.mxu0 0.0
    %2690 = vmatprep.subr.mxu0 0.0
    %2691 = vmatpush2.msra.mxu0 0.0
    %2692 = vmatprep.subr.mxu0 0.0
    %2693 = vmatpush2.msra.mxu0 0.0
    %2694 = vmatprep.subr.mxu0 0.0
    %2695 = vmatpush2.msra.mxu0 0.0
    %2696 = vmatprep.subr.mxu0 0.0
    %2697 = vmatpush2.msra.mxu0 0.0
    %2698 = vmatprep.subr.mxu0 0.0
    %2699 = vmatpush2.msra.mxu0 0.0
    %2700 = vmatprep.subr.mxu0 0.0
    %2701 = vmatpush2.msra.mxu0 0.0
    %2702 = vmatprep.subr.mxu0 0.0
    %2703 = vmatpush2.msra.mxu0 0.0
    %2704 = vmatprep.mubr.f32.mxu0 0.0
    %2705 = vmatmul.mubr.f32.gmra.mxu0 %v2638
    %v2706 = vpop.f32.mrf.mxu0
    %v2707 = vadd.f32 0.0, %v2706
    %v2708 = vpop.f32.mrf.mxu0
    %2709 = vdwg.mxu0
    %2710 = vrot.lane.b32.xlu0 %v284, 56
    %v2711 = vpop.permute.xlu0 %2710
    %v2714 = vsel %vm300, %v2325, 0
    %2716 = vmatprep.subr.mxu0 0.0
    %2717 = vmatpush1.msra.mxu0 0.0
    %2718 = vmatprep.subr.mxu0 0.0
    %2719 = vmatpush1.msra.mxu0 0.0
    %2720 = vmatprep.subr.mxu0 0.0
    %2721 = vmatpush1.msra.mxu0 0.0
    %2722 = vmatprep.subr.mxu0 0.0
    %2723 = vmatpush1.msra.mxu0 0.0
    %2724 = vmatprep.subr.mxu0 0.0
    %2725 = vmatpush1.msra.mxu0 0.0
    %2726 = vmatprep.subr.mxu0 0.0
    %2727 = vmatpush1.msra.mxu0 0.0
    %2728 = vmatprep.subr.mxu0 0.0
    %2729 = vmatpush1.msra.mxu0 0.0
    %2730 = vmatprep.subr.mxu0 0.0
    %2731 = vmatpush1.msra.mxu0 0.0
    %2732 = vmatprep.subr.mxu0 0.0
    %2733 = vmatpush1.msra.mxu0 0.0
    %2734 = vmatprep.subr.mxu0 0.0
    %2735 = vmatpush1.msra.mxu0 0.0
    %2736 = vmatprep.subr.mxu0 0.0
    %2737 = vmatpush1.msra.mxu0 0.0
    %2738 = vmatprep.subr.mxu0 0.0
    %2739 = vmatpush1.msra.mxu0 0.0
    %2740 = vmatprep.subr.mxu0 0.0
    %2741 = vmatpush1.msra.mxu0 0.0
    %2742 = vmatprep.subr.mxu0 0.0
    %2743 = vmatpush1.msra.mxu0 0.0
    %2744 = vmatprep.subr.mxu0 0.0
    %2745 = vmatpush1.msra.mxu0 0.0
    %2746 = vmatprep.subr.mxu0 0.0
    %2747 = vmatpush1.msra.mxu0 %v2711
    %2748 = vmatprep.subr.mxu0 0.0
    %2749 = vmatpush2.msra.mxu0 0.0
    %2750 = vmatprep.subr.mxu0 0.0
    %2751 = vmatpush2.msra.mxu0 0.0
    %2752 = vmatprep.subr.mxu0 0.0
    %2753 = vmatpush2.msra.mxu0 0.0
    %2754 = vmatprep.subr.mxu0 0.0
    %2755 = vmatpush2.msra.mxu0 0.0
    %2756 = vmatprep.subr.mxu0 0.0
    %2757 = vmatpush2.msra.mxu0 0.0
    %2758 = vmatprep.subr.mxu0 0.0
    %2759 = vmatpush2.msra.mxu0 0.0
    %2760 = vmatprep.subr.mxu0 0.0
    %2761 = vmatpush2.msra.mxu0 0.0
    %2762 = vmatprep.subr.mxu0 0.0
    %2763 = vmatpush2.msra.mxu0 0.0
    %2764 = vmatprep.subr.mxu0 0.0
    %2765 = vmatpush2.msra.mxu0 0.0
    %2766 = vmatprep.subr.mxu0 0.0
    %2767 = vmatpush2.msra.mxu0 0.0
    %2768 = vmatprep.subr.mxu0 0.0
    %2769 = vmatpush2.msra.mxu0 0.0
    %2770 = vmatprep.subr.mxu0 0.0
    %2771 = vmatpush2.msra.mxu0 0.0
    %2772 = vmatprep.subr.mxu0 0.0
    %2773 = vmatpush2.msra.mxu0 0.0
    %2774 = vmatprep.subr.mxu0 0.0
    %2775 = vmatpush2.msra.mxu0 0.0
    %2776 = vmatprep.subr.mxu0 0.0
    %2777 = vmatpush2.msra.mxu0 0.0
    %2778 = vmatprep.subr.mxu0 0.0
    %2779 = vmatpush2.msra.mxu0 0.0
    %2780 = vmatprep.mubr.f32.mxu0 0.0
    %2781 = vmatmul.mubr.f32.gmra.mxu0 %v2714
    %v2782 = vpop.f32.mrf.mxu0
    %v2783 = vadd.f32 0.0, %v2782
    %v2784 = vpop.f32.mrf.mxu0
    %2785 = vdwg.mxu0
    %2786 = vrot.lane.b32.xlu0 %v289, 56
    %v2787 = vpop.permute.xlu0 %2786
    %v2790 = vsel %vm300, %v2327, 0
    %2792 = vmatprep.subr.mxu0 0.0
    %2793 = vmatpush1.msra.mxu0 0.0
    %2794 = vmatprep.subr.mxu0 0.0
    %2795 = vmatpush1.msra.mxu0 0.0
    %2796 = vmatprep.subr.mxu0 0.0
    %2797 = vmatpush1.msra.mxu0 0.0
    %2798 = vmatprep.subr.mxu0 0.0
    %2799 = vmatpush1.msra.mxu0 0.0
    %2800 = vmatprep.subr.mxu0 0.0
    %2801 = vmatpush1.msra.mxu0 0.0
    %2802 = vmatprep.subr.mxu0 0.0
    %2803 = vmatpush1.msra.mxu0 0.0
    %2804 = vmatprep.subr.mxu0 0.0
    %2805 = vmatpush1.msra.mxu0 0.0
    %2806 = vmatprep.subr.mxu0 0.0
    %2807 = vmatpush1.msra.mxu0 0.0
    %2808 = vmatprep.subr.mxu0 0.0
    %2809 = vmatpush1.msra.mxu0 0.0
    %2810 = vmatprep.subr.mxu0 0.0
    %2811 = vmatpush1.msra.mxu0 0.0
    %2812 = vmatprep.subr.mxu0 0.0
    %2813 = vmatpush1.msra.mxu0 0.0
    %2814 = vmatprep.subr.mxu0 0.0
    %2815 = vmatpush1.msra.mxu0 0.0
    %2816 = vmatprep.subr.mxu0 0.0
    %2817 = vmatpush1.msra.mxu0 0.0
    %2818 = vmatprep.subr.mxu0 0.0
    %2819 = vmatpush1.msra.mxu0 0.0
    %2820 = vmatprep.subr.mxu0 0.0
    %2821 = vmatpush1.msra.mxu0 0.0
    %2822 = vmatprep.subr.mxu0 0.0
    %2823 = vmatpush1.msra.mxu0 %v2787
    %2824 = vmatprep.subr.mxu0 0.0
    %2825 = vmatpush2.msra.mxu0 0.0
    %2826 = vmatprep.subr.mxu0 0.0
    %2827 = vmatpush2.msra.mxu0 0.0
    %2828 = vmatprep.subr.mxu0 0.0
    %2829 = vmatpush2.msra.mxu0 0.0
    %2830 = vmatprep.subr.mxu0 0.0
    %2831 = vmatpush2.msra.mxu0 0.0
    %2832 = vmatprep.subr.mxu0 0.0
    %2833 = vmatpush2.msra.mxu0 0.0
    %2834 = vmatprep.subr.mxu0 0.0
    %2835 = vmatpush2.msra.mxu0 0.0
    %2836 = vmatprep.subr.mxu0 0.0
    %2837 = vmatpush2.msra.mxu0 0.0
    %2838 = vmatprep.subr.mxu0 0.0
    %2839 = vmatpush2.msra.mxu0 0.0
    %2840 = vmatprep.subr.mxu0 0.0
    %2841 = vmatpush2.msra.mxu0 0.0
    %2842 = vmatprep.subr.mxu0 0.0
    %2843 = vmatpush2.msra.mxu0 0.0
    %2844 = vmatprep.subr.mxu0 0.0
    %2845 = vmatpush2.msra.mxu0 0.0
    %2846 = vmatprep.subr.mxu0 0.0
    %2847 = vmatpush2.msra.mxu0 0.0
    %2848 = vmatprep.subr.mxu0 0.0
    %2849 = vmatpush2.msra.mxu0 0.0
    %2850 = vmatprep.subr.mxu0 0.0
    %2851 = vmatpush2.msra.mxu0 0.0
    %2852 = vmatprep.subr.mxu0 0.0
    %2853 = vmatpush2.msra.mxu0 0.0
    %2854 = vmatprep.subr.mxu0 0.0
    %2855 = vmatpush2.msra.mxu0 0.0
    %2856 = vmatprep.mubr.f32.mxu0 0.0
    %2857 = vmatmul.mubr.f32.gmra.mxu0 %v2790
    %v2858 = vpop.f32.mrf.mxu0
    %v2859 = vadd.f32 0.0, %v2858
    %v2860 = vpop.f32.mrf.mxu0
    %2861 = vdwg.mxu0
    %2862 = vrot.lane.b32.xlu0 %v294, 56
    %v2863 = vpop.permute.xlu0 %2862
    %v2866 = vsel %vm300, %v2329, 0
    %2868 = vmatprep.subr.mxu0 0.0
    %2869 = vmatpush1.msra.mxu0 0.0
    %2870 = vmatprep.subr.mxu0 0.0
    %2871 = vmatpush1.msra.mxu0 0.0
    %2872 = vmatprep.subr.mxu0 0.0
    %2873 = vmatpush1.msra.mxu0 0.0
    %2874 = vmatprep.subr.mxu0 0.0
    %2875 = vmatpush1.msra.mxu0 0.0
    %2876 = vmatprep.subr.mxu0 0.0
    %2877 = vmatpush1.msra.mxu0 0.0
    %2878 = vmatprep.subr.mxu0 0.0
    %2879 = vmatpush1.msra.mxu0 0.0
    %2880 = vmatprep.subr.mxu0 0.0
    %2881 = vmatpush1.msra.mxu0 0.0
    %2882 = vmatprep.subr.mxu0 0.0
    %2883 = vmatpush1.msra.mxu0 0.0
    %2884 = vmatprep.subr.mxu0 0.0
    %2885 = vmatpush1.msra.mxu0 0.0
    %2886 = vmatprep.subr.mxu0 0.0
    %2887 = vmatpush1.msra.mxu0 0.0
    %2888 = vmatprep.subr.mxu0 0.0
    %2889 = vmatpush1.msra.mxu0 0.0
    %2890 = vmatprep.subr.mxu0 0.0
    %2891 = vmatpush1.msra.mxu0 0.0
    %2892 = vmatprep.subr.mxu0 0.0
    %2893 = vmatpush1.msra.mxu0 0.0
    %2894 = vmatprep.subr.mxu0 0.0
    %2895 = vmatpush1.msra.mxu0 0.0
    %2896 = vmatprep.subr.mxu0 0.0
    %2897 = vmatpush1.msra.mxu0 0.0
    %2898 = vmatprep.subr.mxu0 0.0
    %2899 = vmatpush1.msra.mxu0 %v2863
    %2900 = vmatprep.subr.mxu0 0.0
    %2901 = vmatpush2.msra.mxu0 0.0
    %2902 = vmatprep.subr.mxu0 0.0
    %2903 = vmatpush2.msra.mxu0 0.0
    %2904 = vmatprep.subr.mxu0 0.0
    %2905 = vmatpush2.msra.mxu0 0.0
    %2906 = vmatprep.subr.mxu0 0.0
    %2907 = vmatpush2.msra.mxu0 0.0
    %2908 = vmatprep.subr.mxu0 0.0
    %2909 = vmatpush2.msra.mxu0 0.0
    %2910 = vmatprep.subr.mxu0 0.0
    %2911 = vmatpush2.msra.mxu0 0.0
    %2912 = vmatprep.subr.mxu0 0.0
    %2913 = vmatpush2.msra.mxu0 0.0
    %2914 = vmatprep.subr.mxu0 0.0
    %2915 = vmatpush2.msra.mxu0 0.0
    %2916 = vmatprep.subr.mxu0 0.0
    %2917 = vmatpush2.msra.mxu0 0.0
    %2918 = vmatprep.subr.mxu0 0.0
    %2919 = vmatpush2.msra.mxu0 0.0
    %2920 = vmatprep.subr.mxu0 0.0
    %2921 = vmatpush2.msra.mxu0 0.0
    %2922 = vmatprep.subr.mxu0 0.0
    %2923 = vmatpush2.msra.mxu0 0.0
    %2924 = vmatprep.subr.mxu0 0.0
    %2925 = vmatpush2.msra.mxu0 0.0
    %2926 = vmatprep.subr.mxu0 0.0
    %2927 = vmatpush2.msra.mxu0 0.0
    %2928 = vmatprep.subr.mxu0 0.0
    %2929 = vmatpush2.msra.mxu0 0.0
    %2930 = vmatprep.subr.mxu0 0.0
    %2931 = vmatpush2.msra.mxu0 0.0
    %2932 = vmatprep.mubr.f32.mxu0 0.0
    %2933 = vmatmul.mubr.f32.gmra.mxu0 %v2866
    %v2934 = vpop.f32.mrf.mxu0
    %v2935 = vadd.f32 0.0, %v2934
    %v2936 = vpop.f32.mrf.mxu0
    %2937 = vdwg.mxu0
    %2946 = vrot.lane.b32.xlu0 %v2403, 8
    %v2947 = vpop.permute.xlu0 %2946
    %2948 = vrot.lane.b32.xlu0 %v2479, 8
    %v2949 = vpop.permute.xlu0 %2948
    %2950 = vrot.lane.b32.xlu0 %v2555, 8
    %v2951 = vpop.permute.xlu0 %2950
    %2952 = vrot.lane.b32.xlu0 %v2631, 8
    %v2953 = vpop.permute.xlu0 %2952
    %2954 = vrot.lane.b32.xlu0 %v2707, 8
    %v2955 = vpop.permute.xlu0 %2954
    %2956 = vrot.lane.b32.xlu0 %v2783, 8
    %v2957 = vpop.permute.xlu0 %2956
    %2958 = vrot.lane.b32.xlu0 %v2859, 8
    %v2959 = vpop.permute.xlu0 %2958
    %2960 = vrot.lane.b32.xlu0 %v2935, 8
    %v2961 = vpop.permute.xlu0 %2960
    %vm2970 = vcmask 130112
    %2971 = vst.msk [vmem:[#allocation2] sm:$0xff] %vm2970, %v2947
    %2972 = vst.msk [vmem:[#allocation2 + $0x8] sm:$0xff] %vm2970, %v2949
    %2973 = vst.msk [vmem:[#allocation2 + $0x10] sm:$0xff] %vm2970, %v2951
    %2974 = vst.msk [vmem:[#allocation2 + $0x18] sm:$0xff] %vm2970, %v2953
    %2975 = vst.msk [vmem:[#allocation2 + $0x20] sm:$0xff] %vm2970, %v2955
    %2976 = vst.msk [vmem:[#allocation2 + $0x28] sm:$0xff] %vm2970, %v2957
    %2977 = vst.msk [vmem:[#allocation2 + $0x30] sm:$0xff] %vm2970, %v2959
    %2978 = vst.msk [vmem:[#allocation2 + $0x38] sm:$0xff] %vm2970, %v2961
    %2979 = vrot.lane.b32.xlu0 %v259, 112
    %v2980 = vpop.permute.xlu0 %2979
    %2981 = vrot.lane.b32.xlu0 %v259, 80
    %v2982 = vpop.permute.xlu0 %2981
    %v2983 = vsel %vm300, %v2980, 0
    %v2985 = vsel %vm300, %v2982, 0
    %2987 = vmatprep.subr.mxu0 0.0
    %2988 = vmatpush1.xpose.msra.mxu0 0.0
    %2989 = vmatprep.subr.mxu0 0.0
    %2990 = vmatpush1.xpose.msra.mxu0 0.0
    %2991 = vmatprep.subr.mxu0 0.0
    %2992 = vmatpush1.xpose.msra.mxu0 0.0
    %2993 = vmatprep.subr.mxu0 0.0
    %2994 = vmatpush1.xpose.msra.mxu0 0.0
    %2995 = vmatprep.subr.mxu0 0.0
    %2996 = vmatpush1.xpose.msra.mxu0 0.0
    %2997 = vmatprep.subr.mxu0 0.0
    %2998 = vmatpush1.xpose.msra.mxu0 0.0
    %2999 = vmatprep.subr.mxu0 0.0
    %3000 = vmatpush1.xpose.msra.mxu0 0.0
    %3001 = vmatprep.subr.mxu0 0.0
    %3002 = vmatpush1.xpose.msra.mxu0 0.0
    %3003 = vmatprep.subr.mxu0 0.0
    %3004 = vmatpush1.xpose.msra.mxu0 0.0
    %3005 = vmatprep.subr.mxu0 0.0
    %3006 = vmatpush1.xpose.msra.mxu0 0.0
    %3007 = vmatprep.subr.mxu0 0.0
    %3008 = vmatpush1.xpose.msra.mxu0 0.0
    %3009 = vmatprep.subr.mxu0 0.0
    %3010 = vmatpush1.xpose.msra.mxu0 0.0
    %3011 = vmatprep.subr.mxu0 0.0
    %3012 = vmatpush1.xpose.msra.mxu0 0.0
    %3013 = vmatprep.subr.mxu0 0.0
    %3014 = vmatpush1.xpose.msra.mxu0 0.0
    %3015 = vmatprep.subr.mxu0 0.0
    %3016 = vmatpush1.xpose.msra.mxu0 0.0
    %3017 = vmatprep.subr.mxu0 0.0
    %3018 = vmatpush1.xpose.msra.mxu0 %v2985
    %3019 = vmatprep.subr.mxu0 0.0
    %3020 = vmatpush2.xpose.msra.mxu0 0.0
    %3021 = vmatprep.subr.mxu0 0.0
    %3022 = vmatpush2.xpose.msra.mxu0 0.0
    %3023 = vmatprep.subr.mxu0 0.0
    %3024 = vmatpush2.xpose.msra.mxu0 0.0
    %3025 = vmatprep.subr.mxu0 0.0
    %3026 = vmatpush2.xpose.msra.mxu0 0.0
    %3027 = vmatprep.subr.mxu0 0.0
    %3028 = vmatpush2.xpose.msra.mxu0 0.0
    %3029 = vmatprep.subr.mxu0 0.0
    %3030 = vmatpush2.xpose.msra.mxu0 0.0
    %3031 = vmatprep.subr.mxu0 0.0
    %3032 = vmatpush2.xpose.msra.mxu0 0.0
    %3033 = vmatprep.subr.mxu0 0.0
    %3034 = vmatpush2.xpose.msra.mxu0 0.0
    %3035 = vmatprep.subr.mxu0 0.0
    %3036 = vmatpush2.xpose.msra.mxu0 0.0
    %3037 = vmatprep.subr.mxu0 0.0
    %3038 = vmatpush2.xpose.msra.mxu0 0.0
    %3039 = vmatprep.subr.mxu0 0.0
    %3040 = vmatpush2.xpose.msra.mxu0 0.0
    %3041 = vmatprep.subr.mxu0 0.0
    %3042 = vmatpush2.xpose.msra.mxu0 0.0
    %3043 = vmatprep.subr.mxu0 0.0
    %3044 = vmatpush2.xpose.msra.mxu0 0.0
    %3045 = vmatprep.subr.mxu0 0.0
    %3046 = vmatpush2.xpose.msra.mxu0 0.0
    %3047 = vmatprep.subr.mxu0 0.0
    %3048 = vmatpush2.xpose.msra.mxu0 0.0
    %3049 = vmatprep.subr.mxu0 0.0
    %3050 = vmatpush2.xpose.msra.mxu0 0.0
    %3051 = vmatprep.mubr.f32.mxu0 0.0
    %3052 = vmatmul.mubr.f32.gmra.mxu0 %v2983
    %v3053 = vpop.f32.mrf.mxu0
    %v3054 = vadd.f32 0.0, %v3053
    %v3055 = vpop.f32.mrf.mxu0
    %3056 = vdwg.mxu0
    %3057 = vrot.lane.b32.xlu0 %v264, 112
    %v3058 = vpop.permute.xlu0 %3057
    %3059 = vrot.lane.b32.xlu0 %v264, 80
    %v3060 = vpop.permute.xlu0 %3059
    %v3061 = vsel %vm300, %v3058, 0
    %v3063 = vsel %vm300, %v3060, 0
    %3065 = vmatprep.subr.mxu0 0.0
    %3066 = vmatpush1.xpose.msra.mxu0 0.0
    %3067 = vmatprep.subr.mxu0 0.0
    %3068 = vmatpush1.xpose.msra.mxu0 0.0
    %3069 = vmatprep.subr.mxu0 0.0
    %3070 = vmatpush1.xpose.msra.mxu0 0.0
    %3071 = vmatprep.subr.mxu0 0.0
    %3072 = vmatpush1.xpose.msra.mxu0 0.0
    %3073 = vmatprep.subr.mxu0 0.0
    %3074 = vmatpush1.xpose.msra.mxu0 0.0
    %3075 = vmatprep.subr.mxu0 0.0
    %3076 = vmatpush1.xpose.msra.mxu0 0.0
    %3077 = vmatprep.subr.mxu0 0.0
    %3078 = vmatpush1.xpose.msra.mxu0 0.0
    %3079 = vmatprep.subr.mxu0 0.0
    %3080 = vmatpush1.xpose.msra.mxu0 0.0
    %3081 = vmatprep.subr.mxu0 0.0
    %3082 = vmatpush1.xpose.msra.mxu0 0.0
    %3083 = vmatprep.subr.mxu0 0.0
    %3084 = vmatpush1.xpose.msra.mxu0 0.0
    %3085 = vmatprep.subr.mxu0 0.0
    %3086 = vmatpush1.xpose.msra.mxu0 0.0
    %3087 = vmatprep.subr.mxu0 0.0
    %3088 = vmatpush1.xpose.msra.mxu0 0.0
    %3089 = vmatprep.subr.mxu0 0.0
    %3090 = vmatpush1.xpose.msra.mxu0 0.0
    %3091 = vmatprep.subr.mxu0 0.0
    %3092 = vmatpush1.xpose.msra.mxu0 0.0
    %3093 = vmatprep.subr.mxu0 0.0
    %3094 = vmatpush1.xpose.msra.mxu0 0.0
    %3095 = vmatprep.subr.mxu0 0.0
    %3096 = vmatpush1.xpose.msra.mxu0 %v3063
    %3097 = vmatprep.subr.mxu0 0.0
    %3098 = vmatpush2.xpose.msra.mxu0 0.0
    %3099 = vmatprep.subr.mxu0 0.0
    %3100 = vmatpush2.xpose.msra.mxu0 0.0
    %3101 = vmatprep.subr.mxu0 0.0
    %3102 = vmatpush2.xpose.msra.mxu0 0.0
    %3103 = vmatprep.subr.mxu0 0.0
    %3104 = vmatpush2.xpose.msra.mxu0 0.0
    %3105 = vmatprep.subr.mxu0 0.0
    %3106 = vmatpush2.xpose.msra.mxu0 0.0
    %3107 = vmatprep.subr.mxu0 0.0
    %3108 = vmatpush2.xpose.msra.mxu0 0.0
    %3109 = vmatprep.subr.mxu0 0.0
    %3110 = vmatpush2.xpose.msra.mxu0 0.0
    %3111 = vmatprep.subr.mxu0 0.0
    %3112 = vmatpush2.xpose.msra.mxu0 0.0
    %3113 = vmatprep.subr.mxu0 0.0
    %3114 = vmatpush2.xpose.msra.mxu0 0.0
    %3115 = vmatprep.subr.mxu0 0.0
    %3116 = vmatpush2.xpose.msra.mxu0 0.0
    %3117 = vmatprep.subr.mxu0 0.0
    %3118 = vmatpush2.xpose.msra.mxu0 0.0
    %3119 = vmatprep.subr.mxu0 0.0
    %3120 = vmatpush2.xpose.msra.mxu0 0.0
    %3121 = vmatprep.subr.mxu0 0.0
    %3122 = vmatpush2.xpose.msra.mxu0 0.0
    %3123 = vmatprep.subr.mxu0 0.0
    %3124 = vmatpush2.xpose.msra.mxu0 0.0
    %3125 = vmatprep.subr.mxu0 0.0
    %3126 = vmatpush2.xpose.msra.mxu0 0.0
    %3127 = vmatprep.subr.mxu0 0.0
    %3128 = vmatpush2.xpose.msra.mxu0 0.0
    %3129 = vmatprep.mubr.f32.mxu0 0.0
    %3130 = vmatmul.mubr.f32.gmra.mxu0 %v3061
    %v3131 = vpop.f32.mrf.mxu0
    %v3132 = vadd.f32 0.0, %v3131
    %v3133 = vpop.f32.mrf.mxu0
    %3134 = vdwg.mxu0
    %3135 = vrot.lane.b32.xlu0 %v269, 112
    %v3136 = vpop.permute.xlu0 %3135
    %3137 = vrot.lane.b32.xlu0 %v269, 80
    %v3138 = vpop.permute.xlu0 %3137
    %v3139 = vsel %vm300, %v3136, 0
    %v3141 = vsel %vm300, %v3138, 0
    %3143 = vmatprep.subr.mxu0 0.0
    %3144 = vmatpush1.xpose.msra.mxu0 0.0
    %3145 = vmatprep.subr.mxu0 0.0
    %3146 = vmatpush1.xpose.msra.mxu0 0.0
    %3147 = vmatprep.subr.mxu0 0.0
    %3148 = vmatpush1.xpose.msra.mxu0 0.0
    %3149 = vmatprep.subr.mxu0 0.0
    %3150 = vmatpush1.xpose.msra.mxu0 0.0
    %3151 = vmatprep.subr.mxu0 0.0
    %3152 = vmatpush1.xpose.msra.mxu0 0.0
    %3153 = vmatprep.subr.mxu0 0.0
    %3154 = vmatpush1.xpose.msra.mxu0 0.0
    %3155 = vmatprep.subr.mxu0 0.0
    %3156 = vmatpush1.xpose.msra.mxu0 0.0
    %3157 = vmatprep.subr.mxu0 0.0
    %3158 = vmatpush1.xpose.msra.mxu0 0.0
    %3159 = vmatprep.subr.mxu0 0.0
    %3160 = vmatpush1.xpose.msra.mxu0 0.0
    %3161 = vmatprep.subr.mxu0 0.0
    %3162 = vmatpush1.xpose.msra.mxu0 0.0
    %3163 = vmatprep.subr.mxu0 0.0
    %3164 = vmatpush1.xpose.msra.mxu0 0.0
    %3165 = vmatprep.subr.mxu0 0.0
    %3166 = vmatpush1.xpose.msra.mxu0 0.0
    %3167 = vmatprep.subr.mxu0 0.0
    %3168 = vmatpush1.xpose.msra.mxu0 0.0
    %3169 = vmatprep.subr.mxu0 0.0
    %3170 = vmatpush1.xpose.msra.mxu0 0.0
    %3171 = vmatprep.subr.mxu0 0.0
    %3172 = vmatpush1.xpose.msra.mxu0 0.0
    %3173 = vmatprep.subr.mxu0 0.0
    %3174 = vmatpush1.xpose.msra.mxu0 %v3141
    %3175 = vmatprep.subr.mxu0 0.0
    %3176 = vmatpush2.xpose.msra.mxu0 0.0
    %3177 = vmatprep.subr.mxu0 0.0
    %3178 = vmatpush2.xpose.msra.mxu0 0.0
    %3179 = vmatprep.subr.mxu0 0.0
    %3180 = vmatpush2.xpose.msra.mxu0 0.0
    %3181 = vmatprep.subr.mxu0 0.0
    %3182 = vmatpush2.xpose.msra.mxu0 0.0
    %3183 = vmatprep.subr.mxu0 0.0
    %3184 = vmatpush2.xpose.msra.mxu0 0.0
    %3185 = vmatprep.subr.mxu0 0.0
    %3186 = vmatpush2.xpose.msra.mxu0 0.0
    %3187 = vmatprep.subr.mxu0 0.0
    %3188 = vmatpush2.xpose.msra.mxu0 0.0
    %3189 = vmatprep.subr.mxu0 0.0
    %3190 = vmatpush2.xpose.msra.mxu0 0.0
    %3191 = vmatprep.subr.mxu0 0.0
    %3192 = vmatpush2.xpose.msra.mxu0 0.0
    %3193 = vmatprep.subr.mxu0 0.0
    %3194 = vmatpush2.xpose.msra.mxu0 0.0
    %3195 = vmatprep.subr.mxu0 0.0
    %3196 = vmatpush2.xpose.msra.mxu0 0.0
    %3197 = vmatprep.subr.mxu0 0.0
    %3198 = vmatpush2.xpose.msra.mxu0 0.0
    %3199 = vmatprep.subr.mxu0 0.0
    %3200 = vmatpush2.xpose.msra.mxu0 0.0
    %3201 = vmatprep.subr.mxu0 0.0
    %3202 = vmatpush2.xpose.msra.mxu0 0.0
    %3203 = vmatprep.subr.mxu0 0.0
    %3204 = vmatpush2.xpose.msra.mxu0 0.0
    %3205 = vmatprep.subr.mxu0 0.0
    %3206 = vmatpush2.xpose.msra.mxu0 0.0
    %3207 = vmatprep.mubr.f32.mxu0 0.0
    %3208 = vmatmul.mubr.f32.gmra.mxu0 %v3139
    %v3209 = vpop.f32.mrf.mxu0
    %v3210 = vadd.f32 0.0, %v3209
    %v3211 = vpop.f32.mrf.mxu0
    %3212 = vdwg.mxu0
    %3213 = vrot.lane.b32.xlu0 %v274, 112
    %v3214 = vpop.permute.xlu0 %3213
    %3215 = vrot.lane.b32.xlu0 %v274, 80
    %v3216 = vpop.permute.xlu0 %3215
    %v3217 = vsel %vm300, %v3214, 0
    %v3219 = vsel %vm300, %v3216, 0
    %3221 = vmatprep.subr.mxu0 0.0
    %3222 = vmatpush1.xpose.msra.mxu0 0.0
    %3223 = vmatprep.subr.mxu0 0.0
    %3224 = vmatpush1.xpose.msra.mxu0 0.0
    %3225 = vmatprep.subr.mxu0 0.0
    %3226 = vmatpush1.xpose.msra.mxu0 0.0
    %3227 = vmatprep.subr.mxu0 0.0
    %3228 = vmatpush1.xpose.msra.mxu0 0.0
    %3229 = vmatprep.subr.mxu0 0.0
    %3230 = vmatpush1.xpose.msra.mxu0 0.0
    %3231 = vmatprep.subr.mxu0 0.0
    %3232 = vmatpush1.xpose.msra.mxu0 0.0
    %3233 = vmatprep.subr.mxu0 0.0
    %3234 = vmatpush1.xpose.msra.mxu0 0.0
    %3235 = vmatprep.subr.mxu0 0.0
    %3236 = vmatpush1.xpose.msra.mxu0 0.0
    %3237 = vmatprep.subr.mxu0 0.0
    %3238 = vmatpush1.xpose.msra.mxu0 0.0
    %3239 = vmatprep.subr.mxu0 0.0
    %3240 = vmatpush1.xpose.msra.mxu0 0.0
    %3241 = vmatprep.subr.mxu0 0.0
    %3242 = vmatpush1.xpose.msra.mxu0 0.0
    %3243 = vmatprep.subr.mxu0 0.0
    %3244 = vmatpush1.xpose.msra.mxu0 0.0
    %3245 = vmatprep.subr.mxu0 0.0
    %3246 = vmatpush1.xpose.msra.mxu0 0.0
    %3247 = vmatprep.subr.mxu0 0.0
    %3248 = vmatpush1.xpose.msra.mxu0 0.0
    %3249 = vmatprep.subr.mxu0 0.0
    %3250 = vmatpush1.xpose.msra.mxu0 0.0
    %3251 = vmatprep.subr.mxu0 0.0
    %3252 = vmatpush1.xpose.msra.mxu0 %v3219
    %3253 = vmatprep.subr.mxu0 0.0
    %3254 = vmatpush2.xpose.msra.mxu0 0.0
    %3255 = vmatprep.subr.mxu0 0.0
    %3256 = vmatpush2.xpose.msra.mxu0 0.0
    %3257 = vmatprep.subr.mxu0 0.0
    %3258 = vmatpush2.xpose.msra.mxu0 0.0
    %3259 = vmatprep.subr.mxu0 0.0
    %3260 = vmatpush2.xpose.msra.mxu0 0.0
    %3261 = vmatprep.subr.mxu0 0.0
    %3262 = vmatpush2.xpose.msra.mxu0 0.0
    %3263 = vmatprep.subr.mxu0 0.0
    %3264 = vmatpush2.xpose.msra.mxu0 0.0
    %3265 = vmatprep.subr.mxu0 0.0
    %3266 = vmatpush2.xpose.msra.mxu0 0.0
    %3267 = vmatprep.subr.mxu0 0.0
    %3268 = vmatpush2.xpose.msra.mxu0 0.0
    %3269 = vmatprep.subr.mxu0 0.0
    %3270 = vmatpush2.xpose.msra.mxu0 0.0
    %3271 = vmatprep.subr.mxu0 0.0
    %3272 = vmatpush2.xpose.msra.mxu0 0.0
    %3273 = vmatprep.subr.mxu0 0.0
    %3274 = vmatpush2.xpose.msra.mxu0 0.0
    %3275 = vmatprep.subr.mxu0 0.0
    %3276 = vmatpush2.xpose.msra.mxu0 0.0
    %3277 = vmatprep.subr.mxu0 0.0
    %3278 = vmatpush2.xpose.msra.mxu0 0.0
    %3279 = vmatprep.subr.mxu0 0.0
    %3280 = vmatpush2.xpose.msra.mxu0 0.0
    %3281 = vmatprep.subr.mxu0 0.0
    %3282 = vmatpush2.xpose.msra.mxu0 0.0
    %3283 = vmatprep.subr.mxu0 0.0
    %3284 = vmatpush2.xpose.msra.mxu0 0.0
    %3285 = vmatprep.mubr.f32.mxu0 0.0
    %3286 = vmatmul.mubr.f32.gmra.mxu0 %v3217
    %v3287 = vpop.f32.mrf.mxu0
    %v3288 = vadd.f32 0.0, %v3287
    %v3289 = vpop.f32.mrf.mxu0
    %3290 = vdwg.mxu0
    %3291 = vrot.lane.b32.xlu0 %v279, 112
    %v3292 = vpop.permute.xlu0 %3291
    %3293 = vrot.lane.b32.xlu0 %v279, 80
    %v3294 = vpop.permute.xlu0 %3293
    %v3295 = vsel %vm300, %v3292, 0
    %v3297 = vsel %vm300, %v3294, 0
    %3299 = vmatprep.subr.mxu0 0.0
    %3300 = vmatpush1.xpose.msra.mxu0 0.0
    %3301 = vmatprep.subr.mxu0 0.0
    %3302 = vmatpush1.xpose.msra.mxu0 0.0
    %3303 = vmatprep.subr.mxu0 0.0
    %3304 = vmatpush1.xpose.msra.mxu0 0.0
    %3305 = vmatprep.subr.mxu0 0.0
    %3306 = vmatpush1.xpose.msra.mxu0 0.0
    %3307 = vmatprep.subr.mxu0 0.0
    %3308 = vmatpush1.xpose.msra.mxu0 0.0
    %3309 = vmatprep.subr.mxu0 0.0
    %3310 = vmatpush1.xpose.msra.mxu0 0.0
    %3311 = vmatprep.subr.mxu0 0.0
    %3312 = vmatpush1.xpose.msra.mxu0 0.0
    %3313 = vmatprep.subr.mxu0 0.0
    %3314 = vmatpush1.xpose.msra.mxu0 0.0
    %3315 = vmatprep.subr.mxu0 0.0
    %3316 = vmatpush1.xpose.msra.mxu0 0.0
    %3317 = vmatprep.subr.mxu0 0.0
    %3318 = vmatpush1.xpose.msra.mxu0 0.0
    %3319 = vmatprep.subr.mxu0 0.0
    %3320 = vmatpush1.xpose.msra.mxu0 0.0
    %3321 = vmatprep.subr.mxu0 0.0
    %3322 = vmatpush1.xpose.msra.mxu0 0.0
    %3323 = vmatprep.subr.mxu0 0.0
    %3324 = vmatpush1.xpose.msra.mxu0 0.0
    %3325 = vmatprep.subr.mxu0 0.0
    %3326 = vmatpush1.xpose.msra.mxu0 0.0
    %3327 = vmatprep.subr.mxu0 0.0
    %3328 = vmatpush1.xpose.msra.mxu0 0.0
    %3329 = vmatprep.subr.mxu0 0.0
    %3330 = vmatpush1.xpose.msra.mxu0 %v3297
    %3331 = vmatprep.subr.mxu0 0.0
    %3332 = vmatpush2.xpose.msra.mxu0 0.0
    %3333 = vmatprep.subr.mxu0 0.0
    %3334 = vmatpush2.xpose.msra.mxu0 0.0
    %3335 = vmatprep.subr.mxu0 0.0
    %3336 = vmatpush2.xpose.msra.mxu0 0.0
    %3337 = vmatprep.subr.mxu0 0.0
    %3338 = vmatpush2.xpose.msra.mxu0 0.0
    %3339 = vmatprep.subr.mxu0 0.0
    %3340 = vmatpush2.xpose.msra.mxu0 0.0
    %3341 = vmatprep.subr.mxu0 0.0
    %3342 = vmatpush2.xpose.msra.mxu0 0.0
    %3343 = vmatprep.subr.mxu0 0.0
    %3344 = vmatpush2.xpose.msra.mxu0 0.0
    %3345 = vmatprep.subr.mxu0 0.0
    %3346 = vmatpush2.xpose.msra.mxu0 0.0
    %3347 = vmatprep.subr.mxu0 0.0
    %3348 = vmatpush2.xpose.msra.mxu0 0.0
    %3349 = vmatprep.subr.mxu0 0.0
    %3350 = vmatpush2.xpose.msra.mxu0 0.0
    %3351 = vmatprep.subr.mxu0 0.0
    %3352 = vmatpush2.xpose.msra.mxu0 0.0
    %3353 = vmatprep.subr.mxu0 0.0
    %3354 = vmatpush2.xpose.msra.mxu0 0.0
    %3355 = vmatprep.subr.mxu0 0.0
    %3356 = vmatpush2.xpose.msra.mxu0 0.0
    %3357 = vmatprep.subr.mxu0 0.0
    %3358 = vmatpush2.xpose.msra.mxu0 0.0
    %3359 = vmatprep.subr.mxu0 0.0
    %3360 = vmatpush2.xpose.msra.mxu0 0.0
    %3361 = vmatprep.subr.mxu0 0.0
    %3362 = vmatpush2.xpose.msra.mxu0 0.0
    %3363 = vmatprep.mubr.f32.mxu0 0.0
    %3364 = vmatmul.mubr.f32.gmra.mxu0 %v3295
    %v3365 = vpop.f32.mrf.mxu0
    %v3366 = vadd.f32 0.0, %v3365
    %v3367 = vpop.f32.mrf.mxu0
    %3368 = vdwg.mxu0
    %3369 = vrot.lane.b32.xlu0 %v284, 112
    %v3370 = vpop.permute.xlu0 %3369
    %3371 = vrot.lane.b32.xlu0 %v284, 80
    %v3372 = vpop.permute.xlu0 %3371
    %v3373 = vsel %vm300, %v3370, 0
    %v3375 = vsel %vm300, %v3372, 0
    %3377 = vmatprep.subr.mxu0 0.0
    %3378 = vmatpush1.xpose.msra.mxu0 0.0
    %3379 = vmatprep.subr.mxu0 0.0
    %3380 = vmatpush1.xpose.msra.mxu0 0.0
    %3381 = vmatprep.subr.mxu0 0.0
    %3382 = vmatpush1.xpose.msra.mxu0 0.0
    %3383 = vmatprep.subr.mxu0 0.0
    %3384 = vmatpush1.xpose.msra.mxu0 0.0
    %3385 = vmatprep.subr.mxu0 0.0
    %3386 = vmatpush1.xpose.msra.mxu0 0.0
    %3387 = vmatprep.subr.mxu0 0.0
    %3388 = vmatpush1.xpose.msra.mxu0 0.0
    %3389 = vmatprep.subr.mxu0 0.0
    %3390 = vmatpush1.xpose.msra.mxu0 0.0
    %3391 = vmatprep.subr.mxu0 0.0
    %3392 = vmatpush1.xpose.msra.mxu0 0.0
    %3393 = vmatprep.subr.mxu0 0.0
    %3394 = vmatpush1.xpose.msra.mxu0 0.0
    %3395 = vmatprep.subr.mxu0 0.0
    %3396 = vmatpush1.xpose.msra.mxu0 0.0
    %3397 = vmatprep.subr.mxu0 0.0
    %3398 = vmatpush1.xpose.msra.mxu0 0.0
    %3399 = vmatprep.subr.mxu0 0.0
    %3400 = vmatpush1.xpose.msra.mxu0 0.0
    %3401 = vmatprep.subr.mxu0 0.0
    %3402 = vmatpush1.xpose.msra.mxu0 0.0
    %3403 = vmatprep.subr.mxu0 0.0
    %3404 = vmatpush1.xpose.msra.mxu0 0.0
    %3405 = vmatprep.subr.mxu0 0.0
    %3406 = vmatpush1.xpose.msra.mxu0 0.0
    %3407 = vmatprep.subr.mxu0 0.0
    %3408 = vmatpush1.xpose.msra.mxu0 %v3375
    %3409 = vmatprep.subr.mxu0 0.0
    %3410 = vmatpush2.xpose.msra.mxu0 0.0
    %3411 = vmatprep.subr.mxu0 0.0
    %3412 = vmatpush2.xpose.msra.mxu0 0.0
    %3413 = vmatprep.subr.mxu0 0.0
    %3414 = vmatpush2.xpose.msra.mxu0 0.0
    %3415 = vmatprep.subr.mxu0 0.0
    %3416 = vmatpush2.xpose.msra.mxu0 0.0
    %3417 = vmatprep.subr.mxu0 0.0
    %3418 = vmatpush2.xpose.msra.mxu0 0.0
    %3419 = vmatprep.subr.mxu0 0.0
    %3420 = vmatpush2.xpose.msra.mxu0 0.0
    %3421 = vmatprep.subr.mxu0 0.0
    %3422 = vmatpush2.xpose.msra.mxu0 0.0
    %3423 = vmatprep.subr.mxu0 0.0
    %3424 = vmatpush2.xpose.msra.mxu0 0.0
    %3425 = vmatprep.subr.mxu0 0.0
    %3426 = vmatpush2.xpose.msra.mxu0 0.0
    %3427 = vmatprep.subr.mxu0 0.0
    %3428 = vmatpush2.xpose.msra.mxu0 0.0
    %3429 = vmatprep.subr.mxu0 0.0
    %3430 = vmatpush2.xpose.msra.mxu0 0.0
    %3431 = vmatprep.subr.mxu0 0.0
    %3432 = vmatpush2.xpose.msra.mxu0 0.0
    %3433 = vmatprep.subr.mxu0 0.0
    %3434 = vmatpush2.xpose.msra.mxu0 0.0
    %3435 = vmatprep.subr.mxu0 0.0
    %3436 = vmatpush2.xpose.msra.mxu0 0.0
    %3437 = vmatprep.subr.mxu0 0.0
    %3438 = vmatpush2.xpose.msra.mxu0 0.0
    %3439 = vmatprep.subr.mxu0 0.0
    %3440 = vmatpush2.xpose.msra.mxu0 0.0
    %3441 = vmatprep.mubr.f32.mxu0 0.0
    %3442 = vmatmul.mubr.f32.gmra.mxu0 %v3373
    %v3443 = vpop.f32.mrf.mxu0
    %v3444 = vadd.f32 0.0, %v3443
    %v3445 = vpop.f32.mrf.mxu0
    %3446 = vdwg.mxu0
    %3447 = vrot.lane.b32.xlu0 %v289, 112
    %v3448 = vpop.permute.xlu0 %3447
    %3449 = vrot.lane.b32.xlu0 %v289, 80
    %v3450 = vpop.permute.xlu0 %3449
    %v3451 = vsel %vm300, %v3448, 0
    %v3453 = vsel %vm300, %v3450, 0
    %3455 = vmatprep.subr.mxu0 0.0
    %3456 = vmatpush1.xpose.msra.mxu0 0.0
    %3457 = vmatprep.subr.mxu0 0.0
    %3458 = vmatpush1.xpose.msra.mxu0 0.0
    %3459 = vmatprep.subr.mxu0 0.0
    %3460 = vmatpush1.xpose.msra.mxu0 0.0
    %3461 = vmatprep.subr.mxu0 0.0
    %3462 = vmatpush1.xpose.msra.mxu0 0.0
    %3463 = vmatprep.subr.mxu0 0.0
    %3464 = vmatpush1.xpose.msra.mxu0 0.0
    %3465 = vmatprep.subr.mxu0 0.0
    %3466 = vmatpush1.xpose.msra.mxu0 0.0
    %3467 = vmatprep.subr.mxu0 0.0
    %3468 = vmatpush1.xpose.msra.mxu0 0.0
    %3469 = vmatprep.subr.mxu0 0.0
    %3470 = vmatpush1.xpose.msra.mxu0 0.0
    %3471 = vmatprep.subr.mxu0 0.0
    %3472 = vmatpush1.xpose.msra.mxu0 0.0
    %3473 = vmatprep.subr.mxu0 0.0
    %3474 = vmatpush1.xpose.msra.mxu0 0.0
    %3475 = vmatprep.subr.mxu0 0.0
    %3476 = vmatpush1.xpose.msra.mxu0 0.0
    %3477 = vmatprep.subr.mxu0 0.0
    %3478 = vmatpush1.xpose.msra.mxu0 0.0
    %3479 = vmatprep.subr.mxu0 0.0
    %3480 = vmatpush1.xpose.msra.mxu0 0.0
    %3481 = vmatprep.subr.mxu0 0.0
    %3482 = vmatpush1.xpose.msra.mxu0 0.0
    %3483 = vmatprep.subr.mxu0 0.0
    %3484 = vmatpush1.xpose.msra.mxu0 0.0
    %3485 = vmatprep.subr.mxu0 0.0
    %3486 = vmatpush1.xpose.msra.mxu0 %v3453
    %3487 = vmatprep.subr.mxu0 0.0
    %3488 = vmatpush2.xpose.msra.mxu0 0.0
    %3489 = vmatprep.subr.mxu0 0.0
    %3490 = vmatpush2.xpose.msra.mxu0 0.0
    %3491 = vmatprep.subr.mxu0 0.0
    %3492 = vmatpush2.xpose.msra.mxu0 0.0
    %3493 = vmatprep.subr.mxu0 0.0
    %3494 = vmatpush2.xpose.msra.mxu0 0.0
    %3495 = vmatprep.subr.mxu0 0.0
    %3496 = vmatpush2.xpose.msra.mxu0 0.0
    %3497 = vmatprep.subr.mxu0 0.0
    %3498 = vmatpush2.xpose.msra.mxu0 0.0
    %3499 = vmatprep.subr.mxu0 0.0
    %3500 = vmatpush2.xpose.msra.mxu0 0.0
    %3501 = vmatprep.subr.mxu0 0.0
    %3502 = vmatpush2.xpose.msra.mxu0 0.0
    %3503 = vmatprep.subr.mxu0 0.0
    %3504 = vmatpush2.xpose.msra.mxu0 0.0
    %3505 = vmatprep.subr.mxu0 0.0
    %3506 = vmatpush2.xpose.msra.mxu0 0.0
    %3507 = vmatprep.subr.mxu0 0.0
    %3508 = vmatpush2.xpose.msra.mxu0 0.0
    %3509 = vmatprep.subr.mxu0 0.0
    %3510 = vmatpush2.xpose.msra.mxu0 0.0
    %3511 = vmatprep.subr.mxu0 0.0
    %3512 = vmatpush2.xpose.msra.mxu0 0.0
    %3513 = vmatprep.subr.mxu0 0.0
    %3514 = vmatpush2.xpose.msra.mxu0 0.0
    %3515 = vmatprep.subr.mxu0 0.0
    %3516 = vmatpush2.xpose.msra.mxu0 0.0
    %3517 = vmatprep.subr.mxu0 0.0
    %3518 = vmatpush2.xpose.msra.mxu0 0.0
    %3519 = vmatprep.mubr.f32.mxu0 0.0
    %3520 = vmatmul.mubr.f32.gmra.mxu0 %v3451
    %v3521 = vpop.f32.mrf.mxu0
    %v3522 = vadd.f32 0.0, %v3521
    %v3523 = vpop.f32.mrf.mxu0
    %3524 = vdwg.mxu0
    %3525 = vrot.lane.b32.xlu0 %v294, 112
    %v3526 = vpop.permute.xlu0 %3525
    %3527 = vrot.lane.b32.xlu0 %v294, 80
    %v3528 = vpop.permute.xlu0 %3527
    %v3529 = vsel %vm300, %v3526, 0
    %v3531 = vsel %vm300, %v3528, 0
    %3533 = vmatprep.subr.mxu0 0.0
    %3534 = vmatpush1.xpose.msra.mxu0 0.0
    %3535 = vmatprep.subr.mxu0 0.0
    %3536 = vmatpush1.xpose.msra.mxu0 0.0
    %3537 = vmatprep.subr.mxu0 0.0
    %3538 = vmatpush1.xpose.msra.mxu0 0.0
    %3539 = vmatprep.subr.mxu0 0.0
    %3540 = vmatpush1.xpose.msra.mxu0 0.0
    %3541 = vmatprep.subr.mxu0 0.0
    %3542 = vmatpush1.xpose.msra.mxu0 0.0
    %3543 = vmatprep.subr.mxu0 0.0
    %3544 = vmatpush1.xpose.msra.mxu0 0.0
    %3545 = vmatprep.subr.mxu0 0.0
    %3546 = vmatpush1.xpose.msra.mxu0 0.0
    %3547 = vmatprep.subr.mxu0 0.0
    %3548 = vmatpush1.xpose.msra.mxu0 0.0
    %3549 = vmatprep.subr.mxu0 0.0
    %3550 = vmatpush1.xpose.msra.mxu0 0.0
    %3551 = vmatprep.subr.mxu0 0.0
    %3552 = vmatpush1.xpose.msra.mxu0 0.0
    %3553 = vmatprep.subr.mxu0 0.0
    %3554 = vmatpush1.xpose.msra.mxu0 0.0
    %3555 = vmatprep.subr.mxu0 0.0
    %3556 = vmatpush1.xpose.msra.mxu0 0.0
    %3557 = vmatprep.subr.mxu0 0.0
    %3558 = vmatpush1.xpose.msra.mxu0 0.0
    %3559 = vmatprep.subr.mxu0 0.0
    %3560 = vmatpush1.xpose.msra.mxu0 0.0
    %3561 = vmatprep.subr.mxu0 0.0
    %3562 = vmatpush1.xpose.msra.mxu0 0.0
    %3563 = vmatprep.subr.mxu0 0.0
    %3564 = vmatpush1.xpose.msra.mxu0 %v3531
    %3565 = vmatprep.subr.mxu0 0.0
    %3566 = vmatpush2.xpose.msra.mxu0 0.0
    %3567 = vmatprep.subr.mxu0 0.0
    %3568 = vmatpush2.xpose.msra.mxu0 0.0
    %3569 = vmatprep.subr.mxu0 0.0
    %3570 = vmatpush2.xpose.msra.mxu0 0.0
    %3571 = vmatprep.subr.mxu0 0.0
    %3572 = vmatpush2.xpose.msra.mxu0 0.0
    %3573 = vmatprep.subr.mxu0 0.0
    %3574 = vmatpush2.xpose.msra.mxu0 0.0
    %3575 = vmatprep.subr.mxu0 0.0
    %3576 = vmatpush2.xpose.msra.mxu0 0.0
    %3577 = vmatprep.subr.mxu0 0.0
    %3578 = vmatpush2.xpose.msra.mxu0 0.0
    %3579 = vmatprep.subr.mxu0 0.0
    %3580 = vmatpush2.xpose.msra.mxu0 0.0
    %3581 = vmatprep.subr.mxu0 0.0
    %3582 = vmatpush2.xpose.msra.mxu0 0.0
    %3583 = vmatprep.subr.mxu0 0.0
    %3584 = vmatpush2.xpose.msra.mxu0 0.0
    %3585 = vmatprep.subr.mxu0 0.0
    %3586 = vmatpush2.xpose.msra.mxu0 0.0
    %3587 = vmatprep.subr.mxu0 0.0
    %3588 = vmatpush2.xpose.msra.mxu0 0.0
    %3589 = vmatprep.subr.mxu0 0.0
    %3590 = vmatpush2.xpose.msra.mxu0 0.0
    %3591 = vmatprep.subr.mxu0 0.0
    %3592 = vmatpush2.xpose.msra.mxu0 0.0
    %3593 = vmatprep.subr.mxu0 0.0
    %3594 = vmatpush2.xpose.msra.mxu0 0.0
    %3595 = vmatprep.subr.mxu0 0.0
    %3596 = vmatpush2.xpose.msra.mxu0 0.0
    %3597 = vmatprep.mubr.f32.mxu0 0.0
    %3598 = vmatmul.mubr.f32.gmra.mxu0 %v3529
    %v3599 = vpop.f32.mrf.mxu0
    %v3600 = vadd.f32 0.0, %v3599
    %v3601 = vpop.f32.mrf.mxu0
    %3602 = vdwg.mxu0
    %v3603 = vsel %vm300, %v3054, -inf
    %3604 = vmax.xlane.f32.xlu0 %v3603
    %v3605 = vpop.xlane.xlu0 %3604
    %v3606 = vsel %vm300, %v3132, -inf
    %3607 = vmax.xlane.f32.xlu0 %v3606
    %v3608 = vpop.xlane.xlu0 %3607
    %v3609 = vsel %vm300, %v3210, -inf
    %3610 = vmax.xlane.f32.xlu0 %v3609
    %v3611 = vpop.xlane.xlu0 %3610
    %v3612 = vsel %vm300, %v3288, -inf
    %3613 = vmax.xlane.f32.xlu0 %v3612
    %v3614 = vpop.xlane.xlu0 %3613
    %v3615 = vsel %vm300, %v3366, -inf
    %3616 = vmax.xlane.f32.xlu0 %v3615
    %v3617 = vpop.xlane.xlu0 %3616
    %v3618 = vsel %vm300, %v3444, -inf
    %3619 = vmax.xlane.f32.xlu0 %v3618
    %v3620 = vpop.xlane.xlu0 %3619
    %v3621 = vsel %vm300, %v3522, -inf
    %3622 = vmax.xlane.f32.xlu0 %v3621
    %v3623 = vpop.xlane.xlu0 %3622
    %v3624 = vsel %vm300, %v3600, -inf
    %3625 = vmax.xlane.f32.xlu0 %v3624
    %v3626 = vpop.xlane.xlu0 %3625
    %v3627 = vsub.f32 %v3054, %v3605
    %v3628 = vsub.f32 %v3132, %v3608
    %v3629 = vsub.f32 %v3210, %v3611
    %v3630 = vsub.f32 %v3288, %v3614
    %v3631 = vsub.f32 %v3366, %v3617
    %v3632 = vsub.f32 %v3444, %v3620
    %v3633 = vsub.f32 %v3522, %v3623
    %v3634 = vsub.f32 %v3600, %v3626
    %v3635 = vmul.f32 %v3627, 1.442695
    %v3636 = vpow.pop %v3635
    %v3637 = vmul.f32 %v3628, 1.442695
    %v3638 = vpow.pop %v3637
    %v3639 = vmul.f32 %v3629, 1.442695
    %v3640 = vpow.pop %v3639
    %v3641 = vmul.f32 %v3630, 1.442695
    %v3642 = vpow.pop %v3641
    %v3643 = vmul.f32 %v3631, 1.442695
    %v3644 = vpow.pop %v3643
    %v3645 = vmul.f32 %v3632, 1.442695
    %v3646 = vpow.pop %v3645
    %v3647 = vmul.f32 %v3633, 1.442695
    %v3648 = vpow.pop %v3647
    %v3649 = vmul.f32 %v3634, 1.442695
    %v3650 = vpow.pop %v3649
    %v3651 = vsel %vm300, %v3636, 0.0
    %3652 = vadd.xlane.f32.xlu0 %v3651
    %v3653 = vpop.xlane.xlu0 %3652
    %v3654 = vsel %vm300, %v3638, 0.0
    %3655 = vadd.xlane.f32.xlu0 %v3654
    %v3656 = vpop.xlane.xlu0 %3655
    %v3657 = vsel %vm300, %v3640, 0.0
    %3658 = vadd.xlane.f32.xlu0 %v3657
    %v3659 = vpop.xlane.xlu0 %3658
    %v3660 = vsel %vm300, %v3642, 0.0
    %3661 = vadd.xlane.f32.xlu0 %v3660
    %v3662 = vpop.xlane.xlu0 %3661
    %v3663 = vsel %vm300, %v3644, 0.0
    %3664 = vadd.xlane.f32.xlu0 %v3663
    %v3665 = vpop.xlane.xlu0 %3664
    %v3666 = vsel %vm300, %v3646, 0.0
    %3667 = vadd.xlane.f32.xlu0 %v3666
    %v3668 = vpop.xlane.xlu0 %3667
    %v3669 = vsel %vm300, %v3648, 0.0
    %3670 = vadd.xlane.f32.xlu0 %v3669
    %v3671 = vpop.xlane.xlu0 %3670
    %v3672 = vsel %vm300, %v3650, 0.0
    %3673 = vadd.xlane.f32.xlu0 %v3672
    %v3674 = vpop.xlane.xlu0 %3673
    %v3675 = vrcp.pop %v3653
    %v3676 = vmul.f32 %v3636, %v3675
    %v3677 = vrcp.pop %v3656
    %v3678 = vmul.f32 %v3638, %v3677
    %v3679 = vrcp.pop %v3659
    %v3680 = vmul.f32 %v3640, %v3679
    %v3681 = vrcp.pop %v3662
    %v3682 = vmul.f32 %v3642, %v3681
    %v3683 = vrcp.pop %v3665
    %v3684 = vmul.f32 %v3644, %v3683
    %v3685 = vrcp.pop %v3668
    %v3686 = vmul.f32 %v3646, %v3685
    %v3687 = vrcp.pop %v3671
    %v3688 = vmul.f32 %v3648, %v3687
    %v3689 = vrcp.pop %v3674
    %v3690 = vmul.f32 %v3650, %v3689
    %3691 = vrot.lane.b32.xlu0 %v259, 48
    %v3692 = vpop.permute.xlu0 %3691
    %v3695 = vsel %vm300, %v3676, 0
    %3697 = vmatprep.subr.mxu0 0.0
    %3698 = vmatpush1.msra.mxu0 0.0
    %3699 = vmatprep.subr.mxu0 0.0
    %3700 = vmatpush1.msra.mxu0 0.0
    %3701 = vmatprep.subr.mxu0 0.0
    %3702 = vmatpush1.msra.mxu0 0.0
    %3703 = vmatprep.subr.mxu0 0.0
    %3704 = vmatpush1.msra.mxu0 0.0
    %3705 = vmatprep.subr.mxu0 0.0
    %3706 = vmatpush1.msra.mxu0 0.0
    %3707 = vmatprep.subr.mxu0 0.0
    %3708 = vmatpush1.msra.mxu0 0.0
    %3709 = vmatprep.subr.mxu0 0.0
    %3710 = vmatpush1.msra.mxu0 0.0
    %3711 = vmatprep.subr.mxu0 0.0
    %3712 = vmatpush1.msra.mxu0 0.0
    %3713 = vmatprep.subr.mxu0 0.0
    %3714 = vmatpush1.msra.mxu0 0.0
    %3715 = vmatprep.subr.mxu0 0.0
    %3716 = vmatpush1.msra.mxu0 0.0
    %3717 = vmatprep.subr.mxu0 0.0
    %3718 = vmatpush1.msra.mxu0 0.0
    %3719 = vmatprep.subr.mxu0 0.0
    %3720 = vmatpush1.msra.mxu0 0.0
    %3721 = vmatprep.subr.mxu0 0.0
    %3722 = vmatpush1.msra.mxu0 0.0
    %3723 = vmatprep.subr.mxu0 0.0
    %3724 = vmatpush1.msra.mxu0 0.0
    %3725 = vmatprep.subr.mxu0 0.0
    %3726 = vmatpush1.msra.mxu0 0.0
    %3727 = vmatprep.subr.mxu0 0.0
    %3728 = vmatpush1.msra.mxu0 %v3692
    %3729 = vmatprep.subr.mxu0 0.0
    %3730 = vmatpush2.msra.mxu0 0.0
    %3731 = vmatprep.subr.mxu0 0.0
    %3732 = vmatpush2.msra.mxu0 0.0
    %3733 = vmatprep.subr.mxu0 0.0
    %3734 = vmatpush2.msra.mxu0 0.0
    %3735 = vmatprep.subr.mxu0 0.0
    %3736 = vmatpush2.msra.mxu0 0.0
    %3737 = vmatprep.subr.mxu0 0.0
    %3738 = vmatpush2.msra.mxu0 0.0
    %3739 = vmatprep.subr.mxu0 0.0
    %3740 = vmatpush2.msra.mxu0 0.0
    %3741 = vmatprep.subr.mxu0 0.0
    %3742 = vmatpush2.msra.mxu0 0.0
    %3743 = vmatprep.subr.mxu0 0.0
    %3744 = vmatpush2.msra.mxu0 0.0
    %3745 = vmatprep.subr.mxu0 0.0
    %3746 = vmatpush2.msra.mxu0 0.0
    %3747 = vmatprep.subr.mxu0 0.0
    %3748 = vmatpush2.msra.mxu0 0.0
    %3749 = vmatprep.subr.mxu0 0.0
    %3750 = vmatpush2.msra.mxu0 0.0
    %3751 = vmatprep.subr.mxu0 0.0
    %3752 = vmatpush2.msra.mxu0 0.0
    %3753 = vmatprep.subr.mxu0 0.0
    %3754 = vmatpush2.msra.mxu0 0.0
    %3755 = vmatprep.subr.mxu0 0.0
    %3756 = vmatpush2.msra.mxu0 0.0
    %3757 = vmatprep.subr.mxu0 0.0
    %3758 = vmatpush2.msra.mxu0 0.0
    %3759 = vmatprep.subr.mxu0 0.0
    %3760 = vmatpush2.msra.mxu0 0.0
    %3761 = vmatprep.mubr.f32.mxu0 0.0
    %3762 = vmatmul.mubr.f32.gmra.mxu0 %v3695
    %v3763 = vpop.f32.mrf.mxu0
    %v3764 = vadd.f32 0.0, %v3763
    %v3765 = vpop.f32.mrf.mxu0
    %3766 = vdwg.mxu0
    %3767 = vrot.lane.b32.xlu0 %v264, 48
    %v3768 = vpop.permute.xlu0 %3767
    %v3771 = vsel %vm300, %v3678, 0
    %3773 = vmatprep.subr.mxu0 0.0
    %3774 = vmatpush1.msra.mxu0 0.0
    %3775 = vmatprep.subr.mxu0 0.0
    %3776 = vmatpush1.msra.mxu0 0.0
    %3777 = vmatprep.subr.mxu0 0.0
    %3778 = vmatpush1.msra.mxu0 0.0
    %3779 = vmatprep.subr.mxu0 0.0
    %3780 = vmatpush1.msra.mxu0 0.0
    %3781 = vmatprep.subr.mxu0 0.0
    %3782 = vmatpush1.msra.mxu0 0.0
    %3783 = vmatprep.subr.mxu0 0.0
    %3784 = vmatpush1.msra.mxu0 0.0
    %3785 = vmatprep.subr.mxu0 0.0
    %3786 = vmatpush1.msra.mxu0 0.0
    %3787 = vmatprep.subr.mxu0 0.0
    %3788 = vmatpush1.msra.mxu0 0.0
    %3789 = vmatprep.subr.mxu0 0.0
    %3790 = vmatpush1.msra.mxu0 0.0
    %3791 = vmatprep.subr.mxu0 0.0
    %3792 = vmatpush1.msra.mxu0 0.0
    %3793 = vmatprep.subr.mxu0 0.0
    %3794 = vmatpush1.msra.mxu0 0.0
    %3795 = vmatprep.subr.mxu0 0.0
    %3796 = vmatpush1.msra.mxu0 0.0
    %3797 = vmatprep.subr.mxu0 0.0
    %3798 = vmatpush1.msra.mxu0 0.0
    %3799 = vmatprep.subr.mxu0 0.0
    %3800 = vmatpush1.msra.mxu0 0.0
    %3801 = vmatprep.subr.mxu0 0.0
    %3802 = vmatpush1.msra.mxu0 0.0
    %3803 = vmatprep.subr.mxu0 0.0
    %3804 = vmatpush1.msra.mxu0 %v3768
    %3805 = vmatprep.subr.mxu0 0.0
    %3806 = vmatpush2.msra.mxu0 0.0
    %3807 = vmatprep.subr.mxu0 0.0
    %3808 = vmatpush2.msra.mxu0 0.0
    %3809 = vmatprep.subr.mxu0 0.0
    %3810 = vmatpush2.msra.mxu0 0.0
    %3811 = vmatprep.subr.mxu0 0.0
    %3812 = vmatpush2.msra.mxu0 0.0
    %3813 = vmatprep.subr.mxu0 0.0
    %3814 = vmatpush2.msra.mxu0 0.0
    %3815 = vmatprep.subr.mxu0 0.0
    %3816 = vmatpush2.msra.mxu0 0.0
    %3817 = vmatprep.subr.mxu0 0.0
    %3818 = vmatpush2.msra.mxu0 0.0
    %3819 = vmatprep.subr.mxu0 0.0
    %3820 = vmatpush2.msra.mxu0 0.0
    %3821 = vmatprep.subr.mxu0 0.0
    %3822 = vmatpush2.msra.mxu0 0.0
    %3823 = vmatprep.subr.mxu0 0.0
    %3824 = vmatpush2.msra.mxu0 0.0
    %3825 = vmatprep.subr.mxu0 0.0
    %3826 = vmatpush2.msra.mxu0 0.0
    %3827 = vmatprep.subr.mxu0 0.0
    %3828 = vmatpush2.msra.mxu0 0.0
    %3829 = vmatprep.subr.mxu0 0.0
    %3830 = vmatpush2.msra.mxu0 0.0
    %3831 = vmatprep.subr.mxu0 0.0
    %3832 = vmatpush2.msra.mxu0 0.0
    %3833 = vmatprep.subr.mxu0 0.0
    %3834 = vmatpush2.msra.mxu0 0.0
    %3835 = vmatprep.subr.mxu0 0.0
    %3836 = vmatpush2.msra.mxu0 0.0
    %3837 = vmatprep.mubr.f32.mxu0 0.0
    %3838 = vmatmul.mubr.f32.gmra.mxu0 %v3771
    %v3839 = vpop.f32.mrf.mxu0
    %v3840 = vadd.f32 0.0, %v3839
    %v3841 = vpop.f32.mrf.mxu0
    %3842 = vdwg.mxu0
    %3843 = vrot.lane.b32.xlu0 %v269, 48
    %v3844 = vpop.permute.xlu0 %3843
    %v3847 = vsel %vm300, %v3680, 0
    %3849 = vmatprep.subr.mxu0 0.0
    %3850 = vmatpush1.msra.mxu0 0.0
    %3851 = vmatprep.subr.mxu0 0.0
    %3852 = vmatpush1.msra.mxu0 0.0
    %3853 = vmatprep.subr.mxu0 0.0
    %3854 = vmatpush1.msra.mxu0 0.0
    %3855 = vmatprep.subr.mxu0 0.0
    %3856 = vmatpush1.msra.mxu0 0.0
    %3857 = vmatprep.subr.mxu0 0.0
    %3858 = vmatpush1.msra.mxu0 0.0
    %3859 = vmatprep.subr.mxu0 0.0
    %3860 = vmatpush1.msra.mxu0 0.0
    %3861 = vmatprep.subr.mxu0 0.0
    %3862 = vmatpush1.msra.mxu0 0.0
    %3863 = vmatprep.subr.mxu0 0.0
    %3864 = vmatpush1.msra.mxu0 0.0
    %3865 = vmatprep.subr.mxu0 0.0
    %3866 = vmatpush1.msra.mxu0 0.0
    %3867 = vmatprep.subr.mxu0 0.0
    %3868 = vmatpush1.msra.mxu0 0.0
    %3869 = vmatprep.subr.mxu0 0.0
    %3870 = vmatpush1.msra.mxu0 0.0
    %3871 = vmatprep.subr.mxu0 0.0
    %3872 = vmatpush1.msra.mxu0 0.0
    %3873 = vmatprep.subr.mxu0 0.0
    %3874 = vmatpush1.msra.mxu0 0.0
    %3875 = vmatprep.subr.mxu0 0.0
    %3876 = vmatpush1.msra.mxu0 0.0
    %3877 = vmatprep.subr.mxu0 0.0
    %3878 = vmatpush1.msra.mxu0 0.0
    %3879 = vmatprep.subr.mxu0 0.0
    %3880 = vmatpush1.msra.mxu0 %v3844
    %3881 = vmatprep.subr.mxu0 0.0
    %3882 = vmatpush2.msra.mxu0 0.0
    %3883 = vmatprep.subr.mxu0 0.0
    %3884 = vmatpush2.msra.mxu0 0.0
    %3885 = vmatprep.subr.mxu0 0.0
    %3886 = vmatpush2.msra.mxu0 0.0
    %3887 = vmatprep.subr.mxu0 0.0
    %3888 = vmatpush2.msra.mxu0 0.0
    %3889 = vmatprep.subr.mxu0 0.0
    %3890 = vmatpush2.msra.mxu0 0.0
    %3891 = vmatprep.subr.mxu0 0.0
    %3892 = vmatpush2.msra.mxu0 0.0
    %3893 = vmatprep.subr.mxu0 0.0
    %3894 = vmatpush2.msra.mxu0 0.0
    %3895 = vmatprep.subr.mxu0 0.0
    %3896 = vmatpush2.msra.mxu0 0.0
    %3897 = vmatprep.subr.mxu0 0.0
    %3898 = vmatpush2.msra.mxu0 0.0
    %3899 = vmatprep.subr.mxu0 0.0
    %3900 = vmatpush2.msra.mxu0 0.0
    %3901 = vmatprep.subr.mxu0 0.0
    %3902 = vmatpush2.msra.mxu0 0.0
    %3903 = vmatprep.subr.mxu0 0.0
    %3904 = vmatpush2.msra.mxu0 0.0
    %3905 = vmatprep.subr.mxu0 0.0
    %3906 = vmatpush2.msra.mxu0 0.0
    %3907 = vmatprep.subr.mxu0 0.0
    %3908 = vmatpush2.msra.mxu0 0.0
    %3909 = vmatprep.subr.mxu0 0.0
    %3910 = vmatpush2.msra.mxu0 0.0
    %3911 = vmatprep.subr.mxu0 0.0
    %3912 = vmatpush2.msra.mxu0 0.0
    %3913 = vmatprep.mubr.f32.mxu0 0.0
    %3914 = vmatmul.mubr.f32.gmra.mxu0 %v3847
    %v3915 = vpop.f32.mrf.mxu0
    %v3916 = vadd.f32 0.0, %v3915
    %v3917 = vpop.f32.mrf.mxu0
    %3918 = vdwg.mxu0
    %3919 = vrot.lane.b32.xlu0 %v274, 48
    %v3920 = vpop.permute.xlu0 %3919
    %v3923 = vsel %vm300, %v3682, 0
    %3925 = vmatprep.subr.mxu0 0.0
    %3926 = vmatpush1.msra.mxu0 0.0
    %3927 = vmatprep.subr.mxu0 0.0
    %3928 = vmatpush1.msra.mxu0 0.0
    %3929 = vmatprep.subr.mxu0 0.0
    %3930 = vmatpush1.msra.mxu0 0.0
    %3931 = vmatprep.subr.mxu0 0.0
    %3932 = vmatpush1.msra.mxu0 0.0
    %3933 = vmatprep.subr.mxu0 0.0
    %3934 = vmatpush1.msra.mxu0 0.0
    %3935 = vmatprep.subr.mxu0 0.0
    %3936 = vmatpush1.msra.mxu0 0.0
    %3937 = vmatprep.subr.mxu0 0.0
    %3938 = vmatpush1.msra.mxu0 0.0
    %3939 = vmatprep.subr.mxu0 0.0
    %3940 = vmatpush1.msra.mxu0 0.0
    %3941 = vmatprep.subr.mxu0 0.0
    %3942 = vmatpush1.msra.mxu0 0.0
    %3943 = vmatprep.subr.mxu0 0.0
    %3944 = vmatpush1.msra.mxu0 0.0
    %3945 = vmatprep.subr.mxu0 0.0
    %3946 = vmatpush1.msra.mxu0 0.0
    %3947 = vmatprep.subr.mxu0 0.0
    %3948 = vmatpush1.msra.mxu0 0.0
    %3949 = vmatprep.subr.mxu0 0.0
    %3950 = vmatpush1.msra.mxu0 0.0
    %3951 = vmatprep.subr.mxu0 0.0
    %3952 = vmatpush1.msra.mxu0 0.0
    %3953 = vmatprep.subr.mxu0 0.0
    %3954 = vmatpush1.msra.mxu0 0.0
    %3955 = vmatprep.subr.mxu0 0.0
    %3956 = vmatpush1.msra.mxu0 %v3920
    %3957 = vmatprep.subr.mxu0 0.0
    %3958 = vmatpush2.msra.mxu0 0.0
    %3959 = vmatprep.subr.mxu0 0.0
    %3960 = vmatpush2.msra.mxu0 0.0
    %3961 = vmatprep.subr.mxu0 0.0
    %3962 = vmatpush2.msra.mxu0 0.0
    %3963 = vmatprep.subr.mxu0 0.0
    %3964 = vmatpush2.msra.mxu0 0.0
    %3965 = vmatprep.subr.mxu0 0.0
    %3966 = vmatpush2.msra.mxu0 0.0
    %3967 = vmatprep.subr.mxu0 0.0
    %3968 = vmatpush2.msra.mxu0 0.0
    %3969 = vmatprep.subr.mxu0 0.0
    %3970 = vmatpush2.msra.mxu0 0.0
    %3971 = vmatprep.subr.mxu0 0.0
    %3972 = vmatpush2.msra.mxu0 0.0
    %3973 = vmatprep.subr.mxu0 0.0
    %3974 = vmatpush2.msra.mxu0 0.0
    %3975 = vmatprep.subr.mxu0 0.0
    %3976 = vmatpush2.msra.mxu0 0.0
    %3977 = vmatprep.subr.mxu0 0.0
    %3978 = vmatpush2.msra.mxu0 0.0
    %3979 = vmatprep.subr.mxu0 0.0
    %3980 = vmatpush2.msra.mxu0 0.0
    %3981 = vmatprep.subr.mxu0 0.0
    %3982 = vmatpush2.msra.mxu0 0.0
    %3983 = vmatprep.subr.mxu0 0.0
    %3984 = vmatpush2.msra.mxu0 0.0
    %3985 = vmatprep.subr.mxu0 0.0
    %3986 = vmatpush2.msra.mxu0 0.0
    %3987 = vmatprep.subr.mxu0 0.0
    %3988 = vmatpush2.msra.mxu0 0.0
    %3989 = vmatprep.mubr.f32.mxu0 0.0
    %3990 = vmatmul.mubr.f32.gmra.mxu0 %v3923
    %v3991 = vpop.f32.mrf.mxu0
    %v3992 = vadd.f32 0.0, %v3991
    %v3993 = vpop.f32.mrf.mxu0
    %3994 = vdwg.mxu0
    %3995 = vrot.lane.b32.xlu0 %v279, 48
    %v3996 = vpop.permute.xlu0 %3995
    %v3999 = vsel %vm300, %v3684, 0
    %4001 = vmatprep.subr.mxu0 0.0
    %4002 = vmatpush1.msra.mxu0 0.0
    %4003 = vmatprep.subr.mxu0 0.0
    %4004 = vmatpush1.msra.mxu0 0.0
    %4005 = vmatprep.subr.mxu0 0.0
    %4006 = vmatpush1.msra.mxu0 0.0
    %4007 = vmatprep.subr.mxu0 0.0
    %4008 = vmatpush1.msra.mxu0 0.0
    %4009 = vmatprep.subr.mxu0 0.0
    %4010 = vmatpush1.msra.mxu0 0.0
    %4011 = vmatprep.subr.mxu0 0.0
    %4012 = vmatpush1.msra.mxu0 0.0
    %4013 = vmatprep.subr.mxu0 0.0
    %4014 = vmatpush1.msra.mxu0 0.0
    %4015 = vmatprep.subr.mxu0 0.0
    %4016 = vmatpush1.msra.mxu0 0.0
    %4017 = vmatprep.subr.mxu0 0.0
    %4018 = vmatpush1.msra.mxu0 0.0
    %4019 = vmatprep.subr.mxu0 0.0
    %4020 = vmatpush1.msra.mxu0 0.0
    %4021 = vmatprep.subr.mxu0 0.0
    %4022 = vmatpush1.msra.mxu0 0.0
    %4023 = vmatprep.subr.mxu0 0.0
    %4024 = vmatpush1.msra.mxu0 0.0
    %4025 = vmatprep.subr.mxu0 0.0
    %4026 = vmatpush1.msra.mxu0 0.0
    %4027 = vmatprep.subr.mxu0 0.0
    %4028 = vmatpush1.msra.mxu0 0.0
    %4029 = vmatprep.subr.mxu0 0.0
    %4030 = vmatpush1.msra.mxu0 0.0
    %4031 = vmatprep.subr.mxu0 0.0
    %4032 = vmatpush1.msra.mxu0 %v3996
    %4033 = vmatprep.subr.mxu0 0.0
    %4034 = vmatpush2.msra.mxu0 0.0
    %4035 = vmatprep.subr.mxu0 0.0
    %4036 = vmatpush2.msra.mxu0 0.0
    %4037 = vmatprep.subr.mxu0 0.0
    %4038 = vmatpush2.msra.mxu0 0.0
    %4039 = vmatprep.subr.mxu0 0.0
    %4040 = vmatpush2.msra.mxu0 0.0
    %4041 = vmatprep.subr.mxu0 0.0
    %4042 = vmatpush2.msra.mxu0 0.0
    %4043 = vmatprep.subr.mxu0 0.0
    %4044 = vmatpush2.msra.mxu0 0.0
    %4045 = vmatprep.subr.mxu0 0.0
    %4046 = vmatpush2.msra.mxu0 0.0
    %4047 = vmatprep.subr.mxu0 0.0
    %4048 = vmatpush2.msra.mxu0 0.0
    %4049 = vmatprep.subr.mxu0 0.0
    %4050 = vmatpush2.msra.mxu0 0.0
    %4051 = vmatprep.subr.mxu0 0.0
    %4052 = vmatpush2.msra.mxu0 0.0
    %4053 = vmatprep.subr.mxu0 0.0
    %4054 = vmatpush2.msra.mxu0 0.0
    %4055 = vmatprep.subr.mxu0 0.0
    %4056 = vmatpush2.msra.mxu0 0.0
    %4057 = vmatprep.subr.mxu0 0.0
    %4058 = vmatpush2.msra.mxu0 0.0
    %4059 = vmatprep.subr.mxu0 0.0
    %4060 = vmatpush2.msra.mxu0 0.0
    %4061 = vmatprep.subr.mxu0 0.0
    %4062 = vmatpush2.msra.mxu0 0.0
    %4063 = vmatprep.subr.mxu0 0.0
    %4064 = vmatpush2.msra.mxu0 0.0
    %4065 = vmatprep.mubr.f32.mxu0 0.0
    %4066 = vmatmul.mubr.f32.gmra.mxu0 %v3999
    %v4067 = vpop.f32.mrf.mxu0
    %v4068 = vadd.f32 0.0, %v4067
    %v4069 = vpop.f32.mrf.mxu0
    %4070 = vdwg.mxu0
    %4071 = vrot.lane.b32.xlu0 %v284, 48
    %v4072 = vpop.permute.xlu0 %4071
    %v4075 = vsel %vm300, %v3686, 0
    %4077 = vmatprep.subr.mxu0 0.0
    %4078 = vmatpush1.msra.mxu0 0.0
    %4079 = vmatprep.subr.mxu0 0.0
    %4080 = vmatpush1.msra.mxu0 0.0
    %4081 = vmatprep.subr.mxu0 0.0
    %4082 = vmatpush1.msra.mxu0 0.0
    %4083 = vmatprep.subr.mxu0 0.0
    %4084 = vmatpush1.msra.mxu0 0.0
    %4085 = vmatprep.subr.mxu0 0.0
    %4086 = vmatpush1.msra.mxu0 0.0
    %4087 = vmatprep.subr.mxu0 0.0
    %4088 = vmatpush1.msra.mxu0 0.0
    %4089 = vmatprep.subr.mxu0 0.0
    %4090 = vmatpush1.msra.mxu0 0.0
    %4091 = vmatprep.subr.mxu0 0.0
    %4092 = vmatpush1.msra.mxu0 0.0
    %4093 = vmatprep.subr.mxu0 0.0
    %4094 = vmatpush1.msra.mxu0 0.0
    %4095 = vmatprep.subr.mxu0 0.0
    %4096 = vmatpush1.msra.mxu0 0.0
    %4097 = vmatprep.subr.mxu0 0.0
    %4098 = vmatpush1.msra.mxu0 0.0
    %4099 = vmatprep.subr.mxu0 0.0
    %4100 = vmatpush1.msra.mxu0 0.0
    %4101 = vmatprep.subr.mxu0 0.0
    %4102 = vmatpush1.msra.mxu0 0.0
    %4103 = vmatprep.subr.mxu0 0.0
    %4104 = vmatpush1.msra.mxu0 0.0
    %4105 = vmatprep.subr.mxu0 0.0
    %4106 = vmatpush1.msra.mxu0 0.0
    %4107 = vmatprep.subr.mxu0 0.0
    %4108 = vmatpush1.msra.mxu0 %v4072
    %4109 = vmatprep.subr.mxu0 0.0
    %4110 = vmatpush2.msra.mxu0 0.0
    %4111 = vmatprep.subr.mxu0 0.0
    %4112 = vmatpush2.msra.mxu0 0.0
    %4113 = vmatprep.subr.mxu0 0.0
    %4114 = vmatpush2.msra.mxu0 0.0
    %4115 = vmatprep.subr.mxu0 0.0
    %4116 = vmatpush2.msra.mxu0 0.0
    %4117 = vmatprep.subr.mxu0 0.0
    %4118 = vmatpush2.msra.mxu0 0.0
    %4119 = vmatprep.subr.mxu0 0.0
    %4120 = vmatpush2.msra.mxu0 0.0
    %4121 = vmatprep.subr.mxu0 0.0
    %4122 = vmatpush2.msra.mxu0 0.0
    %4123 = vmatprep.subr.mxu0 0.0
    %4124 = vmatpush2.msra.mxu0 0.0
    %4125 = vmatprep.subr.mxu0 0.0
    %4126 = vmatpush2.msra.mxu0 0.0
    %4127 = vmatprep.subr.mxu0 0.0
    %4128 = vmatpush2.msra.mxu0 0.0
    %4129 = vmatprep.subr.mxu0 0.0
    %4130 = vmatpush2.msra.mxu0 0.0
    %4131 = vmatprep.subr.mxu0 0.0
    %4132 = vmatpush2.msra.mxu0 0.0
    %4133 = vmatprep.subr.mxu0 0.0
    %4134 = vmatpush2.msra.mxu0 0.0
    %4135 = vmatprep.subr.mxu0 0.0
    %4136 = vmatpush2.msra.mxu0 0.0
    %4137 = vmatprep.subr.mxu0 0.0
    %4138 = vmatpush2.msra.mxu0 0.0
    %4139 = vmatprep.subr.mxu0 0.0
    %4140 = vmatpush2.msra.mxu0 0.0
    %4141 = vmatprep.mubr.f32.mxu0 0.0
    %4142 = vmatmul.mubr.f32.gmra.mxu0 %v4075
    %v4143 = vpop.f32.mrf.mxu0
    %v4144 = vadd.f32 0.0, %v4143
    %v4145 = vpop.f32.mrf.mxu0
    %4146 = vdwg.mxu0
    %4147 = vrot.lane.b32.xlu0 %v289, 48
    %v4148 = vpop.permute.xlu0 %4147
    %v4151 = vsel %vm300, %v3688, 0
    %4153 = vmatprep.subr.mxu0 0.0
    %4154 = vmatpush1.msra.mxu0 0.0
    %4155 = vmatprep.subr.mxu0 0.0
    %4156 = vmatpush1.msra.mxu0 0.0
    %4157 = vmatprep.subr.mxu0 0.0
    %4158 = vmatpush1.msra.mxu0 0.0
    %4159 = vmatprep.subr.mxu0 0.0
    %4160 = vmatpush1.msra.mxu0 0.0
    %4161 = vmatprep.subr.mxu0 0.0
    %4162 = vmatpush1.msra.mxu0 0.0
    %4163 = vmatprep.subr.mxu0 0.0
    %4164 = vmatpush1.msra.mxu0 0.0
    %4165 = vmatprep.subr.mxu0 0.0
    %4166 = vmatpush1.msra.mxu0 0.0
    %4167 = vmatprep.subr.mxu0 0.0
    %4168 = vmatpush1.msra.mxu0 0.0
    %4169 = vmatprep.subr.mxu0 0.0
    %4170 = vmatpush1.msra.mxu0 0.0
    %4171 = vmatprep.subr.mxu0 0.0
    %4172 = vmatpush1.msra.mxu0 0.0
    %4173 = vmatprep.subr.mxu0 0.0
    %4174 = vmatpush1.msra.mxu0 0.0
    %4175 = vmatprep.subr.mxu0 0.0
    %4176 = vmatpush1.msra.mxu0 0.0
    %4177 = vmatprep.subr.mxu0 0.0
    %4178 = vmatpush1.msra.mxu0 0.0
    %4179 = vmatprep.subr.mxu0 0.0
    %4180 = vmatpush1.msra.mxu0 0.0
    %4181 = vmatprep.subr.mxu0 0.0
    %4182 = vmatpush1.msra.mxu0 0.0
    %4183 = vmatprep.subr.mxu0 0.0
    %4184 = vmatpush1.msra.mxu0 %v4148
    %4185 = vmatprep.subr.mxu0 0.0
    %4186 = vmatpush2.msra.mxu0 0.0
    %4187 = vmatprep.subr.mxu0 0.0
    %4188 = vmatpush2.msra.mxu0 0.0
    %4189 = vmatprep.subr.mxu0 0.0
    %4190 = vmatpush2.msra.mxu0 0.0
    %4191 = vmatprep.subr.mxu0 0.0
    %4192 = vmatpush2.msra.mxu0 0.0
    %4193 = vmatprep.subr.mxu0 0.0
    %4194 = vmatpush2.msra.mxu0 0.0
    %4195 = vmatprep.subr.mxu0 0.0
    %4196 = vmatpush2.msra.mxu0 0.0
    %4197 = vmatprep.subr.mxu0 0.0
    %4198 = vmatpush2.msra.mxu0 0.0
    %4199 = vmatprep.subr.mxu0 0.0
    %4200 = vmatpush2.msra.mxu0 0.0
    %4201 = vmatprep.subr.mxu0 0.0
    %4202 = vmatpush2.msra.mxu0 0.0
    %4203 = vmatprep.subr.mxu0 0.0
    %4204 = vmatpush2.msra.mxu0 0.0
    %4205 = vmatprep.subr.mxu0 0.0
    %4206 = vmatpush2.msra.mxu0 0.0
    %4207 = vmatprep.subr.mxu0 0.0
    %4208 = vmatpush2.msra.mxu0 0.0
    %4209 = vmatprep.subr.mxu0 0.0
    %4210 = vmatpush2.msra.mxu0 0.0
    %4211 = vmatprep.subr.mxu0 0.0
    %4212 = vmatpush2.msra.mxu0 0.0
    %4213 = vmatprep.subr.mxu0 0.0
    %4214 = vmatpush2.msra.mxu0 0.0
    %4215 = vmatprep.subr.mxu0 0.0
    %4216 = vmatpush2.msra.mxu0 0.0
    %4217 = vmatprep.mubr.f32.mxu0 0.0
    %4218 = vmatmul.mubr.f32.gmra.mxu0 %v4151
    %v4219 = vpop.f32.mrf.mxu0
    %v4220 = vadd.f32 0.0, %v4219
    %v4221 = vpop.f32.mrf.mxu0
    %4222 = vdwg.mxu0
    %4223 = vrot.lane.b32.xlu0 %v294, 48
    %v4224 = vpop.permute.xlu0 %4223
    %v4227 = vsel %vm300, %v3690, 0
    %4229 = vmatprep.subr.mxu0 0.0
    %4230 = vmatpush1.msra.mxu0 0.0
    %4231 = vmatprep.subr.mxu0 0.0
    %4232 = vmatpush1.msra.mxu0 0.0
    %4233 = vmatprep.subr.mxu0 0.0
    %4234 = vmatpush1.msra.mxu0 0.0
    %4235 = vmatprep.subr.mxu0 0.0
    %4236 = vmatpush1.msra.mxu0 0.0
    %4237 = vmatprep.subr.mxu0 0.0
    %4238 = vmatpush1.msra.mxu0 0.0
    %4239 = vmatprep.subr.mxu0 0.0
    %4240 = vmatpush1.msra.mxu0 0.0
    %4241 = vmatprep.subr.mxu0 0.0
    %4242 = vmatpush1.msra.mxu0 0.0
    %4243 = vmatprep.subr.mxu0 0.0
    %4244 = vmatpush1.msra.mxu0 0.0
    %4245 = vmatprep.subr.mxu0 0.0
    %4246 = vmatpush1.msra.mxu0 0.0
    %4247 = vmatprep.subr.mxu0 0.0
    %4248 = vmatpush1.msra.mxu0 0.0
    %4249 = vmatprep.subr.mxu0 0.0
    %4250 = vmatpush1.msra.mxu0 0.0
    %4251 = vmatprep.subr.mxu0 0.0
    %4252 = vmatpush1.msra.mxu0 0.0
    %4253 = vmatprep.subr.mxu0 0.0
    %4254 = vmatpush1.msra.mxu0 0.0
    %4255 = vmatprep.subr.mxu0 0.0
    %4256 = vmatpush1.msra.mxu0 0.0
    %4257 = vmatprep.subr.mxu0 0.0
    %4258 = vmatpush1.msra.mxu0 0.0
    %4259 = vmatprep.subr.mxu0 0.0
    %4260 = vmatpush1.msra.mxu0 %v4224
    %4261 = vmatprep.subr.mxu0 0.0
    %4262 = vmatpush2.msra.mxu0 0.0
    %4263 = vmatprep.subr.mxu0 0.0
    %4264 = vmatpush2.msra.mxu0 0.0
    %4265 = vmatprep.subr.mxu0 0.0
    %4266 = vmatpush2.msra.mxu0 0.0
    %4267 = vmatprep.subr.mxu0 0.0
    %4268 = vmatpush2.msra.mxu0 0.0
    %4269 = vmatprep.subr.mxu0 0.0
    %4270 = vmatpush2.msra.mxu0 0.0
    %4271 = vmatprep.subr.mxu0 0.0
    %4272 = vmatpush2.msra.mxu0 0.0
    %4273 = vmatprep.subr.mxu0 0.0
    %4274 = vmatpush2.msra.mxu0 0.0
    %4275 = vmatprep.subr.mxu0 0.0
    %4276 = vmatpush2.msra.mxu0 0.0
    %4277 = vmatprep.subr.mxu0 0.0
    %4278 = vmatpush2.msra.mxu0 0.0
    %4279 = vmatprep.subr.mxu0 0.0
    %4280 = vmatpush2.msra.mxu0 0.0
    %4281 = vmatprep.subr.mxu0 0.0
    %4282 = vmatpush2.msra.mxu0 0.0
    %4283 = vmatprep.subr.mxu0 0.0
    %4284 = vmatpush2.msra.mxu0 0.0
    %4285 = vmatprep.subr.mxu0 0.0
    %4286 = vmatpush2.msra.mxu0 0.0
    %4287 = vmatprep.subr.mxu0 0.0
    %4288 = vmatpush2.msra.mxu0 0.0
    %4289 = vmatprep.subr.mxu0 0.0
    %4290 = vmatpush2.msra.mxu0 0.0
    %4291 = vmatprep.subr.mxu0 0.0
    %4292 = vmatpush2.msra.mxu0 0.0
    %4293 = vmatprep.mubr.f32.mxu0 0.0
    %4294 = vmatmul.mubr.f32.gmra.mxu0 %v4227
    %v4295 = vpop.f32.mrf.mxu0
    %v4296 = vadd.f32 0.0, %v4295
    %v4297 = vpop.f32.mrf.mxu0
    %4298 = vdwg.mxu0
    %4307 = vrot.lane.b32.xlu0 %v3764, 16
    %v4308 = vpop.permute.xlu0 %4307
    %4309 = vrot.lane.b32.xlu0 %v3840, 16
    %v4310 = vpop.permute.xlu0 %4309
    %4311 = vrot.lane.b32.xlu0 %v3916, 16
    %v4312 = vpop.permute.xlu0 %4311
    %4313 = vrot.lane.b32.xlu0 %v3992, 16
    %v4314 = vpop.permute.xlu0 %4313
    %4315 = vrot.lane.b32.xlu0 %v4068, 16
    %v4316 = vpop.permute.xlu0 %4315
    %4317 = vrot.lane.b32.xlu0 %v4144, 16
    %v4318 = vpop.permute.xlu0 %4317
    %4319 = vrot.lane.b32.xlu0 %v4220, 16
    %v4320 = vpop.permute.xlu0 %4319
    %4321 = vrot.lane.b32.xlu0 %v4296, 16
    %v4322 = vpop.permute.xlu0 %4321
    %vm4331 = vcmask 195712
    %4332 = vst.msk [vmem:[#allocation2] sm:$0xff] %vm4331, %v4308
    %4333 = vst.msk [vmem:[#allocation2 + $0x8] sm:$0xff] %vm4331, %v4310
    %4334 = vst.msk [vmem:[#allocation2 + $0x10] sm:$0xff] %vm4331, %v4312
    %4335 = vst.msk [vmem:[#allocation2 + $0x18] sm:$0xff] %vm4331, %v4314
    %4336 = vst.msk [vmem:[#allocation2 + $0x20] sm:$0xff] %vm4331, %v4316
    %4337 = vst.msk [vmem:[#allocation2 + $0x28] sm:$0xff] %vm4331, %v4318
    %4338 = vst.msk [vmem:[#allocation2 + $0x30] sm:$0xff] %vm4331, %v4320
    %4339 = vst.msk [vmem:[#allocation2 + $0x38] sm:$0xff] %vm4331, %v4322
    %4340 = vrot.lane.b32.xlu0 %v259, 104
    %v4341 = vpop.permute.xlu0 %4340
    %4342 = vrot.lane.b32.xlu0 %v259, 72
    %v4343 = vpop.permute.xlu0 %4342
    %v4344 = vsel %vm300, %v4341, 0
    %v4346 = vsel %vm300, %v4343, 0
    %4348 = vmatprep.subr.mxu0 0.0
    %4349 = vmatpush1.xpose.msra.mxu0 0.0
    %4350 = vmatprep.subr.mxu0 0.0
    %4351 = vmatpush1.xpose.msra.mxu0 0.0
    %4352 = vmatprep.subr.mxu0 0.0
    %4353 = vmatpush1.xpose.msra.mxu0 0.0
    %4354 = vmatprep.subr.mxu0 0.0
    %4355 = vmatpush1.xpose.msra.mxu0 0.0
    %4356 = vmatprep.subr.mxu0 0.0
    %4357 = vmatpush1.xpose.msra.mxu0 0.0
    %4358 = vmatprep.subr.mxu0 0.0
    %4359 = vmatpush1.xpose.msra.mxu0 0.0
    %4360 = vmatprep.subr.mxu0 0.0
    %4361 = vmatpush1.xpose.msra.mxu0 0.0
    %4362 = vmatprep.subr.mxu0 0.0
    %4363 = vmatpush1.xpose.msra.mxu0 0.0
    %4364 = vmatprep.subr.mxu0 0.0
    %4365 = vmatpush1.xpose.msra.mxu0 0.0
    %4366 = vmatprep.subr.mxu0 0.0
    %4367 = vmatpush1.xpose.msra.mxu0 0.0
    %4368 = vmatprep.subr.mxu0 0.0
    %4369 = vmatpush1.xpose.msra.mxu0 0.0
    %4370 = vmatprep.subr.mxu0 0.0
    %4371 = vmatpush1.xpose.msra.mxu0 0.0
    %4372 = vmatprep.subr.mxu0 0.0
    %4373 = vmatpush1.xpose.msra.mxu0 0.0
    %4374 = vmatprep.subr.mxu0 0.0
    %4375 = vmatpush1.xpose.msra.mxu0 0.0
    %4376 = vmatprep.subr.mxu0 0.0
    %4377 = vmatpush1.xpose.msra.mxu0 0.0
    %4378 = vmatprep.subr.mxu0 0.0
    %4379 = vmatpush1.xpose.msra.mxu0 %v4346
    %4380 = vmatprep.subr.mxu0 0.0
    %4381 = vmatpush2.xpose.msra.mxu0 0.0
    %4382 = vmatprep.subr.mxu0 0.0
    %4383 = vmatpush2.xpose.msra.mxu0 0.0
    %4384 = vmatprep.subr.mxu0 0.0
    %4385 = vmatpush2.xpose.msra.mxu0 0.0
    %4386 = vmatprep.subr.mxu0 0.0
    %4387 = vmatpush2.xpose.msra.mxu0 0.0
    %4388 = vmatprep.subr.mxu0 0.0
    %4389 = vmatpush2.xpose.msra.mxu0 0.0
    %4390 = vmatprep.subr.mxu0 0.0
    %4391 = vmatpush2.xpose.msra.mxu0 0.0
    %4392 = vmatprep.subr.mxu0 0.0
    %4393 = vmatpush2.xpose.msra.mxu0 0.0
    %4394 = vmatprep.subr.mxu0 0.0
    %4395 = vmatpush2.xpose.msra.mxu0 0.0
    %4396 = vmatprep.subr.mxu0 0.0
    %4397 = vmatpush2.xpose.msra.mxu0 0.0
    %4398 = vmatprep.subr.mxu0 0.0
    %4399 = vmatpush2.xpose.msra.mxu0 0.0
    %4400 = vmatprep.subr.mxu0 0.0
    %4401 = vmatpush2.xpose.msra.mxu0 0.0
    %4402 = vmatprep.subr.mxu0 0.0
    %4403 = vmatpush2.xpose.msra.mxu0 0.0
    %4404 = vmatprep.subr.mxu0 0.0
    %4405 = vmatpush2.xpose.msra.mxu0 0.0
    %4406 = vmatprep.subr.mxu0 0.0
    %4407 = vmatpush2.xpose.msra.mxu0 0.0
    %4408 = vmatprep.subr.mxu0 0.0
    %4409 = vmatpush2.xpose.msra.mxu0 0.0
    %4410 = vmatprep.subr.mxu0 0.0
    %4411 = vmatpush2.xpose.msra.mxu0 0.0
    %4412 = vmatprep.mubr.f32.mxu0 0.0
    %4413 = vmatmul.mubr.f32.gmra.mxu0 %v4344
    %v4414 = vpop.f32.mrf.mxu0
    %v4415 = vadd.f32 0.0, %v4414
    %v4416 = vpop.f32.mrf.mxu0
    %4417 = vdwg.mxu0
    %4418 = vrot.lane.b32.xlu0 %v264, 104
    %v4419 = vpop.permute.xlu0 %4418
    %4420 = vrot.lane.b32.xlu0 %v264, 72
    %v4421 = vpop.permute.xlu0 %4420
    %v4422 = vsel %vm300, %v4419, 0
    %v4424 = vsel %vm300, %v4421, 0
    %4426 = vmatprep.subr.mxu0 0.0
    %4427 = vmatpush1.xpose.msra.mxu0 0.0
    %4428 = vmatprep.subr.mxu0 0.0
    %4429 = vmatpush1.xpose.msra.mxu0 0.0
    %4430 = vmatprep.subr.mxu0 0.0
    %4431 = vmatpush1.xpose.msra.mxu0 0.0
    %4432 = vmatprep.subr.mxu0 0.0
    %4433 = vmatpush1.xpose.msra.mxu0 0.0
    %4434 = vmatprep.subr.mxu0 0.0
    %4435 = vmatpush1.xpose.msra.mxu0 0.0
    %4436 = vmatprep.subr.mxu0 0.0
    %4437 = vmatpush1.xpose.msra.mxu0 0.0
    %4438 = vmatprep.subr.mxu0 0.0
    %4439 = vmatpush1.xpose.msra.mxu0 0.0
    %4440 = vmatprep.subr.mxu0 0.0
    %4441 = vmatpush1.xpose.msra.mxu0 0.0
    %4442 = vmatprep.subr.mxu0 0.0
    %4443 = vmatpush1.xpose.msra.mxu0 0.0
    %4444 = vmatprep.subr.mxu0 0.0
    %4445 = vmatpush1.xpose.msra.mxu0 0.0
    %4446 = vmatprep.subr.mxu0 0.0
    %4447 = vmatpush1.xpose.msra.mxu0 0.0
    %4448 = vmatprep.subr.mxu0 0.0
    %4449 = vmatpush1.xpose.msra.mxu0 0.0
    %4450 = vmatprep.subr.mxu0 0.0
    %4451 = vmatpush1.xpose.msra.mxu0 0.0
    %4452 = vmatprep.subr.mxu0 0.0
    %4453 = vmatpush1.xpose.msra.mxu0 0.0
    %4454 = vmatprep.subr.mxu0 0.0
    %4455 = vmatpush1.xpose.msra.mxu0 0.0
    %4456 = vmatprep.subr.mxu0 0.0
    %4457 = vmatpush1.xpose.msra.mxu0 %v4424
    %4458 = vmatprep.subr.mxu0 0.0
    %4459 = vmatpush2.xpose.msra.mxu0 0.0
    %4460 = vmatprep.subr.mxu0 0.0
    %4461 = vmatpush2.xpose.msra.mxu0 0.0
    %4462 = vmatprep.subr.mxu0 0.0
    %4463 = vmatpush2.xpose.msra.mxu0 0.0
    %4464 = vmatprep.subr.mxu0 0.0
    %4465 = vmatpush2.xpose.msra.mxu0 0.0
    %4466 = vmatprep.subr.mxu0 0.0
    %4467 = vmatpush2.xpose.msra.mxu0 0.0
    %4468 = vmatprep.subr.mxu0 0.0
    %4469 = vmatpush2.xpose.msra.mxu0 0.0
    %4470 = vmatprep.subr.mxu0 0.0
    %4471 = vmatpush2.xpose.msra.mxu0 0.0
    %4472 = vmatprep.subr.mxu0 0.0
    %4473 = vmatpush2.xpose.msra.mxu0 0.0
    %4474 = vmatprep.subr.mxu0 0.0
    %4475 = vmatpush2.xpose.msra.mxu0 0.0
    %4476 = vmatprep.subr.mxu0 0.0
    %4477 = vmatpush2.xpose.msra.mxu0 0.0
    %4478 = vmatprep.subr.mxu0 0.0
    %4479 = vmatpush2.xpose.msra.mxu0 0.0
    %4480 = vmatprep.subr.mxu0 0.0
    %4481 = vmatpush2.xpose.msra.mxu0 0.0
    %4482 = vmatprep.subr.mxu0 0.0
    %4483 = vmatpush2.xpose.msra.mxu0 0.0
    %4484 = vmatprep.subr.mxu0 0.0
    %4485 = vmatpush2.xpose.msra.mxu0 0.0
    %4486 = vmatprep.subr.mxu0 0.0
    %4487 = vmatpush2.xpose.msra.mxu0 0.0
    %4488 = vmatprep.subr.mxu0 0.0
    %4489 = vmatpush2.xpose.msra.mxu0 0.0
    %4490 = vmatprep.mubr.f32.mxu0 0.0
    %4491 = vmatmul.mubr.f32.gmra.mxu0 %v4422
    %v4492 = vpop.f32.mrf.mxu0
    %v4493 = vadd.f32 0.0, %v4492
    %v4494 = vpop.f32.mrf.mxu0
    %4495 = vdwg.mxu0
    %4496 = vrot.lane.b32.xlu0 %v269, 104
    %v4497 = vpop.permute.xlu0 %4496
    %4498 = vrot.lane.b32.xlu0 %v269, 72
    %v4499 = vpop.permute.xlu0 %4498
    %v4500 = vsel %vm300, %v4497, 0
    %v4502 = vsel %vm300, %v4499, 0
    %4504 = vmatprep.subr.mxu0 0.0
    %4505 = vmatpush1.xpose.msra.mxu0 0.0
    %4506 = vmatprep.subr.mxu0 0.0
    %4507 = vmatpush1.xpose.msra.mxu0 0.0
    %4508 = vmatprep.subr.mxu0 0.0
    %4509 = vmatpush1.xpose.msra.mxu0 0.0
    %4510 = vmatprep.subr.mxu0 0.0
    %4511 = vmatpush1.xpose.msra.mxu0 0.0
    %4512 = vmatprep.subr.mxu0 0.0
    %4513 = vmatpush1.xpose.msra.mxu0 0.0
    %4514 = vmatprep.subr.mxu0 0.0
    %4515 = vmatpush1.xpose.msra.mxu0 0.0
    %4516 = vmatprep.subr.mxu0 0.0
    %4517 = vmatpush1.xpose.msra.mxu0 0.0
    %4518 = vmatprep.subr.mxu0 0.0
    %4519 = vmatpush1.xpose.msra.mxu0 0.0
    %4520 = vmatprep.subr.mxu0 0.0
    %4521 = vmatpush1.xpose.msra.mxu0 0.0
    %4522 = vmatprep.subr.mxu0 0.0
    %4523 = vmatpush1.xpose.msra.mxu0 0.0
    %4524 = vmatprep.subr.mxu0 0.0
    %4525 = vmatpush1.xpose.msra.mxu0 0.0
    %4526 = vmatprep.subr.mxu0 0.0
    %4527 = vmatpush1.xpose.msra.mxu0 0.0
    %4528 = vmatprep.subr.mxu0 0.0
    %4529 = vmatpush1.xpose.msra.mxu0 0.0
    %4530 = vmatprep.subr.mxu0 0.0
    %4531 = vmatpush1.xpose.msra.mxu0 0.0
    %4532 = vmatprep.subr.mxu0 0.0
    %4533 = vmatpush1.xpose.msra.mxu0 0.0
    %4534 = vmatprep.subr.mxu0 0.0
    %4535 = vmatpush1.xpose.msra.mxu0 %v4502
    %4536 = vmatprep.subr.mxu0 0.0
    %4537 = vmatpush2.xpose.msra.mxu0 0.0
    %4538 = vmatprep.subr.mxu0 0.0
    %4539 = vmatpush2.xpose.msra.mxu0 0.0
    %4540 = vmatprep.subr.mxu0 0.0
    %4541 = vmatpush2.xpose.msra.mxu0 0.0
    %4542 = vmatprep.subr.mxu0 0.0
    %4543 = vmatpush2.xpose.msra.mxu0 0.0
    %4544 = vmatprep.subr.mxu0 0.0
    %4545 = vmatpush2.xpose.msra.mxu0 0.0
    %4546 = vmatprep.subr.mxu0 0.0
    %4547 = vmatpush2.xpose.msra.mxu0 0.0
    %4548 = vmatprep.subr.mxu0 0.0
    %4549 = vmatpush2.xpose.msra.mxu0 0.0
    %4550 = vmatprep.subr.mxu0 0.0
    %4551 = vmatpush2.xpose.msra.mxu0 0.0
    %4552 = vmatprep.subr.mxu0 0.0
    %4553 = vmatpush2.xpose.msra.mxu0 0.0
    %4554 = vmatprep.subr.mxu0 0.0
    %4555 = vmatpush2.xpose.msra.mxu0 0.0
    %4556 = vmatprep.subr.mxu0 0.0
    %4557 = vmatpush2.xpose.msra.mxu0 0.0
    %4558 = vmatprep.subr.mxu0 0.0
    %4559 = vmatpush2.xpose.msra.mxu0 0.0
    %4560 = vmatprep.subr.mxu0 0.0
    %4561 = vmatpush2.xpose.msra.mxu0 0.0
    %4562 = vmatprep.subr.mxu0 0.0
    %4563 = vmatpush2.xpose.msra.mxu0 0.0
    %4564 = vmatprep.subr.mxu0 0.0
    %4565 = vmatpush2.xpose.msra.mxu0 0.0
    %4566 = vmatprep.subr.mxu0 0.0
    %4567 = vmatpush2.xpose.msra.mxu0 0.0
    %4568 = vmatprep.mubr.f32.mxu0 0.0
    %4569 = vmatmul.mubr.f32.gmra.mxu0 %v4500
    %v4570 = vpop.f32.mrf.mxu0
    %v4571 = vadd.f32 0.0, %v4570
    %v4572 = vpop.f32.mrf.mxu0
    %4573 = vdwg.mxu0
    %4574 = vrot.lane.b32.xlu0 %v274, 104
    %v4575 = vpop.permute.xlu0 %4574
    %4576 = vrot.lane.b32.xlu0 %v274, 72
    %v4577 = vpop.permute.xlu0 %4576
    %v4578 = vsel %vm300, %v4575, 0
    %v4580 = vsel %vm300, %v4577, 0
    %4582 = vmatprep.subr.mxu0 0.0
    %4583 = vmatpush1.xpose.msra.mxu0 0.0
    %4584 = vmatprep.subr.mxu0 0.0
    %4585 = vmatpush1.xpose.msra.mxu0 0.0
    %4586 = vmatprep.subr.mxu0 0.0
    %4587 = vmatpush1.xpose.msra.mxu0 0.0
    %4588 = vmatprep.subr.mxu0 0.0
    %4589 = vmatpush1.xpose.msra.mxu0 0.0
    %4590 = vmatprep.subr.mxu0 0.0
    %4591 = vmatpush1.xpose.msra.mxu0 0.0
    %4592 = vmatprep.subr.mxu0 0.0
    %4593 = vmatpush1.xpose.msra.mxu0 0.0
    %4594 = vmatprep.subr.mxu0 0.0
    %4595 = vmatpush1.xpose.msra.mxu0 0.0
    %4596 = vmatprep.subr.mxu0 0.0
    %4597 = vmatpush1.xpose.msra.mxu0 0.0
    %4598 = vmatprep.subr.mxu0 0.0
    %4599 = vmatpush1.xpose.msra.mxu0 0.0
    %4600 = vmatprep.subr.mxu0 0.0
    %4601 = vmatpush1.xpose.msra.mxu0 0.0
    %4602 = vmatprep.subr.mxu0 0.0
    %4603 = vmatpush1.xpose.msra.mxu0 0.0
    %4604 = vmatprep.subr.mxu0 0.0
    %4605 = vmatpush1.xpose.msra.mxu0 0.0
    %4606 = vmatprep.subr.mxu0 0.0
    %4607 = vmatpush1.xpose.msra.mxu0 0.0
    %4608 = vmatprep.subr.mxu0 0.0
    %4609 = vmatpush1.xpose.msra.mxu0 0.0
    %4610 = vmatprep.subr.mxu0 0.0
    %4611 = vmatpush1.xpose.msra.mxu0 0.0
    %4612 = vmatprep.subr.mxu0 0.0
    %4613 = vmatpush1.xpose.msra.mxu0 %v4580
    %4614 = vmatprep.subr.mxu0 0.0
    %4615 = vmatpush2.xpose.msra.mxu0 0.0
    %4616 = vmatprep.subr.mxu0 0.0
    %4617 = vmatpush2.xpose.msra.mxu0 0.0
    %4618 = vmatprep.subr.mxu0 0.0
    %4619 = vmatpush2.xpose.msra.mxu0 0.0
    %4620 = vmatprep.subr.mxu0 0.0
    %4621 = vmatpush2.xpose.msra.mxu0 0.0
    %4622 = vmatprep.subr.mxu0 0.0
    %4623 = vmatpush2.xpose.msra.mxu0 0.0
    %4624 = vmatprep.subr.mxu0 0.0
    %4625 = vmatpush2.xpose.msra.mxu0 0.0
    %4626 = vmatprep.subr.mxu0 0.0
    %4627 = vmatpush2.xpose.msra.mxu0 0.0
    %4628 = vmatprep.subr.mxu0 0.0
    %4629 = vmatpush2.xpose.msra.mxu0 0.0
    %4630 = vmatprep.subr.mxu0 0.0
    %4631 = vmatpush2.xpose.msra.mxu0 0.0
    %4632 = vmatprep.subr.mxu0 0.0
    %4633 = vmatpush2.xpose.msra.mxu0 0.0
    %4634 = vmatprep.subr.mxu0 0.0
    %4635 = vmatpush2.xpose.msra.mxu0 0.0
    %4636 = vmatprep.subr.mxu0 0.0
    %4637 = vmatpush2.xpose.msra.mxu0 0.0
    %4638 = vmatprep.subr.mxu0 0.0
    %4639 = vmatpush2.xpose.msra.mxu0 0.0
    %4640 = vmatprep.subr.mxu0 0.0
    %4641 = vmatpush2.xpose.msra.mxu0 0.0
    %4642 = vmatprep.subr.mxu0 0.0
    %4643 = vmatpush2.xpose.msra.mxu0 0.0
    %4644 = vmatprep.subr.mxu0 0.0
    %4645 = vmatpush2.xpose.msra.mxu0 0.0
    %4646 = vmatprep.mubr.f32.mxu0 0.0
    %4647 = vmatmul.mubr.f32.gmra.mxu0 %v4578
    %v4648 = vpop.f32.mrf.mxu0
    %v4649 = vadd.f32 0.0, %v4648
    %v4650 = vpop.f32.mrf.mxu0
    %4651 = vdwg.mxu0
    %4652 = vrot.lane.b32.xlu0 %v279, 104
    %v4653 = vpop.permute.xlu0 %4652
    %4654 = vrot.lane.b32.xlu0 %v279, 72
    %v4655 = vpop.permute.xlu0 %4654
    %v4656 = vsel %vm300, %v4653, 0
    %v4658 = vsel %vm300, %v4655, 0
    %4660 = vmatprep.subr.mxu0 0.0
    %4661 = vmatpush1.xpose.msra.mxu0 0.0
    %4662 = vmatprep.subr.mxu0 0.0
    %4663 = vmatpush1.xpose.msra.mxu0 0.0
    %4664 = vmatprep.subr.mxu0 0.0
    %4665 = vmatpush1.xpose.msra.mxu0 0.0
    %4666 = vmatprep.subr.mxu0 0.0
    %4667 = vmatpush1.xpose.msra.mxu0 0.0
    %4668 = vmatprep.subr.mxu0 0.0
    %4669 = vmatpush1.xpose.msra.mxu0 0.0
    %4670 = vmatprep.subr.mxu0 0.0
    %4671 = vmatpush1.xpose.msra.mxu0 0.0
    %4672 = vmatprep.subr.mxu0 0.0
    %4673 = vmatpush1.xpose.msra.mxu0 0.0
    %4674 = vmatprep.subr.mxu0 0.0
    %4675 = vmatpush1.xpose.msra.mxu0 0.0
    %4676 = vmatprep.subr.mxu0 0.0
    %4677 = vmatpush1.xpose.msra.mxu0 0.0
    %4678 = vmatprep.subr.mxu0 0.0
    %4679 = vmatpush1.xpose.msra.mxu0 0.0
    %4680 = vmatprep.subr.mxu0 0.0
    %4681 = vmatpush1.xpose.msra.mxu0 0.0
    %4682 = vmatprep.subr.mxu0 0.0
    %4683 = vmatpush1.xpose.msra.mxu0 0.0
    %4684 = vmatprep.subr.mxu0 0.0
    %4685 = vmatpush1.xpose.msra.mxu0 0.0
    %4686 = vmatprep.subr.mxu0 0.0
    %4687 = vmatpush1.xpose.msra.mxu0 0.0
    %4688 = vmatprep.subr.mxu0 0.0
    %4689 = vmatpush1.xpose.msra.mxu0 0.0
    %4690 = vmatprep.subr.mxu0 0.0
    %4691 = vmatpush1.xpose.msra.mxu0 %v4658
    %4692 = vmatprep.subr.mxu0 0.0
    %4693 = vmatpush2.xpose.msra.mxu0 0.0
    %4694 = vmatprep.subr.mxu0 0.0
    %4695 = vmatpush2.xpose.msra.mxu0 0.0
    %4696 = vmatprep.subr.mxu0 0.0
    %4697 = vmatpush2.xpose.msra.mxu0 0.0
    %4698 = vmatprep.subr.mxu0 0.0
    %4699 = vmatpush2.xpose.msra.mxu0 0.0
    %4700 = vmatprep.subr.mxu0 0.0
    %4701 = vmatpush2.xpose.msra.mxu0 0.0
    %4702 = vmatprep.subr.mxu0 0.0
    %4703 = vmatpush2.xpose.msra.mxu0 0.0
    %4704 = vmatprep.subr.mxu0 0.0
    %4705 = vmatpush2.xpose.msra.mxu0 0.0
    %4706 = vmatprep.subr.mxu0 0.0
    %4707 = vmatpush2.xpose.msra.mxu0 0.0
    %4708 = vmatprep.subr.mxu0 0.0
    %4709 = vmatpush2.xpose.msra.mxu0 0.0
    %4710 = vmatprep.subr.mxu0 0.0
    %4711 = vmatpush2.xpose.msra.mxu0 0.0
    %4712 = vmatprep.subr.mxu0 0.0
    %4713 = vmatpush2.xpose.msra.mxu0 0.0
    %4714 = vmatprep.subr.mxu0 0.0
    %4715 = vmatpush2.xpose.msra.mxu0 0.0
    %4716 = vmatprep.subr.mxu0 0.0
    %4717 = vmatpush2.xpose.msra.mxu0 0.0
    %4718 = vmatprep.subr.mxu0 0.0
    %4719 = vmatpush2.xpose.msra.mxu0 0.0
    %4720 = vmatprep.subr.mxu0 0.0
    %4721 = vmatpush2.xpose.msra.mxu0 0.0
    %4722 = vmatprep.subr.mxu0 0.0
    %4723 = vmatpush2.xpose.msra.mxu0 0.0
    %4724 = vmatprep.mubr.f32.mxu0 0.0
    %4725 = vmatmul.mubr.f32.gmra.mxu0 %v4656
    %v4726 = vpop.f32.mrf.mxu0
    %v4727 = vadd.f32 0.0, %v4726
    %v4728 = vpop.f32.mrf.mxu0
    %4729 = vdwg.mxu0
    %4730 = vrot.lane.b32.xlu0 %v284, 104
    %v4731 = vpop.permute.xlu0 %4730
    %4732 = vrot.lane.b32.xlu0 %v284, 72
    %v4733 = vpop.permute.xlu0 %4732
    %v4734 = vsel %vm300, %v4731, 0
    %v4736 = vsel %vm300, %v4733, 0
    %4738 = vmatprep.subr.mxu0 0.0
    %4739 = vmatpush1.xpose.msra.mxu0 0.0
    %4740 = vmatprep.subr.mxu0 0.0
    %4741 = vmatpush1.xpose.msra.mxu0 0.0
    %4742 = vmatprep.subr.mxu0 0.0
    %4743 = vmatpush1.xpose.msra.mxu0 0.0
    %4744 = vmatprep.subr.mxu0 0.0
    %4745 = vmatpush1.xpose.msra.mxu0 0.0
    %4746 = vmatprep.subr.mxu0 0.0
    %4747 = vmatpush1.xpose.msra.mxu0 0.0
    %4748 = vmatprep.subr.mxu0 0.0
    %4749 = vmatpush1.xpose.msra.mxu0 0.0
    %4750 = vmatprep.subr.mxu0 0.0
    %4751 = vmatpush1.xpose.msra.mxu0 0.0
    %4752 = vmatprep.subr.mxu0 0.0
    %4753 = vmatpush1.xpose.msra.mxu0 0.0
    %4754 = vmatprep.subr.mxu0 0.0
    %4755 = vmatpush1.xpose.msra.mxu0 0.0
    %4756 = vmatprep.subr.mxu0 0.0
    %4757 = vmatpush1.xpose.msra.mxu0 0.0
    %4758 = vmatprep.subr.mxu0 0.0
    %4759 = vmatpush1.xpose.msra.mxu0 0.0
    %4760 = vmatprep.subr.mxu0 0.0
    %4761 = vmatpush1.xpose.msra.mxu0 0.0
    %4762 = vmatprep.subr.mxu0 0.0
    %4763 = vmatpush1.xpose.msra.mxu0 0.0
    %4764 = vmatprep.subr.mxu0 0.0
    %4765 = vmatpush1.xpose.msra.mxu0 0.0
    %4766 = vmatprep.subr.mxu0 0.0
    %4767 = vmatpush1.xpose.msra.mxu0 0.0
    %4768 = vmatprep.subr.mxu0 0.0
    %4769 = vmatpush1.xpose.msra.mxu0 %v4736
    %4770 = vmatprep.subr.mxu0 0.0
    %4771 = vmatpush2.xpose.msra.mxu0 0.0
    %4772 = vmatprep.subr.mxu0 0.0
    %4773 = vmatpush2.xpose.msra.mxu0 0.0
    %4774 = vmatprep.subr.mxu0 0.0
    %4775 = vmatpush2.xpose.msra.mxu0 0.0
    %4776 = vmatprep.subr.mxu0 0.0
    %4777 = vmatpush2.xpose.msra.mxu0 0.0
    %4778 = vmatprep.subr.mxu0 0.0
    %4779 = vmatpush2.xpose.msra.mxu0 0.0
    %4780 = vmatprep.subr.mxu0 0.0
    %4781 = vmatpush2.xpose.msra.mxu0 0.0
    %4782 = vmatprep.subr.mxu0 0.0
    %4783 = vmatpush2.xpose.msra.mxu0 0.0
    %4784 = vmatprep.subr.mxu0 0.0
    %4785 = vmatpush2.xpose.msra.mxu0 0.0
    %4786 = vmatprep.subr.mxu0 0.0
    %4787 = vmatpush2.xpose.msra.mxu0 0.0
    %4788 = vmatprep.subr.mxu0 0.0
    %4789 = vmatpush2.xpose.msra.mxu0 0.0
    %4790 = vmatprep.subr.mxu0 0.0
    %4791 = vmatpush2.xpose.msra.mxu0 0.0
    %4792 = vmatprep.subr.mxu0 0.0
    %4793 = vmatpush2.xpose.msra.mxu0 0.0
    %4794 = vmatprep.subr.mxu0 0.0
    %4795 = vmatpush2.xpose.msra.mxu0 0.0
    %4796 = vmatprep.subr.mxu0 0.0
    %4797 = vmatpush2.xpose.msra.mxu0 0.0
    %4798 = vmatprep.subr.mxu0 0.0
    %4799 = vmatpush2.xpose.msra.mxu0 0.0
    %4800 = vmatprep.subr.mxu0 0.0
    %4801 = vmatpush2.xpose.msra.mxu0 0.0
    %4802 = vmatprep.mubr.f32.mxu0 0.0
    %4803 = vmatmul.mubr.f32.gmra.mxu0 %v4734
    %v4804 = vpop.f32.mrf.mxu0
    %v4805 = vadd.f32 0.0, %v4804
    %v4806 = vpop.f32.mrf.mxu0
    %4807 = vdwg.mxu0
    %4808 = vrot.lane.b32.xlu0 %v289, 104
    %v4809 = vpop.permute.xlu0 %4808
    %4810 = vrot.lane.b32.xlu0 %v289, 72
    %v4811 = vpop.permute.xlu0 %4810
    %v4812 = vsel %vm300, %v4809, 0
    %v4814 = vsel %vm300, %v4811, 0
    %4816 = vmatprep.subr.mxu0 0.0
    %4817 = vmatpush1.xpose.msra.mxu0 0.0
    %4818 = vmatprep.subr.mxu0 0.0
    %4819 = vmatpush1.xpose.msra.mxu0 0.0
    %4820 = vmatprep.subr.mxu0 0.0
    %4821 = vmatpush1.xpose.msra.mxu0 0.0
    %4822 = vmatprep.subr.mxu0 0.0
    %4823 = vmatpush1.xpose.msra.mxu0 0.0
    %4824 = vmatprep.subr.mxu0 0.0
    %4825 = vmatpush1.xpose.msra.mxu0 0.0
    %4826 = vmatprep.subr.mxu0 0.0
    %4827 = vmatpush1.xpose.msra.mxu0 0.0
    %4828 = vmatprep.subr.mxu0 0.0
    %4829 = vmatpush1.xpose.msra.mxu0 0.0
    %4830 = vmatprep.subr.mxu0 0.0
    %4831 = vmatpush1.xpose.msra.mxu0 0.0
    %4832 = vmatprep.subr.mxu0 0.0
    %4833 = vmatpush1.xpose.msra.mxu0 0.0
    %4834 = vmatprep.subr.mxu0 0.0
    %4835 = vmatpush1.xpose.msra.mxu0 0.0
    %4836 = vmatprep.subr.mxu0 0.0
    %4837 = vmatpush1.xpose.msra.mxu0 0.0
    %4838 = vmatprep.subr.mxu0 0.0
    %4839 = vmatpush1.xpose.msra.mxu0 0.0
    %4840 = vmatprep.subr.mxu0 0.0
    %4841 = vmatpush1.xpose.msra.mxu0 0.0
    %4842 = vmatprep.subr.mxu0 0.0
    %4843 = vmatpush1.xpose.msra.mxu0 0.0
    %4844 = vmatprep.subr.mxu0 0.0
    %4845 = vmatpush1.xpose.msra.mxu0 0.0
    %4846 = vmatprep.subr.mxu0 0.0
    %4847 = vmatpush1.xpose.msra.mxu0 %v4814
    %4848 = vmatprep.subr.mxu0 0.0
    %4849 = vmatpush2.xpose.msra.mxu0 0.0
    %4850 = vmatprep.subr.mxu0 0.0
    %4851 = vmatpush2.xpose.msra.mxu0 0.0
    %4852 = vmatprep.subr.mxu0 0.0
    %4853 = vmatpush2.xpose.msra.mxu0 0.0
    %4854 = vmatprep.subr.mxu0 0.0
    %4855 = vmatpush2.xpose.msra.mxu0 0.0
    %4856 = vmatprep.subr.mxu0 0.0
    %4857 = vmatpush2.xpose.msra.mxu0 0.0
    %4858 = vmatprep.subr.mxu0 0.0
    %4859 = vmatpush2.xpose.msra.mxu0 0.0
    %4860 = vmatprep.subr.mxu0 0.0
    %4861 = vmatpush2.xpose.msra.mxu0 0.0
    %4862 = vmatprep.subr.mxu0 0.0
    %4863 = vmatpush2.xpose.msra.mxu0 0.0
    %4864 = vmatprep.subr.mxu0 0.0
    %4865 = vmatpush2.xpose.msra.mxu0 0.0
    %4866 = vmatprep.subr.mxu0 0.0
    %4867 = vmatpush2.xpose.msra.mxu0 0.0
    %4868 = vmatprep.subr.mxu0 0.0
    %4869 = vmatpush2.xpose.msra.mxu0 0.0
    %4870 = vmatprep.subr.mxu0 0.0
    %4871 = vmatpush2.xpose.msra.mxu0 0.0
    %4872 = vmatprep.subr.mxu0 0.0
    %4873 = vmatpush2.xpose.msra.mxu0 0.0
    %4874 = vmatprep.subr.mxu0 0.0
    %4875 = vmatpush2.xpose.msra.mxu0 0.0
    %4876 = vmatprep.subr.mxu0 0.0
    %4877 = vmatpush2.xpose.msra.mxu0 0.0
    %4878 = vmatprep.subr.mxu0 0.0
    %4879 = vmatpush2.xpose.msra.mxu0 0.0
    %4880 = vmatprep.mubr.f32.mxu0 0.0
    %4881 = vmatmul.mubr.f32.gmra.mxu0 %v4812
    %v4882 = vpop.f32.mrf.mxu0
    %v4883 = vadd.f32 0.0, %v4882
    %v4884 = vpop.f32.mrf.mxu0
    %4885 = vdwg.mxu0
    %4886 = vrot.lane.b32.xlu0 %v294, 104
    %v4887 = vpop.permute.xlu0 %4886
    %4888 = vrot.lane.b32.xlu0 %v294, 72
    %v4889 = vpop.permute.xlu0 %4888
    %v4890 = vsel %vm300, %v4887, 0
    %v4892 = vsel %vm300, %v4889, 0
    %4894 = vmatprep.subr.mxu0 0.0
    %4895 = vmatpush1.xpose.msra.mxu0 0.0
    %4896 = vmatprep.subr.mxu0 0.0
    %4897 = vmatpush1.xpose.msra.mxu0 0.0
    %4898 = vmatprep.subr.mxu0 0.0
    %4899 = vmatpush1.xpose.msra.mxu0 0.0
    %4900 = vmatprep.subr.mxu0 0.0
    %4901 = vmatpush1.xpose.msra.mxu0 0.0
    %4902 = vmatprep.subr.mxu0 0.0
    %4903 = vmatpush1.xpose.msra.mxu0 0.0
    %4904 = vmatprep.subr.mxu0 0.0
    %4905 = vmatpush1.xpose.msra.mxu0 0.0
    %4906 = vmatprep.subr.mxu0 0.0
    %4907 = vmatpush1.xpose.msra.mxu0 0.0
    %4908 = vmatprep.subr.mxu0 0.0
    %4909 = vmatpush1.xpose.msra.mxu0 0.0
    %4910 = vmatprep.subr.mxu0 0.0
    %4911 = vmatpush1.xpose.msra.mxu0 0.0
    %4912 = vmatprep.subr.mxu0 0.0
    %4913 = vmatpush1.xpose.msra.mxu0 0.0
    %4914 = vmatprep.subr.mxu0 0.0
    %4915 = vmatpush1.xpose.msra.mxu0 0.0
    %4916 = vmatprep.subr.mxu0 0.0
    %4917 = vmatpush1.xpose.msra.mxu0 0.0
    %4918 = vmatprep.subr.mxu0 0.0
    %4919 = vmatpush1.xpose.msra.mxu0 0.0
    %4920 = vmatprep.subr.mxu0 0.0
    %4921 = vmatpush1.xpose.msra.mxu0 0.0
    %4922 = vmatprep.subr.mxu0 0.0
    %4923 = vmatpush1.xpose.msra.mxu0 0.0
    %4924 = vmatprep.subr.mxu0 0.0
    %4925 = vmatpush1.xpose.msra.mxu0 %v4892
    %4926 = vmatprep.subr.mxu0 0.0
    %4927 = vmatpush2.xpose.msra.mxu0 0.0
    %4928 = vmatprep.subr.mxu0 0.0
    %4929 = vmatpush2.xpose.msra.mxu0 0.0
    %4930 = vmatprep.subr.mxu0 0.0
    %4931 = vmatpush2.xpose.msra.mxu0 0.0
    %4932 = vmatprep.subr.mxu0 0.0
    %4933 = vmatpush2.xpose.msra.mxu0 0.0
    %4934 = vmatprep.subr.mxu0 0.0
    %4935 = vmatpush2.xpose.msra.mxu0 0.0
    %4936 = vmatprep.subr.mxu0 0.0
    %4937 = vmatpush2.xpose.msra.mxu0 0.0
    %4938 = vmatprep.subr.mxu0 0.0
    %4939 = vmatpush2.xpose.msra.mxu0 0.0
    %4940 = vmatprep.subr.mxu0 0.0
    %4941 = vmatpush2.xpose.msra.mxu0 0.0
    %4942 = vmatprep.subr.mxu0 0.0
    %4943 = vmatpush2.xpose.msra.mxu0 0.0
    %4944 = vmatprep.subr.mxu0 0.0
    %4945 = vmatpush2.xpose.msra.mxu0 0.0
    %4946 = vmatprep.subr.mxu0 0.0
    %4947 = vmatpush2.xpose.msra.mxu0 0.0
    %4948 = vmatprep.subr.mxu0 0.0
    %4949 = vmatpush2.xpose.msra.mxu0 0.0
    %4950 = vmatprep.subr.mxu0 0.0
    %4951 = vmatpush2.xpose.msra.mxu0 0.0
    %4952 = vmatprep.subr.mxu0 0.0
    %4953 = vmatpush2.xpose.msra.mxu0 0.0
    %4954 = vmatprep.subr.mxu0 0.0
    %4955 = vmatpush2.xpose.msra.mxu0 0.0
    %4956 = vmatprep.subr.mxu0 0.0
    %4957 = vmatpush2.xpose.msra.mxu0 0.0
    %4958 = vmatprep.mubr.f32.mxu0 0.0
    %4959 = vmatmul.mubr.f32.gmra.mxu0 %v4890
    %v4960 = vpop.f32.mrf.mxu0
    %v4961 = vadd.f32 0.0, %v4960
    %v4962 = vpop.f32.mrf.mxu0
    %4963 = vdwg.mxu0
    %v4964 = vsel %vm300, %v4415, -inf
    %4965 = vmax.xlane.f32.xlu0 %v4964
    %v4966 = vpop.xlane.xlu0 %4965
    %v4967 = vsel %vm300, %v4493, -inf
    %4968 = vmax.xlane.f32.xlu0 %v4967
    %v4969 = vpop.xlane.xlu0 %4968
    %v4970 = vsel %vm300, %v4571, -inf
    %4971 = vmax.xlane.f32.xlu0 %v4970
    %v4972 = vpop.xlane.xlu0 %4971
    %v4973 = vsel %vm300, %v4649, -inf
    %4974 = vmax.xlane.f32.xlu0 %v4973
    %v4975 = vpop.xlane.xlu0 %4974
    %v4976 = vsel %vm300, %v4727, -inf
    %4977 = vmax.xlane.f32.xlu0 %v4976
    %v4978 = vpop.xlane.xlu0 %4977
    %v4979 = vsel %vm300, %v4805, -inf
    %4980 = vmax.xlane.f32.xlu0 %v4979
    %v4981 = vpop.xlane.xlu0 %4980
    %v4982 = vsel %vm300, %v4883, -inf
    %4983 = vmax.xlane.f32.xlu0 %v4982
    %v4984 = vpop.xlane.xlu0 %4983
    %v4985 = vsel %vm300, %v4961, -inf
    %4986 = vmax.xlane.f32.xlu0 %v4985
    %v4987 = vpop.xlane.xlu0 %4986
    %v4988 = vsub.f32 %v4415, %v4966
    %v4989 = vsub.f32 %v4493, %v4969
    %v4990 = vsub.f32 %v4571, %v4972
    %v4991 = vsub.f32 %v4649, %v4975
    %v4992 = vsub.f32 %v4727, %v4978
    %v4993 = vsub.f32 %v4805, %v4981
    %v4994 = vsub.f32 %v4883, %v4984
    %v4995 = vsub.f32 %v4961, %v4987
    %v4996 = vmul.f32 %v4988, 1.442695
    %v4997 = vpow.pop %v4996
    %v4998 = vmul.f32 %v4989, 1.442695
    %v4999 = vpow.pop %v4998
    %v5000 = vmul.f32 %v4990, 1.442695
    %v5001 = vpow.pop %v5000
    %v5002 = vmul.f32 %v4991, 1.442695
    %v5003 = vpow.pop %v5002
    %v5004 = vmul.f32 %v4992, 1.442695
    %v5005 = vpow.pop %v5004
    %v5006 = vmul.f32 %v4993, 1.442695
    %v5007 = vpow.pop %v5006
    %v5008 = vmul.f32 %v4994, 1.442695
    %v5009 = vpow.pop %v5008
    %v5010 = vmul.f32 %v4995, 1.442695
    %v5011 = vpow.pop %v5010
    %v5012 = vsel %vm300, %v4997, 0.0
    %5013 = vadd.xlane.f32.xlu0 %v5012
    %v5014 = vpop.xlane.xlu0 %5013
    %v5015 = vsel %vm300, %v4999, 0.0
    %5016 = vadd.xlane.f32.xlu0 %v5015
    %v5017 = vpop.xlane.xlu0 %5016
    %v5018 = vsel %vm300, %v5001, 0.0
    %5019 = vadd.xlane.f32.xlu0 %v5018
    %v5020 = vpop.xlane.xlu0 %5019
    %v5021 = vsel %vm300, %v5003, 0.0
    %5022 = vadd.xlane.f32.xlu0 %v5021
    %v5023 = vpop.xlane.xlu0 %5022
    %v5024 = vsel %vm300, %v5005, 0.0
    %5025 = vadd.xlane.f32.xlu0 %v5024
    %v5026 = vpop.xlane.xlu0 %5025
    %v5027 = vsel %vm300, %v5007, 0.0
    %5028 = vadd.xlane.f32.xlu0 %v5027
    %v5029 = vpop.xlane.xlu0 %5028
    %v5030 = vsel %vm300, %v5009, 0.0
    %5031 = vadd.xlane.f32.xlu0 %v5030
    %v5032 = vpop.xlane.xlu0 %5031
    %v5033 = vsel %vm300, %v5011, 0.0
    %5034 = vadd.xlane.f32.xlu0 %v5033
    %v5035 = vpop.xlane.xlu0 %5034
    %v5036 = vrcp.pop %v5014
    %v5037 = vmul.f32 %v4997, %v5036
    %v5038 = vrcp.pop %v5017
    %v5039 = vmul.f32 %v4999, %v5038
    %v5040 = vrcp.pop %v5020
    %v5041 = vmul.f32 %v5001, %v5040
    %v5042 = vrcp.pop %v5023
    %v5043 = vmul.f32 %v5003, %v5042
    %v5044 = vrcp.pop %v5026
    %v5045 = vmul.f32 %v5005, %v5044
    %v5046 = vrcp.pop %v5029
    %v5047 = vmul.f32 %v5007, %v5046
    %v5048 = vrcp.pop %v5032
    %v5049 = vmul.f32 %v5009, %v5048
    %v5050 = vrcp.pop %v5035
    %v5051 = vmul.f32 %v5011, %v5050
    %5052 = vrot.lane.b32.xlu0 %v259, 40
    %v5053 = vpop.permute.xlu0 %5052
    %v5056 = vsel %vm300, %v5037, 0
    %5058 = vmatprep.subr.mxu0 0.0
    %5059 = vmatpush1.msra.mxu0 0.0
    %5060 = vmatprep.subr.mxu0 0.0
    %5061 = vmatpush1.msra.mxu0 0.0
    %5062 = vmatprep.subr.mxu0 0.0
    %5063 = vmatpush1.msra.mxu0 0.0
    %5064 = vmatprep.subr.mxu0 0.0
    %5065 = vmatpush1.msra.mxu0 0.0
    %5066 = vmatprep.subr.mxu0 0.0
    %5067 = vmatpush1.msra.mxu0 0.0
    %5068 = vmatprep.subr.mxu0 0.0
    %5069 = vmatpush1.msra.mxu0 0.0
    %5070 = vmatprep.subr.mxu0 0.0
    %5071 = vmatpush1.msra.mxu0 0.0
    %5072 = vmatprep.subr.mxu0 0.0
    %5073 = vmatpush1.msra.mxu0 0.0
    %5074 = vmatprep.subr.mxu0 0.0
    %5075 = vmatpush1.msra.mxu0 0.0
    %5076 = vmatprep.subr.mxu0 0.0
    %5077 = vmatpush1.msra.mxu0 0.0
    %5078 = vmatprep.subr.mxu0 0.0
    %5079 = vmatpush1.msra.mxu0 0.0
    %5080 = vmatprep.subr.mxu0 0.0
    %5081 = vmatpush1.msra.mxu0 0.0
    %5082 = vmatprep.subr.mxu0 0.0
    %5083 = vmatpush1.msra.mxu0 0.0
    %5084 = vmatprep.subr.mxu0 0.0
    %5085 = vmatpush1.msra.mxu0 0.0
    %5086 = vmatprep.subr.mxu0 0.0
    %5087 = vmatpush1.msra.mxu0 0.0
    %5088 = vmatprep.subr.mxu0 0.0
    %5089 = vmatpush1.msra.mxu0 %v5053
    %5090 = vmatprep.subr.mxu0 0.0
    %5091 = vmatpush2.msra.mxu0 0.0
    %5092 = vmatprep.subr.mxu0 0.0
    %5093 = vmatpush2.msra.mxu0 0.0
    %5094 = vmatprep.subr.mxu0 0.0
    %5095 = vmatpush2.msra.mxu0 0.0
    %5096 = vmatprep.subr.mxu0 0.0
    %5097 = vmatpush2.msra.mxu0 0.0
    %5098 = vmatprep.subr.mxu0 0.0
    %5099 = vmatpush2.msra.mxu0 0.0
    %5100 = vmatprep.subr.mxu0 0.0
    %5101 = vmatpush2.msra.mxu0 0.0
    %5102 = vmatprep.subr.mxu0 0.0
    %5103 = vmatpush2.msra.mxu0 0.0
    %5104 = vmatprep.subr.mxu0 0.0
    %5105 = vmatpush2.msra.mxu0 0.0
    %5106 = vmatprep.subr.mxu0 0.0
    %5107 = vmatpush2.msra.mxu0 0.0
    %5108 = vmatprep.subr.mxu0 0.0
    %5109 = vmatpush2.msra.mxu0 0.0
    %5110 = vmatprep.subr.mxu0 0.0
    %5111 = vmatpush2.msra.mxu0 0.0
    %5112 = vmatprep.subr.mxu0 0.0
    %5113 = vmatpush2.msra.mxu0 0.0
    %5114 = vmatprep.subr.mxu0 0.0
    %5115 = vmatpush2.msra.mxu0 0.0
    %5116 = vmatprep.subr.mxu0 0.0
    %5117 = vmatpush2.msra.mxu0 0.0
    %5118 = vmatprep.subr.mxu0 0.0
    %5119 = vmatpush2.msra.mxu0 0.0
    %5120 = vmatprep.subr.mxu0 0.0
    %5121 = vmatpush2.msra.mxu0 0.0
    %5122 = vmatprep.mubr.f32.mxu0 0.0
    %5123 = vmatmul.mubr.f32.gmra.mxu0 %v5056
    %v5124 = vpop.f32.mrf.mxu0
    %v5125 = vadd.f32 0.0, %v5124
    %v5126 = vpop.f32.mrf.mxu0
    %5127 = vdwg.mxu0
    %5128 = vrot.lane.b32.xlu0 %v264, 40
    %v5129 = vpop.permute.xlu0 %5128
    %v5132 = vsel %vm300, %v5039, 0
    %5134 = vmatprep.subr.mxu0 0.0
    %5135 = vmatpush1.msra.mxu0 0.0
    %5136 = vmatprep.subr.mxu0 0.0
    %5137 = vmatpush1.msra.mxu0 0.0
    %5138 = vmatprep.subr.mxu0 0.0
    %5139 = vmatpush1.msra.mxu0 0.0
    %5140 = vmatprep.subr.mxu0 0.0
    %5141 = vmatpush1.msra.mxu0 0.0
    %5142 = vmatprep.subr.mxu0 0.0
    %5143 = vmatpush1.msra.mxu0 0.0
    %5144 = vmatprep.subr.mxu0 0.0
    %5145 = vmatpush1.msra.mxu0 0.0
    %5146 = vmatprep.subr.mxu0 0.0
    %5147 = vmatpush1.msra.mxu0 0.0
    %5148 = vmatprep.subr.mxu0 0.0
    %5149 = vmatpush1.msra.mxu0 0.0
    %5150 = vmatprep.subr.mxu0 0.0
    %5151 = vmatpush1.msra.mxu0 0.0
    %5152 = vmatprep.subr.mxu0 0.0
    %5153 = vmatpush1.msra.mxu0 0.0
    %5154 = vmatprep.subr.mxu0 0.0
    %5155 = vmatpush1.msra.mxu0 0.0
    %5156 = vmatprep.subr.mxu0 0.0
    %5157 = vmatpush1.msra.mxu0 0.0
    %5158 = vmatprep.subr.mxu0 0.0
    %5159 = vmatpush1.msra.mxu0 0.0
    %5160 = vmatprep.subr.mxu0 0.0
    %5161 = vmatpush1.msra.mxu0 0.0
    %5162 = vmatprep.subr.mxu0 0.0
    %5163 = vmatpush1.msra.mxu0 0.0
    %5164 = vmatprep.subr.mxu0 0.0
    %5165 = vmatpush1.msra.mxu0 %v5129
    %5166 = vmatprep.subr.mxu0 0.0
    %5167 = vmatpush2.msra.mxu0 0.0
    %5168 = vmatprep.subr.mxu0 0.0
    %5169 = vmatpush2.msra.mxu0 0.0
    %5170 = vmatprep.subr.mxu0 0.0
    %5171 = vmatpush2.msra.mxu0 0.0
    %5172 = vmatprep.subr.mxu0 0.0
    %5173 = vmatpush2.msra.mxu0 0.0
    %5174 = vmatprep.subr.mxu0 0.0
    %5175 = vmatpush2.msra.mxu0 0.0
    %5176 = vmatprep.subr.mxu0 0.0
    %5177 = vmatpush2.msra.mxu0 0.0
    %5178 = vmatprep.subr.mxu0 0.0
    %5179 = vmatpush2.msra.mxu0 0.0
    %5180 = vmatprep.subr.mxu0 0.0
    %5181 = vmatpush2.msra.mxu0 0.0
    %5182 = vmatprep.subr.mxu0 0.0
    %5183 = vmatpush2.msra.mxu0 0.0
    %5184 = vmatprep.subr.mxu0 0.0
    %5185 = vmatpush2.msra.mxu0 0.0
    %5186 = vmatprep.subr.mxu0 0.0
    %5187 = vmatpush2.msra.mxu0 0.0
    %5188 = vmatprep.subr.mxu0 0.0
    %5189 = vmatpush2.msra.mxu0 0.0
    %5190 = vmatprep.subr.mxu0 0.0
    %5191 = vmatpush2.msra.mxu0 0.0
    %5192 = vmatprep.subr.mxu0 0.0
    %5193 = vmatpush2.msra.mxu0 0.0
    %5194 = vmatprep.subr.mxu0 0.0
    %5195 = vmatpush2.msra.mxu0 0.0
    %5196 = vmatprep.subr.mxu0 0.0
    %5197 = vmatpush2.msra.mxu0 0.0
    %5198 = vmatprep.mubr.f32.mxu0 0.0
    %5199 = vmatmul.mubr.f32.gmra.mxu0 %v5132
    %v5200 = vpop.f32.mrf.mxu0
    %v5201 = vadd.f32 0.0, %v5200
    %v5202 = vpop.f32.mrf.mxu0
    %5203 = vdwg.mxu0
    %5204 = vrot.lane.b32.xlu0 %v269, 40
    %v5205 = vpop.permute.xlu0 %5204
    %v5208 = vsel %vm300, %v5041, 0
    %5210 = vmatprep.subr.mxu0 0.0
    %5211 = vmatpush1.msra.mxu0 0.0
    %5212 = vmatprep.subr.mxu0 0.0
    %5213 = vmatpush1.msra.mxu0 0.0
    %5214 = vmatprep.subr.mxu0 0.0
    %5215 = vmatpush1.msra.mxu0 0.0
    %5216 = vmatprep.subr.mxu0 0.0
    %5217 = vmatpush1.msra.mxu0 0.0
    %5218 = vmatprep.subr.mxu0 0.0
    %5219 = vmatpush1.msra.mxu0 0.0
    %5220 = vmatprep.subr.mxu0 0.0
    %5221 = vmatpush1.msra.mxu0 0.0
    %5222 = vmatprep.subr.mxu0 0.0
    %5223 = vmatpush1.msra.mxu0 0.0
    %5224 = vmatprep.subr.mxu0 0.0
    %5225 = vmatpush1.msra.mxu0 0.0
    %5226 = vmatprep.subr.mxu0 0.0
    %5227 = vmatpush1.msra.mxu0 0.0
    %5228 = vmatprep.subr.mxu0 0.0
    %5229 = vmatpush1.msra.mxu0 0.0
    %5230 = vmatprep.subr.mxu0 0.0
    %5231 = vmatpush1.msra.mxu0 0.0
    %5232 = vmatprep.subr.mxu0 0.0
    %5233 = vmatpush1.msra.mxu0 0.0
    %5234 = vmatprep.subr.mxu0 0.0
    %5235 = vmatpush1.msra.mxu0 0.0
    %5236 = vmatprep.subr.mxu0 0.0
    %5237 = vmatpush1.msra.mxu0 0.0
    %5238 = vmatprep.subr.mxu0 0.0
    %5239 = vmatpush1.msra.mxu0 0.0
    %5240 = vmatprep.subr.mxu0 0.0
    %5241 = vmatpush1.msra.mxu0 %v5205
    %5242 = vmatprep.subr.mxu0 0.0
    %5243 = vmatpush2.msra.mxu0 0.0
    %5244 = vmatprep.subr.mxu0 0.0
    %5245 = vmatpush2.msra.mxu0 0.0
    %5246 = vmatprep.subr.mxu0 0.0
    %5247 = vmatpush2.msra.mxu0 0.0
    %5248 = vmatprep.subr.mxu0 0.0
    %5249 = vmatpush2.msra.mxu0 0.0
    %5250 = vmatprep.subr.mxu0 0.0
    %5251 = vmatpush2.msra.mxu0 0.0
    %5252 = vmatprep.subr.mxu0 0.0
    %5253 = vmatpush2.msra.mxu0 0.0
    %5254 = vmatprep.subr.mxu0 0.0
    %5255 = vmatpush2.msra.mxu0 0.0
    %5256 = vmatprep.subr.mxu0 0.0
    %5257 = vmatpush2.msra.mxu0 0.0
    %5258 = vmatprep.subr.mxu0 0.0
    %5259 = vmatpush2.msra.mxu0 0.0
    %5260 = vmatprep.subr.mxu0 0.0
    %5261 = vmatpush2.msra.mxu0 0.0
    %5262 = vmatprep.subr.mxu0 0.0
    %5263 = vmatpush2.msra.mxu0 0.0
    %5264 = vmatprep.subr.mxu0 0.0
    %5265 = vmatpush2.msra.mxu0 0.0
    %5266 = vmatprep.subr.mxu0 0.0
    %5267 = vmatpush2.msra.mxu0 0.0
    %5268 = vmatprep.subr.mxu0 0.0
    %5269 = vmatpush2.msra.mxu0 0.0
    %5270 = vmatprep.subr.mxu0 0.0
    %5271 = vmatpush2.msra.mxu0 0.0
    %5272 = vmatprep.subr.mxu0 0.0
    %5273 = vmatpush2.msra.mxu0 0.0
    %5274 = vmatprep.mubr.f32.mxu0 0.0
    %5275 = vmatmul.mubr.f32.gmra.mxu0 %v5208
    %v5276 = vpop.f32.mrf.mxu0
    %v5277 = vadd.f32 0.0, %v5276
    %v5278 = vpop.f32.mrf.mxu0
    %5279 = vdwg.mxu0
    %5280 = vrot.lane.b32.xlu0 %v274, 40
    %v5281 = vpop.permute.xlu0 %5280
    %v5284 = vsel %vm300, %v5043, 0
    %5286 = vmatprep.subr.mxu0 0.0
    %5287 = vmatpush1.msra.mxu0 0.0
    %5288 = vmatprep.subr.mxu0 0.0
    %5289 = vmatpush1.msra.mxu0 0.0
    %5290 = vmatprep.subr.mxu0 0.0
    %5291 = vmatpush1.msra.mxu0 0.0
    %5292 = vmatprep.subr.mxu0 0.0
    %5293 = vmatpush1.msra.mxu0 0.0
    %5294 = vmatprep.subr.mxu0 0.0
    %5295 = vmatpush1.msra.mxu0 0.0
    %5296 = vmatprep.subr.mxu0 0.0
    %5297 = vmatpush1.msra.mxu0 0.0
    %5298 = vmatprep.subr.mxu0 0.0
    %5299 = vmatpush1.msra.mxu0 0.0
    %5300 = vmatprep.subr.mxu0 0.0
    %5301 = vmatpush1.msra.mxu0 0.0
    %5302 = vmatprep.subr.mxu0 0.0
    %5303 = vmatpush1.msra.mxu0 0.0
    %5304 = vmatprep.subr.mxu0 0.0
    %5305 = vmatpush1.msra.mxu0 0.0
    %5306 = vmatprep.subr.mxu0 0.0
    %5307 = vmatpush1.msra.mxu0 0.0
    %5308 = vmatprep.subr.mxu0 0.0
    %5309 = vmatpush1.msra.mxu0 0.0
    %5310 = vmatprep.subr.mxu0 0.0
    %5311 = vmatpush1.msra.mxu0 0.0
    %5312 = vmatprep.subr.mxu0 0.0
    %5313 = vmatpush1.msra.mxu0 0.0
    %5314 = vmatprep.subr.mxu0 0.0
    %5315 = vmatpush1.msra.mxu0 0.0
    %5316 = vmatprep.subr.mxu0 0.0
    %5317 = vmatpush1.msra.mxu0 %v5281
    %5318 = vmatprep.subr.mxu0 0.0
    %5319 = vmatpush2.msra.mxu0 0.0
    %5320 = vmatprep.subr.mxu0 0.0
    %5321 = vmatpush2.msra.mxu0 0.0
    %5322 = vmatprep.subr.mxu0 0.0
    %5323 = vmatpush2.msra.mxu0 0.0
    %5324 = vmatprep.subr.mxu0 0.0
    %5325 = vmatpush2.msra.mxu0 0.0
    %5326 = vmatprep.subr.mxu0 0.0
    %5327 = vmatpush2.msra.mxu0 0.0
    %5328 = vmatprep.subr.mxu0 0.0
    %5329 = vmatpush2.msra.mxu0 0.0
    %5330 = vmatprep.subr.mxu0 0.0
    %5331 = vmatpush2.msra.mxu0 0.0
    %5332 = vmatprep.subr.mxu0 0.0
    %5333 = vmatpush2.msra.mxu0 0.0
    %5334 = vmatprep.subr.mxu0 0.0
    %5335 = vmatpush2.msra.mxu0 0.0
    %5336 = vmatprep.subr.mxu0 0.0
    %5337 = vmatpush2.msra.mxu0 0.0
    %5338 = vmatprep.subr.mxu0 0.0
    %5339 = vmatpush2.msra.mxu0 0.0
    %5340 = vmatprep.subr.mxu0 0.0
    %5341 = vmatpush2.msra.mxu0 0.0
    %5342 = vmatprep.subr.mxu0 0.0
    %5343 = vmatpush2.msra.mxu0 0.0
    %5344 = vmatprep.subr.mxu0 0.0
    %5345 = vmatpush2.msra.mxu0 0.0
    %5346 = vmatprep.subr.mxu0 0.0
    %5347 = vmatpush2.msra.mxu0 0.0
    %5348 = vmatprep.subr.mxu0 0.0
    %5349 = vmatpush2.msra.mxu0 0.0
    %5350 = vmatprep.mubr.f32.mxu0 0.0
    %5351 = vmatmul.mubr.f32.gmra.mxu0 %v5284
    %v5352 = vpop.f32.mrf.mxu0
    %v5353 = vadd.f32 0.0, %v5352
    %v5354 = vpop.f32.mrf.mxu0
    %5355 = vdwg.mxu0
    %5356 = vrot.lane.b32.xlu0 %v279, 40
    %v5357 = vpop.permute.xlu0 %5356
    %v5360 = vsel %vm300, %v5045, 0
    %5362 = vmatprep.subr.mxu0 0.0
    %5363 = vmatpush1.msra.mxu0 0.0
    %5364 = vmatprep.subr.mxu0 0.0
    %5365 = vmatpush1.msra.mxu0 0.0
    %5366 = vmatprep.subr.mxu0 0.0
    %5367 = vmatpush1.msra.mxu0 0.0
    %5368 = vmatprep.subr.mxu0 0.0
    %5369 = vmatpush1.msra.mxu0 0.0
    %5370 = vmatprep.subr.mxu0 0.0
    %5371 = vmatpush1.msra.mxu0 0.0
    %5372 = vmatprep.subr.mxu0 0.0
    %5373 = vmatpush1.msra.mxu0 0.0
    %5374 = vmatprep.subr.mxu0 0.0
    %5375 = vmatpush1.msra.mxu0 0.0
    %5376 = vmatprep.subr.mxu0 0.0
    %5377 = vmatpush1.msra.mxu0 0.0
    %5378 = vmatprep.subr.mxu0 0.0
    %5379 = vmatpush1.msra.mxu0 0.0
    %5380 = vmatprep.subr.mxu0 0.0
    %5381 = vmatpush1.msra.mxu0 0.0
    %5382 = vmatprep.subr.mxu0 0.0
    %5383 = vmatpush1.msra.mxu0 0.0
    %5384 = vmatprep.subr.mxu0 0.0
    %5385 = vmatpush1.msra.mxu0 0.0
    %5386 = vmatprep.subr.mxu0 0.0
    %5387 = vmatpush1.msra.mxu0 0.0
    %5388 = vmatprep.subr.mxu0 0.0
    %5389 = vmatpush1.msra.mxu0 0.0
    %5390 = vmatprep.subr.mxu0 0.0
    %5391 = vmatpush1.msra.mxu0 0.0
    %5392 = vmatprep.subr.mxu0 0.0
    %5393 = vmatpush1.msra.mxu0 %v5357
    %5394 = vmatprep.subr.mxu0 0.0
    %5395 = vmatpush2.msra.mxu0 0.0
    %5396 = vmatprep.subr.mxu0 0.0
    %5397 = vmatpush2.msra.mxu0 0.0
    %5398 = vmatprep.subr.mxu0 0.0
    %5399 = vmatpush2.msra.mxu0 0.0
    %5400 = vmatprep.subr.mxu0 0.0
    %5401 = vmatpush2.msra.mxu0 0.0
    %5402 = vmatprep.subr.mxu0 0.0
    %5403 = vmatpush2.msra.mxu0 0.0
    %5404 = vmatprep.subr.mxu0 0.0
    %5405 = vmatpush2.msra.mxu0 0.0
    %5406 = vmatprep.subr.mxu0 0.0
    %5407 = vmatpush2.msra.mxu0 0.0
    %5408 = vmatprep.subr.mxu0 0.0
    %5409 = vmatpush2.msra.mxu0 0.0
    %5410 = vmatprep.subr.mxu0 0.0
    %5411 = vmatpush2.msra.mxu0 0.0
    %5412 = vmatprep.subr.mxu0 0.0
    %5413 = vmatpush2.msra.mxu0 0.0
    %5414 = vmatprep.subr.mxu0 0.0
    %5415 = vmatpush2.msra.mxu0 0.0
    %5416 = vmatprep.subr.mxu0 0.0
    %5417 = vmatpush2.msra.mxu0 0.0
    %5418 = vmatprep.subr.mxu0 0.0
    %5419 = vmatpush2.msra.mxu0 0.0
    %5420 = vmatprep.subr.mxu0 0.0
    %5421 = vmatpush2.msra.mxu0 0.0
    %5422 = vmatprep.subr.mxu0 0.0
    %5423 = vmatpush2.msra.mxu0 0.0
    %5424 = vmatprep.subr.mxu0 0.0
    %5425 = vmatpush2.msra.mxu0 0.0
    %5426 = vmatprep.mubr.f32.mxu0 0.0
    %5427 = vmatmul.mubr.f32.gmra.mxu0 %v5360
    %v5428 = vpop.f32.mrf.mxu0
    %v5429 = vadd.f32 0.0, %v5428
    %v5430 = vpop.f32.mrf.mxu0
    %5431 = vdwg.mxu0
    %5432 = vrot.lane.b32.xlu0 %v284, 40
    %v5433 = vpop.permute.xlu0 %5432
    %v5436 = vsel %vm300, %v5047, 0
    %5438 = vmatprep.subr.mxu0 0.0
    %5439 = vmatpush1.msra.mxu0 0.0
    %5440 = vmatprep.subr.mxu0 0.0
    %5441 = vmatpush1.msra.mxu0 0.0
    %5442 = vmatprep.subr.mxu0 0.0
    %5443 = vmatpush1.msra.mxu0 0.0
    %5444 = vmatprep.subr.mxu0 0.0
    %5445 = vmatpush1.msra.mxu0 0.0
    %5446 = vmatprep.subr.mxu0 0.0
    %5447 = vmatpush1.msra.mxu0 0.0
    %5448 = vmatprep.subr.mxu0 0.0
    %5449 = vmatpush1.msra.mxu0 0.0
    %5450 = vmatprep.subr.mxu0 0.0
    %5451 = vmatpush1.msra.mxu0 0.0
    %5452 = vmatprep.subr.mxu0 0.0
    %5453 = vmatpush1.msra.mxu0 0.0
    %5454 = vmatprep.subr.mxu0 0.0
    %5455 = vmatpush1.msra.mxu0 0.0
    %5456 = vmatprep.subr.mxu0 0.0
    %5457 = vmatpush1.msra.mxu0 0.0
    %5458 = vmatprep.subr.mxu0 0.0
    %5459 = vmatpush1.msra.mxu0 0.0
    %5460 = vmatprep.subr.mxu0 0.0
    %5461 = vmatpush1.msra.mxu0 0.0
    %5462 = vmatprep.subr.mxu0 0.0
    %5463 = vmatpush1.msra.mxu0 0.0
    %5464 = vmatprep.subr.mxu0 0.0
    %5465 = vmatpush1.msra.mxu0 0.0
    %5466 = vmatprep.subr.mxu0 0.0
    %5467 = vmatpush1.msra.mxu0 0.0
    %5468 = vmatprep.subr.mxu0 0.0
    %5469 = vmatpush1.msra.mxu0 %v5433
    %5470 = vmatprep.subr.mxu0 0.0
    %5471 = vmatpush2.msra.mxu0 0.0
    %5472 = vmatprep.subr.mxu0 0.0
    %5473 = vmatpush2.msra.mxu0 0.0
    %5474 = vmatprep.subr.mxu0 0.0
    %5475 = vmatpush2.msra.mxu0 0.0
    %5476 = vmatprep.subr.mxu0 0.0
    %5477 = vmatpush2.msra.mxu0 0.0
    %5478 = vmatprep.subr.mxu0 0.0
    %5479 = vmatpush2.msra.mxu0 0.0
    %5480 = vmatprep.subr.mxu0 0.0
    %5481 = vmatpush2.msra.mxu0 0.0
    %5482 = vmatprep.subr.mxu0 0.0
    %5483 = vmatpush2.msra.mxu0 0.0
    %5484 = vmatprep.subr.mxu0 0.0
    %5485 = vmatpush2.msra.mxu0 0.0
    %5486 = vmatprep.subr.mxu0 0.0
    %5487 = vmatpush2.msra.mxu0 0.0
    %5488 = vmatprep.subr.mxu0 0.0
    %5489 = vmatpush2.msra.mxu0 0.0
    %5490 = vmatprep.subr.mxu0 0.0
    %5491 = vmatpush2.msra.mxu0 0.0
    %5492 = vmatprep.subr.mxu0 0.0
    %5493 = vmatpush2.msra.mxu0 0.0
    %5494 = vmatprep.subr.mxu0 0.0
    %5495 = vmatpush2.msra.mxu0 0.0
    %5496 = vmatprep.subr.mxu0 0.0
    %5497 = vmatpush2.msra.mxu0 0.0
    %5498 = vmatprep.subr.mxu0 0.0
    %5499 = vmatpush2.msra.mxu0 0.0
    %5500 = vmatprep.subr.mxu0 0.0
    %5501 = vmatpush2.msra.mxu0 0.0
    %5502 = vmatprep.mubr.f32.mxu0 0.0
    %5503 = vmatmul.mubr.f32.gmra.mxu0 %v5436
    %v5504 = vpop.f32.mrf.mxu0
    %v5505 = vadd.f32 0.0, %v5504
    %v5506 = vpop.f32.mrf.mxu0
    %5507 = vdwg.mxu0
    %5508 = vrot.lane.b32.xlu0 %v289, 40
    %v5509 = vpop.permute.xlu0 %5508
    %v5512 = vsel %vm300, %v5049, 0
    %5514 = vmatprep.subr.mxu0 0.0
    %5515 = vmatpush1.msra.mxu0 0.0
    %5516 = vmatprep.subr.mxu0 0.0
    %5517 = vmatpush1.msra.mxu0 0.0
    %5518 = vmatprep.subr.mxu0 0.0
    %5519 = vmatpush1.msra.mxu0 0.0
    %5520 = vmatprep.subr.mxu0 0.0
    %5521 = vmatpush1.msra.mxu0 0.0
    %5522 = vmatprep.subr.mxu0 0.0
    %5523 = vmatpush1.msra.mxu0 0.0
    %5524 = vmatprep.subr.mxu0 0.0
    %5525 = vmatpush1.msra.mxu0 0.0
    %5526 = vmatprep.subr.mxu0 0.0
    %5527 = vmatpush1.msra.mxu0 0.0
    %5528 = vmatprep.subr.mxu0 0.0
    %5529 = vmatpush1.msra.mxu0 0.0
    %5530 = vmatprep.subr.mxu0 0.0
    %5531 = vmatpush1.msra.mxu0 0.0
    %5532 = vmatprep.subr.mxu0 0.0
    %5533 = vmatpush1.msra.mxu0 0.0
    %5534 = vmatprep.subr.mxu0 0.0
    %5535 = vmatpush1.msra.mxu0 0.0
    %5536 = vmatprep.subr.mxu0 0.0
    %5537 = vmatpush1.msra.mxu0 0.0
    %5538 = vmatprep.subr.mxu0 0.0
    %5539 = vmatpush1.msra.mxu0 0.0
    %5540 = vmatprep.subr.mxu0 0.0
    %5541 = vmatpush1.msra.mxu0 0.0
    %5542 = vmatprep.subr.mxu0 0.0
    %5543 = vmatpush1.msra.mxu0 0.0
    %5544 = vmatprep.subr.mxu0 0.0
    %5545 = vmatpush1.msra.mxu0 %v5509
    %5546 = vmatprep.subr.mxu0 0.0
    %5547 = vmatpush2.msra.mxu0 0.0
    %5548 = vmatprep.subr.mxu0 0.0
    %5549 = vmatpush2.msra.mxu0 0.0
    %5550 = vmatprep.subr.mxu0 0.0
    %5551 = vmatpush2.msra.mxu0 0.0
    %5552 = vmatprep.subr.mxu0 0.0
    %5553 = vmatpush2.msra.mxu0 0.0
    %5554 = vmatprep.subr.mxu0 0.0
    %5555 = vmatpush2.msra.mxu0 0.0
    %5556 = vmatprep.subr.mxu0 0.0
    %5557 = vmatpush2.msra.mxu0 0.0
    %5558 = vmatprep.subr.mxu0 0.0
    %5559 = vmatpush2.msra.mxu0 0.0
    %5560 = vmatprep.subr.mxu0 0.0
    %5561 = vmatpush2.msra.mxu0 0.0
    %5562 = vmatprep.subr.mxu0 0.0
    %5563 = vmatpush2.msra.mxu0 0.0
    %5564 = vmatprep.subr.mxu0 0.0
    %5565 = vmatpush2.msra.mxu0 0.0
    %5566 = vmatprep.subr.mxu0 0.0
    %5567 = vmatpush2.msra.mxu0 0.0
    %5568 = vmatprep.subr.mxu0 0.0
    %5569 = vmatpush2.msra.mxu0 0.0
    %5570 = vmatprep.subr.mxu0 0.0
    %5571 = vmatpush2.msra.mxu0 0.0
    %5572 = vmatprep.subr.mxu0 0.0
    %5573 = vmatpush2.msra.mxu0 0.0
    %5574 = vmatprep.subr.mxu0 0.0
    %5575 = vmatpush2.msra.mxu0 0.0
    %5576 = vmatprep.subr.mxu0 0.0
    %5577 = vmatpush2.msra.mxu0 0.0
    %5578 = vmatprep.mubr.f32.mxu0 0.0
    %5579 = vmatmul.mubr.f32.gmra.mxu0 %v5512
    %v5580 = vpop.f32.mrf.mxu0
    %v5581 = vadd.f32 0.0, %v5580
    %v5582 = vpop.f32.mrf.mxu0
    %5583 = vdwg.mxu0
    %5584 = vrot.lane.b32.xlu0 %v294, 40
    %v5585 = vpop.permute.xlu0 %5584
    %v5588 = vsel %vm300, %v5051, 0
    %5590 = vmatprep.subr.mxu0 0.0
    %5591 = vmatpush1.msra.mxu0 0.0
    %5592 = vmatprep.subr.mxu0 0.0
    %5593 = vmatpush1.msra.mxu0 0.0
    %5594 = vmatprep.subr.mxu0 0.0
    %5595 = vmatpush1.msra.mxu0 0.0
    %5596 = vmatprep.subr.mxu0 0.0
    %5597 = vmatpush1.msra.mxu0 0.0
    %5598 = vmatprep.subr.mxu0 0.0
    %5599 = vmatpush1.msra.mxu0 0.0
    %5600 = vmatprep.subr.mxu0 0.0
    %5601 = vmatpush1.msra.mxu0 0.0
    %5602 = vmatprep.subr.mxu0 0.0
    %5603 = vmatpush1.msra.mxu0 0.0
    %5604 = vmatprep.subr.mxu0 0.0
    %5605 = vmatpush1.msra.mxu0 0.0
    %5606 = vmatprep.subr.mxu0 0.0
    %5607 = vmatpush1.msra.mxu0 0.0
    %5608 = vmatprep.subr.mxu0 0.0
    %5609 = vmatpush1.msra.mxu0 0.0
    %5610 = vmatprep.subr.mxu0 0.0
    %5611 = vmatpush1.msra.mxu0 0.0
    %5612 = vmatprep.subr.mxu0 0.0
    %5613 = vmatpush1.msra.mxu0 0.0
    %5614 = vmatprep.subr.mxu0 0.0
    %5615 = vmatpush1.msra.mxu0 0.0
    %5616 = vmatprep.subr.mxu0 0.0
    %5617 = vmatpush1.msra.mxu0 0.0
    %5618 = vmatprep.subr.mxu0 0.0
    %5619 = vmatpush1.msra.mxu0 0.0
    %5620 = vmatprep.subr.mxu0 0.0
    %5621 = vmatpush1.msra.mxu0 %v5585
    %5622 = vmatprep.subr.mxu0 0.0
    %5623 = vmatpush2.msra.mxu0 0.0
    %5624 = vmatprep.subr.mxu0 0.0
    %5625 = vmatpush2.msra.mxu0 0.0
    %5626 = vmatprep.subr.mxu0 0.0
    %5627 = vmatpush2.msra.mxu0 0.0
    %5628 = vmatprep.subr.mxu0 0.0
    %5629 = vmatpush2.msra.mxu0 0.0
    %5630 = vmatprep.subr.mxu0 0.0
    %5631 = vmatpush2.msra.mxu0 0.0
    %5632 = vmatprep.subr.mxu0 0.0
    %5633 = vmatpush2.msra.mxu0 0.0
    %5634 = vmatprep.subr.mxu0 0.0
    %5635 = vmatpush2.msra.mxu0 0.0
    %5636 = vmatprep.subr.mxu0 0.0
    %5637 = vmatpush2.msra.mxu0 0.0
    %5638 = vmatprep.subr.mxu0 0.0
    %5639 = vmatpush2.msra.mxu0 0.0
    %5640 = vmatprep.subr.mxu0 0.0
    %5641 = vmatpush2.msra.mxu0 0.0
    %5642 = vmatprep.subr.mxu0 0.0
    %5643 = vmatpush2.msra.mxu0 0.0
    %5644 = vmatprep.subr.mxu0 0.0
    %5645 = vmatpush2.msra.mxu0 0.0
    %5646 = vmatprep.subr.mxu0 0.0
    %5647 = vmatpush2.msra.mxu0 0.0
    %5648 = vmatprep.subr.mxu0 0.0
    %5649 = vmatpush2.msra.mxu0 0.0
    %5650 = vmatprep.subr.mxu0 0.0
    %5651 = vmatpush2.msra.mxu0 0.0
    %5652 = vmatprep.subr.mxu0 0.0
    %5653 = vmatpush2.msra.mxu0 0.0
    %5654 = vmatprep.mubr.f32.mxu0 0.0
    %5655 = vmatmul.mubr.f32.gmra.mxu0 %v5588
    %v5656 = vpop.f32.mrf.mxu0
    %v5657 = vadd.f32 0.0, %v5656
    %v5658 = vpop.f32.mrf.mxu0
    %5659 = vdwg.mxu0
    %5668 = vrot.lane.b32.xlu0 %v5125, 24
    %v5669 = vpop.permute.xlu0 %5668
    %5670 = vrot.lane.b32.xlu0 %v5201, 24
    %v5671 = vpop.permute.xlu0 %5670
    %5672 = vrot.lane.b32.xlu0 %v5277, 24
    %v5673 = vpop.permute.xlu0 %5672
    %5674 = vrot.lane.b32.xlu0 %v5353, 24
    %v5675 = vpop.permute.xlu0 %5674
    %5676 = vrot.lane.b32.xlu0 %v5429, 24
    %v5677 = vpop.permute.xlu0 %5676
    %5678 = vrot.lane.b32.xlu0 %v5505, 24
    %v5679 = vpop.permute.xlu0 %5678
    %5680 = vrot.lane.b32.xlu0 %v5581, 24
    %v5681 = vpop.permute.xlu0 %5680
    %5682 = vrot.lane.b32.xlu0 %v5657, 24
    %v5683 = vpop.permute.xlu0 %5682
    %vm5692 = vcmask 261312
    %5693 = vst.msk [vmem:[#allocation2] sm:$0xff] %vm5692, %v5669
    %5694 = vst.msk [vmem:[#allocation2 + $0x8] sm:$0xff] %vm5692, %v5671
    %5695 = vst.msk [vmem:[#allocation2 + $0x10] sm:$0xff] %vm5692, %v5673
    %5696 = vst.msk [vmem:[#allocation2 + $0x18] sm:$0xff] %vm5692, %v5675
    %5697 = vst.msk [vmem:[#allocation2 + $0x20] sm:$0xff] %vm5692, %v5677
    %5698 = vst.msk [vmem:[#allocation2 + $0x28] sm:$0xff] %vm5692, %v5679
    %5699 = vst.msk [vmem:[#allocation2 + $0x30] sm:$0xff] %vm5692, %v5681
    %5700 = vst.msk [vmem:[#allocation2 + $0x38] sm:$0xff] %vm5692, %v5683
    %v5701 = vld [vmem:[#allocation2] sm:$0xff]
    %v5702 = vld [vmem:[#allocation2 + $0x8] sm:$0xff]
    %v5703 = vld [vmem:[#allocation2 + $0x10] sm:$0xff]
    %v5704 = vld [vmem:[#allocation2 + $0x18] sm:$0xff]
    %v5705 = vld [vmem:[#allocation2 + $0x20] sm:$0xff]
    %v5706 = vld [vmem:[#allocation2 + $0x28] sm:$0xff]
    %v5707 = vld [vmem:[#allocation2 + $0x30] sm:$0xff]
    %v5708 = vld [vmem:[#allocation2 + $0x38] sm:$0xff]
    %v5709 = vld [vmem:[#allocation8] sm:$0xff]
    %v5710 = vld [vmem:[#allocation8 + $0x20] sm:$0xff]
    %v5711 = vld [vmem:[#allocation8 + $0x40] sm:$0xff]
    %v5712 = vld [vmem:[#allocation8 + $0x60] sm:$0xff]
    %v5713 = vld [vmem:[#allocation9 + $0x1] sm:$0x1]
    %v5714 = vlaneseq
    %v5715 = vshrl.u32 %v5714, 7
    %v5716 = vsub.s32 0, %v5715
    %v5717 = vrot.slane %v5713, %v5716
    %vm5718 = vcmask 261120
    %v5720 = vsel %vm5718, %v5701, 0
    %v5723 = vsel %vm5718, %v5702, 0
    %v5726 = vsel %vm5718, %v5703, 0
    %v5729 = vsel %vm5718, %v5704, 0
    %v5732 = vsel %vm5718, %v5705, 0
    %v5735 = vsel %vm5718, %v5706, 0
    %v5738 = vsel %vm5718, %v5707, 0
    %v5741 = vsel %vm5718, %v5708, 0
    %5743 = vmatprep.subr.mxu0 0.0
    %5744 = vmatpush1.msra.mxu0 0.0
    %5745 = vmatprep.subr.mxu0 0.0
    %5746 = vmatpush1.msra.mxu0 0.0
    %5747 = vmatprep.subr.mxu0 0.0
    %5748 = vmatpush1.msra.mxu0 0.0
    %5749 = vmatprep.subr.mxu0 0.0
    %5750 = vmatpush1.msra.mxu0 0.0
    %5751 = vmatprep.subr.mxu0 0.0
    %5752 = vmatpush1.msra.mxu0 0.0
    %5753 = vmatprep.subr.mxu0 0.0
    %5754 = vmatpush1.msra.mxu0 0.0
    %5755 = vmatprep.subr.mxu0 0.0
    %5756 = vmatpush1.msra.mxu0 0.0
    %5757 = vmatprep.subr.mxu0 0.0
    %5758 = vmatpush1.msra.mxu0 0.0
    %5759 = vmatprep.subr.mxu0 0.0
    %5760 = vmatpush1.msra.mxu0 0.0
    %5761 = vmatprep.subr.mxu0 0.0
    %5762 = vmatpush1.msra.mxu0 0.0
    %5763 = vmatprep.subr.mxu0 0.0
    %5764 = vmatpush1.msra.mxu0 0.0
    %5765 = vmatprep.subr.mxu0 0.0
    %5766 = vmatpush1.msra.mxu0 0.0
    %5767 = vmatprep.subr.mxu0 0.0
    %5768 = vmatpush1.msra.mxu0 %v5712
    %5769 = vmatprep.subr.mxu0 0.0
    %5770 = vmatpush1.msra.mxu0 %v5711
    %5771 = vmatprep.subr.mxu0 0.0
    %5772 = vmatpush1.msra.mxu0 %v5710
    %5773 = vmatprep.subr.mxu0 0.0
    %5774 = vmatpush1.msra.mxu0 %v5709
    %5775 = vmatprep.subr.mxu0 0.0
    %5776 = vmatpush2.msra.mxu0 0.0
    %5777 = vmatprep.subr.mxu0 0.0
    %5778 = vmatpush2.msra.mxu0 0.0
    %5779 = vmatprep.subr.mxu0 0.0
    %5780 = vmatpush2.msra.mxu0 0.0
    %5781 = vmatprep.subr.mxu0 0.0
    %5782 = vmatpush2.msra.mxu0 0.0
    %5783 = vmatprep.subr.mxu0 0.0
    %5784 = vmatpush2.msra.mxu0 0.0
    %5785 = vmatprep.subr.mxu0 0.0
    %5786 = vmatpush2.msra.mxu0 0.0
    %5787 = vmatprep.subr.mxu0 0.0
    %5788 = vmatpush2.msra.mxu0 0.0
    %5789 = vmatprep.subr.mxu0 0.0
    %5790 = vmatpush2.msra.mxu0 0.0
    %5791 = vmatprep.subr.mxu0 0.0
    %5792 = vmatpush2.msra.mxu0 0.0
    %5793 = vmatprep.subr.mxu0 0.0
    %5794 = vmatpush2.msra.mxu0 0.0
    %5795 = vmatprep.subr.mxu0 0.0
    %5796 = vmatpush2.msra.mxu0 0.0
    %5797 = vmatprep.subr.mxu0 0.0
    %5798 = vmatpush2.msra.mxu0 0.0
    %5799 = vmatprep.subr.mxu0 0.0
    %5800 = vmatpush2.msra.mxu0 0.0
    %5801 = vmatprep.subr.mxu0 0.0
    %5802 = vmatpush2.msra.mxu0 0.0
    %5803 = vmatprep.subr.mxu0 0.0
    %5804 = vmatpush2.msra.mxu0 0.0
    %5805 = vmatprep.subr.mxu0 0.0
    %5806 = vmatpush2.msra.mxu0 0.0
    %5807 = vmatprep.mubr.f32.mxu0 0.0
    %5808 = vmatmul.mubr.f32.gmra.mxu0 %v5720
    %v5809 = vpop.f32.mrf.mxu0
    %v5810 = vadd.f32 %v5717, %v5809
    %v5811 = vpop.f32.mrf.mxu0
    %5812 = vmatprep.mubr.f32.mxu0 0.0
    %5813 = vmatmul.mubr.f32.gmra.mxu0 %v5723
    %v5814 = vpop.f32.mrf.mxu0
    %v5815 = vadd.f32 %v5717, %v5814
    %v5816 = vpop.f32.mrf.mxu0
    %5817 = vmatprep.mubr.f32.mxu0 0.0
    %5818 = vmatmul.mubr.f32.gmra.mxu0 %v5726
    %v5819 = vpop.f32.mrf.mxu0
    %v5820 = vadd.f32 %v5717, %v5819
    %v5821 = vpop.f32.mrf.mxu0
    %5822 = vmatprep.mubr.f32.mxu0 0.0
    %5823 = vmatmul.mubr.f32.gmra.mxu0 %v5729
    %v5824 = vpop.f32.mrf.mxu0
    %v5825 = vadd.f32 %v5717, %v5824
    %v5826 = vpop.f32.mrf.mxu0
    %5827 = vmatprep.mubr.f32.mxu0 0.0
    %5828 = vmatmul.mubr.f32.gmra.mxu0 %v5732
    %v5829 = vpop.f32.mrf.mxu0
    %v5830 = vadd.f32 %v5717, %v5829
    %v5831 = vpop.f32.mrf.mxu0
    %5832 = vmatprep.mubr.f32.mxu0 0.0
    %5833 = vmatmul.mubr.f32.gmra.mxu0 %v5735
    %v5834 = vpop.f32.mrf.mxu0
    %v5835 = vadd.f32 %v5717, %v5834
    %v5836 = vpop.f32.mrf.mxu0
    %5837 = vmatprep.mubr.f32.mxu0 0.0
    %5838 = vmatmul.mubr.f32.gmra.mxu0 %v5738
    %v5839 = vpop.f32.mrf.mxu0
    %v5840 = vadd.f32 %v5717, %v5839
    %v5841 = vpop.f32.mrf.mxu0
    %5842 = vmatprep.mubr.f32.mxu0 0.0
    %5843 = vmatmul.mubr.f32.gmra.mxu0 %v5741
    %v5844 = vpop.f32.mrf.mxu0
    %v5845 = vadd.f32 %v5717, %v5844
    %v5846 = vpop.f32.mrf.mxu0
    %5847 = vdwg.mxu0
    %v5848 = vld [vmem:[#allocation9 + $0x2] sm:$0x1]
    %v5849 = vld [vmem:[#allocation9 + $0x3] sm:$0x1]
    %v5850 = vsel %vm5718, %v5810, 0.0
    %5851 = vadd.xlane.f32.xlu0 %v5850
    %v5852 = vpop.xlane.xlu0 %5851
    %v5853 = vsel %vm5718, %v5815, 0.0
    %5854 = vadd.xlane.f32.xlu0 %v5853
    %v5855 = vpop.xlane.xlu0 %5854
    %v5856 = vsel %vm5718, %v5820, 0.0
    %5857 = vadd.xlane.f32.xlu0 %v5856
    %v5858 = vpop.xlane.xlu0 %5857
    %v5859 = vsel %vm5718, %v5825, 0.0
    %5860 = vadd.xlane.f32.xlu0 %v5859
    %v5861 = vpop.xlane.xlu0 %5860
    %v5862 = vsel %vm5718, %v5830, 0.0
    %5863 = vadd.xlane.f32.xlu0 %v5862
    %v5864 = vpop.xlane.xlu0 %5863
    %v5865 = vsel %vm5718, %v5835, 0.0
    %5866 = vadd.xlane.f32.xlu0 %v5865
    %v5867 = vpop.xlane.xlu0 %5866
    %v5868 = vsel %vm5718, %v5840, 0.0
    %5869 = vadd.xlane.f32.xlu0 %v5868
    %v5870 = vpop.xlane.xlu0 %5869
    %v5871 = vsel %vm5718, %v5845, 0.0
    %5872 = vadd.xlane.f32.xlu0 %v5871
    %v5873 = vpop.xlane.xlu0 %5872
    %v5874 = vrcp.pop 32.0
    %v5875 = vmul.f32 %v5852, %v5874
    %v5876 = vmul.f32 %v5855, %v5874
    %v5877 = vmul.f32 %v5858, %v5874
    %v5878 = vmul.f32 %v5861, %v5874
    %v5879 = vmul.f32 %v5864, %v5874
    %v5880 = vmul.f32 %v5867, %v5874
    %v5881 = vmul.f32 %v5870, %v5874
    %v5882 = vmul.f32 %v5873, %v5874
    %v5883 = vsub.f32 %v5810, %v5875
    %v5884 = vsub.f32 %v5815, %v5876
    %v5885 = vsub.f32 %v5820, %v5877
    %v5886 = vsub.f32 %v5825, %v5878
    %v5887 = vsub.f32 %v5830, %v5879
    %v5888 = vsub.f32 %v5835, %v5880
    %v5889 = vsub.f32 %v5840, %v5881
    %v5890 = vsub.f32 %v5845, %v5882
    %v5891 = vmul.f32 %v5883, %v5883
    %v5892 = vmul.f32 %v5884, %v5884
    %v5893 = vmul.f32 %v5885, %v5885
    %v5894 = vmul.f32 %v5886, %v5886
    %v5895 = vmul.f32 %v5887, %v5887
    %v5896 = vmul.f32 %v5888, %v5888
    %v5897 = vmul.f32 %v5889, %v5889
    %v5898 = vmul.f32 %v5890, %v5890
    %v5899 = vsel %vm5718, %v5891, 0.0
    %5900 = vadd.xlane.f32.xlu0 %v5899
    %v5901 = vpop.xlane.xlu0 %5900
    %v5902 = vsel %vm5718, %v5892, 0.0
    %5903 = vadd.xlane.f32.xlu0 %v5902
    %v5904 = vpop.xlane.xlu0 %5903
    %v5905 = vsel %vm5718, %v5893, 0.0
    %5906 = vadd.xlane.f32.xlu0 %v5905
    %v5907 = vpop.xlane.xlu0 %5906
    %v5908 = vsel %vm5718, %v5894, 0.0
    %5909 = vadd.xlane.f32.xlu0 %v5908
    %v5910 = vpop.xlane.xlu0 %5909
    %v5911 = vsel %vm5718, %v5895, 0.0
    %5912 = vadd.xlane.f32.xlu0 %v5911
    %v5913 = vpop.xlane.xlu0 %5912
    %v5914 = vsel %vm5718, %v5896, 0.0
    %5915 = vadd.xlane.f32.xlu0 %v5914
    %v5916 = vpop.xlane.xlu0 %5915
    %v5917 = vsel %vm5718, %v5897, 0.0
    %5918 = vadd.xlane.f32.xlu0 %v5917
    %v5919 = vpop.xlane.xlu0 %5918
    %v5920 = vsel %vm5718, %v5898, 0.0
    %5921 = vadd.xlane.f32.xlu0 %v5920
    %v5922 = vpop.xlane.xlu0 %5921
    %v5923 = vmul.f32 %v5901, %v5874
    %v5924 = vmul.f32 %v5904, %v5874
    %v5925 = vmul.f32 %v5907, %v5874
    %v5926 = vmul.f32 %v5910, %v5874
    %v5927 = vmul.f32 %v5913, %v5874
    %v5928 = vmul.f32 %v5916, %v5874
    %v5929 = vmul.f32 %v5919, %v5874
    %v5930 = vmul.f32 %v5922, %v5874
    %v5931 = vadd.f32 %v5923, 1e-05
    %v5932 = vadd.f32 %v5924, 1e-05
    %v5933 = vadd.f32 %v5925, 1e-05
    %v5934 = vadd.f32 %v5926, 1e-05
    %v5935 = vadd.f32 %v5927, 1e-05
    %v5936 = vadd.f32 %v5928, 1e-05
    %v5937 = vadd.f32 %v5929, 1e-05
    %v5938 = vadd.f32 %v5930, 1e-05
    %v5939 = vrsqrt.pop %v5931
    %v5940 = vrsqrt.pop %v5932
    %v5941 = vrsqrt.pop %v5933
    %v5942 = vrsqrt.pop %v5934
    %v5943 = vrsqrt.pop %v5935
    %v5944 = vrsqrt.pop %v5936
    %v5945 = vrsqrt.pop %v5937
    %v5946 = vrsqrt.pop %v5938
    %v5947 = vmul.f32 %v5883, %v5939
    %v5948 = vmul.f32 %v5884, %v5940
    %v5949 = vmul.f32 %v5885, %v5941
    %v5950 = vmul.f32 %v5886, %v5942
    %v5951 = vmul.f32 %v5887, %v5943
    %v5952 = vmul.f32 %v5888, %v5944
    %v5953 = vmul.f32 %v5889, %v5945
    %v5954 = vmul.f32 %v5890, %v5946
    %v5955 = vlaneseq
    %v5956 = vshrl.u32 %v5955, 7
    %v5957 = vsub.s32 0, %v5956
    %v5958 = vrot.slane %v5848, %v5957
    %v5959 = vmul.f32 %v5947, %v5958
    %v5960 = vmul.f32 %v5948, %v5958
    %v5961 = vmul.f32 %v5949, %v5958
    %v5962 = vmul.f32 %v5950, %v5958
    %v5963 = vmul.f32 %v5951, %v5958
    %v5964 = vmul.f32 %v5952, %v5958
    %v5965 = vmul.f32 %v5953, %v5958
    %v5966 = vmul.f32 %v5954, %v5958
    %v5967 = vlaneseq
    %v5968 = vshrl.u32 %v5967, 7
    %v5969 = vsub.s32 0, %v5968
    %v5970 = vrot.slane %v5849, %v5969
    %v5971 = vadd.f32 %v5959, %v5970
    %v5972 = vadd.f32 %v5960, %v5970
    %v5973 = vadd.f32 %v5961, %v5970
    %v5974 = vadd.f32 %v5962, %v5970
    %v5975 = vadd.f32 %v5963, %v5970
    %v5976 = vadd.f32 %v5964, %v5970
    %v5977 = vadd.f32 %v5965, %v5970
    %v5978 = vadd.f32 %v5966, %v5970
    %v5979 = vmul.f32 %v5971, 0.5
    %v5980 = vmul.f32 %v5972, 0.5
    %v5981 = vmul.f32 %v5973, 0.5
    %v5982 = vmul.f32 %v5974, 0.5
    %v5983 = vmul.f32 %v5975, 0.5
    %v5984 = vmul.f32 %v5976, 0.5
    %v5985 = vmul.f32 %v5977, 0.5
    %v5986 = vmul.f32 %v5978, 0.5
    %v5987 = vmul.f32 %v5971, 0.70710677
    %v5988 = vmul.f32 %v5972, 0.70710677
    %v5989 = vmul.f32 %v5973, 0.70710677
    %v5990 = vmul.f32 %v5974, 0.70710677
    %v5991 = vmul.f32 %v5975, 0.70710677
    %v5992 = vmul.f32 %v5976, 0.70710677
    %v5993 = vmul.f32 %v5977, 0.70710677
    %v5994 = vmul.f32 %v5978, 0.70710677
    %v5995 = vand.u32 2147483647, %v5987
    %v5996 = vand.u32 2147483647, %v5988
    %v5997 = vand.u32 2147483647, %v5989
    %v5998 = vand.u32 2147483647, %v5990
    %v5999 = vand.u32 2147483647, %v5991
    %v6000 = vand.u32 2147483647, %v5992
    %v6001 = vand.u32 2147483647, %v5993
    %v6002 = vand.u32 2147483647, %v5994
    %v6003 = vmul.f32 %v5995, 0.3275911
    %v6004 = vmul.f32 %v5996, 0.3275911
    %v6005 = vmul.f32 %v5997, 0.3275911
    %v6006 = vmul.f32 %v5998, 0.3275911
    %v6007 = vmul.f32 %v5999, 0.3275911
    %v6008 = vmul.f32 %v6000, 0.3275911
    %v6009 = vmul.f32 %v6001, 0.3275911
    %v6010 = vmul.f32 %v6002, 0.3275911
    %v6011 = vadd.f32 %v6003, 1.0
    %v6012 = vadd.f32 %v6004, 1.0
    %v6013 = vadd.f32 %v6005, 1.0
    %v6014 = vadd.f32 %v6006, 1.0
    %v6015 = vadd.f32 %v6007, 1.0
    %v6016 = vadd.f32 %v6008, 1.0
    %v6017 = vadd.f32 %v6009, 1.0
    %v6018 = vadd.f32 %v6010, 1.0
    %v6019 = vrcp.pop %v6011
    %v6020 = vmul.f32 1.0, %v6019
    %v6021 = vrcp.pop %v6012
    %v6022 = vmul.f32 1.0, %v6021
    %v6023 = vrcp.pop %v6013
    %v6024 = vmul.f32 1.0, %v6023
    %v6025 = vrcp.pop %v6014
    %v6026 = vmul.f32 1.0, %v6025
    %v6027 = vrcp.pop %v6015
    %v6028 = vmul.f32 1.0, %v6027
    %v6029 = vrcp.pop %v6016
    %v6030 = vmul.f32 1.0, %v6029
    %v6031 = vrcp.pop %v6017
    %v6032 = vmul.f32 1.0, %v6031
    %v6033 = vrcp.pop %v6018
    %v6034 = vmul.f32 1.0, %v6033
    %v6035 = vmul.f32 %v6020, 1.0614054
    %v6036 = vmul.f32 %v6022, 1.0614054
    %v6037 = vmul.f32 %v6024, 1.0614054
    %v6038 = vmul.f32 %v6026, 1.0614054
    %v6039 = vmul.f32 %v6028, 1.0614054
    %v6040 = vmul.f32 %v6030, 1.0614054
    %v6041 = vmul.f32 %v6032, 1.0614054
    %v6042 = vmul.f32 %v6034, 1.0614054
    %v6043 = vadd.f32 %v6035, -1.4531521
    %v6044 = vadd.f32 %v6036, -1.4531521
    %v6045 = vadd.f32 %v6037, -1.4531521
    %v6046 = vadd.f32 %v6038, -1.4531521
    %v6047 = vadd.f32 %v6039, -1.4531521
    %v6048 = vadd.f32 %v6040, -1.4531521
    %v6049 = vadd.f32 %v6041, -1.4531521
    %v6050 = vadd.f32 %v6042, -1.4531521
    %v6051 = vmul.f32 %v6043, %v6020
    %v6052 = vmul.f32 %v6044, %v6022
    %v6053 = vmul.f32 %v6045, %v6024
    %v6054 = vmul.f32 %v6046, %v6026
    %v6055 = vmul.f32 %v6047, %v6028
    %v6056 = vmul.f32 %v6048, %v6030
    %v6057 = vmul.f32 %v6049, %v6032
    %v6058 = vmul.f32 %v6050, %v6034
    %v6059 = vadd.f32 %v6051, 1.4214138
    %v6060 = vadd.f32 %v6052, 1.4214138
    %v6061 = vadd.f32 %v6053, 1.4214138
    %v6062 = vadd.f32 %v6054, 1.4214138
    %v6063 = vadd.f32 %v6055, 1.4214138
    %v6064 = vadd.f32 %v6056, 1.4214138
    %v6065 = vadd.f32 %v6057, 1.4214138
    %v6066 = vadd.f32 %v6058, 1.4214138
    %v6067 = vmul.f32 %v6059, %v6020
    %v6068 = vmul.f32 %v6060, %v6022
    %v6069 = vmul.f32 %v6061, %v6024
    %v6070 = vmul.f32 %v6062, %v6026
    %v6071 = vmul.f32 %v6063, %v6028
    %v6072 = vmul.f32 %v6064, %v6030
    %v6073 = vmul.f32 %v6065, %v6032
    %v6074 = vmul.f32 %v6066, %v6034
    %v6075 = vadd.f32 %v6067, -0.28449672
    %v6076 = vadd.f32 %v6068, -0.28449672
    %v6077 = vadd.f32 %v6069, -0.28449672
    %v6078 = vadd.f32 %v6070, -0.28449672
    %v6079 = vadd.f32 %v6071, -0.28449672
    %v6080 = vadd.f32 %v6072, -0.28449672
    %v6081 = vadd.f32 %v6073, -0.28449672
    %v6082 = vadd.f32 %v6074, -0.28449672
    %v6083 = vmul.f32 %v6075, %v6020
    %v6084 = vmul.f32 %v6076, %v6022
    %v6085 = vmul.f32 %v6077, %v6024
    %v6086 = vmul.f32 %v6078, %v6026
    %v6087 = vmul.f32 %v6079, %v6028
    %v6088 = vmul.f32 %v6080, %v6030
    %v6089 = vmul.f32 %v6081, %v6032
    %v6090 = vmul.f32 %v6082, %v6034
    %v6091 = vadd.f32 %v6083, 0.2548296
    %v6092 = vadd.f32 %v6084, 0.2548296
    %v6093 = vadd.f32 %v6085, 0.2548296
    %v6094 = vadd.f32 %v6086, 0.2548296
    %v6095 = vadd.f32 %v6087, 0.2548296
    %v6096 = vadd.f32 %v6088, 0.2548296
    %v6097 = vadd.f32 %v6089, 0.2548296
    %v6098 = vadd.f32 %v6090, 0.2548296
    %v6099 = vmul.f32 %v6091, %v6020
    %v6100 = vmul.f32 %v6092, %v6022
    %v6101 = vmul.f32 %v6093, %v6024
    %v6102 = vmul.f32 %v6094, %v6026
    %v6103 = vmul.f32 %v6095, %v6028
    %v6104 = vmul.f32 %v6096, %v6030
    %v6105 = vmul.f32 %v6097, %v6032
    %v6106 = vmul.f32 %v6098, %v6034
    %v6107 = vsub.f32 0.0, %v5995
    %v6108 = vsub.f32 0.0, %v5996
    %v6109 = vsub.f32 0.0, %v5997
    %v6110 = vsub.f32 0.0, %v5998
    %v6111 = vsub.f32 0.0, %v5999
    %v6112 = vsub.f32 0.0, %v6000
    %v6113 = vsub.f32 0.0, %v6001
    %v6114 = vsub.f32 0.0, %v6002
    %v6115 = vmul.f32 %v6107, %v5995
    %v6116 = vmul.f32 %v6108, %v5996
    %v6117 = vmul.f32 %v6109, %v5997
    %v6118 = vmul.f32 %v6110, %v5998
    %v6119 = vmul.f32 %v6111, %v5999
    %v6120 = vmul.f32 %v6112, %v6000
    %v6121 = vmul.f32 %v6113, %v6001
    %v6122 = vmul.f32 %v6114, %v6002
    %v6123 = vmul.f32 %v6115, 1.442695
    %v6124 = vpow.pop %v6123
    %v6125 = vmul.f32 %v6116, 1.442695
    %v6126 = vpow.pop %v6125
    %v6127 = vmul.f32 %v6117, 1.442695
    %v6128 = vpow.pop %v6127
    %v6129 = vmul.f32 %v6118, 1.442695
    %v6130 = vpow.pop %v6129
    %v6131 = vmul.f32 %v6119, 1.442695
    %v6132 = vpow.pop %v6131
    %v6133 = vmul.f32 %v6120, 1.442695
    %v6134 = vpow.pop %v6133
    %v6135 = vmul.f32 %v6121, 1.442695
    %v6136 = vpow.pop %v6135
    %v6137 = vmul.f32 %v6122, 1.442695
    %v6138 = vpow.pop %v6137
    %v6139 = vmul.f32 %v6099, %v6124
    %v6140 = vmul.f32 %v6100, %v6126
    %v6141 = vmul.f32 %v6101, %v6128
    %v6142 = vmul.f32 %v6102, %v6130
    %v6143 = vmul.f32 %v6103, %v6132
    %v6144 = vmul.f32 %v6104, %v6134
    %v6145 = vmul.f32 %v6105, %v6136
    %v6146 = vmul.f32 %v6106, %v6138
    %v6147 = vsub.f32 1.0, %v6139
    %v6148 = vsub.f32 1.0, %v6140
    %v6149 = vsub.f32 1.0, %v6141
    %v6150 = vsub.f32 1.0, %v6142
    %v6151 = vsub.f32 1.0, %v6143
    %v6152 = vsub.f32 1.0, %v6144
    %v6153 = vsub.f32 1.0, %v6145
    %v6154 = vsub.f32 1.0, %v6146
    %vm6155 = vcmp.ge.f32.partialorder %v5987, 0.0
    %vm6156 = vcmp.ge.f32.partialorder %v5988, 0.0
    %vm6157 = vcmp.ge.f32.partialorder %v5989, 0.0
    %vm6158 = vcmp.ge.f32.partialorder %v5990, 0.0
    %vm6159 = vcmp.ge.f32.partialorder %v5991, 0.0
    %vm6160 = vcmp.ge.f32.partialorder %v5992, 0.0
    %vm6161 = vcmp.ge.f32.partialorder %v5993, 0.0
    %vm6162 = vcmp.ge.f32.partialorder %v5994, 0.0
    %v6163 = vsub.f32 0.0, %v6147
    %v6164 = vsub.f32 0.0, %v6148
    %v6165 = vsub.f32 0.0, %v6149
    %v6166 = vsub.f32 0.0, %v6150
    %v6167 = vsub.f32 0.0, %v6151
    %v6168 = vsub.f32 0.0, %v6152
    %v6169 = vsub.f32 0.0, %v6153
    %v6170 = vsub.f32 0.0, %v6154
    %v6171 = vsel %vm6155, %v6147, %v6163
    %v6172 = vsel %vm6156, %v6148, %v6164
    %v6173 = vsel %vm6157, %v6149, %v6165
    %v6174 = vsel %vm6158, %v6150, %v6166
    %v6175 = vsel %vm6159, %v6151, %v6167
    %v6176 = vsel %vm6160, %v6152, %v6168
    %v6177 = vsel %vm6161, %v6153, %v6169
    %v6178 = vsel %vm6162, %v6154, %v6170
    %v6179 = vadd.f32 %v6171, 1.0
    %v6180 = vadd.f32 %v6172, 1.0
    %v6181 = vadd.f32 %v6173, 1.0
    %v6182 = vadd.f32 %v6174, 1.0
    %v6183 = vadd.f32 %v6175, 1.0
    %v6184 = vadd.f32 %v6176, 1.0
    %v6185 = vadd.f32 %v6177, 1.0
    %v6186 = vadd.f32 %v6178, 1.0
    %v6187 = vmul.f32 %v5979, %v6179
    %v6188 = vmul.f32 %v5980, %v6180
    %v6189 = vmul.f32 %v5981, %v6181
    %v6190 = vmul.f32 %v5982, %v6182
    %v6191 = vmul.f32 %v5983, %v6183
    %v6192 = vmul.f32 %v5984, %v6184
    %v6193 = vmul.f32 %v5985, %v6185
    %v6194 = vmul.f32 %v5986, %v6186
    %v6195 = vld [vmem:[#allocation8 + $0x8] sm:$0xff]
    %v6196 = vld [vmem:[#allocation8 + $0x28] sm:$0xff]
    %v6197 = vld [vmem:[#allocation8 + $0x48] sm:$0xff]
    %v6198 = vld [vmem:[#allocation8 + $0x68] sm:$0xff]
    %v6199 = vld [vmem:[#allocation9 + $0x4] sm:$0x1]
    %v6200 = vlaneseq
    %v6201 = vshrl.u32 %v6200, 7
    %v6202 = vsub.s32 0, %v6201
    %v6203 = vrot.slane %v6199, %v6202
    %v6205 = vsel %vm5718, %v6187, 0
    %v6208 = vsel %vm5718, %v6188, 0
    %v6211 = vsel %vm5718, %v6189, 0
    %v6214 = vsel %vm5718, %v6190, 0
    %v6217 = vsel %vm5718, %v6191, 0
    %v6220 = vsel %vm5718, %v6192, 0
    %v6223 = vsel %vm5718, %v6193, 0
    %v6226 = vsel %vm5718, %v6194, 0
    %6228 = vmatprep.subr.mxu0 0.0
    %6229 = vmatpush1.msra.mxu0 0.0
    %6230 = vmatprep.subr.mxu0 0.0
    %6231 = vmatpush1.msra.mxu0 0.0
    %6232 = vmatprep.subr.mxu0 0.0
    %6233 = vmatpush1.msra.mxu0 0.0
    %6234 = vmatprep.subr.mxu0 0.0
    %6235 = vmatpush1.msra.mxu0 0.0
    %6236 = vmatprep.subr.mxu0 0.0
    %6237 = vmatpush1.msra.mxu0 0.0
    %6238 = vmatprep.subr.mxu0 0.0
    %6239 = vmatpush1.msra.mxu0 0.0
    %6240 = vmatprep.subr.mxu0 0.0
    %6241 = vmatpush1.msra.mxu0 0.0
    %6242 = vmatprep.subr.mxu0 0.0
    %6243 = vmatpush1.msra.mxu0 0.0
    %6244 = vmatprep.subr.mxu0 0.0
    %6245 = vmatpush1.msra.mxu0 0.0
    %6246 = vmatprep.subr.mxu0 0.0
    %6247 = vmatpush1.msra.mxu0 0.0
    %6248 = vmatprep.subr.mxu0 0.0
    %6249 = vmatpush1.msra.mxu0 0.0
    %6250 = vmatprep.subr.mxu0 0.0
    %6251 = vmatpush1.msra.mxu0 0.0
    %6252 = vmatprep.subr.mxu0 0.0
    %6253 = vmatpush1.msra.mxu0 %v6198
    %6254 = vmatprep.subr.mxu0 0.0
    %6255 = vmatpush1.msra.mxu0 %v6197
    %6256 = vmatprep.subr.mxu0 0.0
    %6257 = vmatpush1.msra.mxu0 %v6196
    %6258 = vmatprep.subr.mxu0 0.0
    %6259 = vmatpush1.msra.mxu0 %v6195
    %6260 = vmatprep.subr.mxu0 0.0
    %6261 = vmatpush2.msra.mxu0 0.0
    %6262 = vmatprep.subr.mxu0 0.0
    %6263 = vmatpush2.msra.mxu0 0.0
    %6264 = vmatprep.subr.mxu0 0.0
    %6265 = vmatpush2.msra.mxu0 0.0
    %6266 = vmatprep.subr.mxu0 0.0
    %6267 = vmatpush2.msra.mxu0 0.0
    %6268 = vmatprep.subr.mxu0 0.0
    %6269 = vmatpush2.msra.mxu0 0.0
    %6270 = vmatprep.subr.mxu0 0.0
    %6271 = vmatpush2.msra.mxu0 0.0
    %6272 = vmatprep.subr.mxu0 0.0
    %6273 = vmatpush2.msra.mxu0 0.0
    %6274 = vmatprep.subr.mxu0 0.0
    %6275 = vmatpush2.msra.mxu0 0.0
    %6276 = vmatprep.subr.mxu0 0.0
    %6277 = vmatpush2.msra.mxu0 0.0
    %6278 = vmatprep.subr.mxu0 0.0
    %6279 = vmatpush2.msra.mxu0 0.0
    %6280 = vmatprep.subr.mxu0 0.0
    %6281 = vmatpush2.msra.mxu0 0.0
    %6282 = vmatprep.subr.mxu0 0.0
    %6283 = vmatpush2.msra.mxu0 0.0
    %6284 = vmatprep.subr.mxu0 0.0
    %6285 = vmatpush2.msra.mxu0 0.0
    %6286 = vmatprep.subr.mxu0 0.0
    %6287 = vmatpush2.msra.mxu0 0.0
    %6288 = vmatprep.subr.mxu0 0.0
    %6289 = vmatpush2.msra.mxu0 0.0
    %6290 = vmatprep.subr.mxu0 0.0
    %6291 = vmatpush2.msra.mxu0 0.0
    %6292 = vmatprep.mubr.f32.mxu0 0.0
    %6293 = vmatmul.mubr.f32.gmra.mxu0 %v6205
    %v6294 = vpop.f32.mrf.mxu0
    %v6295 = vadd.f32 %v6203, %v6294
    %v6296 = vpop.f32.mrf.mxu0
    %6297 = vmatprep.mubr.f32.mxu0 0.0
    %6298 = vmatmul.mubr.f32.gmra.mxu0 %v6208
    %v6299 = vpop.f32.mrf.mxu0
    %v6300 = vadd.f32 %v6203, %v6299
    %v6301 = vpop.f32.mrf.mxu0
    %6302 = vmatprep.mubr.f32.mxu0 0.0
    %6303 = vmatmul.mubr.f32.gmra.mxu0 %v6211
    %v6304 = vpop.f32.mrf.mxu0
    %v6305 = vadd.f32 %v6203, %v6304
    %v6306 = vpop.f32.mrf.mxu0
    %6307 = vmatprep.mubr.f32.mxu0 0.0
    %6308 = vmatmul.mubr.f32.gmra.mxu0 %v6214
    %v6309 = vpop.f32.mrf.mxu0
    %v6310 = vadd.f32 %v6203, %v6309
    %v6311 = vpop.f32.mrf.mxu0
    %6312 = vmatprep.mubr.f32.mxu0 0.0
    %6313 = vmatmul.mubr.f32.gmra.mxu0 %v6217
    %v6314 = vpop.f32.mrf.mxu0
    %v6315 = vadd.f32 %v6203, %v6314
    %v6316 = vpop.f32.mrf.mxu0
    %6317 = vmatprep.mubr.f32.mxu0 0.0
    %6318 = vmatmul.mubr.f32.gmra.mxu0 %v6220
    %v6319 = vpop.f32.mrf.mxu0
    %v6320 = vadd.f32 %v6203, %v6319
    %v6321 = vpop.f32.mrf.mxu0
    %6322 = vmatprep.mubr.f32.mxu0 0.0
    %6323 = vmatmul.mubr.f32.gmra.mxu0 %v6223
    %v6324 = vpop.f32.mrf.mxu0
    %v6325 = vadd.f32 %v6203, %v6324
    %v6326 = vpop.f32.mrf.mxu0
    %6327 = vmatprep.mubr.f32.mxu0 0.0
    %6328 = vmatmul.mubr.f32.gmra.mxu0 %v6226
    %v6329 = vpop.f32.mrf.mxu0
    %v6330 = vadd.f32 %v6203, %v6329
    %v6331 = vpop.f32.mrf.mxu0
    %6332 = vdwg.mxu0
    %v6333 = vld [vmem:[#allocation9 + $0x5] sm:$0x1]
    %v6334 = vld [vmem:[#allocation9 + $0x6] sm:$0x1]
    %v6335 = vsel %vm5718, %v6295, 0.0
    %6336 = vadd.xlane.f32.xlu0 %v6335
    %v6337 = vpop.xlane.xlu0 %6336
    %v6338 = vsel %vm5718, %v6300, 0.0
    %6339 = vadd.xlane.f32.xlu0 %v6338
    %v6340 = vpop.xlane.xlu0 %6339
    %v6341 = vsel %vm5718, %v6305, 0.0
    %6342 = vadd.xlane.f32.xlu0 %v6341
    %v6343 = vpop.xlane.xlu0 %6342
    %v6344 = vsel %vm5718, %v6310, 0.0
    %6345 = vadd.xlane.f32.xlu0 %v6344
    %v6346 = vpop.xlane.xlu0 %6345
    %v6347 = vsel %vm5718, %v6315, 0.0
    %6348 = vadd.xlane.f32.xlu0 %v6347
    %v6349 = vpop.xlane.xlu0 %6348
    %v6350 = vsel %vm5718, %v6320, 0.0
    %6351 = vadd.xlane.f32.xlu0 %v6350
    %v6352 = vpop.xlane.xlu0 %6351
    %v6353 = vsel %vm5718, %v6325, 0.0
    %6354 = vadd.xlane.f32.xlu0 %v6353
    %v6355 = vpop.xlane.xlu0 %6354
    %v6356 = vsel %vm5718, %v6330, 0.0
    %6357 = vadd.xlane.f32.xlu0 %v6356
    %v6358 = vpop.xlane.xlu0 %6357
    %v6359 = vmul.f32 %v6337, %v5874
    %v6360 = vmul.f32 %v6340, %v5874
    %v6361 = vmul.f32 %v6343, %v5874
    %v6362 = vmul.f32 %v6346, %v5874
    %v6363 = vmul.f32 %v6349, %v5874
    %v6364 = vmul.f32 %v6352, %v5874
    %v6365 = vmul.f32 %v6355, %v5874
    %v6366 = vmul.f32 %v6358, %v5874
    %v6367 = vsub.f32 %v6295, %v6359
    %v6368 = vsub.f32 %v6300, %v6360
    %v6369 = vsub.f32 %v6305, %v6361
    %v6370 = vsub.f32 %v6310, %v6362
    %v6371 = vsub.f32 %v6315, %v6363
    %v6372 = vsub.f32 %v6320, %v6364
    %v6373 = vsub.f32 %v6325, %v6365
    %v6374 = vsub.f32 %v6330, %v6366
    %v6375 = vmul.f32 %v6367, %v6367
    %v6376 = vmul.f32 %v6368, %v6368
    %v6377 = vmul.f32 %v6369, %v6369
    %v6378 = vmul.f32 %v6370, %v6370
    %v6379 = vmul.f32 %v6371, %v6371
    %v6380 = vmul.f32 %v6372, %v6372
    %v6381 = vmul.f32 %v6373, %v6373
    %v6382 = vmul.f32 %v6374, %v6374
    %v6383 = vsel %vm5718, %v6375, 0.0
    %6384 = vadd.xlane.f32.xlu0 %v6383
    %v6385 = vpop.xlane.xlu0 %6384
    %v6386 = vsel %vm5718, %v6376, 0.0
    %6387 = vadd.xlane.f32.xlu0 %v6386
    %v6388 = vpop.xlane.xlu0 %6387
    %v6389 = vsel %vm5718, %v6377, 0.0
    %6390 = vadd.xlane.f32.xlu0 %v6389
    %v6391 = vpop.xlane.xlu0 %6390
    %v6392 = vsel %vm5718, %v6378, 0.0
    %6393 = vadd.xlane.f32.xlu0 %v6392
    %v6394 = vpop.xlane.xlu0 %6393
    %v6395 = vsel %vm5718, %v6379, 0.0
    %6396 = vadd.xlane.f32.xlu0 %v6395
    %v6397 = vpop.xlane.xlu0 %6396
    %v6398 = vsel %vm5718, %v6380, 0.0
    %6399 = vadd.xlane.f32.xlu0 %v6398
    %v6400 = vpop.xlane.xlu0 %6399
    %v6401 = vsel %vm5718, %v6381, 0.0
    %6402 = vadd.xlane.f32.xlu0 %v6401
    %v6403 = vpop.xlane.xlu0 %6402
    %v6404 = vsel %vm5718, %v6382, 0.0
    %6405 = vadd.xlane.f32.xlu0 %v6404
    %v6406 = vpop.xlane.xlu0 %6405
    %v6407 = vmul.f32 %v6385, %v5874
    %v6408 = vmul.f32 %v6388, %v5874
    %v6409 = vmul.f32 %v6391, %v5874
    %v6410 = vmul.f32 %v6394, %v5874
    %v6411 = vmul.f32 %v6397, %v5874
    %v6412 = vmul.f32 %v6400, %v5874
    %v6413 = vmul.f32 %v6403, %v5874
    %v6414 = vmul.f32 %v6406, %v5874
    %v6415 = vadd.f32 %v6407, 1e-05
    %v6416 = vadd.f32 %v6408, 1e-05
    %v6417 = vadd.f32 %v6409, 1e-05
    %v6418 = vadd.f32 %v6410, 1e-05
    %v6419 = vadd.f32 %v6411, 1e-05
    %v6420 = vadd.f32 %v6412, 1e-05
    %v6421 = vadd.f32 %v6413, 1e-05
    %v6422 = vadd.f32 %v6414, 1e-05
    %v6423 = vrsqrt.pop %v6415
    %v6424 = vrsqrt.pop %v6416
    %v6425 = vrsqrt.pop %v6417
    %v6426 = vrsqrt.pop %v6418
    %v6427 = vrsqrt.pop %v6419
    %v6428 = vrsqrt.pop %v6420
    %v6429 = vrsqrt.pop %v6421
    %v6430 = vrsqrt.pop %v6422
    %v6431 = vmul.f32 %v6367, %v6423
    %v6432 = vmul.f32 %v6368, %v6424
    %v6433 = vmul.f32 %v6369, %v6425
    %v6434 = vmul.f32 %v6370, %v6426
    %v6435 = vmul.f32 %v6371, %v6427
    %v6436 = vmul.f32 %v6372, %v6428
    %v6437 = vmul.f32 %v6373, %v6429
    %v6438 = vmul.f32 %v6374, %v6430
    %v6439 = vlaneseq
    %v6440 = vshrl.u32 %v6439, 7
    %v6441 = vsub.s32 0, %v6440
    %v6442 = vrot.slane %v6333, %v6441
    %v6443 = vmul.f32 %v6431, %v6442
    %v6444 = vmul.f32 %v6432, %v6442
    %v6445 = vmul.f32 %v6433, %v6442
    %v6446 = vmul.f32 %v6434, %v6442
    %v6447 = vmul.f32 %v6435, %v6442
    %v6448 = vmul.f32 %v6436, %v6442
    %v6449 = vmul.f32 %v6437, %v6442
    %v6450 = vmul.f32 %v6438, %v6442
    %v6451 = vlaneseq
    %v6452 = vshrl.u32 %v6451, 7
    %v6453 = vsub.s32 0, %v6452
    %v6454 = vrot.slane %v6334, %v6453
    %v6455 = vadd.f32 %v6443, %v6454
    %v6456 = vadd.f32 %v6444, %v6454
    %v6457 = vadd.f32 %v6445, %v6454
    %v6458 = vadd.f32 %v6446, %v6454
    %v6459 = vadd.f32 %v6447, %v6454
    %v6460 = vadd.f32 %v6448, %v6454
    %v6461 = vadd.f32 %v6449, %v6454
    %v6462 = vadd.f32 %v6450, %v6454
    %v6463 = vmul.f32 %v6455, 0.5
    %v6464 = vmul.f32 %v6456, 0.5
    %v6465 = vmul.f32 %v6457, 0.5
    %v6466 = vmul.f32 %v6458, 0.5
    %v6467 = vmul.f32 %v6459, 0.5
    %v6468 = vmul.f32 %v6460, 0.5
    %v6469 = vmul.f32 %v6461, 0.5
    %v6470 = vmul.f32 %v6462, 0.5
    %v6471 = vmul.f32 %v6455, 0.70710677
    %v6472 = vmul.f32 %v6456, 0.70710677
    %v6473 = vmul.f32 %v6457, 0.70710677
    %v6474 = vmul.f32 %v6458, 0.70710677
    %v6475 = vmul.f32 %v6459, 0.70710677
    %v6476 = vmul.f32 %v6460, 0.70710677
    %v6477 = vmul.f32 %v6461, 0.70710677
    %v6478 = vmul.f32 %v6462, 0.70710677
    %v6479 = vand.u32 2147483647, %v6471
    %v6480 = vand.u32 2147483647, %v6472
    %v6481 = vand.u32 2147483647, %v6473
    %v6482 = vand.u32 2147483647, %v6474
    %v6483 = vand.u32 2147483647, %v6475
    %v6484 = vand.u32 2147483647, %v6476
    %v6485 = vand.u32 2147483647, %v6477
    %v6486 = vand.u32 2147483647, %v6478
    %v6487 = vmul.f32 %v6479, 0.3275911
    %v6488 = vmul.f32 %v6480, 0.3275911
    %v6489 = vmul.f32 %v6481, 0.3275911
    %v6490 = vmul.f32 %v6482, 0.3275911
    %v6491 = vmul.f32 %v6483, 0.3275911
    %v6492 = vmul.f32 %v6484, 0.3275911
    %v6493 = vmul.f32 %v6485, 0.3275911
    %v6494 = vmul.f32 %v6486, 0.3275911
    %v6495 = vadd.f32 %v6487, 1.0
    %v6496 = vadd.f32 %v6488, 1.0
    %v6497 = vadd.f32 %v6489, 1.0
    %v6498 = vadd.f32 %v6490, 1.0
    %v6499 = vadd.f32 %v6491, 1.0
    %v6500 = vadd.f32 %v6492, 1.0
    %v6501 = vadd.f32 %v6493, 1.0
    %v6502 = vadd.f32 %v6494, 1.0
    %v6503 = vrcp.pop %v6495
    %v6504 = vmul.f32 1.0, %v6503
    %v6505 = vrcp.pop %v6496
    %v6506 = vmul.f32 1.0, %v6505
    %v6507 = vrcp.pop %v6497
    %v6508 = vmul.f32 1.0, %v6507
    %v6509 = vrcp.pop %v6498
    %v6510 = vmul.f32 1.0, %v6509
    %v6511 = vrcp.pop %v6499
    %v6512 = vmul.f32 1.0, %v6511
    %v6513 = vrcp.pop %v6500
    %v6514 = vmul.f32 1.0, %v6513
    %v6515 = vrcp.pop %v6501
    %v6516 = vmul.f32 1.0, %v6515
    %v6517 = vrcp.pop %v6502
    %v6518 = vmul.f32 1.0, %v6517
    %v6519 = vmul.f32 %v6504, 1.0614054
    %v6520 = vmul.f32 %v6506, 1.0614054
    %v6521 = vmul.f32 %v6508, 1.0614054
    %v6522 = vmul.f32 %v6510, 1.0614054
    %v6523 = vmul.f32 %v6512, 1.0614054
    %v6524 = vmul.f32 %v6514, 1.0614054
    %v6525 = vmul.f32 %v6516, 1.0614054
    %v6526 = vmul.f32 %v6518, 1.0614054
    %v6527 = vadd.f32 %v6519, -1.4531521
    %v6528 = vadd.f32 %v6520, -1.4531521
    %v6529 = vadd.f32 %v6521, -1.4531521
    %v6530 = vadd.f32 %v6522, -1.4531521
    %v6531 = vadd.f32 %v6523, -1.4531521
    %v6532 = vadd.f32 %v6524, -1.4531521
    %v6533 = vadd.f32 %v6525, -1.4531521
    %v6534 = vadd.f32 %v6526, -1.4531521
    %v6535 = vmul.f32 %v6527, %v6504
    %v6536 = vmul.f32 %v6528, %v6506
    %v6537 = vmul.f32 %v6529, %v6508
    %v6538 = vmul.f32 %v6530, %v6510
    %v6539 = vmul.f32 %v6531, %v6512
    %v6540 = vmul.f32 %v6532, %v6514
    %v6541 = vmul.f32 %v6533, %v6516
    %v6542 = vmul.f32 %v6534, %v6518
    %v6543 = vadd.f32 %v6535, 1.4214138
    %v6544 = vadd.f32 %v6536, 1.4214138
    %v6545 = vadd.f32 %v6537, 1.4214138
    %v6546 = vadd.f32 %v6538, 1.4214138
    %v6547 = vadd.f32 %v6539, 1.4214138
    %v6548 = vadd.f32 %v6540, 1.4214138
    %v6549 = vadd.f32 %v6541, 1.4214138
    %v6550 = vadd.f32 %v6542, 1.4214138
    %v6551 = vmul.f32 %v6543, %v6504
    %v6552 = vmul.f32 %v6544, %v6506
    %v6553 = vmul.f32 %v6545, %v6508
    %v6554 = vmul.f32 %v6546, %v6510
    %v6555 = vmul.f32 %v6547, %v6512
    %v6556 = vmul.f32 %v6548, %v6514
    %v6557 = vmul.f32 %v6549, %v6516
    %v6558 = vmul.f32 %v6550, %v6518
    %v6559 = vadd.f32 %v6551, -0.28449672
    %v6560 = vadd.f32 %v6552, -0.28449672
    %v6561 = vadd.f32 %v6553, -0.28449672
    %v6562 = vadd.f32 %v6554, -0.28449672
    %v6563 = vadd.f32 %v6555, -0.28449672
    %v6564 = vadd.f32 %v6556, -0.28449672
    %v6565 = vadd.f32 %v6557, -0.28449672
    %v6566 = vadd.f32 %v6558, -0.28449672
    %v6567 = vmul.f32 %v6559, %v6504
    %v6568 = vmul.f32 %v6560, %v6506
    %v6569 = vmul.f32 %v6561, %v6508
    %v6570 = vmul.f32 %v6562, %v6510
    %v6571 = vmul.f32 %v6563, %v6512
    %v6572 = vmul.f32 %v6564, %v6514
    %v6573 = vmul.f32 %v6565, %v6516
    %v6574 = vmul.f32 %v6566, %v6518
    %v6575 = vadd.f32 %v6567, 0.2548296
    %v6576 = vadd.f32 %v6568, 0.2548296
    %v6577 = vadd.f32 %v6569, 0.2548296
    %v6578 = vadd.f32 %v6570, 0.2548296
    %v6579 = vadd.f32 %v6571, 0.2548296
    %v6580 = vadd.f32 %v6572, 0.2548296
    %v6581 = vadd.f32 %v6573, 0.2548296
    %v6582 = vadd.f32 %v6574, 0.2548296
    %v6583 = vmul.f32 %v6575, %v6504
    %v6584 = vmul.f32 %v6576, %v6506
    %v6585 = vmul.f32 %v6577, %v6508
    %v6586 = vmul.f32 %v6578, %v6510
    %v6587 = vmul.f32 %v6579, %v6512
    %v6588 = vmul.f32 %v6580, %v6514
    %v6589 = vmul.f32 %v6581, %v6516
    %v6590 = vmul.f32 %v6582, %v6518
    %v6591 = vsub.f32 0.0, %v6479
    %v6592 = vsub.f32 0.0, %v6480
    %v6593 = vsub.f32 0.0, %v6481
    %v6594 = vsub.f32 0.0, %v6482
    %v6595 = vsub.f32 0.0, %v6483
    %v6596 = vsub.f32 0.0, %v6484
    %v6597 = vsub.f32 0.0, %v6485
    %v6598 = vsub.f32 0.0, %v6486
    %v6599 = vmul.f32 %v6591, %v6479
    %v6600 = vmul.f32 %v6592, %v6480
    %v6601 = vmul.f32 %v6593, %v6481
    %v6602 = vmul.f32 %v6594, %v6482
    %v6603 = vmul.f32 %v6595, %v6483
    %v6604 = vmul.f32 %v6596, %v6484
    %v6605 = vmul.f32 %v6597, %v6485
    %v6606 = vmul.f32 %v6598, %v6486
    %v6607 = vmul.f32 %v6599, 1.442695
    %v6608 = vpow.pop %v6607
    %v6609 = vmul.f32 %v6600, 1.442695
    %v6610 = vpow.pop %v6609
    %v6611 = vmul.f32 %v6601, 1.442695
    %v6612 = vpow.pop %v6611
    %v6613 = vmul.f32 %v6602, 1.442695
    %v6614 = vpow.pop %v6613
    %v6615 = vmul.f32 %v6603, 1.442695
    %v6616 = vpow.pop %v6615
    %v6617 = vmul.f32 %v6604, 1.442695
    %v6618 = vpow.pop %v6617
    %v6619 = vmul.f32 %v6605, 1.442695
    %v6620 = vpow.pop %v6619
    %v6621 = vmul.f32 %v6606, 1.442695
    %v6622 = vpow.pop %v6621
    %v6623 = vmul.f32 %v6583, %v6608
    %v6624 = vmul.f32 %v6584, %v6610
    %v6625 = vmul.f32 %v6585, %v6612
    %v6626 = vmul.f32 %v6586, %v6614
    %v6627 = vmul.f32 %v6587, %v6616
    %v6628 = vmul.f32 %v6588, %v6618
    %v6629 = vmul.f32 %v6589, %v6620
    %v6630 = vmul.f32 %v6590, %v6622
    %v6631 = vsub.f32 1.0, %v6623
    %v6632 = vsub.f32 1.0, %v6624
    %v6633 = vsub.f32 1.0, %v6625
    %v6634 = vsub.f32 1.0, %v6626
    %v6635 = vsub.f32 1.0, %v6627
    %v6636 = vsub.f32 1.0, %v6628
    %v6637 = vsub.f32 1.0, %v6629
    %v6638 = vsub.f32 1.0, %v6630
    %vm6639 = vcmp.ge.f32.partialorder %v6471, 0.0
    %vm6640 = vcmp.ge.f32.partialorder %v6472, 0.0
    %vm6641 = vcmp.ge.f32.partialorder %v6473, 0.0
    %vm6642 = vcmp.ge.f32.partialorder %v6474, 0.0
    %vm6643 = vcmp.ge.f32.partialorder %v6475, 0.0
    %vm6644 = vcmp.ge.f32.partialorder %v6476, 0.0
    %vm6645 = vcmp.ge.f32.partialorder %v6477, 0.0
    %vm6646 = vcmp.ge.f32.partialorder %v6478, 0.0
    %v6647 = vsub.f32 0.0, %v6631
    %v6648 = vsub.f32 0.0, %v6632
    %v6649 = vsub.f32 0.0, %v6633
    %v6650 = vsub.f32 0.0, %v6634
    %v6651 = vsub.f32 0.0, %v6635
    %v6652 = vsub.f32 0.0, %v6636
    %v6653 = vsub.f32 0.0, %v6637
    %v6654 = vsub.f32 0.0, %v6638
    %v6655 = vsel %vm6639, %v6631, %v6647
    %v6656 = vsel %vm6640, %v6632, %v6648
    %v6657 = vsel %vm6641, %v6633, %v6649
    %v6658 = vsel %vm6642, %v6634, %v6650
    %v6659 = vsel %vm6643, %v6635, %v6651
    %v6660 = vsel %vm6644, %v6636, %v6652
    %v6661 = vsel %vm6645, %v6637, %v6653
    %v6662 = vsel %vm6646, %v6638, %v6654
    %v6663 = vadd.f32 %v6655, 1.0
    %v6664 = vadd.f32 %v6656, 1.0
    %v6665 = vadd.f32 %v6657, 1.0
    %v6666 = vadd.f32 %v6658, 1.0
    %v6667 = vadd.f32 %v6659, 1.0
    %v6668 = vadd.f32 %v6660, 1.0
    %v6669 = vadd.f32 %v6661, 1.0
    %v6670 = vadd.f32 %v6662, 1.0
    %v6671 = vmul.f32 %v6463, %v6663
    %v6672 = vmul.f32 %v6464, %v6664
    %v6673 = vmul.f32 %v6465, %v6665
    %v6674 = vmul.f32 %v6466, %v6666
    %v6675 = vmul.f32 %v6467, %v6667
    %v6676 = vmul.f32 %v6468, %v6668
    %v6677 = vmul.f32 %v6469, %v6669
    %v6678 = vmul.f32 %v6470, %v6670
    %v6679 = vld [vmem:[#allocation8 + $0x10] sm:$0xff]
    %v6680 = vld [vmem:[#allocation8 + $0x30] sm:$0xff]
    %v6681 = vld [vmem:[#allocation8 + $0x50] sm:$0xff]
    %v6682 = vld [vmem:[#allocation8 + $0x70] sm:$0xff]
    %v6683 = vld [vmem:[#allocation9 + $0x7] sm:$0x1]
    %v6684 = vlaneseq
    %v6685 = vshrl.u32 %v6684, 7
    %v6686 = vsub.s32 0, %v6685
    %v6687 = vrot.slane %v6683, %v6686
    %v6689 = vsel %vm5718, %v6671, 0
    %v6692 = vsel %vm5718, %v6672, 0
    %v6695 = vsel %vm5718, %v6673, 0
    %v6698 = vsel %vm5718, %v6674, 0
    %v6701 = vsel %vm5718, %v6675, 0
    %v6704 = vsel %vm5718, %v6676, 0
    %v6707 = vsel %vm5718, %v6677, 0
    %v6710 = vsel %vm5718, %v6678, 0
    %6712 = vmatprep.subr.mxu0 0.0
    %6713 = vmatpush1.msra.mxu0 0.0
    %6714 = vmatprep.subr.mxu0 0.0
    %6715 = vmatpush1.msra.mxu0 0.0
    %6716 = vmatprep.subr.mxu0 0.0
    %6717 = vmatpush1.msra.mxu0 0.0
    %6718 = vmatprep.subr.mxu0 0.0
    %6719 = vmatpush1.msra.mxu0 0.0
    %6720 = vmatprep.subr.mxu0 0.0
    %6721 = vmatpush1.msra.mxu0 0.0
    %6722 = vmatprep.subr.mxu0 0.0
    %6723 = vmatpush1.msra.mxu0 0.0
    %6724 = vmatprep.subr.mxu0 0.0
    %6725 = vmatpush1.msra.mxu0 0.0
    %6726 = vmatprep.subr.mxu0 0.0
    %6727 = vmatpush1.msra.mxu0 0.0
    %6728 = vmatprep.subr.mxu0 0.0
    %6729 = vmatpush1.msra.mxu0 0.0
    %6730 = vmatprep.subr.mxu0 0.0
    %6731 = vmatpush1.msra.mxu0 0.0
    %6732 = vmatprep.subr.mxu0 0.0
    %6733 = vmatpush1.msra.mxu0 0.0
    %6734 = vmatprep.subr.mxu0 0.0
    %6735 = vmatpush1.msra.mxu0 0.0
    %6736 = vmatprep.subr.mxu0 0.0
    %6737 = vmatpush1.msra.mxu0 %v6682
    %6738 = vmatprep.subr.mxu0 0.0
    %6739 = vmatpush1.msra.mxu0 %v6681
    %6740 = vmatprep.subr.mxu0 0.0
    %6741 = vmatpush1.msra.mxu0 %v6680
    %6742 = vmatprep.subr.mxu0 0.0
    %6743 = vmatpush1.msra.mxu0 %v6679
    %6744 = vmatprep.subr.mxu0 0.0
    %6745 = vmatpush2.msra.mxu0 0.0
    %6746 = vmatprep.subr.mxu0 0.0
    %6747 = vmatpush2.msra.mxu0 0.0
    %6748 = vmatprep.subr.mxu0 0.0
    %6749 = vmatpush2.msra.mxu0 0.0
    %6750 = vmatprep.subr.mxu0 0.0
    %6751 = vmatpush2.msra.mxu0 0.0
    %6752 = vmatprep.subr.mxu0 0.0
    %6753 = vmatpush2.msra.mxu0 0.0
    %6754 = vmatprep.subr.mxu0 0.0
    %6755 = vmatpush2.msra.mxu0 0.0
    %6756 = vmatprep.subr.mxu0 0.0
    %6757 = vmatpush2.msra.mxu0 0.0
    %6758 = vmatprep.subr.mxu0 0.0
    %6759 = vmatpush2.msra.mxu0 0.0
    %6760 = vmatprep.subr.mxu0 0.0
    %6761 = vmatpush2.msra.mxu0 0.0
    %6762 = vmatprep.subr.mxu0 0.0
    %6763 = vmatpush2.msra.mxu0 0.0
    %6764 = vmatprep.subr.mxu0 0.0
    %6765 = vmatpush2.msra.mxu0 0.0
    %6766 = vmatprep.subr.mxu0 0.0
    %6767 = vmatpush2.msra.mxu0 0.0
    %6768 = vmatprep.subr.mxu0 0.0
    %6769 = vmatpush2.msra.mxu0 0.0
    %6770 = vmatprep.subr.mxu0 0.0
    %6771 = vmatpush2.msra.mxu0 0.0
    %6772 = vmatprep.subr.mxu0 0.0
    %6773 = vmatpush2.msra.mxu0 0.0
    %6774 = vmatprep.subr.mxu0 0.0
    %6775 = vmatpush2.msra.mxu0 0.0
    %6776 = vmatprep.mubr.f32.mxu0 0.0
    %6777 = vmatmul.mubr.f32.gmra.mxu0 %v6689
    %v6778 = vpop.f32.mrf.mxu0
    %v6779 = vadd.f32 %v6687, %v6778
    %v6780 = vpop.f32.mrf.mxu0
    %6781 = vmatprep.mubr.f32.mxu0 0.0
    %6782 = vmatmul.mubr.f32.gmra.mxu0 %v6692
    %v6783 = vpop.f32.mrf.mxu0
    %v6784 = vadd.f32 %v6687, %v6783
    %v6785 = vpop.f32.mrf.mxu0
    %6786 = vmatprep.mubr.f32.mxu0 0.0
    %6787 = vmatmul.mubr.f32.gmra.mxu0 %v6695
    %v6788 = vpop.f32.mrf.mxu0
    %v6789 = vadd.f32 %v6687, %v6788
    %v6790 = vpop.f32.mrf.mxu0
    %6791 = vmatprep.mubr.f32.mxu0 0.0
    %6792 = vmatmul.mubr.f32.gmra.mxu0 %v6698
    %v6793 = vpop.f32.mrf.mxu0
    %v6794 = vadd.f32 %v6687, %v6793
    %v6795 = vpop.f32.mrf.mxu0
    %6796 = vmatprep.mubr.f32.mxu0 0.0
    %6797 = vmatmul.mubr.f32.gmra.mxu0 %v6701
    %v6798 = vpop.f32.mrf.mxu0
    %v6799 = vadd.f32 %v6687, %v6798
    %v6800 = vpop.f32.mrf.mxu0
    %6801 = vmatprep.mubr.f32.mxu0 0.0
    %6802 = vmatmul.mubr.f32.gmra.mxu0 %v6704
    %v6803 = vpop.f32.mrf.mxu0
    %v6804 = vadd.f32 %v6687, %v6803
    %v6805 = vpop.f32.mrf.mxu0
    %6806 = vmatprep.mubr.f32.mxu0 0.0
    %6807 = vmatmul.mubr.f32.gmra.mxu0 %v6707
    %v6808 = vpop.f32.mrf.mxu0
    %v6809 = vadd.f32 %v6687, %v6808
    %v6810 = vpop.f32.mrf.mxu0
    %6811 = vmatprep.mubr.f32.mxu0 0.0
    %6812 = vmatmul.mubr.f32.gmra.mxu0 %v6710
    %v6813 = vpop.f32.mrf.mxu0
    %v6814 = vadd.f32 %v6687, %v6813
    %v6815 = vpop.f32.mrf.mxu0
    %6816 = vdwg.mxu0
    %v6817 = vld [vmem:[#allocation9 + $0x8] sm:$0x1]
    %v6818 = vld [vmem:[#allocation9 + $0x9] sm:$0x1]
    %v6819 = vsel %vm5718, %v6779, 0.0
    %6820 = vadd.xlane.f32.xlu0 %v6819
    %v6821 = vpop.xlane.xlu0 %6820
    %v6822 = vsel %vm5718, %v6784, 0.0
    %6823 = vadd.xlane.f32.xlu0 %v6822
    %v6824 = vpop.xlane.xlu0 %6823
    %v6825 = vsel %vm5718, %v6789, 0.0
    %6826 = vadd.xlane.f32.xlu0 %v6825
    %v6827 = vpop.xlane.xlu0 %6826
    %v6828 = vsel %vm5718, %v6794, 0.0
    %6829 = vadd.xlane.f32.xlu0 %v6828
    %v6830 = vpop.xlane.xlu0 %6829
    %v6831 = vsel %vm5718, %v6799, 0.0
    %6832 = vadd.xlane.f32.xlu0 %v6831
    %v6833 = vpop.xlane.xlu0 %6832
    %v6834 = vsel %vm5718, %v6804, 0.0
    %6835 = vadd.xlane.f32.xlu0 %v6834
    %v6836 = vpop.xlane.xlu0 %6835
    %v6837 = vsel %vm5718, %v6809, 0.0
    %6838 = vadd.xlane.f32.xlu0 %v6837
    %v6839 = vpop.xlane.xlu0 %6838
    %v6840 = vsel %vm5718, %v6814, 0.0
    %6841 = vadd.xlane.f32.xlu0 %v6840
    %v6842 = vpop.xlane.xlu0 %6841
    %v6843 = vmul.f32 %v6821, %v5874
    %v6844 = vmul.f32 %v6824, %v5874
    %v6845 = vmul.f32 %v6827, %v5874
    %v6846 = vmul.f32 %v6830, %v5874
    %v6847 = vmul.f32 %v6833, %v5874
    %v6848 = vmul.f32 %v6836, %v5874
    %v6849 = vmul.f32 %v6839, %v5874
    %v6850 = vmul.f32 %v6842, %v5874
    %v6851 = vsub.f32 %v6779, %v6843
    %v6852 = vsub.f32 %v6784, %v6844
    %v6853 = vsub.f32 %v6789, %v6845
    %v6854 = vsub.f32 %v6794, %v6846
    %v6855 = vsub.f32 %v6799, %v6847
    %v6856 = vsub.f32 %v6804, %v6848
    %v6857 = vsub.f32 %v6809, %v6849
    %v6858 = vsub.f32 %v6814, %v6850
    %v6859 = vmul.f32 %v6851, %v6851
    %v6860 = vmul.f32 %v6852, %v6852
    %v6861 = vmul.f32 %v6853, %v6853
    %v6862 = vmul.f32 %v6854, %v6854
    %v6863 = vmul.f32 %v6855, %v6855
    %v6864 = vmul.f32 %v6856, %v6856
    %v6865 = vmul.f32 %v6857, %v6857
    %v6866 = vmul.f32 %v6858, %v6858
    %v6867 = vsel %vm5718, %v6859, 0.0
    %6868 = vadd.xlane.f32.xlu0 %v6867
    %v6869 = vpop.xlane.xlu0 %6868
    %v6870 = vsel %vm5718, %v6860, 0.0
    %6871 = vadd.xlane.f32.xlu0 %v6870
    %v6872 = vpop.xlane.xlu0 %6871
    %v6873 = vsel %vm5718, %v6861, 0.0
    %6874 = vadd.xlane.f32.xlu0 %v6873
    %v6875 = vpop.xlane.xlu0 %6874
    %v6876 = vsel %vm5718, %v6862, 0.0
    %6877 = vadd.xlane.f32.xlu0 %v6876
    %v6878 = vpop.xlane.xlu0 %6877
    %v6879 = vsel %vm5718, %v6863, 0.0
    %6880 = vadd.xlane.f32.xlu0 %v6879
    %v6881 = vpop.xlane.xlu0 %6880
    %v6882 = vsel %vm5718, %v6864, 0.0
    %6883 = vadd.xlane.f32.xlu0 %v6882
    %v6884 = vpop.xlane.xlu0 %6883
    %v6885 = vsel %vm5718, %v6865, 0.0
    %6886 = vadd.xlane.f32.xlu0 %v6885
    %v6887 = vpop.xlane.xlu0 %6886
    %v6888 = vsel %vm5718, %v6866, 0.0
    %6889 = vadd.xlane.f32.xlu0 %v6888
    %v6890 = vpop.xlane.xlu0 %6889
    %v6891 = vmul.f32 %v6869, %v5874
    %v6892 = vmul.f32 %v6872, %v5874
    %v6893 = vmul.f32 %v6875, %v5874
    %v6894 = vmul.f32 %v6878, %v5874
    %v6895 = vmul.f32 %v6881, %v5874
    %v6896 = vmul.f32 %v6884, %v5874
    %v6897 = vmul.f32 %v6887, %v5874
    %v6898 = vmul.f32 %v6890, %v5874
    %v6899 = vadd.f32 %v6891, 1e-05
    %v6900 = vadd.f32 %v6892, 1e-05
    %v6901 = vadd.f32 %v6893, 1e-05
    %v6902 = vadd.f32 %v6894, 1e-05
    %v6903 = vadd.f32 %v6895, 1e-05
    %v6904 = vadd.f32 %v6896, 1e-05
    %v6905 = vadd.f32 %v6897, 1e-05
    %v6906 = vadd.f32 %v6898, 1e-05
    %v6907 = vrsqrt.pop %v6899
    %v6908 = vrsqrt.pop %v6900
    %v6909 = vrsqrt.pop %v6901
    %v6910 = vrsqrt.pop %v6902
    %v6911 = vrsqrt.pop %v6903
    %v6912 = vrsqrt.pop %v6904
    %v6913 = vrsqrt.pop %v6905
    %v6914 = vrsqrt.pop %v6906
    %v6915 = vmul.f32 %v6851, %v6907
    %v6916 = vmul.f32 %v6852, %v6908
    %v6917 = vmul.f32 %v6853, %v6909
    %v6918 = vmul.f32 %v6854, %v6910
    %v6919 = vmul.f32 %v6855, %v6911
    %v6920 = vmul.f32 %v6856, %v6912
    %v6921 = vmul.f32 %v6857, %v6913
    %v6922 = vmul.f32 %v6858, %v6914
    %v6923 = vlaneseq
    %v6924 = vshrl.u32 %v6923, 7
    %v6925 = vsub.s32 0, %v6924
    %v6926 = vrot.slane %v6817, %v6925
    %v6927 = vmul.f32 %v6915, %v6926
    %v6928 = vmul.f32 %v6916, %v6926
    %v6929 = vmul.f32 %v6917, %v6926
    %v6930 = vmul.f32 %v6918, %v6926
    %v6931 = vmul.f32 %v6919, %v6926
    %v6932 = vmul.f32 %v6920, %v6926
    %v6933 = vmul.f32 %v6921, %v6926
    %v6934 = vmul.f32 %v6922, %v6926
    %v6935 = vlaneseq
    %v6936 = vshrl.u32 %v6935, 7
    %v6937 = vsub.s32 0, %v6936
    %v6938 = vrot.slane %v6818, %v6937
    %v6939 = vadd.f32 %v6927, %v6938
    %v6940 = vadd.f32 %v6928, %v6938
    %v6941 = vadd.f32 %v6929, %v6938
    %v6942 = vadd.f32 %v6930, %v6938
    %v6943 = vadd.f32 %v6931, %v6938
    %v6944 = vadd.f32 %v6932, %v6938
    %v6945 = vadd.f32 %v6933, %v6938
    %v6946 = vadd.f32 %v6934, %v6938
    %v6947 = vmul.f32 %v6939, 0.5
    %v6948 = vmul.f32 %v6940, 0.5
    %v6949 = vmul.f32 %v6941, 0.5
    %v6950 = vmul.f32 %v6942, 0.5
    %v6951 = vmul.f32 %v6943, 0.5
    %v6952 = vmul.f32 %v6944, 0.5
    %v6953 = vmul.f32 %v6945, 0.5
    %v6954 = vmul.f32 %v6946, 0.5
    %v6955 = vmul.f32 %v6939, 0.70710677
    %v6956 = vmul.f32 %v6940, 0.70710677
    %v6957 = vmul.f32 %v6941, 0.70710677
    %v6958 = vmul.f32 %v6942, 0.70710677
    %v6959 = vmul.f32 %v6943, 0.70710677
    %v6960 = vmul.f32 %v6944, 0.70710677
    %v6961 = vmul.f32 %v6945, 0.70710677
    %v6962 = vmul.f32 %v6946, 0.70710677
    %v6963 = vand.u32 2147483647, %v6955
    %v6964 = vand.u32 2147483647, %v6956
    %v6965 = vand.u32 2147483647, %v6957
    %v6966 = vand.u32 2147483647, %v6958
    %v6967 = vand.u32 2147483647, %v6959
    %v6968 = vand.u32 2147483647, %v6960
    %v6969 = vand.u32 2147483647, %v6961
    %v6970 = vand.u32 2147483647, %v6962
    %v6971 = vmul.f32 %v6963, 0.3275911
    %v6972 = vmul.f32 %v6964, 0.3275911
    %v6973 = vmul.f32 %v6965, 0.3275911
    %v6974 = vmul.f32 %v6966, 0.3275911
    %v6975 = vmul.f32 %v6967, 0.3275911
    %v6976 = vmul.f32 %v6968, 0.3275911
    %v6977 = vmul.f32 %v6969, 0.3275911
    %v6978 = vmul.f32 %v6970, 0.3275911
    %v6979 = vadd.f32 %v6971, 1.0
    %v6980 = vadd.f32 %v6972, 1.0
    %v6981 = vadd.f32 %v6973, 1.0
    %v6982 = vadd.f32 %v6974, 1.0
    %v6983 = vadd.f32 %v6975, 1.0
    %v6984 = vadd.f32 %v6976, 1.0
    %v6985 = vadd.f32 %v6977, 1.0
    %v6986 = vadd.f32 %v6978, 1.0
    %v6987 = vrcp.pop %v6979
    %v6988 = vmul.f32 1.0, %v6987
    %v6989 = vrcp.pop %v6980
    %v6990 = vmul.f32 1.0, %v6989
    %v6991 = vrcp.pop %v6981
    %v6992 = vmul.f32 1.0, %v6991
    %v6993 = vrcp.pop %v6982
    %v6994 = vmul.f32 1.0, %v6993
    %v6995 = vrcp.pop %v6983
    %v6996 = vmul.f32 1.0, %v6995
    %v6997 = vrcp.pop %v6984
    %v6998 = vmul.f32 1.0, %v6997
    %v6999 = vrcp.pop %v6985
    %v7000 = vmul.f32 1.0, %v6999
    %v7001 = vrcp.pop %v6986
    %v7002 = vmul.f32 1.0, %v7001
    %v7003 = vmul.f32 %v6988, 1.0614054
    %v7004 = vmul.f32 %v6990, 1.0614054
    %v7005 = vmul.f32 %v6992, 1.0614054
    %v7006 = vmul.f32 %v6994, 1.0614054
    %v7007 = vmul.f32 %v6996, 1.0614054
    %v7008 = vmul.f32 %v6998, 1.0614054
    %v7009 = vmul.f32 %v7000, 1.0614054
    %v7010 = vmul.f32 %v7002, 1.0614054
    %v7011 = vadd.f32 %v7003, -1.4531521
    %v7012 = vadd.f32 %v7004, -1.4531521
    %v7013 = vadd.f32 %v7005, -1.4531521
    %v7014 = vadd.f32 %v7006, -1.4531521
    %v7015 = vadd.f32 %v7007, -1.4531521
    %v7016 = vadd.f32 %v7008, -1.4531521
    %v7017 = vadd.f32 %v7009, -1.4531521
    %v7018 = vadd.f32 %v7010, -1.4531521
    %v7019 = vmul.f32 %v7011, %v6988
    %v7020 = vmul.f32 %v7012, %v6990
    %v7021 = vmul.f32 %v7013, %v6992
    %v7022 = vmul.f32 %v7014, %v6994
    %v7023 = vmul.f32 %v7015, %v6996
    %v7024 = vmul.f32 %v7016, %v6998
    %v7025 = vmul.f32 %v7017, %v7000
    %v7026 = vmul.f32 %v7018, %v7002
    %v7027 = vadd.f32 %v7019, 1.4214138
    %v7028 = vadd.f32 %v7020, 1.4214138
    %v7029 = vadd.f32 %v7021, 1.4214138
    %v7030 = vadd.f32 %v7022, 1.4214138
    %v7031 = vadd.f32 %v7023, 1.4214138
    %v7032 = vadd.f32 %v7024, 1.4214138
    %v7033 = vadd.f32 %v7025, 1.4214138
    %v7034 = vadd.f32 %v7026, 1.4214138
    %v7035 = vmul.f32 %v7027, %v6988
    %v7036 = vmul.f32 %v7028, %v6990
    %v7037 = vmul.f32 %v7029, %v6992
    %v7038 = vmul.f32 %v7030, %v6994
    %v7039 = vmul.f32 %v7031, %v6996
    %v7040 = vmul.f32 %v7032, %v6998
    %v7041 = vmul.f32 %v7033, %v7000
    %v7042 = vmul.f32 %v7034, %v7002
    %v7043 = vadd.f32 %v7035, -0.28449672
    %v7044 = vadd.f32 %v7036, -0.28449672
    %v7045 = vadd.f32 %v7037, -0.28449672
    %v7046 = vadd.f32 %v7038, -0.28449672
    %v7047 = vadd.f32 %v7039, -0.28449672
    %v7048 = vadd.f32 %v7040, -0.28449672
    %v7049 = vadd.f32 %v7041, -0.28449672
    %v7050 = vadd.f32 %v7042, -0.28449672
    %v7051 = vmul.f32 %v7043, %v6988
    %v7052 = vmul.f32 %v7044, %v6990
    %v7053 = vmul.f32 %v7045, %v6992
    %v7054 = vmul.f32 %v7046, %v6994
    %v7055 = vmul.f32 %v7047, %v6996
    %v7056 = vmul.f32 %v7048, %v6998
    %v7057 = vmul.f32 %v7049, %v7000
    %v7058 = vmul.f32 %v7050, %v7002
    %v7059 = vadd.f32 %v7051, 0.2548296
    %v7060 = vadd.f32 %v7052, 0.2548296
    %v7061 = vadd.f32 %v7053, 0.2548296
    %v7062 = vadd.f32 %v7054, 0.2548296
    %v7063 = vadd.f32 %v7055, 0.2548296
    %v7064 = vadd.f32 %v7056, 0.2548296
    %v7065 = vadd.f32 %v7057, 0.2548296
    %v7066 = vadd.f32 %v7058, 0.2548296
    %v7067 = vmul.f32 %v7059, %v6988
    %v7068 = vmul.f32 %v7060, %v6990
    %v7069 = vmul.f32 %v7061, %v6992
    %v7070 = vmul.f32 %v7062, %v6994
    %v7071 = vmul.f32 %v7063, %v6996
    %v7072 = vmul.f32 %v7064, %v6998
    %v7073 = vmul.f32 %v7065, %v7000
    %v7074 = vmul.f32 %v7066, %v7002
    %v7075 = vsub.f32 0.0, %v6963
    %v7076 = vsub.f32 0.0, %v6964
    %v7077 = vsub.f32 0.0, %v6965
    %v7078 = vsub.f32 0.0, %v6966
    %v7079 = vsub.f32 0.0, %v6967
    %v7080 = vsub.f32 0.0, %v6968
    %v7081 = vsub.f32 0.0, %v6969
    %v7082 = vsub.f32 0.0, %v6970
    %v7083 = vmul.f32 %v7075, %v6963
    %v7084 = vmul.f32 %v7076, %v6964
    %v7085 = vmul.f32 %v7077, %v6965
    %v7086 = vmul.f32 %v7078, %v6966
    %v7087 = vmul.f32 %v7079, %v6967
    %v7088 = vmul.f32 %v7080, %v6968
    %v7089 = vmul.f32 %v7081, %v6969
    %v7090 = vmul.f32 %v7082, %v6970
    %v7091 = vmul.f32 %v7083, 1.442695
    %v7092 = vpow.pop %v7091
    %v7093 = vmul.f32 %v7084, 1.442695
    %v7094 = vpow.pop %v7093
    %v7095 = vmul.f32 %v7085, 1.442695
    %v7096 = vpow.pop %v7095
    %v7097 = vmul.f32 %v7086, 1.442695
    %v7098 = vpow.pop %v7097
    %v7099 = vmul.f32 %v7087, 1.442695
    %v7100 = vpow.pop %v7099
    %v7101 = vmul.f32 %v7088, 1.442695
    %v7102 = vpow.pop %v7101
    %v7103 = vmul.f32 %v7089, 1.442695
    %v7104 = vpow.pop %v7103
    %v7105 = vmul.f32 %v7090, 1.442695
    %v7106 = vpow.pop %v7105
    %v7107 = vmul.f32 %v7067, %v7092
    %v7108 = vmul.f32 %v7068, %v7094
    %v7109 = vmul.f32 %v7069, %v7096
    %v7110 = vmul.f32 %v7070, %v7098
    %v7111 = vmul.f32 %v7071, %v7100
    %v7112 = vmul.f32 %v7072, %v7102
    %v7113 = vmul.f32 %v7073, %v7104
    %v7114 = vmul.f32 %v7074, %v7106
    %v7115 = vsub.f32 1.0, %v7107
    %v7116 = vsub.f32 1.0, %v7108
    %v7117 = vsub.f32 1.0, %v7109
    %v7118 = vsub.f32 1.0, %v7110
    %v7119 = vsub.f32 1.0, %v7111
    %v7120 = vsub.f32 1.0, %v7112
    %v7121 = vsub.f32 1.0, %v7113
    %v7122 = vsub.f32 1.0, %v7114
    %vm7123 = vcmp.ge.f32.partialorder %v6955, 0.0
    %vm7124 = vcmp.ge.f32.partialorder %v6956, 0.0
    %vm7125 = vcmp.ge.f32.partialorder %v6957, 0.0
    %vm7126 = vcmp.ge.f32.partialorder %v6958, 0.0
    %vm7127 = vcmp.ge.f32.partialorder %v6959, 0.0
    %vm7128 = vcmp.ge.f32.partialorder %v6960, 0.0
    %vm7129 = vcmp.ge.f32.partialorder %v6961, 0.0
    %vm7130 = vcmp.ge.f32.partialorder %v6962, 0.0
    %v7131 = vsub.f32 0.0, %v7115
    %v7132 = vsub.f32 0.0, %v7116
    %v7133 = vsub.f32 0.0, %v7117
    %v7134 = vsub.f32 0.0, %v7118
    %v7135 = vsub.f32 0.0, %v7119
    %v7136 = vsub.f32 0.0, %v7120
    %v7137 = vsub.f32 0.0, %v7121
    %v7138 = vsub.f32 0.0, %v7122
    %v7139 = vsel %vm7123, %v7115, %v7131
    %v7140 = vsel %vm7124, %v7116, %v7132
    %v7141 = vsel %vm7125, %v7117, %v7133
    %v7142 = vsel %vm7126, %v7118, %v7134
    %v7143 = vsel %vm7127, %v7119, %v7135
    %v7144 = vsel %vm7128, %v7120, %v7136
    %v7145 = vsel %vm7129, %v7121, %v7137
    %v7146 = vsel %vm7130, %v7122, %v7138
    %v7147 = vadd.f32 %v7139, 1.0
    %v7148 = vadd.f32 %v7140, 1.0
    %v7149 = vadd.f32 %v7141, 1.0
    %v7150 = vadd.f32 %v7142, 1.0
    %v7151 = vadd.f32 %v7143, 1.0
    %v7152 = vadd.f32 %v7144, 1.0
    %v7153 = vadd.f32 %v7145, 1.0
    %v7154 = vadd.f32 %v7146, 1.0
    %v7155 = vmul.f32 %v6947, %v7147
    %v7156 = vmul.f32 %v6948, %v7148
    %v7157 = vmul.f32 %v6949, %v7149
    %v7158 = vmul.f32 %v6950, %v7150
    %v7159 = vmul.f32 %v6951, %v7151
    %v7160 = vmul.f32 %v6952, %v7152
    %v7161 = vmul.f32 %v6953, %v7153
    %v7162 = vmul.f32 %v6954, %v7154
    %v7163 = vld [vmem:[#allocation8 + $0x18] sm:$0xff]
    %v7164 = vld [vmem:[#allocation8 + $0x38] sm:$0xff]
    %v7165 = vld [vmem:[#allocation8 + $0x58] sm:$0xff]
    %v7166 = vld [vmem:[#allocation8 + $0x78] sm:$0xff]
    %v7167 = vld [vmem:[#allocation9 + $0xa] sm:$0x1]
    %v7168 = vlaneseq
    %v7169 = vshrl.u32 %v7168, 7
    %v7170 = vsub.s32 0, %v7169
    %v7171 = vrot.slane %v7167, %v7170
    %v7173 = vsel %vm5718, %v7155, 0
    %v7176 = vsel %vm5718, %v7156, 0
    %v7179 = vsel %vm5718, %v7157, 0
    %v7182 = vsel %vm5718, %v7158, 0
    %v7185 = vsel %vm5718, %v7159, 0
    %v7188 = vsel %vm5718, %v7160, 0
    %v7191 = vsel %vm5718, %v7161, 0
    %v7194 = vsel %vm5718, %v7162, 0
    %7196 = vmatprep.subr.mxu0 0.0
    %7197 = vmatpush1.msra.mxu0 0.0
    %7198 = vmatprep.subr.mxu0 0.0
    %7199 = vmatpush1.msra.mxu0 0.0
    %7200 = vmatprep.subr.mxu0 0.0
    %7201 = vmatpush1.msra.mxu0 0.0
    %7202 = vmatprep.subr.mxu0 0.0
    %7203 = vmatpush1.msra.mxu0 0.0
    %7204 = vmatprep.subr.mxu0 0.0
    %7205 = vmatpush1.msra.mxu0 0.0
    %7206 = vmatprep.subr.mxu0 0.0
    %7207 = vmatpush1.msra.mxu0 0.0
    %7208 = vmatprep.subr.mxu0 0.0
    %7209 = vmatpush1.msra.mxu0 0.0
    %7210 = vmatprep.subr.mxu0 0.0
    %7211 = vmatpush1.msra.mxu0 0.0
    %7212 = vmatprep.subr.mxu0 0.0
    %7213 = vmatpush1.msra.mxu0 0.0
    %7214 = vmatprep.subr.mxu0 0.0
    %7215 = vmatpush1.msra.mxu0 0.0
    %7216 = vmatprep.subr.mxu0 0.0
    %7217 = vmatpush1.msra.mxu0 0.0
    %7218 = vmatprep.subr.mxu0 0.0
    %7219 = vmatpush1.msra.mxu0 0.0
    %7220 = vmatprep.subr.mxu0 0.0
    %7221 = vmatpush1.msra.mxu0 %v7166
    %7222 = vmatprep.subr.mxu0 0.0
    %7223 = vmatpush1.msra.mxu0 %v7165
    %7224 = vmatprep.subr.mxu0 0.0
    %7225 = vmatpush1.msra.mxu0 %v7164
    %7226 = vmatprep.subr.mxu0 0.0
    %7227 = vmatpush1.msra.mxu0 %v7163
    %7228 = vmatprep.subr.mxu0 0.0
    %7229 = vmatpush2.msra.mxu0 0.0
    %7230 = vmatprep.subr.mxu0 0.0
    %7231 = vmatpush2.msra.mxu0 0.0
    %7232 = vmatprep.subr.mxu0 0.0
    %7233 = vmatpush2.msra.mxu0 0.0
    %7234 = vmatprep.subr.mxu0 0.0
    %7235 = vmatpush2.msra.mxu0 0.0
    %7236 = vmatprep.subr.mxu0 0.0
    %7237 = vmatpush2.msra.mxu0 0.0
    %7238 = vmatprep.subr.mxu0 0.0
    %7239 = vmatpush2.msra.mxu0 0.0
    %7240 = vmatprep.subr.mxu0 0.0
    %7241 = vmatpush2.msra.mxu0 0.0
    %7242 = vmatprep.subr.mxu0 0.0
    %7243 = vmatpush2.msra.mxu0 0.0
    %7244 = vmatprep.subr.mxu0 0.0
    %7245 = vmatpush2.msra.mxu0 0.0
    %7246 = vmatprep.subr.mxu0 0.0
    %7247 = vmatpush2.msra.mxu0 0.0
    %7248 = vmatprep.subr.mxu0 0.0
    %7249 = vmatpush2.msra.mxu0 0.0
    %7250 = vmatprep.subr.mxu0 0.0
    %7251 = vmatpush2.msra.mxu0 0.0
    %7252 = vmatprep.subr.mxu0 0.0
    %7253 = vmatpush2.msra.mxu0 0.0
    %7254 = vmatprep.subr.mxu0 0.0
    %7255 = vmatpush2.msra.mxu0 0.0
    %7256 = vmatprep.subr.mxu0 0.0
    %7257 = vmatpush2.msra.mxu0 0.0
    %7258 = vmatprep.subr.mxu0 0.0
    %7259 = vmatpush2.msra.mxu0 0.0
    %7260 = vmatprep.mubr.f32.mxu0 0.0
    %7261 = vmatmul.mubr.f32.gmra.mxu0 %v7173
    %v7262 = vpop.f32.mrf.mxu0
    %v7263 = vadd.f32 %v7171, %v7262
    %v7264 = vpop.f32.mrf.mxu0
    %7265 = vmatprep.mubr.f32.mxu0 0.0
    %7266 = vmatmul.mubr.f32.gmra.mxu0 %v7176
    %v7267 = vpop.f32.mrf.mxu0
    %v7268 = vadd.f32 %v7171, %v7267
    %v7269 = vpop.f32.mrf.mxu0
    %7270 = vmatprep.mubr.f32.mxu0 0.0
    %7271 = vmatmul.mubr.f32.gmra.mxu0 %v7179
    %v7272 = vpop.f32.mrf.mxu0
    %v7273 = vadd.f32 %v7171, %v7272
    %v7274 = vpop.f32.mrf.mxu0
    %7275 = vmatprep.mubr.f32.mxu0 0.0
    %7276 = vmatmul.mubr.f32.gmra.mxu0 %v7182
    %v7277 = vpop.f32.mrf.mxu0
    %v7278 = vadd.f32 %v7171, %v7277
    %v7279 = vpop.f32.mrf.mxu0
    %7280 = vmatprep.mubr.f32.mxu0 0.0
    %7281 = vmatmul.mubr.f32.gmra.mxu0 %v7185
    %v7282 = vpop.f32.mrf.mxu0
    %v7283 = vadd.f32 %v7171, %v7282
    %v7284 = vpop.f32.mrf.mxu0
    %7285 = vmatprep.mubr.f32.mxu0 0.0
    %7286 = vmatmul.mubr.f32.gmra.mxu0 %v7188
    %v7287 = vpop.f32.mrf.mxu0
    %v7288 = vadd.f32 %v7171, %v7287
    %v7289 = vpop.f32.mrf.mxu0
    %7290 = vmatprep.mubr.f32.mxu0 0.0
    %7291 = vmatmul.mubr.f32.gmra.mxu0 %v7191
    %v7292 = vpop.f32.mrf.mxu0
    %v7293 = vadd.f32 %v7171, %v7292
    %v7294 = vpop.f32.mrf.mxu0
    %7295 = vmatprep.mubr.f32.mxu0 0.0
    %7296 = vmatmul.mubr.f32.gmra.mxu0 %v7194
    %v7297 = vpop.f32.mrf.mxu0
    %v7298 = vadd.f32 %v7171, %v7297
    %v7299 = vpop.f32.mrf.mxu0
    %7300 = vdwg.mxu0
    %v7301 = vtanh.pop %v7263
    %v7302 = vtanh.pop %v7268
    %v7303 = vtanh.pop %v7273
    %v7304 = vtanh.pop %v7278
    %v7305 = vtanh.pop %v7283
    %v7306 = vtanh.pop %v7288
    %v7307 = vtanh.pop %v7293
    %v7308 = vtanh.pop %v7298
    %v7309 = vld [vmem:[#allocation9 + $0xb] sm:$0x1]
    %v7310 = vlaneseq
    %v7311 = vshrl.u32 %v7310, 7
    %v7312 = vsub.s32 0, %v7311
    %v7313 = vrot.slane %v7309, %v7312
    %v7314 = vmul.f32 %v7301, %v7313
    %v7315 = vmul.f32 %v7302, %v7313
    %v7316 = vmul.f32 %v7303, %v7313
    %v7317 = vmul.f32 %v7304, %v7313
    %v7318 = vmul.f32 %v7305, %v7313
    %v7319 = vmul.f32 %v7306, %v7313
    %v7320 = vmul.f32 %v7307, %v7313
    %v7321 = vmul.f32 %v7308, %v7313
    %vm7322 = vcmask 130048
    %v7323 = vsel %vm7322, %v7314, 0.0
    %7324 = vadd.xlane.f32.xlu0 %v7323
    %v7325 = vpop.xlane.xlu0 %7324
    %v7326 = vsel %vm7322, %v7315, 0.0
    %7327 = vadd.xlane.f32.xlu0 %v7326
    %v7328 = vpop.xlane.xlu0 %7327
    %v7329 = vsel %vm7322, %v7316, 0.0
    %7330 = vadd.xlane.f32.xlu0 %v7329
    %v7331 = vpop.xlane.xlu0 %7330
    %v7332 = vsel %vm7322, %v7317, 0.0
    %7333 = vadd.xlane.f32.xlu0 %v7332
    %v7334 = vpop.xlane.xlu0 %7333
    %v7335 = vsel %vm7322, %v7318, 0.0
    %7336 = vadd.xlane.f32.xlu0 %v7335
    %v7337 = vpop.xlane.xlu0 %7336
    %v7338 = vsel %vm7322, %v7319, 0.0
    %7339 = vadd.xlane.f32.xlu0 %v7338
    %v7340 = vpop.xlane.xlu0 %7339
    %v7341 = vsel %vm7322, %v7320, 0.0
    %7342 = vadd.xlane.f32.xlu0 %v7341
    %v7343 = vpop.xlane.xlu0 %7342
    %v7344 = vsel %vm7322, %v7321, 0.0
    %7345 = vadd.xlane.f32.xlu0 %v7344
    %v7346 = vpop.xlane.xlu0 %7345
    %v7347 = vrot.slane %v7325, 4
    %v7348 = vmax.f32 %v7325, %v7347
    %v7349 = vrot.slane %v7348, 2
    %v7350 = vmax.f32 %v7348, %v7349
    %v7351 = vrot.slane %v7350, 1
    %v7352 = vmax.f32 %v7350, %v7351
    %v7353 = vrot.slane %v7328, 4
    %v7354 = vmax.f32 %v7328, %v7353
    %v7355 = vrot.slane %v7354, 2
    %v7356 = vmax.f32 %v7354, %v7355
    %v7357 = vrot.slane %v7356, 1
    %v7358 = vmax.f32 %v7356, %v7357
    %v7359 = vrot.slane %v7331, 4
    %v7360 = vmax.f32 %v7331, %v7359
    %v7361 = vrot.slane %v7360, 2
    %v7362 = vmax.f32 %v7360, %v7361
    %v7363 = vrot.slane %v7362, 1
    %v7364 = vmax.f32 %v7362, %v7363
    %v7365 = vrot.slane %v7334, 4
    %v7366 = vmax.f32 %v7334, %v7365
    %v7367 = vrot.slane %v7366, 2
    %v7368 = vmax.f32 %v7366, %v7367
    %v7369 = vrot.slane %v7368, 1
    %v7370 = vmax.f32 %v7368, %v7369
    %v7371 = vrot.slane %v7337, 4
    %v7372 = vmax.f32 %v7337, %v7371
    %v7373 = vrot.slane %v7372, 2
    %v7374 = vmax.f32 %v7372, %v7373
    %v7375 = vrot.slane %v7374, 1
    %v7376 = vmax.f32 %v7374, %v7375
    %v7377 = vrot.slane %v7340, 4
    %v7378 = vmax.f32 %v7340, %v7377
    %v7379 = vrot.slane %v7378, 2
    %v7380 = vmax.f32 %v7378, %v7379
    %v7381 = vrot.slane %v7380, 1
    %v7382 = vmax.f32 %v7380, %v7381
    %v7383 = vrot.slane %v7343, 4
    %v7384 = vmax.f32 %v7343, %v7383
    %v7385 = vrot.slane %v7384, 2
    %v7386 = vmax.f32 %v7384, %v7385
    %v7387 = vrot.slane %v7386, 1
    %v7388 = vmax.f32 %v7386, %v7387
    %v7389 = vrot.slane %v7346, 4
    %v7390 = vmax.f32 %v7346, %v7389
    %v7391 = vrot.slane %v7390, 2
    %v7392 = vmax.f32 %v7390, %v7391
    %v7393 = vrot.slane %v7392, 1
    %v7394 = vmax.f32 %v7392, %v7393
    %v7395 = vsub.f32 %v7325, %v7352
    %v7396 = vsub.f32 %v7328, %v7358
    %v7397 = vsub.f32 %v7331, %v7364
    %v7398 = vsub.f32 %v7334, %v7370
    %v7399 = vsub.f32 %v7337, %v7376
    %v7400 = vsub.f32 %v7340, %v7382
    %v7401 = vsub.f32 %v7343, %v7388
    %v7402 = vsub.f32 %v7346, %v7394
    %v7403 = vmul.f32 %v7395, 1.442695
    %v7404 = vpow.pop %v7403
    %v7405 = vmul.f32 %v7396, 1.442695
    %v7406 = vpow.pop %v7405
    %v7407 = vmul.f32 %v7397, 1.442695
    %v7408 = vpow.pop %v7407
    %v7409 = vmul.f32 %v7398, 1.442695
    %v7410 = vpow.pop %v7409
    %v7411 = vmul.f32 %v7399, 1.442695
    %v7412 = vpow.pop %v7411
    %v7413 = vmul.f32 %v7400, 1.442695
    %v7414 = vpow.pop %v7413
    %v7415 = vmul.f32 %v7401, 1.442695
    %v7416 = vpow.pop %v7415
    %v7417 = vmul.f32 %v7402, 1.442695
    %v7418 = vpow.pop %v7417
    %v7419 = vrot.slane %v7404, 4
    %v7420 = vadd.f32 %v7404, %v7419
    %v7421 = vrot.slane %v7420, 2
    %v7422 = vadd.f32 %v7420, %v7421
    %v7423 = vrot.slane %v7422, 1
    %v7424 = vadd.f32 %v7422, %v7423
    %v7425 = vrot.slane %v7406, 4
    %v7426 = vadd.f32 %v7406, %v7425
    %v7427 = vrot.slane %v7426, 2
    %v7428 = vadd.f32 %v7426, %v7427
    %v7429 = vrot.slane %v7428, 1
    %v7430 = vadd.f32 %v7428, %v7429
    %v7431 = vrot.slane %v7408, 4
    %v7432 = vadd.f32 %v7408, %v7431
    %v7433 = vrot.slane %v7432, 2
    %v7434 = vadd.f32 %v7432, %v7433
    %v7435 = vrot.slane %v7434, 1
    %v7436 = vadd.f32 %v7434, %v7435
    %v7437 = vrot.slane %v7410, 4
    %v7438 = vadd.f32 %v7410, %v7437
    %v7439 = vrot.slane %v7438, 2
    %v7440 = vadd.f32 %v7438, %v7439
    %v7441 = vrot.slane %v7440, 1
    %v7442 = vadd.f32 %v7440, %v7441
    %v7443 = vrot.slane %v7412, 4
    %v7444 = vadd.f32 %v7412, %v7443
    %v7445 = vrot.slane %v7444, 2
    %v7446 = vadd.f32 %v7444, %v7445
    %v7447 = vrot.slane %v7446, 1
    %v7448 = vadd.f32 %v7446, %v7447
    %v7449 = vrot.slane %v7414, 4
    %v7450 = vadd.f32 %v7414, %v7449
    %v7451 = vrot.slane %v7450, 2
    %v7452 = vadd.f32 %v7450, %v7451
    %v7453 = vrot.slane %v7452, 1
    %v7454 = vadd.f32 %v7452, %v7453
    %v7455 = vrot.slane %v7416, 4
    %v7456 = vadd.f32 %v7416, %v7455
    %v7457 = vrot.slane %v7456, 2
    %v7458 = vadd.f32 %v7456, %v7457
    %v7459 = vrot.slane %v7458, 1
    %v7460 = vadd.f32 %v7458, %v7459
    %v7461 = vrot.slane %v7418, 4
    %v7462 = vadd.f32 %v7418, %v7461
    %v7463 = vrot.slane %v7462, 2
    %v7464 = vadd.f32 %v7462, %v7463
    %v7465 = vrot.slane %v7464, 1
    %v7466 = vadd.f32 %v7464, %v7465
    %v7467 = vrcp.pop %v7424
    %v7468 = vmul.f32 %v7404, %v7467
    %v7469 = vrcp.pop %v7430
    %v7470 = vmul.f32 %v7406, %v7469
    %v7471 = vrcp.pop %v7436
    %v7472 = vmul.f32 %v7408, %v7471
    %v7473 = vrcp.pop %v7442
    %v7474 = vmul.f32 %v7410, %v7473
    %v7475 = vrcp.pop %v7448
    %v7476 = vmul.f32 %v7412, %v7475
    %v7477 = vrcp.pop %v7454
    %v7478 = vmul.f32 %v7414, %v7477
    %v7479 = vrcp.pop %v7460
    %v7480 = vmul.f32 %v7416, %v7479
    %v7481 = vrcp.pop %v7466
    %v7482 = vmul.f32 %v7418, %v7481
    %v7483 = vmul.f32 %v7468, %v7155
    %v7484 = vmul.f32 %v7470, %v7156
    %v7485 = vmul.f32 %v7472, %v7157
    %v7486 = vmul.f32 %v7474, %v7158
    %v7487 = vmul.f32 %v7476, %v7159
    %v7488 = vmul.f32 %v7478, %v7160
    %v7489 = vmul.f32 %v7480, %v7161
    %v7490 = vmul.f32 %v7482, %v7162
    %v7491 = vsel %vm5718, %v7483, 0.0
    %v7492 = vrot.slane %v7491, 4
    %v7493 = vadd.f32 %v7491, %v7492
    %v7494 = vrot.slane %v7493, 2
    %v7495 = vadd.f32 %v7493, %v7494
    %v7496 = vrot.slane %v7495, 1
    %v7497 = vadd.f32 %v7495, %v7496
    %v7498 = vsel %vm5718, %v7484, 0.0
    %v7499 = vrot.slane %v7498, 4
    %v7500 = vadd.f32 %v7498, %v7499
    %v7501 = vrot.slane %v7500, 2
    %v7502 = vadd.f32 %v7500, %v7501
    %v7503 = vrot.slane %v7502, 1
    %v7504 = vadd.f32 %v7502, %v7503
    %v7505 = vsel %vm5718, %v7485, 0.0
    %v7506 = vrot.slane %v7505, 4
    %v7507 = vadd.f32 %v7505, %v7506
    %v7508 = vrot.slane %v7507, 2
    %v7509 = vadd.f32 %v7507, %v7508
    %v7510 = vrot.slane %v7509, 1
    %v7511 = vadd.f32 %v7509, %v7510
    %v7512 = vsel %vm5718, %v7486, 0.0
    %v7513 = vrot.slane %v7512, 4
    %v7514 = vadd.f32 %v7512, %v7513
    %v7515 = vrot.slane %v7514, 2
    %v7516 = vadd.f32 %v7514, %v7515
    %v7517 = vrot.slane %v7516, 1
    %v7518 = vadd.f32 %v7516, %v7517
    %v7519 = vsel %vm5718, %v7487, 0.0
    %v7520 = vrot.slane %v7519, 4
    %v7521 = vadd.f32 %v7519, %v7520
    %v7522 = vrot.slane %v7521, 2
    %v7523 = vadd.f32 %v7521, %v7522
    %v7524 = vrot.slane %v7523, 1
    %v7525 = vadd.f32 %v7523, %v7524
    %v7526 = vsel %vm5718, %v7488, 0.0
    %v7527 = vrot.slane %v7526, 4
    %v7528 = vadd.f32 %v7526, %v7527
    %v7529 = vrot.slane %v7528, 2
    %v7530 = vadd.f32 %v7528, %v7529
    %v7531 = vrot.slane %v7530, 1
    %v7532 = vadd.f32 %v7530, %v7531
    %v7533 = vsel %vm5718, %v7489, 0.0
    %v7534 = vrot.slane %v7533, 4
    %v7535 = vadd.f32 %v7533, %v7534
    %v7536 = vrot.slane %v7535, 2
    %v7537 = vadd.f32 %v7535, %v7536
    %v7538 = vrot.slane %v7537, 1
    %v7539 = vadd.f32 %v7537, %v7538
    %v7540 = vsel %vm5718, %v7490, 0.0
    %v7541 = vrot.slane %v7540, 4
    %v7542 = vadd.f32 %v7540, %v7541
    %v7543 = vrot.slane %v7542, 2
    %v7544 = vadd.f32 %v7542, %v7543
    %v7545 = vrot.slane %v7544, 1
    %v7546 = vadd.f32 %v7544, %v7545
    %vm7555 = vcmask 1041409
    %v7556 = vsel %vm7555, %v7504, %v7497
    %vm7557 = vcmask 1042434
    %v7558 = vsel %vm7557, %v7511, %v7556
    %vm7559 = vcmask 1043459
    %v7560 = vsel %vm7559, %v7518, %v7558
    %vm7561 = vcmask 1044484
    %v7562 = vsel %vm7561, %v7525, %v7560
    %vm7563 = vcmask 1045509
    %v7564 = vsel %vm7563, %v7532, %v7562
    %vm7565 = vcmask 1046534
    %v7566 = vsel %vm7565, %v7539, %v7564
    %vm7567 = vcmask 1047559
    %v7568 = vsel %vm7567, %v7546, %v7566
    %7570 = vst.msk [vmem:[#allocation11] sm:$0xff] %vm5718, %v7568
    // Predicated region
    $region34: #{tpu_custom_call.1} parent=1 // pred_check
      _
    $region35: #{tpu_custom_call.1} parent=1 // pred_check_branch
      %7572 = sbr.rel (0) target = $region37
    $region36: #{tpu_custom_call.1} parent=1 // pred_region
      %s7574 = ssub.s32 128, 128
      %7575 = vsyncadd [#allocation5], %s7574
      %s7577 = sshll.u32 [#allocation11], 4
      %s7578 = int_to_ptr.vmem [resolvable:$true] %s7577
      %7580 = dma.vmem_to_hbm [thread:$0]  %s7578, 128, %s4, [#allocation5]
    $region37: #{tpu_custom_call.1} parent=1 // pred_fallthru
      _
    // Predicated region
    $region38: #{tpu_custom_call.1} parent=1 // pred_check
      _
    $region39: #{tpu_custom_call.1} parent=1 // pred_check_branch
      %7582 = sbr.rel (0) target = $region41
    $region40: #{tpu_custom_call.1} parent=1 // pred_region
      %7583 = dma.done [#allocation5], 128
    $region41: #{tpu_custom_call.1} parent=1 // pred_fallthru
      _
    %7584 = vsyncpa [#allocation4], 1
    %7585 = vsyncpa [#allocation7], 1
    %7586 = vsyncpa [#allocation10], 1
    %7587 = vsyncpa [#allocation5], 1

</llo_original>
